<compile_context>
chip_gen: v6e
topology: v6e:2x2x1
jax: 0.10.0
libtpu: 0.0.40
codegen_flags: <defaults>
</compile_context>

<pallas_src>
import functools

import jax
import jax.numpy as jnp
from jax import lax
from jax.experimental import pallas as pl
from jax.experimental.pallas import tpu as pltpu


# ---------------------------------------------------------------------------
# In-kernel helpers (traced inside the Pallas kernel)
# ---------------------------------------------------------------------------
def _shift_flat(x, d):
    """y[:, p] = x[:, p + d] with zero fill outside [0, L). d is a static int."""
    c, l = x.shape
    if d == 0:
        return x
    if abs(d) >= l:
        return jnp.zeros_like(x)
    pad = jnp.zeros((c, abs(d)), x.dtype)
    if d > 0:
        return jnp.concatenate([x[:, d:], pad], axis=1)
    return jnp.concatenate([pad, x[:, : l + d]], axis=1)


def _conv3x3_in_relu(x, w_ref, b_ref, mask_l, mask_r, H, W, compute_dtype):
    """Conv2d(3x3, pad=1, groups folded via block-diagonal weights)
    + InstanceNorm2d(eps=1e-5) + ReLU in the flat (channels, H*W) layout.

    x:      (Cin, H*W) f32
    w_ref:  (9, Cout, Cin) ref, tap-major (kh, kw), block-diagonal over groups,
            stored in `compute_dtype`
    b_ref:  (Cout, 1) f32 ref
    mask_l / mask_r: (1, H*W) f32 validity masks for the kw=0 / kw=2 taps
    returns (Cout, H*W) f32
    """
    hw = H * W
    # Horizontal taps: built once, masked once per direction (2 VPU muls, f32),
    # then cast once to the MXU operand dtype.
    x_c = x.astype(compute_dtype)
    x_l = (_shift_flat(x, -1) * mask_l).astype(compute_dtype)   # reads x[.., w-1]
    x_r = (_shift_flat(x, +1) * mask_r).astype(compute_dtype)   # reads x[.., w+1]
    cols = (x_l, x_c, x_r)

    def row(kh):
        # sum_kw  W[kh, kw] @ tap(kw)  -> (Cout, H*W), f32 accumulation on MXU.
        acc = jnp.dot(w_ref[3 * kh + 0], cols[0],
                      preferred_element_type=jnp.float32)
        acc += jnp.dot(w_ref[3 * kh + 1], cols[1],
                       preferred_element_type=jnp.float32)
        acc += jnp.dot(w_ref[3 * kh + 2], cols[2],
                       preferred_element_type=jnp.float32)
        return acc

    # Vertical taps are applied to the per-kh partial sums (Cout rows instead
    # of 3x Cin taps); the zero-fill shift handles the top/bottom image edge
    # exactly, so no vertical masks are needed.
    acc = row(1) + b_ref[...]
    acc += _shift_flat(row(2), +W)      # kh = 2 reads the row below
    acc += _shift_flat(row(0), -W)      # kh = 0 reads the row above

    # Two-pass InstanceNorm2d (f32 stats), then ReLU.  Dropout2d = id (eval).
    inv_n = 1.0 / hw
    mean = jnp.sum(acc, axis=1, keepdims=True) * inv_n
    cent = acc - mean
    var = jnp.sum(cent * cent, axis=1, keepdims=True) * inv_n
    y = cent * lax.rsqrt(var + 1e-5)
    return jnp.maximum(y, 0.0)


# ---------------------------------------------------------------------------
# Fused stage kernel: ConvBlock2D for one batch element (all groups at once)
# ---------------------------------------------------------------------------
def _stage_kernel(x_ref, w1_ref, b1_ref, w2_ref, b2_ref, m_ref, out_ref, *,
                  H, W, compute_dtype):
    m = m_ref[...]
    mask_l = m[0:1, :]
    mask_r = m[1:2, :]
    x = x_ref[0].astype(jnp.float32)                      # (Cin, H*W)
    y = _conv3x3_in_relu(x, w1_ref, b1_ref, mask_l, mask_r, H, W, compute_dtype)
    y = _conv3x3_in_relu(y, w2_ref, b2_ref, mask_l, mask_r, H, W, compute_dtype)
    out_ref[0] = y.astype(out_ref.dtype)                  # lane-dense store


# ---------------------------------------------------------------------------
# Wrapper helpers (plain XLA, traced under jit)
# ---------------------------------------------------------------------------
def _edge_masks(H, W):
    wpos = jnp.arange(H * W, dtype=jnp.int32) % W
    mask_l = (wpos >= 1).astype(jnp.float32)          # kw = 0 needs w-1 >= 0
    mask_r = (wpos <= W - 2).astype(jnp.float32)      # kw = 2 needs w+1 <= W-1
    return jnp.stack([mask_l, mask_r], axis=0)        # (2, H*W)


def _block_diag_taps(w, groups, dtype):
    """(Cout, Cin//groups, 3, 3) grouped-conv weight -> (9, Cout, Cin)
    tap-major block-diagonal weight (groups folded into one dense matmul)."""
    cout, cin_pg = w.shape[0], w.shape[1]
    cout_pg = cout // groups
    wt = jnp.transpose(w.astype(jnp.float32), (2, 3, 0, 1))      # (3,3,Cout,cin_pg)
    wg = wt.reshape(3, 3, groups, cout_pg, cin_pg)
    eye = jnp.eye(groups, dtype=jnp.float32)
    bd = jnp.einsum("xygoi,gh->xygohi", wg, eye)
    return bd.reshape(9, cout, groups * cin_pg).astype(dtype)


def _avg_pool2_flat(x_flat, H, W):
    """AvgPool2d(kernel=2) on a flat (N, C, H*W) activation (plain XLA)."""
    N, C, _ = x_flat.shape
    x = x_flat.reshape(N, C, H // 2, 2, W // 2, 2)
    return jnp.mean(x, axis=(3, 5)).reshape(N, C, (H // 2) * (W // 2))


# ---------------------------------------------------------------------------
# One fused pallas_call per stage: conv -> IN -> ReLU -> conv -> IN -> ReLU
# ---------------------------------------------------------------------------
def conv_block2d(x_flat, w1, b1, w2, b2, groups, H, W, compute_dtype):
    """x_flat: (N, Cin, H*W) f32 -> (N, Cout, H*W) f32."""
    N, Cin, HW = x_flat.shape
    assert HW == H * W
    Cout = w1.shape[0]
    cin_pg, cout_pg = Cin // groups, Cout // groups
    assert w1.shape == (Cout, cin_pg, 3, 3) and w2.shape == (Cout, cout_pg, 3, 3)

    w1_bd = _block_diag_taps(w1, groups, compute_dtype)    # (9, Cout, Cin)
    w2_bd = _block_diag_taps(w2, groups, compute_dtype)    # (9, Cout, Cout)
    b1c = b1.astype(jnp.float32).reshape(Cout, 1)
    b2c = b2.astype(jnp.float32).reshape(Cout, 1)
    masks = _edge_masks(H, W)

    itemsize = jnp.dtype(compute_dtype).itemsize
    flops = 2 * 9 * HW * (Cout * Cin + Cout * Cout) * N
    bytes_accessed = (4 * N * HW * (Cin + Cout)                       # acts
                      + itemsize * 9 * (Cout * Cin + Cout * Cout)     # weights
                      + 4 * (2 * Cout + 2 * HW))                      # bias/masks

    kern = functools.partial(_stage_kernel, H=H, W=W,
                             compute_dtype=compute_dtype)
    # NOTE: the weight/bias/mask inputs have constant index_maps; at real
    # channel counts give them pipeline_mode=pl.Buffered(1) to avoid the
    # default double-buffer copy (negligible at these test sizes).
    out = pl.pallas_call(
        kern,
        out_shape=jax.ShapeDtypeStruct((N, Cout, HW), jnp.float32),
        grid=(N,),
        in_specs=[
            pl.BlockSpec((1, Cin, HW), lambda n: (n, 0, 0)),
            pl.BlockSpec((9, Cout, Cin), lambda n: (0, 0, 0)),
            pl.BlockSpec((Cout, 1), lambda n: (0, 0)),
            pl.BlockSpec((9, Cout, Cout), lambda n: (0, 0, 0)),
            pl.BlockSpec((Cout, 1), lambda n: (0, 0)),
            pl.BlockSpec((2, HW), lambda n: (0, 0)),
        ],
        out_specs=pl.BlockSpec((1, Cout, HW), lambda n: (n, 0, 0)),
        compiler_params=pltpu.CompilerParams(
            dimension_semantics=("parallel",)),
        cost_estimate=pl.CostEstimate(
            flops=int(flops), transcendentals=int(2 * Cout * N),
            bytes_accessed=int(bytes_accessed)),
    )(x_flat.astype(jnp.float32), w1_bd, b1c, w2_bd, b2c, masks)
    return out


# ---------------------------------------------------------------------------
# GroupedXNetDown forward
# ---------------------------------------------------------------------------
def grouped_xnet_down(x, down_params, conv_params, groups,
                      compute_dtype=jnp.bfloat16):
    """x: (N, Cin, H, W) -> (output, stack) matching the PyTorch module."""
    N, Cin, H, W = x.shape
    cur = x.reshape(N, Cin, H * W).astype(jnp.float32)
    stack = []
    for (w1, b1, w2, b2) in down_params:
        assert H % 2 == 0 and W % 2 == 0
        blk = conv_block2d(cur, w1, b1, w2, b2, groups, H, W, compute_dtype)
        stack.append(blk.reshape(N, w1.shape[0], H, W))
        cur = _avg_pool2_flat(blk, H, W)      # AvgPool2d(2), no dense selector
        H, W = H // 2, W // 2
    w1, b1, w2, b2 = conv_params
    out = conv_block2d(cur, w1, b1, w2, b2, groups, H, W, compute_dtype)
    return out.reshape(N, w1.shape[0], H, W), stack


def init_params(key, in_chans, chans, num_pool_layers, groups):
    def conv_p(k, cin, cout):
        k1, k2 = jax.random.split(k)
        fan_in = (cin // groups) * 9
        w = jax.random.normal(k1, (cout, cin // groups, 3, 3), jnp.float32)
        w = w / jnp.sqrt(jnp.float32(fan_in))
        b = 0.01 * jax.random.normal(k2, (cout,), jnp.float32)
        return w, b

    def block_p(k, cin, cout):
        k1, k2 = jax.random.split(k)
        return conv_p(k1, cin, cout) + conv_p(k2, cout, cout)

    down = []
    key, sub = jax.random.split(key)
    down.append(block_p(sub, in_chans, chans))
    ch = chans
    for _ in range(num_pool_layers - 1):
        key, sub = jax.random.split(key)
        down.append(block_p(sub, ch, ch * 2))
        ch *= 2
    key, sub = jax.random.split(key)
    conv = block_p(sub, ch, ch)
    return down, conv


# ---------------------------------------------------------------------------
# Pure-JAX reference (correctness check only).  `compute_dtype` rounds the
# conv operands the same way the kernel does, so only accumulation-order
# noise remains when comparing.
# ---------------------------------------------------------------------------
def _ref_conv_in_relu(x, w, b, groups, compute_dtype):
    xq = x.astype(compute_dtype).astype(jnp.float32)
    wq = w.astype(compute_dtype).astype(jnp.float32)
    y = lax.conv_general_dilated(
        xq, wq, window_strides=(1, 1), padding="SAME",
        feature_group_count=groups,
        dimension_numbers=("NCHW", "OIHW", "NCHW"),
    )
    y = y + b[None, :, None, None]
    mean = jnp.mean(y, axis=(2, 3), keepdims=True)
    var = jnp.mean(jnp.square(y - mean), axis=(2, 3), keepdims=True)
    y = (y - mean) * lax.rsqrt(var + 1e-5)
    return jnp.maximum(y, 0.0)


def _ref_pool(x):
    N, C, H, W = x.shape
    return jnp.mean(x.reshape(N, C, H // 2, 2, W // 2, 2), axis=(3, 5))


def _ref_forward(x, down_params, conv_params, groups, compute_dtype):
    stack = []
    out = x
    for (w1, b1, w2, b2) in down_params:
        out = _ref_conv_in_relu(out, w1, b1, groups, compute_dtype)
        out = _ref_conv_in_relu(out, w2, b2, groups, compute_dtype)
        stack.append(out)
        out = _ref_pool(out)
    w1, b1, w2, b2 = conv_params
    out = _ref_conv_in_relu(out, w1, b1, groups, compute_dtype)
    out = _ref_conv_in_relu(out, w2, b2, groups, compute_dtype)
    return out, stack


if __name__ == "__main__":
    key = jax.random.PRNGKey(0)
    kx, kp = jax.random.split(key)

    N, in_chans, chans, num_pool_layers, groups = 2, 2, 2, 3, 2
    H = W = 16
    x = jax.random.normal(kx, (N, in_chans, H, W), jnp.float32)
    down_params, conv_params = init_params(kp, in_chans, chans,
                                           num_pool_layers, groups)

    def run_and_check(compute_dtype, tol):
        fwd = jax.jit(functools.partial(
            grouped_xnet_down, groups=groups, compute_dtype=compute_dtype))
        out, stack = fwd(x, down_params, conv_params)
        out = jax.block_until_ready(out)
        stack = [jax.block_until_ready(s) for s in stack]

        # Shape checks (mirror the PyTorch module semantics)
        assert out.shape == (N, chans * 2 ** (num_pool_layers - 1),
                             H // 2 ** num_pool_layers, W // 2 ** num_pool_layers)
        assert len(stack) == num_pool_layers

        ref_out, ref_stack = _ref_forward(x, down_params, conv_params, groups,
                                          compute_dtype)
        assert jnp.allclose(out, ref_out, atol=tol, rtol=tol), (
            f"final output mismatch ({compute_dtype})")
        for s, rs in zip(stack, ref_stack):
            assert s.shape == rs.shape
            assert jnp.allclose(s, rs, atol=tol, rtol=tol), (
                f"stack output mismatch ({compute_dtype})")

    # f32 MXU operands: tight check.
    run_and_check(jnp.float32, 2e-3)
    # bf16 MXU operands (default perf config): reference operands get the same
    # bf16 rounding; the extra slack covers f32 accumulation-order noise and
    # occasional re-rounding flips at inter-conv bf16 casts.
    run_and_check(jnp.bfloat16, 3e-2)

    print("KERNEL_OK")
</pallas_src>

<mosaic_0001>
module attributes {stable_mosaic.version = 11 : i64} {
  func.func @_stage_kernel(%arg0: i32, %arg1: memref<1x2x256xf32, #tpu.memory_space<vmem>>, %arg2: memref<9x2x2xf32, #tpu.memory_space<vmem>>, %arg3: memref<2x1xf32, #tpu.memory_space<vmem>>, %arg4: memref<9x2x2xf32, #tpu.memory_space<vmem>>, %arg5: memref<2x1xf32, #tpu.memory_space<vmem>>, %arg6: memref<2x256xf32, #tpu.memory_space<vmem>>, %arg7: memref<1x2x256xf32, #tpu.memory_space<vmem>>) attributes {dimension_semantics = [#tpu.dimension_semantics<parallel>], iteration_bounds = array<i64: 2>, scalar_prefetch = 0 : i64, scratch_operands = 0 : i64, tpu.core_type = #tpu.core_type<tc>, window_params = [{transform_indices = @transform_0, window_bounds = array<i64: 1, 2, 256>}, {pipeline_mode = #tpu.pipeline_mode<synchronous>, transform_indices = @transform_1, window_bounds = array<i64: 9, 2, 2>}, {pipeline_mode = #tpu.pipeline_mode<synchronous>, transform_indices = @transform_2, window_bounds = array<i64: 2, 1>}, {pipeline_mode = #tpu.pipeline_mode<synchronous>, transform_indices = @transform_3, window_bounds = array<i64: 9, 2, 2>}, {pipeline_mode = #tpu.pipeline_mode<synchronous>, transform_indices = @transform_4, window_bounds = array<i64: 2, 1>}, {pipeline_mode = #tpu.pipeline_mode<synchronous>, transform_indices = @transform_5, window_bounds = array<i64: 2, 256>}, {transform_indices = @transform_6, window_bounds = array<i64: 1, 2, 256>}]} {
    %c0 = arith.constant 0 : index
    %c0_0 = arith.constant 0 : index
    %0 = vector.load %arg6[%c0, %c0_0] : memref<2x256xf32, #tpu.memory_space<vmem>>, vector<2x256xf32>
    %1 = vector.extract_strided_slice %0 {offsets = [0, 0], sizes = [1, 256], strides = [1, 1]} : vector<2x256xf32> to vector<1x256xf32>
    %2 = vector.extract_strided_slice %0 {offsets = [1, 0], sizes = [1, 256], strides = [1, 1]} : vector<2x256xf32> to vector<1x256xf32>
    %c0_1 = arith.constant 0 : index
    %c0_2 = arith.constant 0 : index
    %c0_3 = arith.constant 0 : index
    %3 = vector.load %arg1[%c0_1, %c0_2, %c0_3] : memref<1x2x256xf32, #tpu.memory_space<vmem>>, vector<1x2x256xf32>
    %4 = vector.shape_cast %3 : vector<1x2x256xf32> to vector<2x256xf32>
    %cst = arith.constant 0.000000e+00 : f32
    %5 = vector.broadcast %cst : f32 to vector<2x1xf32>
    %6 = vector.extract_strided_slice %4 {offsets = [0, 0], sizes = [2, 255], strides = [1, 1]} : vector<2x256xf32> to vector<2x255xf32>
    %7 = tpu.concatenate %5, %6 in 1 : vector<2x1xf32>, vector<2x255xf32> -> vector<2x256xf32>
    %8 = vector.broadcast %1 : vector<1x256xf32> to vector<2x256xf32>
    %9 = arith.mulf %7, %8 : vector<2x256xf32>
    %cst_4 = arith.constant 0.000000e+00 : f32
    %10 = vector.broadcast %cst_4 : f32 to vector<2x1xf32>
    %11 = vector.extract_strided_slice %4 {offsets = [0, 1], sizes = [2, 255], strides = [1, 1]} : vector<2x256xf32> to vector<2x255xf32>
    %12 = tpu.concatenate %11, %10 in 1 : vector<2x255xf32>, vector<2x1xf32> -> vector<2x256xf32>
    %13 = vector.broadcast %2 : vector<1x256xf32> to vector<2x256xf32>
    %14 = arith.mulf %12, %13 : vector<2x256xf32>
    %c3 = arith.constant 3 : index
    %c0_5 = arith.constant 0 : index
    %c0_6 = arith.constant 0 : index
    %15 = vector.load %arg2[%c3, %c0_5, %c0_6] : memref<9x2x2xf32, #tpu.memory_space<vmem>>, vector<1x2x2xf32>
    %16 = vector.shape_cast %15 : vector<1x2x2xf32> to vector<2x2xf32>
    %cst_7 = arith.constant dense<0.000000e+00> : vector<2x256xf32>
    %17 = tpu.matmul %16, %9, %cst_7 {dimension_numbers = #tpu.dot_dimension_numbers<[1], [0], [0], [1], [0, 0, 1, 1], [], []>} : vector<2x2xf32>, vector<2x256xf32>, vector<2x256xf32> -> vector<2x256xf32>
    %c4 = arith.constant 4 : index
    %c0_8 = arith.constant 0 : index
    %c0_9 = arith.constant 0 : index
    %18 = vector.load %arg2[%c4, %c0_8, %c0_9] : memref<9x2x2xf32, #tpu.memory_space<vmem>>, vector<1x2x2xf32>
    %19 = vector.shape_cast %18 : vector<1x2x2xf32> to vector<2x2xf32>
    %cst_10 = arith.constant dense<0.000000e+00> : vector<2x256xf32>
    %20 = tpu.matmul %19, %4, %cst_10 {dimension_numbers = #tpu.dot_dimension_numbers<[1], [0], [0], [1], [0, 0, 1, 1], [], []>} : vector<2x2xf32>, vector<2x256xf32>, vector<2x256xf32> -> vector<2x256xf32>
    %21 = arith.addf %17, %20 : vector<2x256xf32>
    %c5 = arith.constant 5 : index
    %c0_11 = arith.constant 0 : index
    %c0_12 = arith.constant 0 : index
    %22 = vector.load %arg2[%c5, %c0_11, %c0_12] : memref<9x2x2xf32, #tpu.memory_space<vmem>>, vector<1x2x2xf32>
    %23 = vector.shape_cast %22 : vector<1x2x2xf32> to vector<2x2xf32>
    %cst_13 = arith.constant dense<0.000000e+00> : vector<2x256xf32>
    %24 = tpu.matmul %23, %14, %cst_13 {dimension_numbers = #tpu.dot_dimension_numbers<[1], [0], [0], [1], [0, 0, 1, 1], [], []>} : vector<2x2xf32>, vector<2x256xf32>, vector<2x256xf32> -> vector<2x256xf32>
    %25 = arith.addf %21, %24 : vector<2x256xf32>
    %c0_14 = arith.constant 0 : index
    %c0_15 = arith.constant 0 : index
    %26 = vector.load %arg3[%c0_14, %c0_15] : memref<2x1xf32, #tpu.memory_space<vmem>>, vector<2x1xf32>
    %27 = vector.broadcast %26 : vector<2x1xf32> to vector<2x256xf32>
    %28 = arith.addf %25, %27 : vector<2x256xf32>
    %c6 = arith.constant 6 : index
    %c0_16 = arith.constant 0 : index
    %c0_17 = arith.constant 0 : index
    %29 = vector.load %arg2[%c6, %c0_16, %c0_17] : memref<9x2x2xf32, #tpu.memory_space<vmem>>, vector<1x2x2xf32>
    %30 = vector.shape_cast %29 : vector<1x2x2xf32> to vector<2x2xf32>
    %cst_18 = arith.constant dense<0.000000e+00> : vector<2x256xf32>
    %31 = tpu.matmul %30, %9, %cst_18 {dimension_numbers = #tpu.dot_dimension_numbers<[1], [0], [0], [1], [0, 0, 1, 1], [], []>} : vector<2x2xf32>, vector<2x256xf32>, vector<2x256xf32> -> vector<2x256xf32>
    %c7 = arith.constant 7 : index
    %c0_19 = arith.constant 0 : index
    %c0_20 = arith.constant 0 : index
    %32 = vector.load %arg2[%c7, %c0_19, %c0_20] : memref<9x2x2xf32, #tpu.memory_space<vmem>>, vector<1x2x2xf32>
    %33 = vector.shape_cast %32 : vector<1x2x2xf32> to vector<2x2xf32>
    %cst_21 = arith.constant dense<0.000000e+00> : vector<2x256xf32>
    %34 = tpu.matmul %33, %4, %cst_21 {dimension_numbers = #tpu.dot_dimension_numbers<[1], [0], [0], [1], [0, 0, 1, 1], [], []>} : vector<2x2xf32>, vector<2x256xf32>, vector<2x256xf32> -> vector<2x256xf32>
    %35 = arith.addf %31, %34 : vector<2x256xf32>
    %c8 = arith.constant 8 : index
    %c0_22 = arith.constant 0 : index
    %c0_23 = arith.constant 0 : index
    %36 = vector.load %arg2[%c8, %c0_22, %c0_23] : memref<9x2x2xf32, #tpu.memory_space<vmem>>, vector<1x2x2xf32>
    %37 = vector.shape_cast %36 : vector<1x2x2xf32> to vector<2x2xf32>
    %cst_24 = arith.constant dense<0.000000e+00> : vector<2x256xf32>
    %38 = tpu.matmul %37, %14, %cst_24 {dimension_numbers = #tpu.dot_dimension_numbers<[1], [0], [0], [1], [0, 0, 1, 1], [], []>} : vector<2x2xf32>, vector<2x256xf32>, vector<2x256xf32> -> vector<2x256xf32>
    %39 = arith.addf %35, %38 : vector<2x256xf32>
    %cst_25 = arith.constant 0.000000e+00 : f32
    %40 = vector.broadcast %cst_25 : f32 to vector<2x16xf32>
    %41 = vector.extract_strided_slice %39 {offsets = [0, 16], sizes = [2, 240], strides = [1, 1]} : vector<2x256xf32> to vector<2x240xf32>
    %42 = tpu.concatenate %41, %40 in 1 : vector<2x240xf32>, vector<2x16xf32> -> vector<2x256xf32>
    %43 = arith.addf %28, %42 : vector<2x256xf32>
    %c0_26 = arith.constant 0 : index
    %c0_27 = arith.constant 0 : index
    %c0_28 = arith.constant 0 : index
    %44 = vector.load %arg2[%c0_26, %c0_27, %c0_28] : memref<9x2x2xf32, #tpu.memory_space<vmem>>, vector<1x2x2xf32>
    %45 = vector.shape_cast %44 : vector<1x2x2xf32> to vector<2x2xf32>
    %cst_29 = arith.constant dense<0.000000e+00> : vector<2x256xf32>
    %46 = tpu.matmul %45, %9, %cst_29 {dimension_numbers = #tpu.dot_dimension_numbers<[1], [0], [0], [1], [0, 0, 1, 1], [], []>} : vector<2x2xf32>, vector<2x256xf32>, vector<2x256xf32> -> vector<2x256xf32>
    %c1 = arith.constant 1 : index
    %c0_30 = arith.constant 0 : index
    %c0_31 = arith.constant 0 : index
    %47 = vector.load %arg2[%c1, %c0_30, %c0_31] : memref<9x2x2xf32, #tpu.memory_space<vmem>>, vector<1x2x2xf32>
    %48 = vector.shape_cast %47 : vector<1x2x2xf32> to vector<2x2xf32>
    %cst_32 = arith.constant dense<0.000000e+00> : vector<2x256xf32>
    %49 = tpu.matmul %48, %4, %cst_32 {dimension_numbers = #tpu.dot_dimension_numbers<[1], [0], [0], [1], [0, 0, 1, 1], [], []>} : vector<2x2xf32>, vector<2x256xf32>, vector<2x256xf32> -> vector<2x256xf32>
    %50 = arith.addf %46, %49 : vector<2x256xf32>
    %c2 = arith.constant 2 : index
    %c0_33 = arith.constant 0 : index
    %c0_34 = arith.constant 0 : index
    %51 = vector.load %arg2[%c2, %c0_33, %c0_34] : memref<9x2x2xf32, #tpu.memory_space<vmem>>, vector<1x2x2xf32>
    %52 = vector.shape_cast %51 : vector<1x2x2xf32> to vector<2x2xf32>
    %cst_35 = arith.constant dense<0.000000e+00> : vector<2x256xf32>
    %53 = tpu.matmul %52, %14, %cst_35 {dimension_numbers = #tpu.dot_dimension_numbers<[1], [0], [0], [1], [0, 0, 1, 1], [], []>} : vector<2x2xf32>, vector<2x256xf32>, vector<2x256xf32> -> vector<2x256xf32>
    %54 = arith.addf %50, %53 : vector<2x256xf32>
    %cst_36 = arith.constant 0.000000e+00 : f32
    %55 = vector.broadcast %cst_36 : f32 to vector<2x16xf32>
    %56 = vector.extract_strided_slice %54 {offsets = [0, 0], sizes = [2, 240], strides = [1, 1]} : vector<2x256xf32> to vector<2x240xf32>
    %57 = tpu.concatenate %55, %56 in 1 : vector<2x16xf32>, vector<2x240xf32> -> vector<2x256xf32>
    %58 = arith.addf %43, %57 : vector<2x256xf32>
    %cst_37 = arith.constant dense<0.000000e+00> : vector<2xf32>
    %59 = vector.multi_reduction <add>, %58, %cst_37 [1] : vector<2x256xf32> to vector<2xf32>
    %60 = vector.shape_cast %59 : vector<2xf32> to vector<2x1xf32>
    %cst_38 = arith.constant 3.906250e-03 : f32
    %61 = vector.broadcast %cst_38 : f32 to vector<2x1xf32>
    %62 = arith.mulf %60, %61 : vector<2x1xf32>
    %63 = vector.broadcast %62 : vector<2x1xf32> to vector<2x256xf32>
    %64 = arith.subf %58, %63 : vector<2x256xf32>
    %65 = arith.mulf %64, %64 : vector<2x256xf32>
    %cst_39 = arith.constant dense<0.000000e+00> : vector<2xf32>
    %66 = vector.multi_reduction <add>, %65, %cst_39 [1] : vector<2x256xf32> to vector<2xf32>
    %67 = vector.shape_cast %66 : vector<2xf32> to vector<2x1xf32>
    %cst_40 = arith.constant 3.906250e-03 : f32
    %68 = vector.broadcast %cst_40 : f32 to vector<2x1xf32>
    %69 = arith.mulf %67, %68 : vector<2x1xf32>
    %cst_41 = arith.constant 9.99999974E-6 : f32
    %70 = vector.broadcast %cst_41 : f32 to vector<2x1xf32>
    %71 = arith.addf %69, %70 : vector<2x1xf32>
    %72 = math.rsqrt %71 : vector<2x1xf32>
    %73 = vector.broadcast %72 : vector<2x1xf32> to vector<2x256xf32>
    %74 = arith.mulf %64, %73 : vector<2x256xf32>
    %cst_42 = arith.constant 0.000000e+00 : f32
    %75 = vector.broadcast %cst_42 : f32 to vector<2x256xf32>
    %76 = arith.maximumf %74, %75 : vector<2x256xf32>
    %cst_43 = arith.constant 0.000000e+00 : f32
    %77 = vector.broadcast %cst_43 : f32 to vector<2x1xf32>
    %78 = vector.extract_strided_slice %76 {offsets = [0, 0], sizes = [2, 255], strides = [1, 1]} : vector<2x256xf32> to vector<2x255xf32>
    %79 = tpu.concatenate %77, %78 in 1 : vector<2x1xf32>, vector<2x255xf32> -> vector<2x256xf32>
    %80 = vector.broadcast %1 : vector<1x256xf32> to vector<2x256xf32>
    %81 = arith.mulf %79, %80 : vector<2x256xf32>
    %cst_44 = arith.constant 0.000000e+00 : f32
    %82 = vector.broadcast %cst_44 : f32 to vector<2x1xf32>
    %83 = vector.extract_strided_slice %76 {offsets = [0, 1], sizes = [2, 255], strides = [1, 1]} : vector<2x256xf32> to vector<2x255xf32>
    %84 = tpu.concatenate %83, %82 in 1 : vector<2x255xf32>, vector<2x1xf32> -> vector<2x256xf32>
    %85 = vector.broadcast %2 : vector<1x256xf32> to vector<2x256xf32>
    %86 = arith.mulf %84, %85 : vector<2x256xf32>
    %c3_45 = arith.constant 3 : index
    %c0_46 = arith.constant 0 : index
    %c0_47 = arith.constant 0 : index
    %87 = vector.load %arg4[%c3_45, %c0_46, %c0_47] : memref<9x2x2xf32, #tpu.memory_space<vmem>>, vector<1x2x2xf32>
    %88 = vector.shape_cast %87 : vector<1x2x2xf32> to vector<2x2xf32>
    %cst_48 = arith.constant dense<0.000000e+00> : vector<2x256xf32>
    %89 = tpu.matmul %88, %81, %cst_48 {dimension_numbers = #tpu.dot_dimension_numbers<[1], [0], [0], [1], [0, 0, 1, 1], [], []>} : vector<2x2xf32>, vector<2x256xf32>, vector<2x256xf32> -> vector<2x256xf32>
    %c4_49 = arith.constant 4 : index
    %c0_50 = arith.constant 0 : index
    %c0_51 = arith.constant 0 : index
    %90 = vector.load %arg4[%c4_49, %c0_50, %c0_51] : memref<9x2x2xf32, #tpu.memory_space<vmem>>, vector<1x2x2xf32>
    %91 = vector.shape_cast %90 : vector<1x2x2xf32> to vector<2x2xf32>
    %cst_52 = arith.constant dense<0.000000e+00> : vector<2x256xf32>
    %92 = tpu.matmul %91, %76, %cst_52 {dimension_numbers = #tpu.dot_dimension_numbers<[1], [0], [0], [1], [0, 0, 1, 1], [], []>} : vector<2x2xf32>, vector<2x256xf32>, vector<2x256xf32> -> vector<2x256xf32>
    %93 = arith.addf %89, %92 : vector<2x256xf32>
    %c5_53 = arith.constant 5 : index
    %c0_54 = arith.constant 0 : index
    %c0_55 = arith.constant 0 : index
    %94 = vector.load %arg4[%c5_53, %c0_54, %c0_55] : memref<9x2x2xf32, #tpu.memory_space<vmem>>, vector<1x2x2xf32>
    %95 = vector.shape_cast %94 : vector<1x2x2xf32> to vector<2x2xf32>
    %cst_56 = arith.constant dense<0.000000e+00> : vector<2x256xf32>
    %96 = tpu.matmul %95, %86, %cst_56 {dimension_numbers = #tpu.dot_dimension_numbers<[1], [0], [0], [1], [0, 0, 1, 1], [], []>} : vector<2x2xf32>, vector<2x256xf32>, vector<2x256xf32> -> vector<2x256xf32>
    %97 = arith.addf %93, %96 : vector<2x256xf32>
    %c0_57 = arith.constant 0 : index
    %c0_58 = arith.constant 0 : index
    %98 = vector.load %arg5[%c0_57, %c0_58] : memref<2x1xf32, #tpu.memory_space<vmem>>, vector<2x1xf32>
    %99 = vector.broadcast %98 : vector<2x1xf32> to vector<2x256xf32>
    %100 = arith.addf %97, %99 : vector<2x256xf32>
    %c6_59 = arith.constant 6 : index
    %c0_60 = arith.constant 0 : index
    %c0_61 = arith.constant 0 : index
    %101 = vector.load %arg4[%c6_59, %c0_60, %c0_61] : memref<9x2x2xf32, #tpu.memory_space<vmem>>, vector<1x2x2xf32>
    %102 = vector.shape_cast %101 : vector<1x2x2xf32> to vector<2x2xf32>
    %cst_62 = arith.constant dense<0.000000e+00> : vector<2x256xf32>
    %103 = tpu.matmul %102, %81, %cst_62 {dimension_numbers = #tpu.dot_dimension_numbers<[1], [0], [0], [1], [0, 0, 1, 1], [], []>} : vector<2x2xf32>, vector<2x256xf32>, vector<2x256xf32> -> vector<2x256xf32>
    %c7_63 = arith.constant 7 : index
    %c0_64 = arith.constant 0 : index
    %c0_65 = arith.constant 0 : index
    %104 = vector.load %arg4[%c7_63, %c0_64, %c0_65] : memref<9x2x2xf32, #tpu.memory_space<vmem>>, vector<1x2x2xf32>
    %105 = vector.shape_cast %104 : vector<1x2x2xf32> to vector<2x2xf32>
    %cst_66 = arith.constant dense<0.000000e+00> : vector<2x256xf32>
    %106 = tpu.matmul %105, %76, %cst_66 {dimension_numbers = #tpu.dot_dimension_numbers<[1], [0], [0], [1], [0, 0, 1, 1], [], []>} : vector<2x2xf32>, vector<2x256xf32>, vector<2x256xf32> -> vector<2x256xf32>
    %107 = arith.addf %103, %106 : vector<2x256xf32>
    %c8_67 = arith.constant 8 : index
    %c0_68 = arith.constant 0 : index
    %c0_69 = arith.constant 0 : index
    %108 = vector.load %arg4[%c8_67, %c0_68, %c0_69] : memref<9x2x2xf32, #tpu.memory_space<vmem>>, vector<1x2x2xf32>
    %109 = vector.shape_cast %108 : vector<1x2x2xf32> to vector<2x2xf32>
    %cst_70 = arith.constant dense<0.000000e+00> : vector<2x256xf32>
    %110 = tpu.matmul %109, %86, %cst_70 {dimension_numbers = #tpu.dot_dimension_numbers<[1], [0], [0], [1], [0, 0, 1, 1], [], []>} : vector<2x2xf32>, vector<2x256xf32>, vector<2x256xf32> -> vector<2x256xf32>
    %111 = arith.addf %107, %110 : vector<2x256xf32>
    %cst_71 = arith.constant 0.000000e+00 : f32
    %112 = vector.broadcast %cst_71 : f32 to vector<2x16xf32>
    %113 = vector.extract_strided_slice %111 {offsets = [0, 16], sizes = [2, 240], strides = [1, 1]} : vector<2x256xf32> to vector<2x240xf32>
    %114 = tpu.concatenate %113, %112 in 1 : vector<2x240xf32>, vector<2x16xf32> -> vector<2x256xf32>
    %115 = arith.addf %100, %114 : vector<2x256xf32>
    %c0_72 = arith.constant 0 : index
    %c0_73 = arith.constant 0 : index
    %c0_74 = arith.constant 0 : index
    %116 = vector.load %arg4[%c0_72, %c0_73, %c0_74] : memref<9x2x2xf32, #tpu.memory_space<vmem>>, vector<1x2x2xf32>
    %117 = vector.shape_cast %116 : vector<1x2x2xf32> to vector<2x2xf32>
    %cst_75 = arith.constant dense<0.000000e+00> : vector<2x256xf32>
    %118 = tpu.matmul %117, %81, %cst_75 {dimension_numbers = #tpu.dot_dimension_numbers<[1], [0], [0], [1], [0, 0, 1, 1], [], []>} : vector<2x2xf32>, vector<2x256xf32>, vector<2x256xf32> -> vector<2x256xf32>
    %c1_76 = arith.constant 1 : index
    %c0_77 = arith.constant 0 : index
    %c0_78 = arith.constant 0 : index
    %119 = vector.load %arg4[%c1_76, %c0_77, %c0_78] : memref<9x2x2xf32, #tpu.memory_space<vmem>>, vector<1x2x2xf32>
    %120 = vector.shape_cast %119 : vector<1x2x2xf32> to vector<2x2xf32>
    %cst_79 = arith.constant dense<0.000000e+00> : vector<2x256xf32>
    %121 = tpu.matmul %120, %76, %cst_79 {dimension_numbers = #tpu.dot_dimension_numbers<[1], [0], [0], [1], [0, 0, 1, 1], [], []>} : vector<2x2xf32>, vector<2x256xf32>, vector<2x256xf32> -> vector<2x256xf32>
    %122 = arith.addf %118, %121 : vector<2x256xf32>
    %c2_80 = arith.constant 2 : index
    %c0_81 = arith.constant 0 : index
    %c0_82 = arith.constant 0 : index
    %123 = vector.load %arg4[%c2_80, %c0_81, %c0_82] : memref<9x2x2xf32, #tpu.memory_space<vmem>>, vector<1x2x2xf32>
    %124 = vector.shape_cast %123 : vector<1x2x2xf32> to vector<2x2xf32>
    %cst_83 = arith.constant dense<0.000000e+00> : vector<2x256xf32>
    %125 = tpu.matmul %124, %86, %cst_83 {dimension_numbers = #tpu.dot_dimension_numbers<[1], [0], [0], [1], [0, 0, 1, 1], [], []>} : vector<2x2xf32>, vector<2x256xf32>, vector<2x256xf32> -> vector<2x256xf32>
    %126 = arith.addf %122, %125 : vector<2x256xf32>
    %cst_84 = arith.constant 0.000000e+00 : f32
    %127 = vector.broadcast %cst_84 : f32 to vector<2x16xf32>
    %128 = vector.extract_strided_slice %126 {offsets = [0, 0], sizes = [2, 240], strides = [1, 1]} : vector<2x256xf32> to vector<2x240xf32>
    %129 = tpu.concatenate %127, %128 in 1 : vector<2x16xf32>, vector<2x240xf32> -> vector<2x256xf32>
    %130 = arith.addf %115, %129 : vector<2x256xf32>
    %cst_85 = arith.constant dense<0.000000e+00> : vector<2xf32>
    %131 = vector.multi_reduction <add>, %130, %cst_85 [1] : vector<2x256xf32> to vector<2xf32>
    %132 = vector.shape_cast %131 : vector<2xf32> to vector<2x1xf32>
    %cst_86 = arith.constant 3.906250e-03 : f32
    %133 = vector.broadcast %cst_86 : f32 to vector<2x1xf32>
    %134 = arith.mulf %132, %133 : vector<2x1xf32>
    %135 = vector.broadcast %134 : vector<2x1xf32> to vector<2x256xf32>
    %136 = arith.subf %130, %135 : vector<2x256xf32>
    %137 = arith.mulf %136, %136 : vector<2x256xf32>
    %cst_87 = arith.constant dense<0.000000e+00> : vector<2xf32>
    %138 = vector.multi_reduction <add>, %137, %cst_87 [1] : vector<2x256xf32> to vector<2xf32>
    %139 = vector.shape_cast %138 : vector<2xf32> to vector<2x1xf32>
    %cst_88 = arith.constant 3.906250e-03 : f32
    %140 = vector.broadcast %cst_88 : f32 to vector<2x1xf32>
    %141 = arith.mulf %139, %140 : vector<2x1xf32>
    %cst_89 = arith.constant 9.99999974E-6 : f32
    %142 = vector.broadcast %cst_89 : f32 to vector<2x1xf32>
    %143 = arith.addf %141, %142 : vector<2x1xf32>
    %144 = math.rsqrt %143 : vector<2x1xf32>
    %145 = vector.broadcast %144 : vector<2x1xf32> to vector<2x256xf32>
    %146 = arith.mulf %136, %145 : vector<2x256xf32>
    %cst_90 = arith.constant 0.000000e+00 : f32
    %147 = vector.broadcast %cst_90 : f32 to vector<2x256xf32>
    %148 = arith.maximumf %146, %147 : vector<2x256xf32>
    %c0_91 = arith.constant 0 : index
    %c0_92 = arith.constant 0 : index
    %c0_93 = arith.constant 0 : index
    %149 = vector.load %arg7[%c0_91, %c0_92, %c0_93] : memref<1x2x256xf32, #tpu.memory_space<vmem>>, vector<1x2x256xf32>
    %150 = vector.shape_cast %149 : vector<1x2x256xf32> to vector<2x256xf32>
    %151 = vector.shape_cast %148 : vector<2x256xf32> to vector<1x2x256xf32>
    tpu.vector_store %arg7[%c0_91, %c0_92, %c0_93], %151 {strides = array<i32>} : memref<1x2x256xf32, #tpu.memory_space<vmem>>, vector<1x2x256xf32>,
    return
  }
  func.func @transform_0(%arg0: i32) -> (i32, i32, i32) {
    %c0_i32 = arith.constant 0 : i32
    %c0_i32_0 = arith.constant 0 : i32
    %c0_i32_1 = arith.constant 0 : i32
    return %arg0, %c0_i32, %c0_i32_0 : i32, i32, i32
  }
  func.func @transform_1(%arg0: i32) -> (i32, i32, i32) {
    %c0_i32 = arith.constant 0 : i32
    %c0_i32_0 = arith.constant 0 : i32
    %c0_i32_1 = arith.constant 0 : i32
    %c0_i32_2 = arith.constant 0 : i32
    return %c0_i32, %c0_i32_0, %c0_i32_1 : i32, i32, i32
  }
  func.func @transform_2(%arg0: i32) -> (i32, i32) {
    %c0_i32 = arith.constant 0 : i32
    %c0_i32_0 = arith.constant 0 : i32
    %c0_i32_1 = arith.constant 0 : i32
    return %c0_i32, %c0_i32_0 : i32, i32
  }
  func.func @transform_3(%arg0: i32) -> (i32, i32, i32) {
    %c0_i32 = arith.constant 0 : i32
    %c0_i32_0 = arith.constant 0 : i32
    %c0_i32_1 = arith.constant 0 : i32
    %c0_i32_2 = arith.constant 0 : i32
    return %c0_i32, %c0_i32_0, %c0_i32_1 : i32, i32, i32
  }
  func.func @transform_4(%arg0: i32) -> (i32, i32) {
    %c0_i32 = arith.constant 0 : i32
    %c0_i32_0 = arith.constant 0 : i32
    %c0_i32_1 = arith.constant 0 : i32
    return %c0_i32, %c0_i32_0 : i32, i32
  }
  func.func @transform_5(%arg0: i32) -> (i32, i32) {
    %c0_i32 = arith.constant 0 : i32
    %c0_i32_0 = arith.constant 0 : i32
    %c0_i32_1 = arith.constant 0 : i32
    return %c0_i32, %c0_i32_0 : i32, i32
  }
  func.func @transform_6(%arg0: i32) -> (i32, i32, i32) {
    %c0_i32 = arith.constant 0 : i32
    %c0_i32_0 = arith.constant 0 : i32
    %c0_i32_1 = arith.constant 0 : i32
    return %arg0, %c0_i32, %c0_i32_0 : i32, i32, i32
  }
}

module attributes {stable_mosaic.version = 11 : i64} {
  func.func @_stage_kernel(%arg0: i32, %arg1: memref<1x2x64xf32, #tpu.memory_space<vmem>>, %arg2: memref<9x4x2xf32, #tpu.memory_space<vmem>>, %arg3: memref<4x1xf32, #tpu.memory_space<vmem>>, %arg4: memref<9x4x4xf32, #tpu.memory_space<vmem>>, %arg5: memref<4x1xf32, #tpu.memory_space<vmem>>, %arg6: memref<2x64xf32, #tpu.memory_space<vmem>>, %arg7: memref<1x4x64xf32, #tpu.memory_space<vmem>>) attributes {dimension_semantics = [#tpu.dimension_semantics<parallel>], iteration_bounds = array<i64: 2>, scalar_prefetch = 0 : i64, scratch_operands = 0 : i64, tpu.core_type = #tpu.core_type<tc>, window_params = [{transform_indices = @transform_0, window_bounds = array<i64: 1, 2, 64>}, {pipeline_mode = #tpu.pipeline_mode<synchronous>, transform_indices = @transform_1, window_bounds = array<i64: 9, 4, 2>}, {pipeline_mode = #tpu.pipeline_mode<synchronous>, transform_indices = @transform_2, window_bounds = array<i64: 4, 1>}, {pipeline_mode = #tpu.pipeline_mode<synchronous>, transform_indices = @transform_3, window_bounds = array<i64: 9, 4, 4>}, {pipeline_mode = #tpu.pipeline_mode<synchronous>, transform_indices = @transform_4, window_bounds = array<i64: 4, 1>}, {pipeline_mode = #tpu.pipeline_mode<synchronous>, transform_indices = @transform_5, window_bounds = array<i64: 2, 64>}, {transform_indices = @transform_6, window_bounds = array<i64: 1, 4, 64>}]} {
    %c0 = arith.constant 0 : index
    %c0_0 = arith.constant 0 : index
    %0 = vector.load %arg6[%c0, %c0_0] : memref<2x64xf32, #tpu.memory_space<vmem>>, vector<2x64xf32>
    %1 = vector.extract_strided_slice %0 {offsets = [0, 0], sizes = [1, 64], strides = [1, 1]} : vector<2x64xf32> to vector<1x64xf32>
    %2 = vector.extract_strided_slice %0 {offsets = [1, 0], sizes = [1, 64], strides = [1, 1]} : vector<2x64xf32> to vector<1x64xf32>
    %c0_1 = arith.constant 0 : index
    %c0_2 = arith.constant 0 : index
    %c0_3 = arith.constant 0 : index
    %3 = vector.load %arg1[%c0_1, %c0_2, %c0_3] : memref<1x2x64xf32, #tpu.memory_space<vmem>>, vector<1x2x64xf32>
    %4 = vector.shape_cast %3 : vector<1x2x64xf32> to vector<2x64xf32>
    %cst = arith.constant 0.000000e+00 : f32
    %5 = vector.broadcast %cst : f32 to vector<2x1xf32>
    %6 = vector.extract_strided_slice %4 {offsets = [0, 0], sizes = [2, 63], strides = [1, 1]} : vector<2x64xf32> to vector<2x63xf32>
    %7 = tpu.concatenate %5, %6 in 1 : vector<2x1xf32>, vector<2x63xf32> -> vector<2x64xf32>
    %8 = vector.broadcast %1 : vector<1x64xf32> to vector<2x64xf32>
    %9 = arith.mulf %7, %8 : vector<2x64xf32>
    %cst_4 = arith.constant 0.000000e+00 : f32
    %10 = vector.broadcast %cst_4 : f32 to vector<2x1xf32>
    %11 = vector.extract_strided_slice %4 {offsets = [0, 1], sizes = [2, 63], strides = [1, 1]} : vector<2x64xf32> to vector<2x63xf32>
    %12 = tpu.concatenate %11, %10 in 1 : vector<2x63xf32>, vector<2x1xf32> -> vector<2x64xf32>
    %13 = vector.broadcast %2 : vector<1x64xf32> to vector<2x64xf32>
    %14 = arith.mulf %12, %13 : vector<2x64xf32>
    %c3 = arith.constant 3 : index
    %c0_5 = arith.constant 0 : index
    %c0_6 = arith.constant 0 : index
    %15 = vector.load %arg2[%c3, %c0_5, %c0_6] : memref<9x4x2xf32, #tpu.memory_space<vmem>>, vector<1x4x2xf32>
    %16 = vector.shape_cast %15 : vector<1x4x2xf32> to vector<4x2xf32>
    %cst_7 = arith.constant dense<0.000000e+00> : vector<4x64xf32>
    %17 = tpu.matmul %16, %9, %cst_7 {dimension_numbers = #tpu.dot_dimension_numbers<[1], [0], [0], [1], [0, 0, 1, 1], [], []>} : vector<4x2xf32>, vector<2x64xf32>, vector<4x64xf32> -> vector<4x64xf32>
    %c4 = arith.constant 4 : index
    %c0_8 = arith.constant 0 : index
    %c0_9 = arith.constant 0 : index
    %18 = vector.load %arg2[%c4, %c0_8, %c0_9] : memref<9x4x2xf32, #tpu.memory_space<vmem>>, vector<1x4x2xf32>
    %19 = vector.shape_cast %18 : vector<1x4x2xf32> to vector<4x2xf32>
    %cst_10 = arith.constant dense<0.000000e+00> : vector<4x64xf32>
    %20 = tpu.matmul %19, %4, %cst_10 {dimension_numbers = #tpu.dot_dimension_numbers<[1], [0], [0], [1], [0, 0, 1, 1], [], []>} : vector<4x2xf32>, vector<2x64xf32>, vector<4x64xf32> -> vector<4x64xf32>
    %21 = arith.addf %17, %20 : vector<4x64xf32>
    %c5 = arith.constant 5 : index
    %c0_11 = arith.constant 0 : index
    %c0_12 = arith.constant 0 : index
    %22 = vector.load %arg2[%c5, %c0_11, %c0_12] : memref<9x4x2xf32, #tpu.memory_space<vmem>>, vector<1x4x2xf32>
    %23 = vector.shape_cast %22 : vector<1x4x2xf32> to vector<4x2xf32>
    %cst_13 = arith.constant dense<0.000000e+00> : vector<4x64xf32>
    %24 = tpu.matmul %23, %14, %cst_13 {dimension_numbers = #tpu.dot_dimension_numbers<[1], [0], [0], [1], [0, 0, 1, 1], [], []>} : vector<4x2xf32>, vector<2x64xf32>, vector<4x64xf32> -> vector<4x64xf32>
    %25 = arith.addf %21, %24 : vector<4x64xf32>
    %c0_14 = arith.constant 0 : index
    %c0_15 = arith.constant 0 : index
    %26 = vector.load %arg3[%c0_14, %c0_15] : memref<4x1xf32, #tpu.memory_space<vmem>>, vector<4x1xf32>
    %27 = vector.broadcast %26 : vector<4x1xf32> to vector<4x64xf32>
    %28 = arith.addf %25, %27 : vector<4x64xf32>
    %c6 = arith.constant 6 : index
    %c0_16 = arith.constant 0 : index
    %c0_17 = arith.constant 0 : index
    %29 = vector.load %arg2[%c6, %c0_16, %c0_17] : memref<9x4x2xf32, #tpu.memory_space<vmem>>, vector<1x4x2xf32>
    %30 = vector.shape_cast %29 : vector<1x4x2xf32> to vector<4x2xf32>
    %cst_18 = arith.constant dense<0.000000e+00> : vector<4x64xf32>
    %31 = tpu.matmul %30, %9, %cst_18 {dimension_numbers = #tpu.dot_dimension_numbers<[1], [0], [0], [1], [0, 0, 1, 1], [], []>} : vector<4x2xf32>, vector<2x64xf32>, vector<4x64xf32> -> vector<4x64xf32>
    %c7 = arith.constant 7 : index
    %c0_19 = arith.constant 0 : index
    %c0_20 = arith.constant 0 : index
    %32 = vector.load %arg2[%c7, %c0_19, %c0_20] : memref<9x4x2xf32, #tpu.memory_space<vmem>>, vector<1x4x2xf32>
    %33 = vector.shape_cast %32 : vector<1x4x2xf32> to vector<4x2xf32>
    %cst_21 = arith.constant dense<0.000000e+00> : vector<4x64xf32>
    %34 = tpu.matmul %33, %4, %cst_21 {dimension_numbers = #tpu.dot_dimension_numbers<[1], [0], [0], [1], [0, 0, 1, 1], [], []>} : vector<4x2xf32>, vector<2x64xf32>, vector<4x64xf32> -> vector<4x64xf32>
    %35 = arith.addf %31, %34 : vector<4x64xf32>
    %c8 = arith.constant 8 : index
    %c0_22 = arith.constant 0 : index
    %c0_23 = arith.constant 0 : index
    %36 = vector.load %arg2[%c8, %c0_22, %c0_23] : memref<9x4x2xf32, #tpu.memory_space<vmem>>, vector<1x4x2xf32>
    %37 = vector.shape_cast %36 : vector<1x4x2xf32> to vector<4x2xf32>
    %cst_24 = arith.constant dense<0.000000e+00> : vector<4x64xf32>
    %38 = tpu.matmul %37, %14, %cst_24 {dimension_numbers = #tpu.dot_dimension_numbers<[1], [0], [0], [1], [0, 0, 1, 1], [], []>} : vector<4x2xf32>, vector<2x64xf32>, vector<4x64xf32> -> vector<4x64xf32>
    %39 = arith.addf %35, %38 : vector<4x64xf32>
    %cst_25 = arith.constant 0.000000e+00 : f32
    %40 = vector.broadcast %cst_25 : f32 to vector<4x8xf32>
    %41 = vector.extract_strided_slice %39 {offsets = [0, 8], sizes = [4, 56], strides = [1, 1]} : vector<4x64xf32> to vector<4x56xf32>
    %42 = tpu.concatenate %41, %40 in 1 : vector<4x56xf32>, vector<4x8xf32> -> vector<4x64xf32>
    %43 = arith.addf %28, %42 : vector<4x64xf32>
    %c0_26 = arith.constant 0 : index
    %c0_27 = arith.constant 0 : index
    %c0_28 = arith.constant 0 : index
    %44 = vector.load %arg2[%c0_26, %c0_27, %c0_28] : memref<9x4x2xf32, #tpu.memory_space<vmem>>, vector<1x4x2xf32>
    %45 = vector.shape_cast %44 : vector<1x4x2xf32> to vector<4x2xf32>
    %cst_29 = arith.constant dense<0.000000e+00> : vector<4x64xf32>
    %46 = tpu.matmul %45, %9, %cst_29 {dimension_numbers = #tpu.dot_dimension_numbers<[1], [0], [0], [1], [0, 0, 1, 1], [], []>} : vector<4x2xf32>, vector<2x64xf32>, vector<4x64xf32> -> vector<4x64xf32>
    %c1 = arith.constant 1 : index
    %c0_30 = arith.constant 0 : index
    %c0_31 = arith.constant 0 : index
    %47 = vector.load %arg2[%c1, %c0_30, %c0_31] : memref<9x4x2xf32, #tpu.memory_space<vmem>>, vector<1x4x2xf32>
    %48 = vector.shape_cast %47 : vector<1x4x2xf32> to vector<4x2xf32>
    %cst_32 = arith.constant dense<0.000000e+00> : vector<4x64xf32>
    %49 = tpu.matmul %48, %4, %cst_32 {dimension_numbers = #tpu.dot_dimension_numbers<[1], [0], [0], [1], [0, 0, 1, 1], [], []>} : vector<4x2xf32>, vector<2x64xf32>, vector<4x64xf32> -> vector<4x64xf32>
    %50 = arith.addf %46, %49 : vector<4x64xf32>
    %c2 = arith.constant 2 : index
    %c0_33 = arith.constant 0 : index
    %c0_34 = arith.constant 0 : index
    %51 = vector.load %arg2[%c2, %c0_33, %c0_34] : memref<9x4x2xf32, #tpu.memory_space<vmem>>, vector<1x4x2xf32>
    %52 = vector.shape_cast %51 : vector<1x4x2xf32> to vector<4x2xf32>
    %cst_35 = arith.constant dense<0.000000e+00> : vector<4x64xf32>
    %53 = tpu.matmul %52, %14, %cst_35 {dimension_numbers = #tpu.dot_dimension_numbers<[1], [0], [0], [1], [0, 0, 1, 1], [], []>} : vector<4x2xf32>, vector<2x64xf32>, vector<4x64xf32> -> vector<4x64xf32>
    %54 = arith.addf %50, %53 : vector<4x64xf32>
    %cst_36 = arith.constant 0.000000e+00 : f32
    %55 = vector.broadcast %cst_36 : f32 to vector<4x8xf32>
    %56 = vector.extract_strided_slice %54 {offsets = [0, 0], sizes = [4, 56], strides = [1, 1]} : vector<4x64xf32> to vector<4x56xf32>
    %57 = tpu.concatenate %55, %56 in 1 : vector<4x8xf32>, vector<4x56xf32> -> vector<4x64xf32>
    %58 = arith.addf %43, %57 : vector<4x64xf32>
    %cst_37 = arith.constant dense<0.000000e+00> : vector<4xf32>
    %59 = vector.multi_reduction <add>, %58, %cst_37 [1] : vector<4x64xf32> to vector<4xf32>
    %60 = vector.shape_cast %59 : vector<4xf32> to vector<4x1xf32>
    %cst_38 = arith.constant 1.562500e-02 : f32
    %61 = vector.broadcast %cst_38 : f32 to vector<4x1xf32>
    %62 = arith.mulf %60, %61 : vector<4x1xf32>
    %63 = vector.broadcast %62 : vector<4x1xf32> to vector<4x64xf32>
    %64 = arith.subf %58, %63 : vector<4x64xf32>
    %65 = arith.mulf %64, %64 : vector<4x64xf32>
    %cst_39 = arith.constant dense<0.000000e+00> : vector<4xf32>
    %66 = vector.multi_reduction <add>, %65, %cst_39 [1] : vector<4x64xf32> to vector<4xf32>
    %67 = vector.shape_cast %66 : vector<4xf32> to vector<4x1xf32>
    %cst_40 = arith.constant 1.562500e-02 : f32
    %68 = vector.broadcast %cst_40 : f32 to vector<4x1xf32>
    %69 = arith.mulf %67, %68 : vector<4x1xf32>
    %cst_41 = arith.constant 9.99999974E-6 : f32
    %70 = vector.broadcast %cst_41 : f32 to vector<4x1xf32>
    %71 = arith.addf %69, %70 : vector<4x1xf32>
    %72 = math.rsqrt %71 : vector<4x1xf32>
    %73 = vector.broadcast %72 : vector<4x1xf32> to vector<4x64xf32>
    %74 = arith.mulf %64, %73 : vector<4x64xf32>
    %cst_42 = arith.constant 0.000000e+00 : f32
    %75 = vector.broadcast %cst_42 : f32 to vector<4x64xf32>
    %76 = arith.maximumf %74, %75 : vector<4x64xf32>
    %cst_43 = arith.constant 0.000000e+00 : f32
    %77 = vector.broadcast %cst_43 : f32 to vector<4x1xf32>
    %78 = vector.extract_strided_slice %76 {offsets = [0, 0], sizes = [4, 63], strides = [1, 1]} : vector<4x64xf32> to vector<4x63xf32>
    %79 = tpu.concatenate %77, %78 in 1 : vector<4x1xf32>, vector<4x63xf32> -> vector<4x64xf32>
    %80 = vector.broadcast %1 : vector<1x64xf32> to vector<4x64xf32>
    %81 = arith.mulf %79, %80 : vector<4x64xf32>
    %cst_44 = arith.constant 0.000000e+00 : f32
    %82 = vector.broadcast %cst_44 : f32 to vector<4x1xf32>
    %83 = vector.extract_strided_slice %76 {offsets = [0, 1], sizes = [4, 63], strides = [1, 1]} : vector<4x64xf32> to vector<4x63xf32>
    %84 = tpu.concatenate %83, %82 in 1 : vector<4x63xf32>, vector<4x1xf32> -> vector<4x64xf32>
    %85 = vector.broadcast %2 : vector<1x64xf32> to vector<4x64xf32>
    %86 = arith.mulf %84, %85 : vector<4x64xf32>
    %c3_45 = arith.constant 3 : index
    %c0_46 = arith.constant 0 : index
    %c0_47 = arith.constant 0 : index
    %87 = vector.load %arg4[%c3_45, %c0_46, %c0_47] : memref<9x4x4xf32, #tpu.memory_space<vmem>>, vector<1x4x4xf32>
    %88 = vector.shape_cast %87 : vector<1x4x4xf32> to vector<4x4xf32>
    %cst_48 = arith.constant dense<0.000000e+00> : vector<4x64xf32>
    %89 = tpu.matmul %88, %81, %cst_48 {dimension_numbers = #tpu.dot_dimension_numbers<[1], [0], [0], [1], [0, 0, 1, 1], [], []>} : vector<4x4xf32>, vector<4x64xf32>, vector<4x64xf32> -> vector<4x64xf32>
    %c4_49 = arith.constant 4 : index
    %c0_50 = arith.constant 0 : index
    %c0_51 = arith.constant 0 : index
    %90 = vector.load %arg4[%c4_49, %c0_50, %c0_51] : memref<9x4x4xf32, #tpu.memory_space<vmem>>, vector<1x4x4xf32>
    %91 = vector.shape_cast %90 : vector<1x4x4xf32> to vector<4x4xf32>
    %cst_52 = arith.constant dense<0.000000e+00> : vector<4x64xf32>
    %92 = tpu.matmul %91, %76, %cst_52 {dimension_numbers = #tpu.dot_dimension_numbers<[1], [0], [0], [1], [0, 0, 1, 1], [], []>} : vector<4x4xf32>, vector<4x64xf32>, vector<4x64xf32> -> vector<4x64xf32>
    %93 = arith.addf %89, %92 : vector<4x64xf32>
    %c5_53 = arith.constant 5 : index
    %c0_54 = arith.constant 0 : index
    %c0_55 = arith.constant 0 : index
    %94 = vector.load %arg4[%c5_53, %c0_54, %c0_55] : memref<9x4x4xf32, #tpu.memory_space<vmem>>, vector<1x4x4xf32>
    %95 = vector.shape_cast %94 : vector<1x4x4xf32> to vector<4x4xf32>
    %cst_56 = arith.constant dense<0.000000e+00> : vector<4x64xf32>
    %96 = tpu.matmul %95, %86, %cst_56 {dimension_numbers = #tpu.dot_dimension_numbers<[1], [0], [0], [1], [0, 0, 1, 1], [], []>} : vector<4x4xf32>, vector<4x64xf32>, vector<4x64xf32> -> vector<4x64xf32>
    %97 = arith.addf %93, %96 : vector<4x64xf32>
    %c0_57 = arith.constant 0 : index
    %c0_58 = arith.constant 0 : index
    %98 = vector.load %arg5[%c0_57, %c0_58] : memref<4x1xf32, #tpu.memory_space<vmem>>, vector<4x1xf32>
    %99 = vector.broadcast %98 : vector<4x1xf32> to vector<4x64xf32>
    %100 = arith.addf %97, %99 : vector<4x64xf32>
    %c6_59 = arith.constant 6 : index
    %c0_60 = arith.constant 0 : index
    %c0_61 = arith.constant 0 : index
    %101 = vector.load %arg4[%c6_59, %c0_60, %c0_61] : memref<9x4x4xf32, #tpu.memory_space<vmem>>, vector<1x4x4xf32>
    %102 = vector.shape_cast %101 : vector<1x4x4xf32> to vector<4x4xf32>
    %cst_62 = arith.constant dense<0.000000e+00> : vector<4x64xf32>
    %103 = tpu.matmul %102, %81, %cst_62 {dimension_numbers = #tpu.dot_dimension_numbers<[1], [0], [0], [1], [0, 0, 1, 1], [], []>} : vector<4x4xf32>, vector<4x64xf32>, vector<4x64xf32> -> vector<4x64xf32>
    %c7_63 = arith.constant 7 : index
    %c0_64 = arith.constant 0 : index
    %c0_65 = arith.constant 0 : index
    %104 = vector.load %arg4[%c7_63, %c0_64, %c0_65] : memref<9x4x4xf32, #tpu.memory_space<vmem>>, vector<1x4x4xf32>
    %105 = vector.shape_cast %104 : vector<1x4x4xf32> to vector<4x4xf32>
    %cst_66 = arith.constant dense<0.000000e+00> : vector<4x64xf32>
    %106 = tpu.matmul %105, %76, %cst_66 {dimension_numbers = #tpu.dot_dimension_numbers<[1], [0], [0], [1], [0, 0, 1, 1], [], []>} : vector<4x4xf32>, vector<4x64xf32>, vector<4x64xf32> -> vector<4x64xf32>
    %107 = arith.addf %103, %106 : vector<4x64xf32>
    %c8_67 = arith.constant 8 : index
    %c0_68 = arith.constant 0 : index
    %c0_69 = arith.constant 0 : index
    %108 = vector.load %arg4[%c8_67, %c0_68, %c0_69] : memref<9x4x4xf32, #tpu.memory_space<vmem>>, vector<1x4x4xf32>
    %109 = vector.shape_cast %108 : vector<1x4x4xf32> to vector<4x4xf32>
    %cst_70 = arith.constant dense<0.000000e+00> : vector<4x64xf32>
    %110 = tpu.matmul %109, %86, %cst_70 {dimension_numbers = #tpu.dot_dimension_numbers<[1], [0], [0], [1], [0, 0, 1, 1], [], []>} : vector<4x4xf32>, vector<4x64xf32>, vector<4x64xf32> -> vector<4x64xf32>
    %111 = arith.addf %107, %110 : vector<4x64xf32>
    %cst_71 = arith.constant 0.000000e+00 : f32
    %112 = vector.broadcast %cst_71 : f32 to vector<4x8xf32>
    %113 = vector.extract_strided_slice %111 {offsets = [0, 8], sizes = [4, 56], strides = [1, 1]} : vector<4x64xf32> to vector<4x56xf32>
    %114 = tpu.concatenate %113, %112 in 1 : vector<4x56xf32>, vector<4x8xf32> -> vector<4x64xf32>
    %115 = arith.addf %100, %114 : vector<4x64xf32>
    %c0_72 = arith.constant 0 : index
    %c0_73 = arith.constant 0 : index
    %c0_74 = arith.constant 0 : index
    %116 = vector.load %arg4[%c0_72, %c0_73, %c0_74] : memref<9x4x4xf32, #tpu.memory_space<vmem>>, vector<1x4x4xf32>
    %117 = vector.shape_cast %116 : vector<1x4x4xf32> to vector<4x4xf32>
    %cst_75 = arith.constant dense<0.000000e+00> : vector<4x64xf32>
    %118 = tpu.matmul %117, %81, %cst_75 {dimension_numbers = #tpu.dot_dimension_numbers<[1], [0], [0], [1], [0, 0, 1, 1], [], []>} : vector<4x4xf32>, vector<4x64xf32>, vector<4x64xf32> -> vector<4x64xf32>
    %c1_76 = arith.constant 1 : index
    %c0_77 = arith.constant 0 : index
    %c0_78 = arith.constant 0 : index
    %119 = vector.load %arg4[%c1_76, %c0_77, %c0_78] : memref<9x4x4xf32, #tpu.memory_space<vmem>>, vector<1x4x4xf32>
    %120 = vector.shape_cast %119 : vector<1x4x4xf32> to vector<4x4xf32>
    %cst_79 = arith.constant dense<0.000000e+00> : vector<4x64xf32>
    %121 = tpu.matmul %120, %76, %cst_79 {dimension_numbers = #tpu.dot_dimension_numbers<[1], [0], [0], [1], [0, 0, 1, 1], [], []>} : vector<4x4xf32>, vector<4x64xf32>, vector<4x64xf32> -> vector<4x64xf32>
    %122 = arith.addf %118, %121 : vector<4x64xf32>
    %c2_80 = arith.constant 2 : index
    %c0_81 = arith.constant 0 : index
    %c0_82 = arith.constant 0 : index
    %123 = vector.load %arg4[%c2_80, %c0_81, %c0_82] : memref<9x4x4xf32, #tpu.memory_space<vmem>>, vector<1x4x4xf32>
    %124 = vector.shape_cast %123 : vector<1x4x4xf32> to vector<4x4xf32>
    %cst_83 = arith.constant dense<0.000000e+00> : vector<4x64xf32>
    %125 = tpu.matmul %124, %86, %cst_83 {dimension_numbers = #tpu.dot_dimension_numbers<[1], [0], [0], [1], [0, 0, 1, 1], [], []>} : vector<4x4xf32>, vector<4x64xf32>, vector<4x64xf32> -> vector<4x64xf32>
    %126 = arith.addf %122, %125 : vector<4x64xf32>
    %cst_84 = arith.constant 0.000000e+00 : f32
    %127 = vector.broadcast %cst_84 : f32 to vector<4x8xf32>
    %128 = vector.extract_strided_slice %126 {offsets = [0, 0], sizes = [4, 56], strides = [1, 1]} : vector<4x64xf32> to vector<4x56xf32>
    %129 = tpu.concatenate %127, %128 in 1 : vector<4x8xf32>, vector<4x56xf32> -> vector<4x64xf32>
    %130 = arith.addf %115, %129 : vector<4x64xf32>
    %cst_85 = arith.constant dense<0.000000e+00> : vector<4xf32>
    %131 = vector.multi_reduction <add>, %130, %cst_85 [1] : vector<4x64xf32> to vector<4xf32>
    %132 = vector.shape_cast %131 : vector<4xf32> to vector<4x1xf32>
    %cst_86 = arith.constant 1.562500e-02 : f32
    %133 = vector.broadcast %cst_86 : f32 to vector<4x1xf32>
    %134 = arith.mulf %132, %133 : vector<4x1xf32>
    %135 = vector.broadcast %134 : vector<4x1xf32> to vector<4x64xf32>
    %136 = arith.subf %130, %135 : vector<4x64xf32>
    %137 = arith.mulf %136, %136 : vector<4x64xf32>
    %cst_87 = arith.constant dense<0.000000e+00> : vector<4xf32>
    %138 = vector.multi_reduction <add>, %137, %cst_87 [1] : vector<4x64xf32> to vector<4xf32>
    %139 = vector.shape_cast %138 : vector<4xf32> to vector<4x1xf32>
    %cst_88 = arith.constant 1.562500e-02 : f32
    %140 = vector.broadcast %cst_88 : f32 to vector<4x1xf32>
    %141 = arith.mulf %139, %140 : vector<4x1xf32>
    %cst_89 = arith.constant 9.99999974E-6 : f32
    %142 = vector.broadcast %cst_89 : f32 to vector<4x1xf32>
    %143 = arith.addf %141, %142 : vector<4x1xf32>
    %144 = math.rsqrt %143 : vector<4x1xf32>
    %145 = vector.broadcast %144 : vector<4x1xf32> to vector<4x64xf32>
    %146 = arith.mulf %136, %145 : vector<4x64xf32>
    %cst_90 = arith.constant 0.000000e+00 : f32
    %147 = vector.broadcast %cst_90 : f32 to vector<4x64xf32>
    %148 = arith.maximumf %146, %147 : vector<4x64xf32>
    %c0_91 = arith.constant 0 : index
    %c0_92 = arith.constant 0 : index
    %c0_93 = arith.constant 0 : index
    %149 = vector.load %arg7[%c0_91, %c0_92, %c0_93] : memref<1x4x64xf32, #tpu.memory_space<vmem>>, vector<1x4x64xf32>
    %150 = vector.shape_cast %149 : vector<1x4x64xf32> to vector<4x64xf32>
    %151 = vector.shape_cast %148 : vector<4x64xf32> to vector<1x4x64xf32>
    tpu.vector_store %arg7[%c0_91, %c0_92, %c0_93], %151 {strides = array<i32>} : memref<1x4x64xf32, #tpu.memory_space<vmem>>, vector<1x4x64xf32>,
    return
  }
  func.func @transform_0(%arg0: i32) -> (i32, i32, i32) {
    %c0_i32 = arith.constant 0 : i32
    %c0_i32_0 = arith.constant 0 : i32
    %c0_i32_1 = arith.constant 0 : i32
    return %arg0, %c0_i32, %c0_i32_0 : i32, i32, i32
  }
  func.func @transform_1(%arg0: i32) -> (i32, i32, i32) {
    %c0_i32 = arith.constant 0 : i32
    %c0_i32_0 = arith.constant 0 : i32
    %c0_i32_1 = arith.constant 0 : i32
    %c0_i32_2 = arith.constant 0 : i32
    return %c0_i32, %c0_i32_0, %c0_i32_1 : i32, i32, i32
  }
  func.func @transform_2(%arg0: i32) -> (i32, i32) {
    %c0_i32 = arith.constant 0 : i32
    %c0_i32_0 = arith.constant 0 : i32
    %c0_i32_1 = arith.constant 0 : i32
    return %c0_i32, %c0_i32_0 : i32, i32
  }
  func.func @transform_3(%arg0: i32) -> (i32, i32, i32) {
    %c0_i32 = arith.constant 0 : i32
    %c0_i32_0 = arith.constant 0 : i32
    %c0_i32_1 = arith.constant 0 : i32
    %c0_i32_2 = arith.constant 0 : i32
    return %c0_i32, %c0_i32_0, %c0_i32_1 : i32, i32, i32
  }
  func.func @transform_4(%arg0: i32) -> (i32, i32) {
    %c0_i32 = arith.constant 0 : i32
    %c0_i32_0 = arith.constant 0 : i32
    %c0_i32_1 = arith.constant 0 : i32
    return %c0_i32, %c0_i32_0 : i32, i32
  }
  func.func @transform_5(%arg0: i32) -> (i32, i32) {
    %c0_i32 = arith.constant 0 : i32
    %c0_i32_0 = arith.constant 0 : i32
    %c0_i32_1 = arith.constant 0 : i32
    return %c0_i32, %c0_i32_0 : i32, i32
  }
  func.func @transform_6(%arg0: i32) -> (i32, i32, i32) {
    %c0_i32 = arith.constant 0 : i32
    %c0_i32_0 = arith.constant 0 : i32
    %c0_i32_1 = arith.constant 0 : i32
    return %arg0, %c0_i32, %c0_i32_0 : i32, i32, i32
  }
}

module attributes {stable_mosaic.version = 11 : i64} {
  func.func @_stage_kernel(%arg0: i32, %arg1: memref<1x8x4xf32, #tpu.memory_space<vmem>>, %arg2: memref<9x8x8xf32, #tpu.memory_space<vmem>>, %arg3: memref<8x1xf32, #tpu.memory_space<vmem>>, %arg4: memref<9x8x8xf32, #tpu.memory_space<vmem>>, %arg5: memref<8x1xf32, #tpu.memory_space<vmem>>, %arg6: memref<2x4xf32, #tpu.memory_space<vmem>>, %arg7: memref<1x8x4xf32, #tpu.memory_space<vmem>>) attributes {dimension_semantics = [#tpu.dimension_semantics<parallel>], iteration_bounds = array<i64: 2>, scalar_prefetch = 0 : i64, scratch_operands = 0 : i64, tpu.core_type = #tpu.core_type<tc>, window_params = [{transform_indices = @transform_0, window_bounds = array<i64: 1, 8, 4>}, {pipeline_mode = #tpu.pipeline_mode<synchronous>, transform_indices = @transform_1, window_bounds = array<i64: 9, 8, 8>}, {pipeline_mode = #tpu.pipeline_mode<synchronous>, transform_indices = @transform_2, window_bounds = array<i64: 8, 1>}, {pipeline_mode = #tpu.pipeline_mode<synchronous>, transform_indices = @transform_3, window_bounds = array<i64: 9, 8, 8>}, {pipeline_mode = #tpu.pipeline_mode<synchronous>, transform_indices = @transform_4, window_bounds = array<i64: 8, 1>}, {pipeline_mode = #tpu.pipeline_mode<synchronous>, transform_indices = @transform_5, window_bounds = array<i64: 2, 4>}, {transform_indices = @transform_6, window_bounds = array<i64: 1, 8, 4>}]} {
    %c0 = arith.constant 0 : index
    %c0_0 = arith.constant 0 : index
    %0 = vector.load %arg6[%c0, %c0_0] : memref<2x4xf32, #tpu.memory_space<vmem>>, vector<2x4xf32>
    %1 = vector.extract_strided_slice %0 {offsets = [0, 0], sizes = [1, 4], strides = [1, 1]} : vector<2x4xf32> to vector<1x4xf32>
    %2 = vector.extract_strided_slice %0 {offsets = [1, 0], sizes = [1, 4], strides = [1, 1]} : vector<2x4xf32> to vector<1x4xf32>
    %c0_1 = arith.constant 0 : index
    %c0_2 = arith.constant 0 : index
    %c0_3 = arith.constant 0 : index
    %3 = vector.load %arg1[%c0_1, %c0_2, %c0_3] : memref<1x8x4xf32, #tpu.memory_space<vmem>>, vector<1x8x4xf32>
    %4 = vector.shape_cast %3 : vector<1x8x4xf32> to vector<8x4xf32>
    %cst = arith.constant 0.000000e+00 : f32
    %5 = vector.broadcast %cst : f32 to vector<8x1xf32>
    %6 = vector.extract_strided_slice %4 {offsets = [0, 0], sizes = [8, 3], strides = [1, 1]} : vector<8x4xf32> to vector<8x3xf32>
    %7 = tpu.concatenate %5, %6 in 1 : vector<8x1xf32>, vector<8x3xf32> -> vector<8x4xf32>
    %8 = vector.broadcast %1 : vector<1x4xf32> to vector<8x4xf32>
    %9 = arith.mulf %7, %8 : vector<8x4xf32>
    %cst_4 = arith.constant 0.000000e+00 : f32
    %10 = vector.broadcast %cst_4 : f32 to vector<8x1xf32>
    %11 = vector.extract_strided_slice %4 {offsets = [0, 1], sizes = [8, 3], strides = [1, 1]} : vector<8x4xf32> to vector<8x3xf32>
    %12 = tpu.concatenate %11, %10 in 1 : vector<8x3xf32>, vector<8x1xf32> -> vector<8x4xf32>
    %13 = vector.broadcast %2 : vector<1x4xf32> to vector<8x4xf32>
    %14 = arith.mulf %12, %13 : vector<8x4xf32>
    %c3 = arith.constant 3 : index
    %c0_5 = arith.constant 0 : index
    %c0_6 = arith.constant 0 : index
    %15 = vector.load %arg2[%c3, %c0_5, %c0_6] : memref<9x8x8xf32, #tpu.memory_space<vmem>>, vector<1x8x8xf32>
    %16 = vector.shape_cast %15 : vector<1x8x8xf32> to vector<8x8xf32>
    %cst_7 = arith.constant dense<0.000000e+00> : vector<8x4xf32>
    %17 = tpu.matmul %16, %9, %cst_7 {dimension_numbers = #tpu.dot_dimension_numbers<[1], [0], [0], [1], [0, 0, 1, 1], [], []>} : vector<8x8xf32>, vector<8x4xf32>, vector<8x4xf32> -> vector<8x4xf32>
    %c4 = arith.constant 4 : index
    %c0_8 = arith.constant 0 : index
    %c0_9 = arith.constant 0 : index
    %18 = vector.load %arg2[%c4, %c0_8, %c0_9] : memref<9x8x8xf32, #tpu.memory_space<vmem>>, vector<1x8x8xf32>
    %19 = vector.shape_cast %18 : vector<1x8x8xf32> to vector<8x8xf32>
    %cst_10 = arith.constant dense<0.000000e+00> : vector<8x4xf32>
    %20 = tpu.matmul %19, %4, %cst_10 {dimension_numbers = #tpu.dot_dimension_numbers<[1], [0], [0], [1], [0, 0, 1, 1], [], []>} : vector<8x8xf32>, vector<8x4xf32>, vector<8x4xf32> -> vector<8x4xf32>
    %21 = arith.addf %17, %20 : vector<8x4xf32>
    %c5 = arith.constant 5 : index
    %c0_11 = arith.constant 0 : index
    %c0_12 = arith.constant 0 : index
    %22 = vector.load %arg2[%c5, %c0_11, %c0_12] : memref<9x8x8xf32, #tpu.memory_space<vmem>>, vector<1x8x8xf32>
    %23 = vector.shape_cast %22 : vector<1x8x8xf32> to vector<8x8xf32>
    %cst_13 = arith.constant dense<0.000000e+00> : vector<8x4xf32>
    %24 = tpu.matmul %23, %14, %cst_13 {dimension_numbers = #tpu.dot_dimension_numbers<[1], [0], [0], [1], [0, 0, 1, 1], [], []>} : vector<8x8xf32>, vector<8x4xf32>, vector<8x4xf32> -> vector<8x4xf32>
    %25 = arith.addf %21, %24 : vector<8x4xf32>
    %c0_14 = arith.constant 0 : index
    %c0_15 = arith.constant 0 : index
    %26 = vector.load %arg3[%c0_14, %c0_15] : memref<8x1xf32, #tpu.memory_space<vmem>>, vector<8x1xf32>
    %27 = vector.broadcast %26 : vector<8x1xf32> to vector<8x4xf32>
    %28 = arith.addf %25, %27 : vector<8x4xf32>
    %c6 = arith.constant 6 : index
    %c0_16 = arith.constant 0 : index
    %c0_17 = arith.constant 0 : index
    %29 = vector.load %arg2[%c6, %c0_16, %c0_17] : memref<9x8x8xf32, #tpu.memory_space<vmem>>, vector<1x8x8xf32>
    %30 = vector.shape_cast %29 : vector<1x8x8xf32> to vector<8x8xf32>
    %cst_18 = arith.constant dense<0.000000e+00> : vector<8x4xf32>
    %31 = tpu.matmul %30, %9, %cst_18 {dimension_numbers = #tpu.dot_dimension_numbers<[1], [0], [0], [1], [0, 0, 1, 1], [], []>} : vector<8x8xf32>, vector<8x4xf32>, vector<8x4xf32> -> vector<8x4xf32>
    %c7 = arith.constant 7 : index
    %c0_19 = arith.constant 0 : index
    %c0_20 = arith.constant 0 : index
    %32 = vector.load %arg2[%c7, %c0_19, %c0_20] : memref<9x8x8xf32, #tpu.memory_space<vmem>>, vector<1x8x8xf32>
    %33 = vector.shape_cast %32 : vector<1x8x8xf32> to vector<8x8xf32>
    %cst_21 = arith.constant dense<0.000000e+00> : vector<8x4xf32>
    %34 = tpu.matmul %33, %4, %cst_21 {dimension_numbers = #tpu.dot_dimension_numbers<[1], [0], [0], [1], [0, 0, 1, 1], [], []>} : vector<8x8xf32>, vector<8x4xf32>, vector<8x4xf32> -> vector<8x4xf32>
    %35 = arith.addf %31, %34 : vector<8x4xf32>
    %c8 = arith.constant 8 : index
    %c0_22 = arith.constant 0 : index
    %c0_23 = arith.constant 0 : index
    %36 = vector.load %arg2[%c8, %c0_22, %c0_23] : memref<9x8x8xf32, #tpu.memory_space<vmem>>, vector<1x8x8xf32>
    %37 = vector.shape_cast %36 : vector<1x8x8xf32> to vector<8x8xf32>
    %cst_24 = arith.constant dense<0.000000e+00> : vector<8x4xf32>
    %38 = tpu.matmul %37, %14, %cst_24 {dimension_numbers = #tpu.dot_dimension_numbers<[1], [0], [0], [1], [0, 0, 1, 1], [], []>} : vector<8x8xf32>, vector<8x4xf32>, vector<8x4xf32> -> vector<8x4xf32>
    %39 = arith.addf %35, %38 : vector<8x4xf32>
    %cst_25 = arith.constant 0.000000e+00 : f32
    %40 = vector.broadcast %cst_25 : f32 to vector<8x2xf32>
    %41 = vector.extract_strided_slice %39 {offsets = [0, 2], sizes = [8, 2], strides = [1, 1]} : vector<8x4xf32> to vector<8x2xf32>
    %42 = tpu.concatenate %41, %40 in 1 : vector<8x2xf32>, vector<8x2xf32> -> vector<8x4xf32>
    %43 = arith.addf %28, %42 : vector<8x4xf32>
    %c0_26 = arith.constant 0 : index
    %c0_27 = arith.constant 0 : index
    %c0_28 = arith.constant 0 : index
    %44 = vector.load %arg2[%c0_26, %c0_27, %c0_28] : memref<9x8x8xf32, #tpu.memory_space<vmem>>, vector<1x8x8xf32>
    %45 = vector.shape_cast %44 : vector<1x8x8xf32> to vector<8x8xf32>
    %cst_29 = arith.constant dense<0.000000e+00> : vector<8x4xf32>
    %46 = tpu.matmul %45, %9, %cst_29 {dimension_numbers = #tpu.dot_dimension_numbers<[1], [0], [0], [1], [0, 0, 1, 1], [], []>} : vector<8x8xf32>, vector<8x4xf32>, vector<8x4xf32> -> vector<8x4xf32>
    %c1 = arith.constant 1 : index
    %c0_30 = arith.constant 0 : index
    %c0_31 = arith.constant 0 : index
    %47 = vector.load %arg2[%c1, %c0_30, %c0_31] : memref<9x8x8xf32, #tpu.memory_space<vmem>>, vector<1x8x8xf32>
    %48 = vector.shape_cast %47 : vector<1x8x8xf32> to vector<8x8xf32>
    %cst_32 = arith.constant dense<0.000000e+00> : vector<8x4xf32>
    %49 = tpu.matmul %48, %4, %cst_32 {dimension_numbers = #tpu.dot_dimension_numbers<[1], [0], [0], [1], [0, 0, 1, 1], [], []>} : vector<8x8xf32>, vector<8x4xf32>, vector<8x4xf32> -> vector<8x4xf32>
    %50 = arith.addf %46, %49 : vector<8x4xf32>
    %c2 = arith.constant 2 : index
    %c0_33 = arith.constant 0 : index
    %c0_34 = arith.constant 0 : index
    %51 = vector.load %arg2[%c2, %c0_33, %c0_34] : memref<9x8x8xf32, #tpu.memory_space<vmem>>, vector<1x8x8xf32>
    %52 = vector.shape_cast %51 : vector<1x8x8xf32> to vector<8x8xf32>
    %cst_35 = arith.constant dense<0.000000e+00> : vector<8x4xf32>
    %53 = tpu.matmul %52, %14, %cst_35 {dimension_numbers = #tpu.dot_dimension_numbers<[1], [0], [0], [1], [0, 0, 1, 1], [], []>} : vector<8x8xf32>, vector<8x4xf32>, vector<8x4xf32> -> vector<8x4xf32>
    %54 = arith.addf %50, %53 : vector<8x4xf32>
    %cst_36 = arith.constant 0.000000e+00 : f32
    %55 = vector.broadcast %cst_36 : f32 to vector<8x2xf32>
    %56 = vector.extract_strided_slice %54 {offsets = [0, 0], sizes = [8, 2], strides = [1, 1]} : vector<8x4xf32> to vector<8x2xf32>
    %57 = tpu.concatenate %55, %56 in 1 : vector<8x2xf32>, vector<8x2xf32> -> vector<8x4xf32>
    %58 = arith.addf %43, %57 : vector<8x4xf32>
    %cst_37 = arith.constant dense<0.000000e+00> : vector<8xf32>
    %59 = vector.multi_reduction <add>, %58, %cst_37 [1] : vector<8x4xf32> to vector<8xf32>
    %60 = vector.shape_cast %59 : vector<8xf32> to vector<8x1xf32>
    %cst_38 = arith.constant 2.500000e-01 : f32
    %61 = vector.broadcast %cst_38 : f32 to vector<8x1xf32>
    %62 = arith.mulf %60, %61 : vector<8x1xf32>
    %63 = vector.broadcast %62 : vector<8x1xf32> to vector<8x4xf32>
    %64 = arith.subf %58, %63 : vector<8x4xf32>
    %65 = arith.mulf %64, %64 : vector<8x4xf32>
    %cst_39 = arith.constant dense<0.000000e+00> : vector<8xf32>
    %66 = vector.multi_reduction <add>, %65, %cst_39 [1] : vector<8x4xf32> to vector<8xf32>
    %67 = vector.shape_cast %66 : vector<8xf32> to vector<8x1xf32>
    %cst_40 = arith.constant 2.500000e-01 : f32
    %68 = vector.broadcast %cst_40 : f32 to vector<8x1xf32>
    %69 = arith.mulf %67, %68 : vector<8x1xf32>
    %cst_41 = arith.constant 9.99999974E-6 : f32
    %70 = vector.broadcast %cst_41 : f32 to vector<8x1xf32>
    %71 = arith.addf %69, %70 : vector<8x1xf32>
    %72 = math.rsqrt %71 : vector<8x1xf32>
    %73 = vector.broadcast %72 : vector<8x1xf32> to vector<8x4xf32>
    %74 = arith.mulf %64, %73 : vector<8x4xf32>
    %cst_42 = arith.constant 0.000000e+00 : f32
    %75 = vector.broadcast %cst_42 : f32 to vector<8x4xf32>
    %76 = arith.maximumf %74, %75 : vector<8x4xf32>
    %cst_43 = arith.constant 0.000000e+00 : f32
    %77 = vector.broadcast %cst_43 : f32 to vector<8x1xf32>
    %78 = vector.extract_strided_slice %76 {offsets = [0, 0], sizes = [8, 3], strides = [1, 1]} : vector<8x4xf32> to vector<8x3xf32>
    %79 = tpu.concatenate %77, %78 in 1 : vector<8x1xf32>, vector<8x3xf32> -> vector<8x4xf32>
    %80 = vector.broadcast %1 : vector<1x4xf32> to vector<8x4xf32>
    %81 = arith.mulf %79, %80 : vector<8x4xf32>
    %cst_44 = arith.constant 0.000000e+00 : f32
    %82 = vector.broadcast %cst_44 : f32 to vector<8x1xf32>
    %83 = vector.extract_strided_slice %76 {offsets = [0, 1], sizes = [8, 3], strides = [1, 1]} : vector<8x4xf32> to vector<8x3xf32>
    %84 = tpu.concatenate %83, %82 in 1 : vector<8x3xf32>, vector<8x1xf32> -> vector<8x4xf32>
    %85 = vector.broadcast %2 : vector<1x4xf32> to vector<8x4xf32>
    %86 = arith.mulf %84, %85 : vector<8x4xf32>
    %c3_45 = arith.constant 3 : index
    %c0_46 = arith.constant 0 : index
    %c0_47 = arith.constant 0 : index
    %87 = vector.load %arg4[%c3_45, %c0_46, %c0_47] : memref<9x8x8xf32, #tpu.memory_space<vmem>>, vector<1x8x8xf32>
    %88 = vector.shape_cast %87 : vector<1x8x8xf32> to vector<8x8xf32>
    %cst_48 = arith.constant dense<0.000000e+00> : vector<8x4xf32>
    %89 = tpu.matmul %88, %81, %cst_48 {dimension_numbers = #tpu.dot_dimension_numbers<[1], [0], [0], [1], [0, 0, 1, 1], [], []>} : vector<8x8xf32>, vector<8x4xf32>, vector<8x4xf32> -> vector<8x4xf32>
    %c4_49 = arith.constant 4 : index
    %c0_50 = arith.constant 0 : index
    %c0_51 = arith.constant 0 : index
    %90 = vector.load %arg4[%c4_49, %c0_50, %c0_51] : memref<9x8x8xf32, #tpu.memory_space<vmem>>, vector<1x8x8xf32>
    %91 = vector.shape_cast %90 : vector<1x8x8xf32> to vector<8x8xf32>
    %cst_52 = arith.constant dense<0.000000e+00> : vector<8x4xf32>
    %92 = tpu.matmul %91, %76, %cst_52 {dimension_numbers = #tpu.dot_dimension_numbers<[1], [0], [0], [1], [0, 0, 1, 1], [], []>} : vector<8x8xf32>, vector<8x4xf32>, vector<8x4xf32> -> vector<8x4xf32>
    %93 = arith.addf %89, %92 : vector<8x4xf32>
    %c5_53 = arith.constant 5 : index
    %c0_54 = arith.constant 0 : index
    %c0_55 = arith.constant 0 : index
    %94 = vector.load %arg4[%c5_53, %c0_54, %c0_55] : memref<9x8x8xf32, #tpu.memory_space<vmem>>, vector<1x8x8xf32>
    %95 = vector.shape_cast %94 : vector<1x8x8xf32> to vector<8x8xf32>
    %cst_56 = arith.constant dense<0.000000e+00> : vector<8x4xf32>
    %96 = tpu.matmul %95, %86, %cst_56 {dimension_numbers = #tpu.dot_dimension_numbers<[1], [0], [0], [1], [0, 0, 1, 1], [], []>} : vector<8x8xf32>, vector<8x4xf32>, vector<8x4xf32> -> vector<8x4xf32>
    %97 = arith.addf %93, %96 : vector<8x4xf32>
    %c0_57 = arith.constant 0 : index
    %c0_58 = arith.constant 0 : index
    %98 = vector.load %arg5[%c0_57, %c0_58] : memref<8x1xf32, #tpu.memory_space<vmem>>, vector<8x1xf32>
    %99 = vector.broadcast %98 : vector<8x1xf32> to vector<8x4xf32>
    %100 = arith.addf %97, %99 : vector<8x4xf32>
    %c6_59 = arith.constant 6 : index
    %c0_60 = arith.constant 0 : index
    %c0_61 = arith.constant 0 : index
    %101 = vector.load %arg4[%c6_59, %c0_60, %c0_61] : memref<9x8x8xf32, #tpu.memory_space<vmem>>, vector<1x8x8xf32>
    %102 = vector.shape_cast %101 : vector<1x8x8xf32> to vector<8x8xf32>
    %cst_62 = arith.constant dense<0.000000e+00> : vector<8x4xf32>
    %103 = tpu.matmul %102, %81, %cst_62 {dimension_numbers = #tpu.dot_dimension_numbers<[1], [0], [0], [1], [0, 0, 1, 1], [], []>} : vector<8x8xf32>, vector<8x4xf32>, vector<8x4xf32> -> vector<8x4xf32>
    %c7_63 = arith.constant 7 : index
    %c0_64 = arith.constant 0 : index
    %c0_65 = arith.constant 0 : index
    %104 = vector.load %arg4[%c7_63, %c0_64, %c0_65] : memref<9x8x8xf32, #tpu.memory_space<vmem>>, vector<1x8x8xf32>
    %105 = vector.shape_cast %104 : vector<1x8x8xf32> to vector<8x8xf32>
    %cst_66 = arith.constant dense<0.000000e+00> : vector<8x4xf32>
    %106 = tpu.matmul %105, %76, %cst_66 {dimension_numbers = #tpu.dot_dimension_numbers<[1], [0], [0], [1], [0, 0, 1, 1], [], []>} : vector<8x8xf32>, vector<8x4xf32>, vector<8x4xf32> -> vector<8x4xf32>
    %107 = arith.addf %103, %106 : vector<8x4xf32>
    %c8_67 = arith.constant 8 : index
    %c0_68 = arith.constant 0 : index
    %c0_69 = arith.constant 0 : index
    %108 = vector.load %arg4[%c8_67, %c0_68, %c0_69] : memref<9x8x8xf32, #tpu.memory_space<vmem>>, vector<1x8x8xf32>
    %109 = vector.shape_cast %108 : vector<1x8x8xf32> to vector<8x8xf32>
    %cst_70 = arith.constant dense<0.000000e+00> : vector<8x4xf32>
    %110 = tpu.matmul %109, %86, %cst_70 {dimension_numbers = #tpu.dot_dimension_numbers<[1], [0], [0], [1], [0, 0, 1, 1], [], []>} : vector<8x8xf32>, vector<8x4xf32>, vector<8x4xf32> -> vector<8x4xf32>
    %111 = arith.addf %107, %110 : vector<8x4xf32>
    %cst_71 = arith.constant 0.000000e+00 : f32
    %112 = vector.broadcast %cst_71 : f32 to vector<8x2xf32>
    %113 = vector.extract_strided_slice %111 {offsets = [0, 2], sizes = [8, 2], strides = [1, 1]} : vector<8x4xf32> to vector<8x2xf32>
    %114 = tpu.concatenate %113, %112 in 1 : vector<8x2xf32>, vector<8x2xf32> -> vector<8x4xf32>
    %115 = arith.addf %100, %114 : vector<8x4xf32>
    %c0_72 = arith.constant 0 : index
    %c0_73 = arith.constant 0 : index
    %c0_74 = arith.constant 0 : index
    %116 = vector.load %arg4[%c0_72, %c0_73, %c0_74] : memref<9x8x8xf32, #tpu.memory_space<vmem>>, vector<1x8x8xf32>
    %117 = vector.shape_cast %116 : vector<1x8x8xf32> to vector<8x8xf32>
    %cst_75 = arith.constant dense<0.000000e+00> : vector<8x4xf32>
    %118 = tpu.matmul %117, %81, %cst_75 {dimension_numbers = #tpu.dot_dimension_numbers<[1], [0], [0], [1], [0, 0, 1, 1], [], []>} : vector<8x8xf32>, vector<8x4xf32>, vector<8x4xf32> -> vector<8x4xf32>
    %c1_76 = arith.constant 1 : index
    %c0_77 = arith.constant 0 : index
    %c0_78 = arith.constant 0 : index
    %119 = vector.load %arg4[%c1_76, %c0_77, %c0_78] : memref<9x8x8xf32, #tpu.memory_space<vmem>>, vector<1x8x8xf32>
    %120 = vector.shape_cast %119 : vector<1x8x8xf32> to vector<8x8xf32>
    %cst_79 = arith.constant dense<0.000000e+00> : vector<8x4xf32>
    %121 = tpu.matmul %120, %76, %cst_79 {dimension_numbers = #tpu.dot_dimension_numbers<[1], [0], [0], [1], [0, 0, 1, 1], [], []>} : vector<8x8xf32>, vector<8x4xf32>, vector<8x4xf32> -> vector<8x4xf32>
    %122 = arith.addf %118, %121 : vector<8x4xf32>
    %c2_80 = arith.constant 2 : index
    %c0_81 = arith.constant 0 : index
    %c0_82 = arith.constant 0 : index
    %123 = vector.load %arg4[%c2_80, %c0_81, %c0_82] : memref<9x8x8xf32, #tpu.memory_space<vmem>>, vector<1x8x8xf32>
    %124 = vector.shape_cast %123 : vector<1x8x8xf32> to vector<8x8xf32>
    %cst_83 = arith.constant dense<0.000000e+00> : vector<8x4xf32>
    %125 = tpu.matmul %124, %86, %cst_83 {dimension_numbers = #tpu.dot_dimension_numbers<[1], [0], [0], [1], [0, 0, 1, 1], [], []>} : vector<8x8xf32>, vector<8x4xf32>, vector<8x4xf32> -> vector<8x4xf32>
    %126 = arith.addf %122, %125 : vector<8x4xf32>
    %cst_84 = arith.constant 0.000000e+00 : f32
    %127 = vector.broadcast %cst_84 : f32 to vector<8x2xf32>
    %128 = vector.extract_strided_slice %126 {offsets = [0, 0], sizes = [8, 2], strides = [1, 1]} : vector<8x4xf32> to vector<8x2xf32>
    %129 = tpu.concatenate %127, %128 in 1 : vector<8x2xf32>, vector<8x2xf32> -> vector<8x4xf32>
    %130 = arith.addf %115, %129 : vector<8x4xf32>
    %cst_85 = arith.constant dense<0.000000e+00> : vector<8xf32>
    %131 = vector.multi_reduction <add>, %130, %cst_85 [1] : vector<8x4xf32> to vector<8xf32>
    %132 = vector.shape_cast %131 : vector<8xf32> to vector<8x1xf32>
    %cst_86 = arith.constant 2.500000e-01 : f32
    %133 = vector.broadcast %cst_86 : f32 to vector<8x1xf32>
    %134 = arith.mulf %132, %133 : vector<8x1xf32>
    %135 = vector.broadcast %134 : vector<8x1xf32> to vector<8x4xf32>
    %136 = arith.subf %130, %135 : vector<8x4xf32>
    %137 = arith.mulf %136, %136 : vector<8x4xf32>
    %cst_87 = arith.constant dense<0.000000e+00> : vector<8xf32>
    %138 = vector.multi_reduction <add>, %137, %cst_87 [1] : vector<8x4xf32> to vector<8xf32>
    %139 = vector.shape_cast %138 : vector<8xf32> to vector<8x1xf32>
    %cst_88 = arith.constant 2.500000e-01 : f32
    %140 = vector.broadcast %cst_88 : f32 to vector<8x1xf32>
    %141 = arith.mulf %139, %140 : vector<8x1xf32>
    %cst_89 = arith.constant 9.99999974E-6 : f32
    %142 = vector.broadcast %cst_89 : f32 to vector<8x1xf32>
    %143 = arith.addf %141, %142 : vector<8x1xf32>
    %144 = math.rsqrt %143 : vector<8x1xf32>
    %145 = vector.broadcast %144 : vector<8x1xf32> to vector<8x4xf32>
    %146 = arith.mulf %136, %145 : vector<8x4xf32>
    %cst_90 = arith.constant 0.000000e+00 : f32
    %147 = vector.broadcast %cst_90 : f32 to vector<8x4xf32>
    %148 = arith.maximumf %146, %147 : vector<8x4xf32>
    %c0_91 = arith.constant 0 : index
    %c0_92 = arith.constant 0 : index
    %c0_93 = arith.constant 0 : index
    %149 = vector.load %arg7[%c0_91, %c0_92, %c0_93] : memref<1x8x4xf32, #tpu.memory_space<vmem>>, vector<1x8x4xf32>
    %150 = vector.shape_cast %149 : vector<1x8x4xf32> to vector<8x4xf32>
    %151 = vector.shape_cast %148 : vector<8x4xf32> to vector<1x8x4xf32>
    tpu.vector_store %arg7[%c0_91, %c0_92, %c0_93], %151 {strides = array<i32>} : memref<1x8x4xf32, #tpu.memory_space<vmem>>, vector<1x8x4xf32>,
    return
  }
  func.func @transform_0(%arg0: i32) -> (i32, i32, i32) {
    %c0_i32 = arith.constant 0 : i32
    %c0_i32_0 = arith.constant 0 : i32
    %c0_i32_1 = arith.constant 0 : i32
    return %arg0, %c0_i32, %c0_i32_0 : i32, i32, i32
  }
  func.func @transform_1(%arg0: i32) -> (i32, i32, i32) {
    %c0_i32 = arith.constant 0 : i32
    %c0_i32_0 = arith.constant 0 : i32
    %c0_i32_1 = arith.constant 0 : i32
    %c0_i32_2 = arith.constant 0 : i32
    return %c0_i32, %c0_i32_0, %c0_i32_1 : i32, i32, i32
  }
  func.func @transform_2(%arg0: i32) -> (i32, i32) {
    %c0_i32 = arith.constant 0 : i32
    %c0_i32_0 = arith.constant 0 : i32
    %c0_i32_1 = arith.constant 0 : i32
    return %c0_i32, %c0_i32_0 : i32, i32
  }
  func.func @transform_3(%arg0: i32) -> (i32, i32, i32) {
    %c0_i32 = arith.constant 0 : i32
    %c0_i32_0 = arith.constant 0 : i32
    %c0_i32_1 = arith.constant 0 : i32
    %c0_i32_2 = arith.constant 0 : i32
    return %c0_i32, %c0_i32_0, %c0_i32_1 : i32, i32, i32
  }
  func.func @transform_4(%arg0: i32) -> (i32, i32) {
    %c0_i32 = arith.constant 0 : i32
    %c0_i32_0 = arith.constant 0 : i32
    %c0_i32_1 = arith.constant 0 : i32
    return %c0_i32, %c0_i32_0 : i32, i32
  }
  func.func @transform_5(%arg0: i32) -> (i32, i32) {
    %c0_i32 = arith.constant 0 : i32
    %c0_i32_0 = arith.constant 0 : i32
    %c0_i32_1 = arith.constant 0 : i32
    return %c0_i32, %c0_i32_0 : i32, i32
  }
  func.func @transform_6(%arg0: i32) -> (i32, i32, i32) {
    %c0_i32 = arith.constant 0 : i32
    %c0_i32_0 = arith.constant 0 : i32
    %c0_i32_1 = arith.constant 0 : i32
    return %arg0, %c0_i32, %c0_i32_0 : i32, i32, i32
  }
}

module attributes {stable_mosaic.version = 11 : i64} {
  func.func @_stage_kernel(%arg0: i32, %arg1: memref<1x4x16xf32, #tpu.memory_space<vmem>>, %arg2: memref<9x8x4xf32, #tpu.memory_space<vmem>>, %arg3: memref<8x1xf32, #tpu.memory_space<vmem>>, %arg4: memref<9x8x8xf32, #tpu.memory_space<vmem>>, %arg5: memref<8x1xf32, #tpu.memory_space<vmem>>, %arg6: memref<2x16xf32, #tpu.memory_space<vmem>>, %arg7: memref<1x8x16xf32, #tpu.memory_space<vmem>>) attributes {dimension_semantics = [#tpu.dimension_semantics<parallel>], iteration_bounds = array<i64: 2>, scalar_prefetch = 0 : i64, scratch_operands = 0 : i64, tpu.core_type = #tpu.core_type<tc>, window_params = [{transform_indices = @transform_0, window_bounds = array<i64: 1, 4, 16>}, {pipeline_mode = #tpu.pipeline_mode<synchronous>, transform_indices = @transform_1, window_bounds = array<i64: 9, 8, 4>}, {pipeline_mode = #tpu.pipeline_mode<synchronous>, transform_indices = @transform_2, window_bounds = array<i64: 8, 1>}, {pipeline_mode = #tpu.pipeline_mode<synchronous>, transform_indices = @transform_3, window_bounds = array<i64: 9, 8, 8>}, {pipeline_mode = #tpu.pipeline_mode<synchronous>, transform_indices = @transform_4, window_bounds = array<i64: 8, 1>}, {pipeline_mode = #tpu.pipeline_mode<synchronous>, transform_indices = @transform_5, window_bounds = array<i64: 2, 16>}, {transform_indices = @transform_6, window_bounds = array<i64: 1, 8, 16>}]} {
    %c0 = arith.constant 0 : index
    %c0_0 = arith.constant 0 : index
    %0 = vector.load %arg6[%c0, %c0_0] : memref<2x16xf32, #tpu.memory_space<vmem>>, vector<2x16xf32>
    %1 = vector.extract_strided_slice %0 {offsets = [0, 0], sizes = [1, 16], strides = [1, 1]} : vector<2x16xf32> to vector<1x16xf32>
    %2 = vector.extract_strided_slice %0 {offsets = [1, 0], sizes = [1, 16], strides = [1, 1]} : vector<2x16xf32> to vector<1x16xf32>
    %c0_1 = arith.constant 0 : index
    %c0_2 = arith.constant 0 : index
    %c0_3 = arith.constant 0 : index
    %3 = vector.load %arg1[%c0_1, %c0_2, %c0_3] : memref<1x4x16xf32, #tpu.memory_space<vmem>>, vector<1x4x16xf32>
    %4 = vector.shape_cast %3 : vector<1x4x16xf32> to vector<4x16xf32>
    %cst = arith.constant 0.000000e+00 : f32
    %5 = vector.broadcast %cst : f32 to vector<4x1xf32>
    %6 = vector.extract_strided_slice %4 {offsets = [0, 0], sizes = [4, 15], strides = [1, 1]} : vector<4x16xf32> to vector<4x15xf32>
    %7 = tpu.concatenate %5, %6 in 1 : vector<4x1xf32>, vector<4x15xf32> -> vector<4x16xf32>
    %8 = vector.broadcast %1 : vector<1x16xf32> to vector<4x16xf32>
    %9 = arith.mulf %7, %8 : vector<4x16xf32>
    %cst_4 = arith.constant 0.000000e+00 : f32
    %10 = vector.broadcast %cst_4 : f32 to vector<4x1xf32>
    %11 = vector.extract_strided_slice %4 {offsets = [0, 1], sizes = [4, 15], strides = [1, 1]} : vector<4x16xf32> to vector<4x15xf32>
    %12 = tpu.concatenate %11, %10 in 1 : vector<4x15xf32>, vector<4x1xf32> -> vector<4x16xf32>
    %13 = vector.broadcast %2 : vector<1x16xf32> to vector<4x16xf32>
    %14 = arith.mulf %12, %13 : vector<4x16xf32>
    %c3 = arith.constant 3 : index
    %c0_5 = arith.constant 0 : index
    %c0_6 = arith.constant 0 : index
    %15 = vector.load %arg2[%c3, %c0_5, %c0_6] : memref<9x8x4xf32, #tpu.memory_space<vmem>>, vector<1x8x4xf32>
    %16 = vector.shape_cast %15 : vector<1x8x4xf32> to vector<8x4xf32>
    %cst_7 = arith.constant dense<0.000000e+00> : vector<8x16xf32>
    %17 = tpu.matmul %16, %9, %cst_7 {dimension_numbers = #tpu.dot_dimension_numbers<[1], [0], [0], [1], [0, 0, 1, 1], [], []>} : vector<8x4xf32>, vector<4x16xf32>, vector<8x16xf32> -> vector<8x16xf32>
    %c4 = arith.constant 4 : index
    %c0_8 = arith.constant 0 : index
    %c0_9 = arith.constant 0 : index
    %18 = vector.load %arg2[%c4, %c0_8, %c0_9] : memref<9x8x4xf32, #tpu.memory_space<vmem>>, vector<1x8x4xf32>
    %19 = vector.shape_cast %18 : vector<1x8x4xf32> to vector<8x4xf32>
    %cst_10 = arith.constant dense<0.000000e+00> : vector<8x16xf32>
    %20 = tpu.matmul %19, %4, %cst_10 {dimension_numbers = #tpu.dot_dimension_numbers<[1], [0], [0], [1], [0, 0, 1, 1], [], []>} : vector<8x4xf32>, vector<4x16xf32>, vector<8x16xf32> -> vector<8x16xf32>
    %21 = arith.addf %17, %20 : vector<8x16xf32>
    %c5 = arith.constant 5 : index
    %c0_11 = arith.constant 0 : index
    %c0_12 = arith.constant 0 : index
    %22 = vector.load %arg2[%c5, %c0_11, %c0_12] : memref<9x8x4xf32, #tpu.memory_space<vmem>>, vector<1x8x4xf32>
    %23 = vector.shape_cast %22 : vector<1x8x4xf32> to vector<8x4xf32>
    %cst_13 = arith.constant dense<0.000000e+00> : vector<8x16xf32>
    %24 = tpu.matmul %23, %14, %cst_13 {dimension_numbers = #tpu.dot_dimension_numbers<[1], [0], [0], [1], [0, 0, 1, 1], [], []>} : vector<8x4xf32>, vector<4x16xf32>, vector<8x16xf32> -> vector<8x16xf32>
    %25 = arith.addf %21, %24 : vector<8x16xf32>
    %c0_14 = arith.constant 0 : index
    %c0_15 = arith.constant 0 : index
    %26 = vector.load %arg3[%c0_14, %c0_15] : memref<8x1xf32, #tpu.memory_space<vmem>>, vector<8x1xf32>
    %27 = vector.broadcast %26 : vector<8x1xf32> to vector<8x16xf32>
    %28 = arith.addf %25, %27 : vector<8x16xf32>
    %c6 = arith.constant 6 : index
    %c0_16 = arith.constant 0 : index
    %c0_17 = arith.constant 0 : index
    %29 = vector.load %arg2[%c6, %c0_16, %c0_17] : memref<9x8x4xf32, #tpu.memory_space<vmem>>, vector<1x8x4xf32>
    %30 = vector.shape_cast %29 : vector<1x8x4xf32> to vector<8x4xf32>
    %cst_18 = arith.constant dense<0.000000e+00> : vector<8x16xf32>
    %31 = tpu.matmul %30, %9, %cst_18 {dimension_numbers = #tpu.dot_dimension_numbers<[1], [0], [0], [1], [0, 0, 1, 1], [], []>} : vector<8x4xf32>, vector<4x16xf32>, vector<8x16xf32> -> vector<8x16xf32>
    %c7 = arith.constant 7 : index
    %c0_19 = arith.constant 0 : index
    %c0_20 = arith.constant 0 : index
    %32 = vector.load %arg2[%c7, %c0_19, %c0_20] : memref<9x8x4xf32, #tpu.memory_space<vmem>>, vector<1x8x4xf32>
    %33 = vector.shape_cast %32 : vector<1x8x4xf32> to vector<8x4xf32>
    %cst_21 = arith.constant dense<0.000000e+00> : vector<8x16xf32>
    %34 = tpu.matmul %33, %4, %cst_21 {dimension_numbers = #tpu.dot_dimension_numbers<[1], [0], [0], [1], [0, 0, 1, 1], [], []>} : vector<8x4xf32>, vector<4x16xf32>, vector<8x16xf32> -> vector<8x16xf32>
    %35 = arith.addf %31, %34 : vector<8x16xf32>
    %c8 = arith.constant 8 : index
    %c0_22 = arith.constant 0 : index
    %c0_23 = arith.constant 0 : index
    %36 = vector.load %arg2[%c8, %c0_22, %c0_23] : memref<9x8x4xf32, #tpu.memory_space<vmem>>, vector<1x8x4xf32>
    %37 = vector.shape_cast %36 : vector<1x8x4xf32> to vector<8x4xf32>
    %cst_24 = arith.constant dense<0.000000e+00> : vector<8x16xf32>
    %38 = tpu.matmul %37, %14, %cst_24 {dimension_numbers = #tpu.dot_dimension_numbers<[1], [0], [0], [1], [0, 0, 1, 1], [], []>} : vector<8x4xf32>, vector<4x16xf32>, vector<8x16xf32> -> vector<8x16xf32>
    %39 = arith.addf %35, %38 : vector<8x16xf32>
    %cst_25 = arith.constant 0.000000e+00 : f32
    %40 = vector.broadcast %cst_25 : f32 to vector<8x4xf32>
    %41 = vector.extract_strided_slice %39 {offsets = [0, 4], sizes = [8, 12], strides = [1, 1]} : vector<8x16xf32> to vector<8x12xf32>
    %42 = tpu.concatenate %41, %40 in 1 : vector<8x12xf32>, vector<8x4xf32> -> vector<8x16xf32>
    %43 = arith.addf %28, %42 : vector<8x16xf32>
    %c0_26 = arith.constant 0 : index
    %c0_27 = arith.constant 0 : index
    %c0_28 = arith.constant 0 : index
    %44 = vector.load %arg2[%c0_26, %c0_27, %c0_28] : memref<9x8x4xf32, #tpu.memory_space<vmem>>, vector<1x8x4xf32>
    %45 = vector.shape_cast %44 : vector<1x8x4xf32> to vector<8x4xf32>
    %cst_29 = arith.constant dense<0.000000e+00> : vector<8x16xf32>
    %46 = tpu.matmul %45, %9, %cst_29 {dimension_numbers = #tpu.dot_dimension_numbers<[1], [0], [0], [1], [0, 0, 1, 1], [], []>} : vector<8x4xf32>, vector<4x16xf32>, vector<8x16xf32> -> vector<8x16xf32>
    %c1 = arith.constant 1 : index
    %c0_30 = arith.constant 0 : index
    %c0_31 = arith.constant 0 : index
    %47 = vector.load %arg2[%c1, %c0_30, %c0_31] : memref<9x8x4xf32, #tpu.memory_space<vmem>>, vector<1x8x4xf32>
    %48 = vector.shape_cast %47 : vector<1x8x4xf32> to vector<8x4xf32>
    %cst_32 = arith.constant dense<0.000000e+00> : vector<8x16xf32>
    %49 = tpu.matmul %48, %4, %cst_32 {dimension_numbers = #tpu.dot_dimension_numbers<[1], [0], [0], [1], [0, 0, 1, 1], [], []>} : vector<8x4xf32>, vector<4x16xf32>, vector<8x16xf32> -> vector<8x16xf32>
    %50 = arith.addf %46, %49 : vector<8x16xf32>
    %c2 = arith.constant 2 : index
    %c0_33 = arith.constant 0 : index
    %c0_34 = arith.constant 0 : index
    %51 = vector.load %arg2[%c2, %c0_33, %c0_34] : memref<9x8x4xf32, #tpu.memory_space<vmem>>, vector<1x8x4xf32>
    %52 = vector.shape_cast %51 : vector<1x8x4xf32> to vector<8x4xf32>
    %cst_35 = arith.constant dense<0.000000e+00> : vector<8x16xf32>
    %53 = tpu.matmul %52, %14, %cst_35 {dimension_numbers = #tpu.dot_dimension_numbers<[1], [0], [0], [1], [0, 0, 1, 1], [], []>} : vector<8x4xf32>, vector<4x16xf32>, vector<8x16xf32> -> vector<8x16xf32>
    %54 = arith.addf %50, %53 : vector<8x16xf32>
    %cst_36 = arith.constant 0.000000e+00 : f32
    %55 = vector.broadcast %cst_36 : f32 to vector<8x4xf32>
    %56 = vector.extract_strided_slice %54 {offsets = [0, 0], sizes = [8, 12], strides = [1, 1]} : vector<8x16xf32> to vector<8x12xf32>
    %57 = tpu.concatenate %55, %56 in 1 : vector<8x4xf32>, vector<8x12xf32> -> vector<8x16xf32>
    %58 = arith.addf %43, %57 : vector<8x16xf32>
    %cst_37 = arith.constant dense<0.000000e+00> : vector<8xf32>
    %59 = vector.multi_reduction <add>, %58, %cst_37 [1] : vector<8x16xf32> to vector<8xf32>
    %60 = vector.shape_cast %59 : vector<8xf32> to vector<8x1xf32>
    %cst_38 = arith.constant 6.250000e-02 : f32
    %61 = vector.broadcast %cst_38 : f32 to vector<8x1xf32>
    %62 = arith.mulf %60, %61 : vector<8x1xf32>
    %63 = vector.broadcast %62 : vector<8x1xf32> to vector<8x16xf32>
    %64 = arith.subf %58, %63 : vector<8x16xf32>
    %65 = arith.mulf %64, %64 : vector<8x16xf32>
    %cst_39 = arith.constant dense<0.000000e+00> : vector<8xf32>
    %66 = vector.multi_reduction <add>, %65, %cst_39 [1] : vector<8x16xf32> to vector<8xf32>
    %67 = vector.shape_cast %66 : vector<8xf32> to vector<8x1xf32>
    %cst_40 = arith.constant 6.250000e-02 : f32
    %68 = vector.broadcast %cst_40 : f32 to vector<8x1xf32>
    %69 = arith.mulf %67, %68 : vector<8x1xf32>
    %cst_41 = arith.constant 9.99999974E-6 : f32
    %70 = vector.broadcast %cst_41 : f32 to vector<8x1xf32>
    %71 = arith.addf %69, %70 : vector<8x1xf32>
    %72 = math.rsqrt %71 : vector<8x1xf32>
    %73 = vector.broadcast %72 : vector<8x1xf32> to vector<8x16xf32>
    %74 = arith.mulf %64, %73 : vector<8x16xf32>
    %cst_42 = arith.constant 0.000000e+00 : f32
    %75 = vector.broadcast %cst_42 : f32 to vector<8x16xf32>
    %76 = arith.maximumf %74, %75 : vector<8x16xf32>
    %cst_43 = arith.constant 0.000000e+00 : f32
    %77 = vector.broadcast %cst_43 : f32 to vector<8x1xf32>
    %78 = vector.extract_strided_slice %76 {offsets = [0, 0], sizes = [8, 15], strides = [1, 1]} : vector<8x16xf32> to vector<8x15xf32>
    %79 = tpu.concatenate %77, %78 in 1 : vector<8x1xf32>, vector<8x15xf32> -> vector<8x16xf32>
    %80 = vector.broadcast %1 : vector<1x16xf32> to vector<8x16xf32>
    %81 = arith.mulf %79, %80 : vector<8x16xf32>
    %cst_44 = arith.constant 0.000000e+00 : f32
    %82 = vector.broadcast %cst_44 : f32 to vector<8x1xf32>
    %83 = vector.extract_strided_slice %76 {offsets = [0, 1], sizes = [8, 15], strides = [1, 1]} : vector<8x16xf32> to vector<8x15xf32>
    %84 = tpu.concatenate %83, %82 in 1 : vector<8x15xf32>, vector<8x1xf32> -> vector<8x16xf32>
    %85 = vector.broadcast %2 : vector<1x16xf32> to vector<8x16xf32>
    %86 = arith.mulf %84, %85 : vector<8x16xf32>
    %c3_45 = arith.constant 3 : index
    %c0_46 = arith.constant 0 : index
    %c0_47 = arith.constant 0 : index
    %87 = vector.load %arg4[%c3_45, %c0_46, %c0_47] : memref<9x8x8xf32, #tpu.memory_space<vmem>>, vector<1x8x8xf32>
    %88 = vector.shape_cast %87 : vector<1x8x8xf32> to vector<8x8xf32>
    %cst_48 = arith.constant dense<0.000000e+00> : vector<8x16xf32>
    %89 = tpu.matmul %88, %81, %cst_48 {dimension_numbers = #tpu.dot_dimension_numbers<[1], [0], [0], [1], [0, 0, 1, 1], [], []>} : vector<8x8xf32>, vector<8x16xf32>, vector<8x16xf32> -> vector<8x16xf32>
    %c4_49 = arith.constant 4 : index
    %c0_50 = arith.constant 0 : index
    %c0_51 = arith.constant 0 : index
    %90 = vector.load %arg4[%c4_49, %c0_50, %c0_51] : memref<9x8x8xf32, #tpu.memory_space<vmem>>, vector<1x8x8xf32>
    %91 = vector.shape_cast %90 : vector<1x8x8xf32> to vector<8x8xf32>
    %cst_52 = arith.constant dense<0.000000e+00> : vector<8x16xf32>
    %92 = tpu.matmul %91, %76, %cst_52 {dimension_numbers = #tpu.dot_dimension_numbers<[1], [0], [0], [1], [0, 0, 1, 1], [], []>} : vector<8x8xf32>, vector<8x16xf32>, vector<8x16xf32> -> vector<8x16xf32>
    %93 = arith.addf %89, %92 : vector<8x16xf32>
    %c5_53 = arith.constant 5 : index
    %c0_54 = arith.constant 0 : index
    %c0_55 = arith.constant 0 : index
    %94 = vector.load %arg4[%c5_53, %c0_54, %c0_55] : memref<9x8x8xf32, #tpu.memory_space<vmem>>, vector<1x8x8xf32>
    %95 = vector.shape_cast %94 : vector<1x8x8xf32> to vector<8x8xf32>
    %cst_56 = arith.constant dense<0.000000e+00> : vector<8x16xf32>
    %96 = tpu.matmul %95, %86, %cst_56 {dimension_numbers = #tpu.dot_dimension_numbers<[1], [0], [0], [1], [0, 0, 1, 1], [], []>} : vector<8x8xf32>, vector<8x16xf32>, vector<8x16xf32> -> vector<8x16xf32>
    %97 = arith.addf %93, %96 : vector<8x16xf32>
    %c0_57 = arith.constant 0 : index
    %c0_58 = arith.constant 0 : index
    %98 = vector.load %arg5[%c0_57, %c0_58] : memref<8x1xf32, #tpu.memory_space<vmem>>, vector<8x1xf32>
    %99 = vector.broadcast %98 : vector<8x1xf32> to vector<8x16xf32>
    %100 = arith.addf %97, %99 : vector<8x16xf32>
    %c6_59 = arith.constant 6 : index
    %c0_60 = arith.constant 0 : index
    %c0_61 = arith.constant 0 : index
    %101 = vector.load %arg4[%c6_59, %c0_60, %c0_61] : memref<9x8x8xf32, #tpu.memory_space<vmem>>, vector<1x8x8xf32>
    %102 = vector.shape_cast %101 : vector<1x8x8xf32> to vector<8x8xf32>
    %cst_62 = arith.constant dense<0.000000e+00> : vector<8x16xf32>
    %103 = tpu.matmul %102, %81, %cst_62 {dimension_numbers = #tpu.dot_dimension_numbers<[1], [0], [0], [1], [0, 0, 1, 1], [], []>} : vector<8x8xf32>, vector<8x16xf32>, vector<8x16xf32> -> vector<8x16xf32>
    %c7_63 = arith.constant 7 : index
    %c0_64 = arith.constant 0 : index
    %c0_65 = arith.constant 0 : index
    %104 = vector.load %arg4[%c7_63, %c0_64, %c0_65] : memref<9x8x8xf32, #tpu.memory_space<vmem>>, vector<1x8x8xf32>
    %105 = vector.shape_cast %104 : vector<1x8x8xf32> to vector<8x8xf32>
    %cst_66 = arith.constant dense<0.000000e+00> : vector<8x16xf32>
    %106 = tpu.matmul %105, %76, %cst_66 {dimension_numbers = #tpu.dot_dimension_numbers<[1], [0], [0], [1], [0, 0, 1, 1], [], []>} : vector<8x8xf32>, vector<8x16xf32>, vector<8x16xf32> -> vector<8x16xf32>
    %107 = arith.addf %103, %106 : vector<8x16xf32>
    %c8_67 = arith.constant 8 : index
    %c0_68 = arith.constant 0 : index
    %c0_69 = arith.constant 0 : index
    %108 = vector.load %arg4[%c8_67, %c0_68, %c0_69] : memref<9x8x8xf32, #tpu.memory_space<vmem>>, vector<1x8x8xf32>
    %109 = vector.shape_cast %108 : vector<1x8x8xf32> to vector<8x8xf32>
    %cst_70 = arith.constant dense<0.000000e+00> : vector<8x16xf32>
    %110 = tpu.matmul %109, %86, %cst_70 {dimension_numbers = #tpu.dot_dimension_numbers<[1], [0], [0], [1], [0, 0, 1, 1], [], []>} : vector<8x8xf32>, vector<8x16xf32>, vector<8x16xf32> -> vector<8x16xf32>
    %111 = arith.addf %107, %110 : vector<8x16xf32>
    %cst_71 = arith.constant 0.000000e+00 : f32
    %112 = vector.broadcast %cst_71 : f32 to vector<8x4xf32>
    %113 = vector.extract_strided_slice %111 {offsets = [0, 4], sizes = [8, 12], strides = [1, 1]} : vector<8x16xf32> to vector<8x12xf32>
    %114 = tpu.concatenate %113, %112 in 1 : vector<8x12xf32>, vector<8x4xf32> -> vector<8x16xf32>
    %115 = arith.addf %100, %114 : vector<8x16xf32>
    %c0_72 = arith.constant 0 : index
    %c0_73 = arith.constant 0 : index
    %c0_74 = arith.constant 0 : index
    %116 = vector.load %arg4[%c0_72, %c0_73, %c0_74] : memref<9x8x8xf32, #tpu.memory_space<vmem>>, vector<1x8x8xf32>
    %117 = vector.shape_cast %116 : vector<1x8x8xf32> to vector<8x8xf32>
    %cst_75 = arith.constant dense<0.000000e+00> : vector<8x16xf32>
    %118 = tpu.matmul %117, %81, %cst_75 {dimension_numbers = #tpu.dot_dimension_numbers<[1], [0], [0], [1], [0, 0, 1, 1], [], []>} : vector<8x8xf32>, vector<8x16xf32>, vector<8x16xf32> -> vector<8x16xf32>
    %c1_76 = arith.constant 1 : index
    %c0_77 = arith.constant 0 : index
    %c0_78 = arith.constant 0 : index
    %119 = vector.load %arg4[%c1_76, %c0_77, %c0_78] : memref<9x8x8xf32, #tpu.memory_space<vmem>>, vector<1x8x8xf32>
    %120 = vector.shape_cast %119 : vector<1x8x8xf32> to vector<8x8xf32>
    %cst_79 = arith.constant dense<0.000000e+00> : vector<8x16xf32>
    %121 = tpu.matmul %120, %76, %cst_79 {dimension_numbers = #tpu.dot_dimension_numbers<[1], [0], [0], [1], [0, 0, 1, 1], [], []>} : vector<8x8xf32>, vector<8x16xf32>, vector<8x16xf32> -> vector<8x16xf32>
    %122 = arith.addf %118, %121 : vector<8x16xf32>
    %c2_80 = arith.constant 2 : index
    %c0_81 = arith.constant 0 : index
    %c0_82 = arith.constant 0 : index
    %123 = vector.load %arg4[%c2_80, %c0_81, %c0_82] : memref<9x8x8xf32, #tpu.memory_space<vmem>>, vector<1x8x8xf32>
    %124 = vector.shape_cast %123 : vector<1x8x8xf32> to vector<8x8xf32>
    %cst_83 = arith.constant dense<0.000000e+00> : vector<8x16xf32>
    %125 = tpu.matmul %124, %86, %cst_83 {dimension_numbers = #tpu.dot_dimension_numbers<[1], [0], [0], [1], [0, 0, 1, 1], [], []>} : vector<8x8xf32>, vector<8x16xf32>, vector<8x16xf32> -> vector<8x16xf32>
    %126 = arith.addf %122, %125 : vector<8x16xf32>
    %cst_84 = arith.constant 0.000000e+00 : f32
    %127 = vector.broadcast %cst_84 : f32 to vector<8x4xf32>
    %128 = vector.extract_strided_slice %126 {offsets = [0, 0], sizes = [8, 12], strides = [1, 1]} : vector<8x16xf32> to vector<8x12xf32>
    %129 = tpu.concatenate %127, %128 in 1 : vector<8x4xf32>, vector<8x12xf32> -> vector<8x16xf32>
    %130 = arith.addf %115, %129 : vector<8x16xf32>
    %cst_85 = arith.constant dense<0.000000e+00> : vector<8xf32>
    %131 = vector.multi_reduction <add>, %130, %cst_85 [1] : vector<8x16xf32> to vector<8xf32>
    %132 = vector.shape_cast %131 : vector<8xf32> to vector<8x1xf32>
    %cst_86 = arith.constant 6.250000e-02 : f32
    %133 = vector.broadcast %cst_86 : f32 to vector<8x1xf32>
    %134 = arith.mulf %132, %133 : vector<8x1xf32>
    %135 = vector.broadcast %134 : vector<8x1xf32> to vector<8x16xf32>
    %136 = arith.subf %130, %135 : vector<8x16xf32>
    %137 = arith.mulf %136, %136 : vector<8x16xf32>
    %cst_87 = arith.constant dense<0.000000e+00> : vector<8xf32>
    %138 = vector.multi_reduction <add>, %137, %cst_87 [1] : vector<8x16xf32> to vector<8xf32>
    %139 = vector.shape_cast %138 : vector<8xf32> to vector<8x1xf32>
    %cst_88 = arith.constant 6.250000e-02 : f32
    %140 = vector.broadcast %cst_88 : f32 to vector<8x1xf32>
    %141 = arith.mulf %139, %140 : vector<8x1xf32>
    %cst_89 = arith.constant 9.99999974E-6 : f32
    %142 = vector.broadcast %cst_89 : f32 to vector<8x1xf32>
    %143 = arith.addf %141, %142 : vector<8x1xf32>
    %144 = math.rsqrt %143 : vector<8x1xf32>
    %145 = vector.broadcast %144 : vector<8x1xf32> to vector<8x16xf32>
    %146 = arith.mulf %136, %145 : vector<8x16xf32>
    %cst_90 = arith.constant 0.000000e+00 : f32
    %147 = vector.broadcast %cst_90 : f32 to vector<8x16xf32>
    %148 = arith.maximumf %146, %147 : vector<8x16xf32>
    %c0_91 = arith.constant 0 : index
    %c0_92 = arith.constant 0 : index
    %c0_93 = arith.constant 0 : index
    %149 = vector.load %arg7[%c0_91, %c0_92, %c0_93] : memref<1x8x16xf32, #tpu.memory_space<vmem>>, vector<1x8x16xf32>
    %150 = vector.shape_cast %149 : vector<1x8x16xf32> to vector<8x16xf32>
    %151 = vector.shape_cast %148 : vector<8x16xf32> to vector<1x8x16xf32>
    tpu.vector_store %arg7[%c0_91, %c0_92, %c0_93], %151 {strides = array<i32>} : memref<1x8x16xf32, #tpu.memory_space<vmem>>, vector<1x8x16xf32>,
    return
  }
  func.func @transform_0(%arg0: i32) -> (i32, i32, i32) {
    %c0_i32 = arith.constant 0 : i32
    %c0_i32_0 = arith.constant 0 : i32
    %c0_i32_1 = arith.constant 0 : i32
    return %arg0, %c0_i32, %c0_i32_0 : i32, i32, i32
  }
  func.func @transform_1(%arg0: i32) -> (i32, i32, i32) {
    %c0_i32 = arith.constant 0 : i32
    %c0_i32_0 = arith.constant 0 : i32
    %c0_i32_1 = arith.constant 0 : i32
    %c0_i32_2 = arith.constant 0 : i32
    return %c0_i32, %c0_i32_0, %c0_i32_1 : i32, i32, i32
  }
  func.func @transform_2(%arg0: i32) -> (i32, i32) {
    %c0_i32 = arith.constant 0 : i32
    %c0_i32_0 = arith.constant 0 : i32
    %c0_i32_1 = arith.constant 0 : i32
    return %c0_i32, %c0_i32_0 : i32, i32
  }
  func.func @transform_3(%arg0: i32) -> (i32, i32, i32) {
    %c0_i32 = arith.constant 0 : i32
    %c0_i32_0 = arith.constant 0 : i32
    %c0_i32_1 = arith.constant 0 : i32
    %c0_i32_2 = arith.constant 0 : i32
    return %c0_i32, %c0_i32_0, %c0_i32_1 : i32, i32, i32
  }
  func.func @transform_4(%arg0: i32) -> (i32, i32) {
    %c0_i32 = arith.constant 0 : i32
    %c0_i32_0 = arith.constant 0 : i32
    %c0_i32_1 = arith.constant 0 : i32
    return %c0_i32, %c0_i32_0 : i32, i32
  }
  func.func @transform_5(%arg0: i32) -> (i32, i32) {
    %c0_i32 = arith.constant 0 : i32
    %c0_i32_0 = arith.constant 0 : i32
    %c0_i32_1 = arith.constant 0 : i32
    return %c0_i32, %c0_i32_0 : i32, i32
  }
  func.func @transform_6(%arg0: i32) -> (i32, i32, i32) {
    %c0_i32 = arith.constant 0 : i32
    %c0_i32_0 = arith.constant 0 : i32
    %c0_i32_1 = arith.constant 0 : i32
    return %arg0, %c0_i32, %c0_i32_0 : i32, i32, i32
  }
}

</mosaic_0001>

<llo_original>
// kernel: grouped_xnet_down.4
$region0: #{grouped_xnet_down.4}
  #allocation0 [shape = 'u32[]', space=smem, size = 0x4, offset = 0x4, fixed_abs, tag = 'smem constant byte address 0x4 - core index']
  #allocation1 [shape = 'u32[144,128]{1,0:T(1,128)}', space=vmem, size = 0x12000, scoped, tag = 'internal scratch']
  %s0 = inlined_call_operand.vmem [shape: f32[2,2,256], index: 0, kind: input, shape index: {}]
  %s1 = inlined_call_operand.vmem [shape: f32[9,2,2], index: 1, kind: input, shape index: {}]
  %s2 = inlined_call_operand.vmem [shape: f32[2,1], index: 2, kind: input, shape index: {}]
  %s3 = inlined_call_operand.vmem [shape: f32[9,2,2], index: 3, kind: input, shape index: {}]
  %s4 = inlined_call_operand.vmem [shape: f32[2,1], index: 4, kind: input, shape index: {}]
  %s5 = inlined_call_operand.vmem [shape: f32[2,256], index: 5, kind: input, shape index: {}]
  %s6 = inlined_call_operand.vmem [shape: f32[2,2,256], index: 6, kind: output, shape index: {}]
  %s7 = sld [smem:[#allocation0]]
  $region57: #{grouped_xnet_down.4} parent=0
    _
  %s9 = ssub.s32 1, %s7
  %s10 = scalar_select 0, %s9, %s7
  loop: start=0, step=1, limit=4
  $region2: #{grouped_xnet_down.4} parent=0 // loop_pre_header
    _
  $region3: #{grouped_xnet_down.4} parent=0 // loop_header
    %s12 = sphi 0, %s16
    %p13 = scmp.ge.s32.totalorder %s12, 4
    %s22 = sphi 0, %s24
    %s25 = sphi 0, %s22
    %s26 = sphi 0, %s25
    %s42 = sphi 0, %s26
    %s46 = sphi 0, %s46
    %s48 = sphi 0, %s46
    %s49 = sphi 0, %s48
    %s63 = sphi 0, %s49
    %s67 = sphi 0, %s67
    %s69 = sphi 0, %s67
    %s70 = sphi 0, %s69
    %s84 = sphi 0, %s70
    %s88 = sphi 0, %s88
    %s90 = sphi 0, %s88
    %s91 = sphi 0, %s90
    %s105 = sphi 0, %s91
    %s109 = sphi 0, %s109
    %s111 = sphi 0, %s109
    %s112 = sphi 0, %s111
    %s126 = sphi 0, %s112
    %s130 = sphi 0, %s130
    %s132 = sphi 0, %s130
    %s133 = sphi 0, %s132
    %s147 = sphi 0, %s133
    %s153 = sphi 0, %s155
    %s156 = sphi 0, %s153
    %s157 = sphi 0, %s156
    %s173 = sphi 0, %s157
  $region4: #{grouped_xnet_down.4} parent=0 // loop_header_branch
    %15 = sbr.rel (%p13) target = $region8
  $region5: #{grouped_xnet_down.4} parent=0 // loop_body
    %s17 = ssub.s32 %s12, 1
    %s18 = ssub.s32 %s12, 2
    %s19 = sadd.s32 %s12, 1
    %s20 = ssub.s32 %s12, %s19
    %p21 = scmp.eq.s32.totalorder %s20, 0
    %s23 = sadd.s32 %s22, 1
    %s24 = scalar_select %p21, %s22, %s23
    %p27 = pneg %p21
    %p28 = scmp.eq.s32.totalorder %s12, 1
    %p29 = por %p27, %p28
    %p30 = scmp.ne.s32.totalorder %s22, %s25
    %p31 = scmp.eq.s32.totalorder %s12, 0
    %p32 = por %p30, %p31
    %p33 = scmp.ne.s32.totalorder %s22, %s25
    %p34 = scmp.eq.s32.totalorder %s17, 1
    %p35 = por %p33, %p34
    %p36 = scmp.ne.s32.totalorder %s25, %s26
    %p37 = scmp.eq.s32.totalorder %s17, 0
    %p38 = por %p36, %p37
    %p39 = scmp.ne.s32.totalorder %s25, %s26
    %p40 = scmp.eq.s32.totalorder %s18, 1
    %p41 = por %p39, %p40
    %p43 = scmp.ne.s32.totalorder %s26, %s42
    %p44 = scmp.eq.s32.totalorder %s18, 0
    %p45 = por %p43, %p44
    %s47 = sadd.s32 %s46, 1
    %p50 = scmp.eq.s32.totalorder %s12, 1
    %p51 = scmp.ne.s32.totalorder %s46, %s48
    %p52 = scmp.eq.s32.totalorder %s12, 0
    %p53 = por %p51, %p52
    %p54 = scmp.ne.s32.totalorder %s46, %s48
    %p55 = scmp.eq.s32.totalorder %s17, 1
    %p56 = por %p54, %p55
    %p57 = scmp.ne.s32.totalorder %s48, %s49
    %p58 = scmp.eq.s32.totalorder %s17, 0
    %p59 = por %p57, %p58
    %p60 = scmp.ne.s32.totalorder %s48, %s49
    %p61 = scmp.eq.s32.totalorder %s18, 1
    %p62 = por %p60, %p61
    %p64 = scmp.ne.s32.totalorder %s49, %s63
    %p65 = scmp.eq.s32.totalorder %s18, 0
    %p66 = por %p64, %p65
    %s68 = sadd.s32 %s67, 1
    %p71 = scmp.eq.s32.totalorder %s12, 1
    %p72 = scmp.ne.s32.totalorder %s67, %s69
    %p73 = scmp.eq.s32.totalorder %s12, 0
    %p74 = por %p72, %p73
    %p75 = scmp.ne.s32.totalorder %s67, %s69
    %p76 = scmp.eq.s32.totalorder %s17, 1
    %p77 = por %p75, %p76
    %p78 = scmp.ne.s32.totalorder %s69, %s70
    %p79 = scmp.eq.s32.totalorder %s17, 0
    %p80 = por %p78, %p79
    %p81 = scmp.ne.s32.totalorder %s69, %s70
    %p82 = scmp.eq.s32.totalorder %s18, 1
    %p83 = por %p81, %p82
    %p85 = scmp.ne.s32.totalorder %s70, %s84
    %p86 = scmp.eq.s32.totalorder %s18, 0
    %p87 = por %p85, %p86
    %s89 = sadd.s32 %s88, 1
    %p92 = scmp.eq.s32.totalorder %s12, 1
    %p93 = scmp.ne.s32.totalorder %s88, %s90
    %p94 = scmp.eq.s32.totalorder %s12, 0
    %p95 = por %p93, %p94
    %p96 = scmp.ne.s32.totalorder %s88, %s90
    %p97 = scmp.eq.s32.totalorder %s17, 1
    %p98 = por %p96, %p97
    %p99 = scmp.ne.s32.totalorder %s90, %s91
    %p100 = scmp.eq.s32.totalorder %s17, 0
    %p101 = por %p99, %p100
    %p102 = scmp.ne.s32.totalorder %s90, %s91
    %p103 = scmp.eq.s32.totalorder %s18, 1
    %p104 = por %p102, %p103
    %p106 = scmp.ne.s32.totalorder %s91, %s105
    %p107 = scmp.eq.s32.totalorder %s18, 0
    %p108 = por %p106, %p107
    %s110 = sadd.s32 %s109, 1
    %p113 = scmp.eq.s32.totalorder %s12, 1
    %p114 = scmp.ne.s32.totalorder %s109, %s111
    %p115 = scmp.eq.s32.totalorder %s12, 0
    %p116 = por %p114, %p115
    %p117 = scmp.ne.s32.totalorder %s109, %s111
    %p118 = scmp.eq.s32.totalorder %s17, 1
    %p119 = por %p117, %p118
    %p120 = scmp.ne.s32.totalorder %s111, %s112
    %p121 = scmp.eq.s32.totalorder %s17, 0
    %p122 = por %p120, %p121
    %p123 = scmp.ne.s32.totalorder %s111, %s112
    %p124 = scmp.eq.s32.totalorder %s18, 1
    %p125 = por %p123, %p124
    %p127 = scmp.ne.s32.totalorder %s112, %s126
    %p128 = scmp.eq.s32.totalorder %s18, 0
    %p129 = por %p127, %p128
    %s131 = sadd.s32 %s130, 1
    %p134 = scmp.eq.s32.totalorder %s12, 1
    %p135 = scmp.ne.s32.totalorder %s130, %s132
    %p136 = scmp.eq.s32.totalorder %s12, 0
    %p137 = por %p135, %p136
    %p138 = scmp.ne.s32.totalorder %s130, %s132
    %p139 = scmp.eq.s32.totalorder %s17, 1
    %p140 = por %p138, %p139
    %p141 = scmp.ne.s32.totalorder %s132, %s133
    %p142 = scmp.eq.s32.totalorder %s17, 0
    %p143 = por %p141, %p142
    %p144 = scmp.ne.s32.totalorder %s132, %s133
    %p145 = scmp.eq.s32.totalorder %s18, 1
    %p146 = por %p144, %p145
    %p148 = scmp.ne.s32.totalorder %s133, %s147
    %p149 = scmp.eq.s32.totalorder %s18, 0
    %p150 = por %p148, %p149
    %s151 = ssub.s32 %s12, %s19
    %p152 = scmp.eq.s32.totalorder %s151, 0
    %s154 = sadd.s32 %s153, 1
    %s155 = scalar_select %p152, %s153, %s154
    %p158 = pneg %p152
    %p159 = scmp.eq.s32.totalorder %s12, 1
    %p160 = por %p158, %p159
    %p161 = scmp.ne.s32.totalorder %s153, %s156
    %p162 = scmp.eq.s32.totalorder %s12, 0
    %p163 = por %p161, %p162
    %p164 = scmp.ne.s32.totalorder %s153, %s156
    %p165 = scmp.eq.s32.totalorder %s17, 1
    %p166 = por %p164, %p165
    %p167 = scmp.ne.s32.totalorder %s156, %s157
    %p168 = scmp.eq.s32.totalorder %s17, 0
    %p169 = por %p167, %p168
    %p170 = scmp.ne.s32.totalorder %s156, %s157
    %p171 = scmp.eq.s32.totalorder %s18, 1
    %p172 = por %p170, %p171
    %p174 = scmp.ne.s32.totalorder %s157, %s173
    %p175 = scmp.eq.s32.totalorder %s18, 0
    %p176 = por %p174, %p175
    %p177 = scmp.le.s32.totalorder 1, %s12
    %p178 = scmp.lt.s32.totalorder %s12, 3
    %p179 = pnand %p177, %p178
    %p180 = pneg %p179
    // Predicated region
    $region9: #{grouped_xnet_down.4} parent=5 // pred_check
      _
    $region10: #{grouped_xnet_down.4} parent=5 // pred_check_branch
      %182 = sbr.rel (%p179) target = $region12
    $region11: #{grouped_xnet_down.4} parent=5 // pred_region
      %s183 = ssub.s32 %s12, 1
      // Predicated region
      $region13: #{grouped_xnet_down.4} parent=11 // pred_check
        %p184 = pneg %p59
      $region14: #{grouped_xnet_down.4} parent=11 // pred_check_branch
        %186 = sbr.rel (%p184) target = $region16
      $region15: #{grouped_xnet_down.4} parent=11 // pred_region
        _
      $region16: #{grouped_xnet_down.4} parent=11 // pred_fallthru
        _
      // Predicated region
      $region17: #{grouped_xnet_down.4} parent=11 // pred_check
        %p187 = pneg %p80
      $region18: #{grouped_xnet_down.4} parent=11 // pred_check_branch
        %189 = sbr.rel (%p187) target = $region20
      $region19: #{grouped_xnet_down.4} parent=11 // pred_region
        _
      $region20: #{grouped_xnet_down.4} parent=11 // pred_fallthru
        _
      // Predicated region
      $region21: #{grouped_xnet_down.4} parent=11 // pred_check
        %p190 = pneg %p101
      $region22: #{grouped_xnet_down.4} parent=11 // pred_check_branch
        %192 = sbr.rel (%p190) target = $region24
      $region23: #{grouped_xnet_down.4} parent=11 // pred_region
        _
      $region24: #{grouped_xnet_down.4} parent=11 // pred_fallthru
        _
      // Predicated region
      $region25: #{grouped_xnet_down.4} parent=11 // pred_check
        %p193 = pneg %p122
      $region26: #{grouped_xnet_down.4} parent=11 // pred_check_branch
        %195 = sbr.rel (%p193) target = $region28
      $region27: #{grouped_xnet_down.4} parent=11 // pred_region
        _
      $region28: #{grouped_xnet_down.4} parent=11 // pred_fallthru
        _
      // Predicated region
      $region29: #{grouped_xnet_down.4} parent=11 // pred_check
        %p196 = pneg %p143
      $region30: #{grouped_xnet_down.4} parent=11 // pred_check_branch
        %198 = sbr.rel (%p196) target = $region32
      $region31: #{grouped_xnet_down.4} parent=11 // pred_region
        _
      $region32: #{grouped_xnet_down.4} parent=11 // pred_fallthru
        _
    $region12: #{grouped_xnet_down.4} parent=5 // pred_fallthru
      _
    %p199 = scmp.lt.s32.totalorder %s12, 2
    // Predicated region
    $region33: #{grouped_xnet_down.4} parent=5 // pred_check
      %p200 = pneg %p199
    $region34: #{grouped_xnet_down.4} parent=5 // pred_check_branch
      %202 = sbr.rel (%p200) target = $region36
    $region35: #{grouped_xnet_down.4} parent=5 // pred_region
      // Predicated region
      $region37: #{grouped_xnet_down.4} parent=35 // pred_check
        %p203 = pneg %p32
      $region38: #{grouped_xnet_down.4} parent=35 // pred_check_branch
        %205 = sbr.rel (%p203) target = $region40
      $region39: #{grouped_xnet_down.4} parent=35 // pred_region
        %p206 = scmp.lt.s32.totalorder %s12, 1
        %s207 = scalar_select %p206, %s12, 1
        %s208 = smul.addr %s207, 2
        %s209 = smul.addr %s208, 2
        %s210 = scalar_lea.vmem %s0, %s209
      $region40: #{grouped_xnet_down.4} parent=35 // pred_fallthru
        _
    $region36: #{grouped_xnet_down.4} parent=5 // pred_fallthru
      _
    %p211 = scmp.le.s32.totalorder 1, %s12
    %p212 = scmp.lt.s32.totalorder %s12, 3
    %p213 = pnand %p211, %p212
    %p214 = pneg %p213
    // Predicated region
    $region41: #{grouped_xnet_down.4} parent=5 // pred_check
      _
    $region42: #{grouped_xnet_down.4} parent=5 // pred_check_branch
      %216 = sbr.rel (%p213) target = $region44
    $region43: #{grouped_xnet_down.4} parent=5 // pred_region
      %s217 = ssub.s32 %s12, 1
      %p218 = scmp.lt.s32.totalorder %s17, 1
      %s219 = scalar_select %p218, %s17, 1
      %s220 = smul.addr %s219, 2
      %s221 = smul.addr %s220, 2
      %s222 = scalar_lea.vmem %s0, %s221
      %p223 = pneg %p38
      %p224 = pneg %p35
      %p225 = pneg %p59
      %p226 = pneg %p56
      %p227 = pneg %p80
      %p228 = pneg %p77
      %p229 = pneg %p101
      %p230 = pneg %p98
      %p231 = pneg %p122
      %p232 = pneg %p119
      %p233 = pneg %p143
      %p234 = pneg %p140
      %p235 = pneg %p169
      %p236 = pneg %p166
      %p237 = scmp.lt.s32.totalorder %s17, 1
      %s238 = scalar_select %p237, %s17, 1
      %s239 = smul.addr %s238, 2
      %s240 = smul.addr %s239, 2
      %s241 = scalar_lea.vmem %s6, %s240
      %p242 = scmp.lt.s32.totalorder %s17, 1
      %s243 = scalar_select %p242, %s17, 1
      %s244 = smul.addr %s243, 2
      %s245 = smul.addr %s244, 2
      %s246 = scalar_lea.vmem %s0, %s245
      %p247 = scmp.lt.s32.totalorder %s17, 1
      %s248 = scalar_select %p247, %s17, 1
      %s249 = smul.addr %s248, 2
      %s250 = smul.addr %s249, 2
      %s251 = scalar_lea.vmem %s6, %s250
      %v252 = vld [vmem:[%s5] sm:$0xf]
      %v253 = vld [vmem:[%s246] sm:$0xf]
      %v256 = vunpack.c.l.s4 1983009808
      %v257 = vunpack.c.0.s8 %v256
      %v258 = vlaneseq
      %v259 = vshrl.u32 %v258, 7
      %v260 = vsub.s32 %v257, %v259
      %v261 = vrot.slane %v253, %v260
      %v262 = vcombine.high %v261, %v261
      %263 = vrot.lane.b32.xlu0 %v261, 1
      %v264 = vpop.permute.xlu0 %263
      %265 = vrot.lane.b32.xlu0 %v262, 1
      %v266 = vpop.permute.xlu0 %265
      %vm267 = vcmask 7168
      %v268 = vsel %vm267, %v264, %v266
      %v271 = vsel %vm267, 0.0, %v264
      %v273 = vlaneseq
      %v274 = vshrl.u32 %v273, 7
      %v275 = vsub.s32 0, %v274
      %v276 = vrot.slane %v252, %v275
      %v277 = vlaneseq
      %v278 = vshrl.u32 %v277, 7
      %v279 = vsub.s32 2, %v278
      %v280 = vrot.slane %v252, %v279
      %v283 = vlaneseq
      %v284 = vshrl.u32 %v283, 7
      %v285 = vsub.s32 0, %v284
      %v286 = vrot.slane %v276, %v285
      %v287 = vlaneseq
      %v288 = vshrl.u32 %v287, 7
      %v289 = vsub.s32 0, %v288
      %v290 = vrot.slane %v280, %v289
      %v291 = vmul.f32 %v271, %v286
      %v292 = vmul.f32 %v268, %v290
      %293 = vrot.lane.b32.xlu0 %v261, 127
      %v294 = vpop.permute.xlu0 %293
      %295 = vrot.lane.b32.xlu0 %v262, 127
      %v296 = vpop.permute.xlu0 %295
      %vm297 = vcmask 1039360
      %v298 = vsel %vm297, %v294, %v296
      %v301 = vsel %vm297, %v296, 0.0
      %v302 = vlaneseq
      %v303 = vshrl.u32 %v302, 7
      %v304 = vsub.s32 1, %v303
      %v305 = vrot.slane %v252, %v304
      %v306 = vlaneseq
      %v307 = vshrl.u32 %v306, 7
      %v308 = vsub.s32 3, %v307
      %v309 = vrot.slane %v252, %v308
      %v312 = vlaneseq
      %v313 = vshrl.u32 %v312, 7
      %v314 = vsub.s32 1, %v313
      %v315 = vrot.slane %v305, %v314
      %v316 = vlaneseq
      %v317 = vshrl.u32 %v316, 7
      %v318 = vsub.s32 1, %v317
      %v319 = vrot.slane %v309, %v318
      %v320 = vmul.f32 %v298, %v315
      %v321 = vmul.f32 %v301, %v319
      %s322 = scalar_lea.vmem %s1, 6
      %v323 = vld [vmem:[%s322] sm:$0x3]
      %s324 = scalar_lea.vmem %s1, 8
      %v325 = vld [vmem:[%s324] sm:$0x3]
      %vm326 = vcmask 15360
      %v328 = vsel %vm326, %v325, 0
      %vm330 = vcmask 1041408
      %v331 = vsel %vm330, %v261, 0
      %v333 = vsel %vm330, %v262, 0
      %335 = vmatprep.subr.mxu0 0.0
      %336 = vmatpush1.msra.mxu0 0.0
      %337 = vmatprep.subr.mxu0 0.0
      %338 = vmatpush1.msra.mxu0 0.0
      %339 = vmatprep.subr.mxu0 0.0
      %340 = vmatpush1.msra.mxu0 0.0
      %341 = vmatprep.subr.mxu0 0.0
      %342 = vmatpush1.msra.mxu0 0.0
      %343 = vmatprep.subr.mxu0 0.0
      %344 = vmatpush1.msra.mxu0 0.0
      %345 = vmatprep.subr.mxu0 0.0
      %346 = vmatpush1.msra.mxu0 0.0
      %347 = vmatprep.subr.mxu0 0.0
      %348 = vmatpush1.msra.mxu0 0.0
      %349 = vmatprep.subr.mxu0 0.0
      %350 = vmatpush1.msra.mxu0 0.0
      %351 = vmatprep.subr.mxu0 0.0
      %352 = vmatpush1.msra.mxu0 0.0
      %353 = vmatprep.subr.mxu0 0.0
      %354 = vmatpush1.msra.mxu0 0.0
      %355 = vmatprep.subr.mxu0 0.0
      %356 = vmatpush1.msra.mxu0 0.0
      %357 = vmatprep.subr.mxu0 0.0
      %358 = vmatpush1.msra.mxu0 0.0
      %359 = vmatprep.subr.mxu0 0.0
      %360 = vmatpush1.msra.mxu0 0.0
      %361 = vmatprep.subr.mxu0 0.0
      %362 = vmatpush1.msra.mxu0 0.0
      %363 = vmatprep.subr.mxu0 0.0
      %364 = vmatpush1.msra.mxu0 0.0
      %365 = vmatprep.subr.mxu0 %v333
      %366 = vmatpush1.msra.mxu0 %v331
      %367 = vmatprep.subr.mxu0 0.0
      %368 = vmatpush2.msra.mxu0 0.0
      %369 = vmatprep.subr.mxu0 0.0
      %370 = vmatpush2.msra.mxu0 0.0
      %371 = vmatprep.subr.mxu0 0.0
      %372 = vmatpush2.msra.mxu0 0.0
      %373 = vmatprep.subr.mxu0 0.0
      %374 = vmatpush2.msra.mxu0 0.0
      %375 = vmatprep.subr.mxu0 0.0
      %376 = vmatpush2.msra.mxu0 0.0
      %377 = vmatprep.subr.mxu0 0.0
      %378 = vmatpush2.msra.mxu0 0.0
      %379 = vmatprep.subr.mxu0 0.0
      %380 = vmatpush2.msra.mxu0 0.0
      %381 = vmatprep.subr.mxu0 0.0
      %382 = vmatpush2.msra.mxu0 0.0
      %383 = vmatprep.subr.mxu0 0.0
      %384 = vmatpush2.msra.mxu0 0.0
      %385 = vmatprep.subr.mxu0 0.0
      %386 = vmatpush2.msra.mxu0 0.0
      %387 = vmatprep.subr.mxu0 0.0
      %388 = vmatpush2.msra.mxu0 0.0
      %389 = vmatprep.subr.mxu0 0.0
      %390 = vmatpush2.msra.mxu0 0.0
      %391 = vmatprep.subr.mxu0 0.0
      %392 = vmatpush2.msra.mxu0 0.0
      %393 = vmatprep.subr.mxu0 0.0
      %394 = vmatpush2.msra.mxu0 0.0
      %395 = vmatprep.subr.mxu0 0.0
      %396 = vmatpush2.msra.mxu0 0.0
      %397 = vmatprep.subr.mxu0 0.0
      %398 = vmatpush2.msra.mxu0 0.0
      %399 = vmatprep.mubr.f32.mxu0 0.0
      %400 = vmatmul.mubr.f32.gmra.mxu0 %v328
      %v401 = vpop.f32.mrf.mxu0
      %v402 = vadd.f32 0.0, %v401
      %v403 = vpop.f32.mrf.mxu0
      %v404 = vadd.f32 0.0, %v403
      %405 = vdwg.mxu0
      %v407 = vsel %vm326, %v323, 0
      %v410 = vsel %vm330, %v291, 0
      %v413 = vsel %vm330, %v292, 0
      %415 = vmatprep.subr.mxu0 0.0
      %416 = vmatpush1.msra.mxu0 0.0
      %417 = vmatprep.subr.mxu0 0.0
      %418 = vmatpush1.msra.mxu0 0.0
      %419 = vmatprep.subr.mxu0 0.0
      %420 = vmatpush1.msra.mxu0 0.0
      %421 = vmatprep.subr.mxu0 0.0
      %422 = vmatpush1.msra.mxu0 0.0
      %423 = vmatprep.subr.mxu0 0.0
      %424 = vmatpush1.msra.mxu0 0.0
      %425 = vmatprep.subr.mxu0 0.0
      %426 = vmatpush1.msra.mxu0 0.0
      %427 = vmatprep.subr.mxu0 0.0
      %428 = vmatpush1.msra.mxu0 0.0
      %429 = vmatprep.subr.mxu0 0.0
      %430 = vmatpush1.msra.mxu0 0.0
      %431 = vmatprep.subr.mxu0 0.0
      %432 = vmatpush1.msra.mxu0 0.0
      %433 = vmatprep.subr.mxu0 0.0
      %434 = vmatpush1.msra.mxu0 0.0
      %435 = vmatprep.subr.mxu0 0.0
      %436 = vmatpush1.msra.mxu0 0.0
      %437 = vmatprep.subr.mxu0 0.0
      %438 = vmatpush1.msra.mxu0 0.0
      %439 = vmatprep.subr.mxu0 0.0
      %440 = vmatpush1.msra.mxu0 0.0
      %441 = vmatprep.subr.mxu0 0.0
      %442 = vmatpush1.msra.mxu0 0.0
      %443 = vmatprep.subr.mxu0 0.0
      %444 = vmatpush1.msra.mxu0 0.0
      %445 = vmatprep.subr.mxu0 %v413
      %446 = vmatpush1.msra.mxu0 %v410
      %447 = vmatprep.subr.mxu0 0.0
      %448 = vmatpush2.msra.mxu0 0.0
      %449 = vmatprep.subr.mxu0 0.0
      %450 = vmatpush2.msra.mxu0 0.0
      %451 = vmatprep.subr.mxu0 0.0
      %452 = vmatpush2.msra.mxu0 0.0
      %453 = vmatprep.subr.mxu0 0.0
      %454 = vmatpush2.msra.mxu0 0.0
      %455 = vmatprep.subr.mxu0 0.0
      %456 = vmatpush2.msra.mxu0 0.0
      %457 = vmatprep.subr.mxu0 0.0
      %458 = vmatpush2.msra.mxu0 0.0
      %459 = vmatprep.subr.mxu0 0.0
      %460 = vmatpush2.msra.mxu0 0.0
      %461 = vmatprep.subr.mxu0 0.0
      %462 = vmatpush2.msra.mxu0 0.0
      %463 = vmatprep.subr.mxu0 0.0
      %464 = vmatpush2.msra.mxu0 0.0
      %465 = vmatprep.subr.mxu0 0.0
      %466 = vmatpush2.msra.mxu0 0.0
      %467 = vmatprep.subr.mxu0 0.0
      %468 = vmatpush2.msra.mxu0 0.0
      %469 = vmatprep.subr.mxu0 0.0
      %470 = vmatpush2.msra.mxu0 0.0
      %471 = vmatprep.subr.mxu0 0.0
      %472 = vmatpush2.msra.mxu0 0.0
      %473 = vmatprep.subr.mxu0 0.0
      %474 = vmatpush2.msra.mxu0 0.0
      %475 = vmatprep.subr.mxu0 0.0
      %476 = vmatpush2.msra.mxu0 0.0
      %477 = vmatprep.subr.mxu0 0.0
      %478 = vmatpush2.msra.mxu0 0.0
      %479 = vmatprep.mubr.f32.mxu0 0.0
      %480 = vmatmul.mubr.f32.gmra.mxu0 %v407
      %v481 = vpop.f32.mrf.mxu0
      %v482 = vadd.f32 %v402, %v481
      %v483 = vpop.f32.mrf.mxu0
      %v484 = vadd.f32 %v404, %v483
      %485 = vdwg.mxu0
      %s486 = scalar_lea.vmem %s1, 10
      %v487 = vld [vmem:[%s486] sm:$0x3]
      %v489 = vsel %vm326, %v487, 0
      %v492 = vsel %vm330, %v320, 0
      %v495 = vsel %vm330, %v321, 0
      %497 = vmatprep.subr.mxu0 0.0
      %498 = vmatpush1.msra.mxu0 0.0
      %499 = vmatprep.subr.mxu0 0.0
      %500 = vmatpush1.msra.mxu0 0.0
      %501 = vmatprep.subr.mxu0 0.0
      %502 = vmatpush1.msra.mxu0 0.0
      %503 = vmatprep.subr.mxu0 0.0
      %504 = vmatpush1.msra.mxu0 0.0
      %505 = vmatprep.subr.mxu0 0.0
      %506 = vmatpush1.msra.mxu0 0.0
      %507 = vmatprep.subr.mxu0 0.0
      %508 = vmatpush1.msra.mxu0 0.0
      %509 = vmatprep.subr.mxu0 0.0
      %510 = vmatpush1.msra.mxu0 0.0
      %511 = vmatprep.subr.mxu0 0.0
      %512 = vmatpush1.msra.mxu0 0.0
      %513 = vmatprep.subr.mxu0 0.0
      %514 = vmatpush1.msra.mxu0 0.0
      %515 = vmatprep.subr.mxu0 0.0
      %516 = vmatpush1.msra.mxu0 0.0
      %517 = vmatprep.subr.mxu0 0.0
      %518 = vmatpush1.msra.mxu0 0.0
      %519 = vmatprep.subr.mxu0 0.0
      %520 = vmatpush1.msra.mxu0 0.0
      %521 = vmatprep.subr.mxu0 0.0
      %522 = vmatpush1.msra.mxu0 0.0
      %523 = vmatprep.subr.mxu0 0.0
      %524 = vmatpush1.msra.mxu0 0.0
      %525 = vmatprep.subr.mxu0 0.0
      %526 = vmatpush1.msra.mxu0 0.0
      %527 = vmatprep.subr.mxu0 %v495
      %528 = vmatpush1.msra.mxu0 %v492
      %529 = vmatprep.subr.mxu0 0.0
      %530 = vmatpush2.msra.mxu0 0.0
      %531 = vmatprep.subr.mxu0 0.0
      %532 = vmatpush2.msra.mxu0 0.0
      %533 = vmatprep.subr.mxu0 0.0
      %534 = vmatpush2.msra.mxu0 0.0
      %535 = vmatprep.subr.mxu0 0.0
      %536 = vmatpush2.msra.mxu0 0.0
      %537 = vmatprep.subr.mxu0 0.0
      %538 = vmatpush2.msra.mxu0 0.0
      %539 = vmatprep.subr.mxu0 0.0
      %540 = vmatpush2.msra.mxu0 0.0
      %541 = vmatprep.subr.mxu0 0.0
      %542 = vmatpush2.msra.mxu0 0.0
      %543 = vmatprep.subr.mxu0 0.0
      %544 = vmatpush2.msra.mxu0 0.0
      %545 = vmatprep.subr.mxu0 0.0
      %546 = vmatpush2.msra.mxu0 0.0
      %547 = vmatprep.subr.mxu0 0.0
      %548 = vmatpush2.msra.mxu0 0.0
      %549 = vmatprep.subr.mxu0 0.0
      %550 = vmatpush2.msra.mxu0 0.0
      %551 = vmatprep.subr.mxu0 0.0
      %552 = vmatpush2.msra.mxu0 0.0
      %553 = vmatprep.subr.mxu0 0.0
      %554 = vmatpush2.msra.mxu0 0.0
      %555 = vmatprep.subr.mxu0 0.0
      %556 = vmatpush2.msra.mxu0 0.0
      %557 = vmatprep.subr.mxu0 0.0
      %558 = vmatpush2.msra.mxu0 0.0
      %559 = vmatprep.subr.mxu0 0.0
      %560 = vmatpush2.msra.mxu0 0.0
      %561 = vmatprep.mubr.f32.mxu0 0.0
      %562 = vmatmul.mubr.f32.gmra.mxu0 %v489
      %v563 = vpop.f32.mrf.mxu0
      %v564 = vadd.f32 0.0, %v563
      %v565 = vpop.f32.mrf.mxu0
      %v566 = vadd.f32 0.0, %v565
      %567 = vdwg.mxu0
      %v568 = vadd.f32 %v482, %v564
      %v569 = vadd.f32 %v484, %v566
      %v570 = vld [vmem:[%s2] sm:$0x3]
      %572 = vset.pattern.permute.xlu0 0
      %573 = vperm.xlu0 %572, %v570
      %v574 = vpop.permute.xlu0 %573
      %v576 = vadd.f32 %v568, %v574
      %v577 = vadd.f32 %v569, %v574
      %s578 = scalar_lea.vmem %s1, 12
      %v579 = vld [vmem:[%s578] sm:$0x3]
      %s580 = scalar_lea.vmem %s1, 14
      %v581 = vld [vmem:[%s580] sm:$0x3]
      %v583 = vsel %vm326, %v581, 0
      %585 = vmatprep.subr.mxu0 0.0
      %586 = vmatpush1.msra.mxu0 0.0
      %587 = vmatprep.subr.mxu0 0.0
      %588 = vmatpush1.msra.mxu0 0.0
      %589 = vmatprep.subr.mxu0 0.0
      %590 = vmatpush1.msra.mxu0 0.0
      %591 = vmatprep.subr.mxu0 0.0
      %592 = vmatpush1.msra.mxu0 0.0
      %593 = vmatprep.subr.mxu0 0.0
      %594 = vmatpush1.msra.mxu0 0.0
      %595 = vmatprep.subr.mxu0 0.0
      %596 = vmatpush1.msra.mxu0 0.0
      %597 = vmatprep.subr.mxu0 0.0
      %598 = vmatpush1.msra.mxu0 0.0
      %599 = vmatprep.subr.mxu0 0.0
      %600 = vmatpush1.msra.mxu0 0.0
      %601 = vmatprep.subr.mxu0 0.0
      %602 = vmatpush1.msra.mxu0 0.0
      %603 = vmatprep.subr.mxu0 0.0
      %604 = vmatpush1.msra.mxu0 0.0
      %605 = vmatprep.subr.mxu0 0.0
      %606 = vmatpush1.msra.mxu0 0.0
      %607 = vmatprep.subr.mxu0 0.0
      %608 = vmatpush1.msra.mxu0 0.0
      %609 = vmatprep.subr.mxu0 0.0
      %610 = vmatpush1.msra.mxu0 0.0
      %611 = vmatprep.subr.mxu0 0.0
      %612 = vmatpush1.msra.mxu0 0.0
      %613 = vmatprep.subr.mxu0 0.0
      %614 = vmatpush1.msra.mxu0 0.0
      %615 = vmatprep.subr.mxu0 %v333
      %616 = vmatpush1.msra.mxu0 %v331
      %617 = vmatprep.subr.mxu0 0.0
      %618 = vmatpush2.msra.mxu0 0.0
      %619 = vmatprep.subr.mxu0 0.0
      %620 = vmatpush2.msra.mxu0 0.0
      %621 = vmatprep.subr.mxu0 0.0
      %622 = vmatpush2.msra.mxu0 0.0
      %623 = vmatprep.subr.mxu0 0.0
      %624 = vmatpush2.msra.mxu0 0.0
      %625 = vmatprep.subr.mxu0 0.0
      %626 = vmatpush2.msra.mxu0 0.0
      %627 = vmatprep.subr.mxu0 0.0
      %628 = vmatpush2.msra.mxu0 0.0
      %629 = vmatprep.subr.mxu0 0.0
      %630 = vmatpush2.msra.mxu0 0.0
      %631 = vmatprep.subr.mxu0 0.0
      %632 = vmatpush2.msra.mxu0 0.0
      %633 = vmatprep.subr.mxu0 0.0
      %634 = vmatpush2.msra.mxu0 0.0
      %635 = vmatprep.subr.mxu0 0.0
      %636 = vmatpush2.msra.mxu0 0.0
      %637 = vmatprep.subr.mxu0 0.0
      %638 = vmatpush2.msra.mxu0 0.0
      %639 = vmatprep.subr.mxu0 0.0
      %640 = vmatpush2.msra.mxu0 0.0
      %641 = vmatprep.subr.mxu0 0.0
      %642 = vmatpush2.msra.mxu0 0.0
      %643 = vmatprep.subr.mxu0 0.0
      %644 = vmatpush2.msra.mxu0 0.0
      %645 = vmatprep.subr.mxu0 0.0
      %646 = vmatpush2.msra.mxu0 0.0
      %647 = vmatprep.subr.mxu0 0.0
      %648 = vmatpush2.msra.mxu0 0.0
      %649 = vmatprep.mubr.f32.mxu0 0.0
      %650 = vmatmul.mubr.f32.gmra.mxu0 %v583
      %v651 = vpop.f32.mrf.mxu0
      %v652 = vadd.f32 0.0, %v651
      %v653 = vpop.f32.mrf.mxu0
      %v654 = vadd.f32 0.0, %v653
      %655 = vdwg.mxu0
      %v657 = vsel %vm326, %v579, 0
      %659 = vmatprep.subr.mxu0 0.0
      %660 = vmatpush1.msra.mxu0 0.0
      %661 = vmatprep.subr.mxu0 0.0
      %662 = vmatpush1.msra.mxu0 0.0
      %663 = vmatprep.subr.mxu0 0.0
      %664 = vmatpush1.msra.mxu0 0.0
      %665 = vmatprep.subr.mxu0 0.0
      %666 = vmatpush1.msra.mxu0 0.0
      %667 = vmatprep.subr.mxu0 0.0
      %668 = vmatpush1.msra.mxu0 0.0
      %669 = vmatprep.subr.mxu0 0.0
      %670 = vmatpush1.msra.mxu0 0.0
      %671 = vmatprep.subr.mxu0 0.0
      %672 = vmatpush1.msra.mxu0 0.0
      %673 = vmatprep.subr.mxu0 0.0
      %674 = vmatpush1.msra.mxu0 0.0
      %675 = vmatprep.subr.mxu0 0.0
      %676 = vmatpush1.msra.mxu0 0.0
      %677 = vmatprep.subr.mxu0 0.0
      %678 = vmatpush1.msra.mxu0 0.0
      %679 = vmatprep.subr.mxu0 0.0
      %680 = vmatpush1.msra.mxu0 0.0
      %681 = vmatprep.subr.mxu0 0.0
      %682 = vmatpush1.msra.mxu0 0.0
      %683 = vmatprep.subr.mxu0 0.0
      %684 = vmatpush1.msra.mxu0 0.0
      %685 = vmatprep.subr.mxu0 0.0
      %686 = vmatpush1.msra.mxu0 0.0
      %687 = vmatprep.subr.mxu0 0.0
      %688 = vmatpush1.msra.mxu0 0.0
      %689 = vmatprep.subr.mxu0 %v413
      %690 = vmatpush1.msra.mxu0 %v410
      %691 = vmatprep.subr.mxu0 0.0
      %692 = vmatpush2.msra.mxu0 0.0
      %693 = vmatprep.subr.mxu0 0.0
      %694 = vmatpush2.msra.mxu0 0.0
      %695 = vmatprep.subr.mxu0 0.0
      %696 = vmatpush2.msra.mxu0 0.0
      %697 = vmatprep.subr.mxu0 0.0
      %698 = vmatpush2.msra.mxu0 0.0
      %699 = vmatprep.subr.mxu0 0.0
      %700 = vmatpush2.msra.mxu0 0.0
      %701 = vmatprep.subr.mxu0 0.0
      %702 = vmatpush2.msra.mxu0 0.0
      %703 = vmatprep.subr.mxu0 0.0
      %704 = vmatpush2.msra.mxu0 0.0
      %705 = vmatprep.subr.mxu0 0.0
      %706 = vmatpush2.msra.mxu0 0.0
      %707 = vmatprep.subr.mxu0 0.0
      %708 = vmatpush2.msra.mxu0 0.0
      %709 = vmatprep.subr.mxu0 0.0
      %710 = vmatpush2.msra.mxu0 0.0
      %711 = vmatprep.subr.mxu0 0.0
      %712 = vmatpush2.msra.mxu0 0.0
      %713 = vmatprep.subr.mxu0 0.0
      %714 = vmatpush2.msra.mxu0 0.0
      %715 = vmatprep.subr.mxu0 0.0
      %716 = vmatpush2.msra.mxu0 0.0
      %717 = vmatprep.subr.mxu0 0.0
      %718 = vmatpush2.msra.mxu0 0.0
      %719 = vmatprep.subr.mxu0 0.0
      %720 = vmatpush2.msra.mxu0 0.0
      %721 = vmatprep.subr.mxu0 0.0
      %722 = vmatpush2.msra.mxu0 0.0
      %723 = vmatprep.mubr.f32.mxu0 0.0
      %724 = vmatmul.mubr.f32.gmra.mxu0 %v657
      %v725 = vpop.f32.mrf.mxu0
      %v726 = vadd.f32 %v652, %v725
      %v727 = vpop.f32.mrf.mxu0
      %v728 = vadd.f32 %v654, %v727
      %729 = vdwg.mxu0
      %s730 = scalar_lea.vmem %s1, 16
      %v731 = vld [vmem:[%s730] sm:$0x3]
      %v733 = vsel %vm326, %v731, 0
      %735 = vmatprep.subr.mxu0 0.0
      %736 = vmatpush1.msra.mxu0 0.0
      %737 = vmatprep.subr.mxu0 0.0
      %738 = vmatpush1.msra.mxu0 0.0
      %739 = vmatprep.subr.mxu0 0.0
      %740 = vmatpush1.msra.mxu0 0.0
      %741 = vmatprep.subr.mxu0 0.0
      %742 = vmatpush1.msra.mxu0 0.0
      %743 = vmatprep.subr.mxu0 0.0
      %744 = vmatpush1.msra.mxu0 0.0
      %745 = vmatprep.subr.mxu0 0.0
      %746 = vmatpush1.msra.mxu0 0.0
      %747 = vmatprep.subr.mxu0 0.0
      %748 = vmatpush1.msra.mxu0 0.0
      %749 = vmatprep.subr.mxu0 0.0
      %750 = vmatpush1.msra.mxu0 0.0
      %751 = vmatprep.subr.mxu0 0.0
      %752 = vmatpush1.msra.mxu0 0.0
      %753 = vmatprep.subr.mxu0 0.0
      %754 = vmatpush1.msra.mxu0 0.0
      %755 = vmatprep.subr.mxu0 0.0
      %756 = vmatpush1.msra.mxu0 0.0
      %757 = vmatprep.subr.mxu0 0.0
      %758 = vmatpush1.msra.mxu0 0.0
      %759 = vmatprep.subr.mxu0 0.0
      %760 = vmatpush1.msra.mxu0 0.0
      %761 = vmatprep.subr.mxu0 0.0
      %762 = vmatpush1.msra.mxu0 0.0
      %763 = vmatprep.subr.mxu0 0.0
      %764 = vmatpush1.msra.mxu0 0.0
      %765 = vmatprep.subr.mxu0 %v495
      %766 = vmatpush1.msra.mxu0 %v492
      %767 = vmatprep.subr.mxu0 0.0
      %768 = vmatpush2.msra.mxu0 0.0
      %769 = vmatprep.subr.mxu0 0.0
      %770 = vmatpush2.msra.mxu0 0.0
      %771 = vmatprep.subr.mxu0 0.0
      %772 = vmatpush2.msra.mxu0 0.0
      %773 = vmatprep.subr.mxu0 0.0
      %774 = vmatpush2.msra.mxu0 0.0
      %775 = vmatprep.subr.mxu0 0.0
      %776 = vmatpush2.msra.mxu0 0.0
      %777 = vmatprep.subr.mxu0 0.0
      %778 = vmatpush2.msra.mxu0 0.0
      %779 = vmatprep.subr.mxu0 0.0
      %780 = vmatpush2.msra.mxu0 0.0
      %781 = vmatprep.subr.mxu0 0.0
      %782 = vmatpush2.msra.mxu0 0.0
      %783 = vmatprep.subr.mxu0 0.0
      %784 = vmatpush2.msra.mxu0 0.0
      %785 = vmatprep.subr.mxu0 0.0
      %786 = vmatpush2.msra.mxu0 0.0
      %787 = vmatprep.subr.mxu0 0.0
      %788 = vmatpush2.msra.mxu0 0.0
      %789 = vmatprep.subr.mxu0 0.0
      %790 = vmatpush2.msra.mxu0 0.0
      %791 = vmatprep.subr.mxu0 0.0
      %792 = vmatpush2.msra.mxu0 0.0
      %793 = vmatprep.subr.mxu0 0.0
      %794 = vmatpush2.msra.mxu0 0.0
      %795 = vmatprep.subr.mxu0 0.0
      %796 = vmatpush2.msra.mxu0 0.0
      %797 = vmatprep.subr.mxu0 0.0
      %798 = vmatpush2.msra.mxu0 0.0
      %799 = vmatprep.mubr.f32.mxu0 0.0
      %800 = vmatmul.mubr.f32.gmra.mxu0 %v733
      %v801 = vpop.f32.mrf.mxu0
      %v802 = vadd.f32 0.0, %v801
      %v803 = vpop.f32.mrf.mxu0
      %v804 = vadd.f32 0.0, %v803
      %805 = vdwg.mxu0
      %v806 = vadd.f32 %v726, %v802
      %v807 = vadd.f32 %v728, %v804
      %810 = vrot.lane.b32.xlu0 %v806, 112
      %v811 = vpop.permute.xlu0 %810
      %812 = vrot.lane.b32.xlu0 %v807, 112
      %v813 = vpop.permute.xlu0 %812
      %vm814 = vcmask 916480
      %v815 = vsel %vm814, %v811, %v813
      %v818 = vsel %vm814, %v813, 0.0
      %v819 = vadd.f32 %v576, %v815
      %v820 = vadd.f32 %v577, %v818
      %v821 = vld [vmem:[%s1] sm:$0x3]
      %s822 = scalar_lea.vmem %s1, 2
      %v823 = vld [vmem:[%s822] sm:$0x3]
      %v825 = vsel %vm326, %v823, 0
      %827 = vmatprep.subr.mxu0 0.0
      %828 = vmatpush1.msra.mxu0 0.0
      %829 = vmatprep.subr.mxu0 0.0
      %830 = vmatpush1.msra.mxu0 0.0
      %831 = vmatprep.subr.mxu0 0.0
      %832 = vmatpush1.msra.mxu0 0.0
      %833 = vmatprep.subr.mxu0 0.0
      %834 = vmatpush1.msra.mxu0 0.0
      %835 = vmatprep.subr.mxu0 0.0
      %836 = vmatpush1.msra.mxu0 0.0
      %837 = vmatprep.subr.mxu0 0.0
      %838 = vmatpush1.msra.mxu0 0.0
      %839 = vmatprep.subr.mxu0 0.0
      %840 = vmatpush1.msra.mxu0 0.0
      %841 = vmatprep.subr.mxu0 0.0
      %842 = vmatpush1.msra.mxu0 0.0
      %843 = vmatprep.subr.mxu0 0.0
      %844 = vmatpush1.msra.mxu0 0.0
      %845 = vmatprep.subr.mxu0 0.0
      %846 = vmatpush1.msra.mxu0 0.0
      %847 = vmatprep.subr.mxu0 0.0
      %848 = vmatpush1.msra.mxu0 0.0
      %849 = vmatprep.subr.mxu0 0.0
      %850 = vmatpush1.msra.mxu0 0.0
      %851 = vmatprep.subr.mxu0 0.0
      %852 = vmatpush1.msra.mxu0 0.0
      %853 = vmatprep.subr.mxu0 0.0
      %854 = vmatpush1.msra.mxu0 0.0
      %855 = vmatprep.subr.mxu0 0.0
      %856 = vmatpush1.msra.mxu0 0.0
      %857 = vmatprep.subr.mxu0 %v333
      %858 = vmatpush1.msra.mxu0 %v331
      %859 = vmatprep.subr.mxu0 0.0
      %860 = vmatpush2.msra.mxu0 0.0
      %861 = vmatprep.subr.mxu0 0.0
      %862 = vmatpush2.msra.mxu0 0.0
      %863 = vmatprep.subr.mxu0 0.0
      %864 = vmatpush2.msra.mxu0 0.0
      %865 = vmatprep.subr.mxu0 0.0
      %866 = vmatpush2.msra.mxu0 0.0
      %867 = vmatprep.subr.mxu0 0.0
      %868 = vmatpush2.msra.mxu0 0.0
      %869 = vmatprep.subr.mxu0 0.0
      %870 = vmatpush2.msra.mxu0 0.0
      %871 = vmatprep.subr.mxu0 0.0
      %872 = vmatpush2.msra.mxu0 0.0
      %873 = vmatprep.subr.mxu0 0.0
      %874 = vmatpush2.msra.mxu0 0.0
      %875 = vmatprep.subr.mxu0 0.0
      %876 = vmatpush2.msra.mxu0 0.0
      %877 = vmatprep.subr.mxu0 0.0
      %878 = vmatpush2.msra.mxu0 0.0
      %879 = vmatprep.subr.mxu0 0.0
      %880 = vmatpush2.msra.mxu0 0.0
      %881 = vmatprep.subr.mxu0 0.0
      %882 = vmatpush2.msra.mxu0 0.0
      %883 = vmatprep.subr.mxu0 0.0
      %884 = vmatpush2.msra.mxu0 0.0
      %885 = vmatprep.subr.mxu0 0.0
      %886 = vmatpush2.msra.mxu0 0.0
      %887 = vmatprep.subr.mxu0 0.0
      %888 = vmatpush2.msra.mxu0 0.0
      %889 = vmatprep.subr.mxu0 0.0
      %890 = vmatpush2.msra.mxu0 0.0
      %891 = vmatprep.mubr.f32.mxu0 0.0
      %892 = vmatmul.mubr.f32.gmra.mxu0 %v825
      %v893 = vpop.f32.mrf.mxu0
      %v894 = vadd.f32 0.0, %v893
      %v895 = vpop.f32.mrf.mxu0
      %v896 = vadd.f32 0.0, %v895
      %897 = vdwg.mxu0
      %v899 = vsel %vm326, %v821, 0
      %901 = vmatprep.subr.mxu0 0.0
      %902 = vmatpush1.msra.mxu0 0.0
      %903 = vmatprep.subr.mxu0 0.0
      %904 = vmatpush1.msra.mxu0 0.0
      %905 = vmatprep.subr.mxu0 0.0
      %906 = vmatpush1.msra.mxu0 0.0
      %907 = vmatprep.subr.mxu0 0.0
      %908 = vmatpush1.msra.mxu0 0.0
      %909 = vmatprep.subr.mxu0 0.0
      %910 = vmatpush1.msra.mxu0 0.0
      %911 = vmatprep.subr.mxu0 0.0
      %912 = vmatpush1.msra.mxu0 0.0
      %913 = vmatprep.subr.mxu0 0.0
      %914 = vmatpush1.msra.mxu0 0.0
      %915 = vmatprep.subr.mxu0 0.0
      %916 = vmatpush1.msra.mxu0 0.0
      %917 = vmatprep.subr.mxu0 0.0
      %918 = vmatpush1.msra.mxu0 0.0
      %919 = vmatprep.subr.mxu0 0.0
      %920 = vmatpush1.msra.mxu0 0.0
      %921 = vmatprep.subr.mxu0 0.0
      %922 = vmatpush1.msra.mxu0 0.0
      %923 = vmatprep.subr.mxu0 0.0
      %924 = vmatpush1.msra.mxu0 0.0
      %925 = vmatprep.subr.mxu0 0.0
      %926 = vmatpush1.msra.mxu0 0.0
      %927 = vmatprep.subr.mxu0 0.0
      %928 = vmatpush1.msra.mxu0 0.0
      %929 = vmatprep.subr.mxu0 0.0
      %930 = vmatpush1.msra.mxu0 0.0
      %931 = vmatprep.subr.mxu0 %v413
      %932 = vmatpush1.msra.mxu0 %v410
      %933 = vmatprep.subr.mxu0 0.0
      %934 = vmatpush2.msra.mxu0 0.0
      %935 = vmatprep.subr.mxu0 0.0
      %936 = vmatpush2.msra.mxu0 0.0
      %937 = vmatprep.subr.mxu0 0.0
      %938 = vmatpush2.msra.mxu0 0.0
      %939 = vmatprep.subr.mxu0 0.0
      %940 = vmatpush2.msra.mxu0 0.0
      %941 = vmatprep.subr.mxu0 0.0
      %942 = vmatpush2.msra.mxu0 0.0
      %943 = vmatprep.subr.mxu0 0.0
      %944 = vmatpush2.msra.mxu0 0.0
      %945 = vmatprep.subr.mxu0 0.0
      %946 = vmatpush2.msra.mxu0 0.0
      %947 = vmatprep.subr.mxu0 0.0
      %948 = vmatpush2.msra.mxu0 0.0
      %949 = vmatprep.subr.mxu0 0.0
      %950 = vmatpush2.msra.mxu0 0.0
      %951 = vmatprep.subr.mxu0 0.0
      %952 = vmatpush2.msra.mxu0 0.0
      %953 = vmatprep.subr.mxu0 0.0
      %954 = vmatpush2.msra.mxu0 0.0
      %955 = vmatprep.subr.mxu0 0.0
      %956 = vmatpush2.msra.mxu0 0.0
      %957 = vmatprep.subr.mxu0 0.0
      %958 = vmatpush2.msra.mxu0 0.0
      %959 = vmatprep.subr.mxu0 0.0
      %960 = vmatpush2.msra.mxu0 0.0
      %961 = vmatprep.subr.mxu0 0.0
      %962 = vmatpush2.msra.mxu0 0.0
      %963 = vmatprep.subr.mxu0 0.0
      %964 = vmatpush2.msra.mxu0 0.0
      %965 = vmatprep.mubr.f32.mxu0 0.0
      %966 = vmatmul.mubr.f32.gmra.mxu0 %v899
      %v967 = vpop.f32.mrf.mxu0
      %v968 = vadd.f32 %v894, %v967
      %v969 = vpop.f32.mrf.mxu0
      %v970 = vadd.f32 %v896, %v969
      %971 = vdwg.mxu0
      %s972 = scalar_lea.vmem %s1, 4
      %v973 = vld [vmem:[%s972] sm:$0x3]
      %v975 = vsel %vm326, %v973, 0
      %977 = vmatprep.subr.mxu0 0.0
      %978 = vmatpush1.msra.mxu0 0.0
      %979 = vmatprep.subr.mxu0 0.0
      %980 = vmatpush1.msra.mxu0 0.0
      %981 = vmatprep.subr.mxu0 0.0
      %982 = vmatpush1.msra.mxu0 0.0
      %983 = vmatprep.subr.mxu0 0.0
      %984 = vmatpush1.msra.mxu0 0.0
      %985 = vmatprep.subr.mxu0 0.0
      %986 = vmatpush1.msra.mxu0 0.0
      %987 = vmatprep.subr.mxu0 0.0
      %988 = vmatpush1.msra.mxu0 0.0
      %989 = vmatprep.subr.mxu0 0.0
      %990 = vmatpush1.msra.mxu0 0.0
      %991 = vmatprep.subr.mxu0 0.0
      %992 = vmatpush1.msra.mxu0 0.0
      %993 = vmatprep.subr.mxu0 0.0
      %994 = vmatpush1.msra.mxu0 0.0
      %995 = vmatprep.subr.mxu0 0.0
      %996 = vmatpush1.msra.mxu0 0.0
      %997 = vmatprep.subr.mxu0 0.0
      %998 = vmatpush1.msra.mxu0 0.0
      %999 = vmatprep.subr.mxu0 0.0
      %1000 = vmatpush1.msra.mxu0 0.0
      %1001 = vmatprep.subr.mxu0 0.0
      %1002 = vmatpush1.msra.mxu0 0.0
      %1003 = vmatprep.subr.mxu0 0.0
      %1004 = vmatpush1.msra.mxu0 0.0
      %1005 = vmatprep.subr.mxu0 0.0
      %1006 = vmatpush1.msra.mxu0 0.0
      %1007 = vmatprep.subr.mxu0 %v495
      %1008 = vmatpush1.msra.mxu0 %v492
      %1009 = vmatprep.subr.mxu0 0.0
      %1010 = vmatpush2.msra.mxu0 0.0
      %1011 = vmatprep.subr.mxu0 0.0
      %1012 = vmatpush2.msra.mxu0 0.0
      %1013 = vmatprep.subr.mxu0 0.0
      %1014 = vmatpush2.msra.mxu0 0.0
      %1015 = vmatprep.subr.mxu0 0.0
      %1016 = vmatpush2.msra.mxu0 0.0
      %1017 = vmatprep.subr.mxu0 0.0
      %1018 = vmatpush2.msra.mxu0 0.0
      %1019 = vmatprep.subr.mxu0 0.0
      %1020 = vmatpush2.msra.mxu0 0.0
      %1021 = vmatprep.subr.mxu0 0.0
      %1022 = vmatpush2.msra.mxu0 0.0
      %1023 = vmatprep.subr.mxu0 0.0
      %1024 = vmatpush2.msra.mxu0 0.0
      %1025 = vmatprep.subr.mxu0 0.0
      %1026 = vmatpush2.msra.mxu0 0.0
      %1027 = vmatprep.subr.mxu0 0.0
      %1028 = vmatpush2.msra.mxu0 0.0
      %1029 = vmatprep.subr.mxu0 0.0
      %1030 = vmatpush2.msra.mxu0 0.0
      %1031 = vmatprep.subr.mxu0 0.0
      %1032 = vmatpush2.msra.mxu0 0.0
      %1033 = vmatprep.subr.mxu0 0.0
      %1034 = vmatpush2.msra.mxu0 0.0
      %1035 = vmatprep.subr.mxu0 0.0
      %1036 = vmatpush2.msra.mxu0 0.0
      %1037 = vmatprep.subr.mxu0 0.0
      %1038 = vmatpush2.msra.mxu0 0.0
      %1039 = vmatprep.subr.mxu0 0.0
      %1040 = vmatpush2.msra.mxu0 0.0
      %1041 = vmatprep.mubr.f32.mxu0 0.0
      %1042 = vmatmul.mubr.f32.gmra.mxu0 %v975
      %v1043 = vpop.f32.mrf.mxu0
      %v1044 = vadd.f32 0.0, %v1043
      %v1045 = vpop.f32.mrf.mxu0
      %v1046 = vadd.f32 0.0, %v1045
      %1047 = vdwg.mxu0
      %v1048 = vadd.f32 %v968, %v1044
      %v1049 = vadd.f32 %v970, %v1046
      %1052 = vrot.lane.b32.xlu0 %v1048, 16
      %v1053 = vpop.permute.xlu0 %1052
      %1054 = vrot.lane.b32.xlu0 %v1049, 16
      %v1055 = vpop.permute.xlu0 %1054
      %vm1056 = vcmask 130048
      %v1057 = vsel %vm1056, %v1053, %v1055
      %v1060 = vsel %vm1056, 0.0, %v1053
      %v1061 = vadd.f32 %v819, %v1060
      %v1062 = vadd.f32 %v820, %v1057
      %v1063 = vsel %vm330, %v1061, 0.0
      %v1064 = vsel %vm330, %v1062, 0.0
      %v1065 = vadd.f32 %v1063, %v1064
      %1066 = vadd.xlane.f32.xlu0 %v1065
      %v1067 = vpop.xlane.xlu0 %1066
      %v1068 = vmul.f32 %v1067, 0.00390625
      %v1069 = vsub.f32 %v1061, %v1068
      %v1070 = vsub.f32 %v1062, %v1068
      %v1071 = vmul.f32 %v1069, %v1069
      %v1072 = vmul.f32 %v1070, %v1070
      %v1073 = vsel %vm330, %v1071, 0.0
      %v1074 = vsel %vm330, %v1072, 0.0
      %v1075 = vadd.f32 %v1073, %v1074
      %1076 = vadd.xlane.f32.xlu0 %v1075
      %v1077 = vpop.xlane.xlu0 %1076
      %v1078 = vmul.f32 %v1077, 0.00390625
      %v1079 = vadd.f32 %v1078, 1e-05
      %v1080 = vrsqrt.pop %v1079
      %v1081 = vmul.f32 %v1069, %v1080
      %v1082 = vmul.f32 %v1070, %v1080
      %v1083 = vmax.f32 %v1081, 0.0
      %v1084 = vmax.f32 %v1082, 0.0
      %1087 = vrot.lane.b32.xlu0 %v1083, 1
      %v1088 = vpop.permute.xlu0 %1087
      %1089 = vrot.lane.b32.xlu0 %v1084, 1
      %v1090 = vpop.permute.xlu0 %1089
      %v1091 = vsel %vm267, %v1088, %v1090
      %v1094 = vsel %vm267, 0.0, %v1088
      %v1095 = vmul.f32 %v1094, %v286
      %v1096 = vmul.f32 %v1091, %v290
      %1097 = vrot.lane.b32.xlu0 %v1083, 127
      %v1098 = vpop.permute.xlu0 %1097
      %1099 = vrot.lane.b32.xlu0 %v1084, 127
      %v1100 = vpop.permute.xlu0 %1099
      %v1101 = vsel %vm297, %v1098, %v1100
      %v1104 = vsel %vm297, %v1100, 0.0
      %v1105 = vmul.f32 %v1101, %v315
      %v1106 = vmul.f32 %v1104, %v319
      %s1107 = scalar_lea.vmem %s3, 6
      %v1108 = vld [vmem:[%s1107] sm:$0x3]
      %s1109 = scalar_lea.vmem %s3, 8
      %v1110 = vld [vmem:[%s1109] sm:$0x3]
      %v1112 = vsel %vm326, %v1110, 0
      %v1114 = vsel %vm330, %v1083, 0
      %v1116 = vsel %vm330, %v1084, 0
      %1118 = vmatprep.subr.mxu0 0.0
      %1119 = vmatpush1.msra.mxu0 0.0
      %1120 = vmatprep.subr.mxu0 0.0
      %1121 = vmatpush1.msra.mxu0 0.0
      %1122 = vmatprep.subr.mxu0 0.0
      %1123 = vmatpush1.msra.mxu0 0.0
      %1124 = vmatprep.subr.mxu0 0.0
      %1125 = vmatpush1.msra.mxu0 0.0
      %1126 = vmatprep.subr.mxu0 0.0
      %1127 = vmatpush1.msra.mxu0 0.0
      %1128 = vmatprep.subr.mxu0 0.0
      %1129 = vmatpush1.msra.mxu0 0.0
      %1130 = vmatprep.subr.mxu0 0.0
      %1131 = vmatpush1.msra.mxu0 0.0
      %1132 = vmatprep.subr.mxu0 0.0
      %1133 = vmatpush1.msra.mxu0 0.0
      %1134 = vmatprep.subr.mxu0 0.0
      %1135 = vmatpush1.msra.mxu0 0.0
      %1136 = vmatprep.subr.mxu0 0.0
      %1137 = vmatpush1.msra.mxu0 0.0
      %1138 = vmatprep.subr.mxu0 0.0
      %1139 = vmatpush1.msra.mxu0 0.0
      %1140 = vmatprep.subr.mxu0 0.0
      %1141 = vmatpush1.msra.mxu0 0.0
      %1142 = vmatprep.subr.mxu0 0.0
      %1143 = vmatpush1.msra.mxu0 0.0
      %1144 = vmatprep.subr.mxu0 0.0
      %1145 = vmatpush1.msra.mxu0 0.0
      %1146 = vmatprep.subr.mxu0 0.0
      %1147 = vmatpush1.msra.mxu0 0.0
      %1148 = vmatprep.subr.mxu0 %v1116
      %1149 = vmatpush1.msra.mxu0 %v1114
      %1150 = vmatprep.subr.mxu0 0.0
      %1151 = vmatpush2.msra.mxu0 0.0
      %1152 = vmatprep.subr.mxu0 0.0
      %1153 = vmatpush2.msra.mxu0 0.0
      %1154 = vmatprep.subr.mxu0 0.0
      %1155 = vmatpush2.msra.mxu0 0.0
      %1156 = vmatprep.subr.mxu0 0.0
      %1157 = vmatpush2.msra.mxu0 0.0
      %1158 = vmatprep.subr.mxu0 0.0
      %1159 = vmatpush2.msra.mxu0 0.0
      %1160 = vmatprep.subr.mxu0 0.0
      %1161 = vmatpush2.msra.mxu0 0.0
      %1162 = vmatprep.subr.mxu0 0.0
      %1163 = vmatpush2.msra.mxu0 0.0
      %1164 = vmatprep.subr.mxu0 0.0
      %1165 = vmatpush2.msra.mxu0 0.0
      %1166 = vmatprep.subr.mxu0 0.0
      %1167 = vmatpush2.msra.mxu0 0.0
      %1168 = vmatprep.subr.mxu0 0.0
      %1169 = vmatpush2.msra.mxu0 0.0
      %1170 = vmatprep.subr.mxu0 0.0
      %1171 = vmatpush2.msra.mxu0 0.0
      %1172 = vmatprep.subr.mxu0 0.0
      %1173 = vmatpush2.msra.mxu0 0.0
      %1174 = vmatprep.subr.mxu0 0.0
      %1175 = vmatpush2.msra.mxu0 0.0
      %1176 = vmatprep.subr.mxu0 0.0
      %1177 = vmatpush2.msra.mxu0 0.0
      %1178 = vmatprep.subr.mxu0 0.0
      %1179 = vmatpush2.msra.mxu0 0.0
      %1180 = vmatprep.subr.mxu0 0.0
      %1181 = vmatpush2.msra.mxu0 0.0
      %1182 = vmatprep.mubr.f32.mxu0 0.0
      %1183 = vmatmul.mubr.f32.gmra.mxu0 %v1112
      %v1184 = vpop.f32.mrf.mxu0
      %v1185 = vadd.f32 0.0, %v1184
      %v1186 = vpop.f32.mrf.mxu0
      %v1187 = vadd.f32 0.0, %v1186
      %1188 = vdwg.mxu0
      %v1190 = vsel %vm326, %v1108, 0
      %v1193 = vsel %vm330, %v1095, 0
      %v1196 = vsel %vm330, %v1096, 0
      %1198 = vmatprep.subr.mxu0 0.0
      %1199 = vmatpush1.msra.mxu0 0.0
      %1200 = vmatprep.subr.mxu0 0.0
      %1201 = vmatpush1.msra.mxu0 0.0
      %1202 = vmatprep.subr.mxu0 0.0
      %1203 = vmatpush1.msra.mxu0 0.0
      %1204 = vmatprep.subr.mxu0 0.0
      %1205 = vmatpush1.msra.mxu0 0.0
      %1206 = vmatprep.subr.mxu0 0.0
      %1207 = vmatpush1.msra.mxu0 0.0
      %1208 = vmatprep.subr.mxu0 0.0
      %1209 = vmatpush1.msra.mxu0 0.0
      %1210 = vmatprep.subr.mxu0 0.0
      %1211 = vmatpush1.msra.mxu0 0.0
      %1212 = vmatprep.subr.mxu0 0.0
      %1213 = vmatpush1.msra.mxu0 0.0
      %1214 = vmatprep.subr.mxu0 0.0
      %1215 = vmatpush1.msra.mxu0 0.0
      %1216 = vmatprep.subr.mxu0 0.0
      %1217 = vmatpush1.msra.mxu0 0.0
      %1218 = vmatprep.subr.mxu0 0.0
      %1219 = vmatpush1.msra.mxu0 0.0
      %1220 = vmatprep.subr.mxu0 0.0
      %1221 = vmatpush1.msra.mxu0 0.0
      %1222 = vmatprep.subr.mxu0 0.0
      %1223 = vmatpush1.msra.mxu0 0.0
      %1224 = vmatprep.subr.mxu0 0.0
      %1225 = vmatpush1.msra.mxu0 0.0
      %1226 = vmatprep.subr.mxu0 0.0
      %1227 = vmatpush1.msra.mxu0 0.0
      %1228 = vmatprep.subr.mxu0 %v1196
      %1229 = vmatpush1.msra.mxu0 %v1193
      %1230 = vmatprep.subr.mxu0 0.0
      %1231 = vmatpush2.msra.mxu0 0.0
      %1232 = vmatprep.subr.mxu0 0.0
      %1233 = vmatpush2.msra.mxu0 0.0
      %1234 = vmatprep.subr.mxu0 0.0
      %1235 = vmatpush2.msra.mxu0 0.0
      %1236 = vmatprep.subr.mxu0 0.0
      %1237 = vmatpush2.msra.mxu0 0.0
      %1238 = vmatprep.subr.mxu0 0.0
      %1239 = vmatpush2.msra.mxu0 0.0
      %1240 = vmatprep.subr.mxu0 0.0
      %1241 = vmatpush2.msra.mxu0 0.0
      %1242 = vmatprep.subr.mxu0 0.0
      %1243 = vmatpush2.msra.mxu0 0.0
      %1244 = vmatprep.subr.mxu0 0.0
      %1245 = vmatpush2.msra.mxu0 0.0
      %1246 = vmatprep.subr.mxu0 0.0
      %1247 = vmatpush2.msra.mxu0 0.0
      %1248 = vmatprep.subr.mxu0 0.0
      %1249 = vmatpush2.msra.mxu0 0.0
      %1250 = vmatprep.subr.mxu0 0.0
      %1251 = vmatpush2.msra.mxu0 0.0
      %1252 = vmatprep.subr.mxu0 0.0
      %1253 = vmatpush2.msra.mxu0 0.0
      %1254 = vmatprep.subr.mxu0 0.0
      %1255 = vmatpush2.msra.mxu0 0.0
      %1256 = vmatprep.subr.mxu0 0.0
      %1257 = vmatpush2.msra.mxu0 0.0
      %1258 = vmatprep.subr.mxu0 0.0
      %1259 = vmatpush2.msra.mxu0 0.0
      %1260 = vmatprep.subr.mxu0 0.0
      %1261 = vmatpush2.msra.mxu0 0.0
      %1262 = vmatprep.mubr.f32.mxu0 0.0
      %1263 = vmatmul.mubr.f32.gmra.mxu0 %v1190
      %v1264 = vpop.f32.mrf.mxu0
      %v1265 = vadd.f32 %v1185, %v1264
      %v1266 = vpop.f32.mrf.mxu0
      %v1267 = vadd.f32 %v1187, %v1266
      %1268 = vdwg.mxu0
      %s1269 = scalar_lea.vmem %s3, 10
      %v1270 = vld [vmem:[%s1269] sm:$0x3]
      %v1272 = vsel %vm326, %v1270, 0
      %v1275 = vsel %vm330, %v1105, 0
      %v1278 = vsel %vm330, %v1106, 0
      %1280 = vmatprep.subr.mxu0 0.0
      %1281 = vmatpush1.msra.mxu0 0.0
      %1282 = vmatprep.subr.mxu0 0.0
      %1283 = vmatpush1.msra.mxu0 0.0
      %1284 = vmatprep.subr.mxu0 0.0
      %1285 = vmatpush1.msra.mxu0 0.0
      %1286 = vmatprep.subr.mxu0 0.0
      %1287 = vmatpush1.msra.mxu0 0.0
      %1288 = vmatprep.subr.mxu0 0.0
      %1289 = vmatpush1.msra.mxu0 0.0
      %1290 = vmatprep.subr.mxu0 0.0
      %1291 = vmatpush1.msra.mxu0 0.0
      %1292 = vmatprep.subr.mxu0 0.0
      %1293 = vmatpush1.msra.mxu0 0.0
      %1294 = vmatprep.subr.mxu0 0.0
      %1295 = vmatpush1.msra.mxu0 0.0
      %1296 = vmatprep.subr.mxu0 0.0
      %1297 = vmatpush1.msra.mxu0 0.0
      %1298 = vmatprep.subr.mxu0 0.0
      %1299 = vmatpush1.msra.mxu0 0.0
      %1300 = vmatprep.subr.mxu0 0.0
      %1301 = vmatpush1.msra.mxu0 0.0
      %1302 = vmatprep.subr.mxu0 0.0
      %1303 = vmatpush1.msra.mxu0 0.0
      %1304 = vmatprep.subr.mxu0 0.0
      %1305 = vmatpush1.msra.mxu0 0.0
      %1306 = vmatprep.subr.mxu0 0.0
      %1307 = vmatpush1.msra.mxu0 0.0
      %1308 = vmatprep.subr.mxu0 0.0
      %1309 = vmatpush1.msra.mxu0 0.0
      %1310 = vmatprep.subr.mxu0 %v1278
      %1311 = vmatpush1.msra.mxu0 %v1275
      %1312 = vmatprep.subr.mxu0 0.0
      %1313 = vmatpush2.msra.mxu0 0.0
      %1314 = vmatprep.subr.mxu0 0.0
      %1315 = vmatpush2.msra.mxu0 0.0
      %1316 = vmatprep.subr.mxu0 0.0
      %1317 = vmatpush2.msra.mxu0 0.0
      %1318 = vmatprep.subr.mxu0 0.0
      %1319 = vmatpush2.msra.mxu0 0.0
      %1320 = vmatprep.subr.mxu0 0.0
      %1321 = vmatpush2.msra.mxu0 0.0
      %1322 = vmatprep.subr.mxu0 0.0
      %1323 = vmatpush2.msra.mxu0 0.0
      %1324 = vmatprep.subr.mxu0 0.0
      %1325 = vmatpush2.msra.mxu0 0.0
      %1326 = vmatprep.subr.mxu0 0.0
      %1327 = vmatpush2.msra.mxu0 0.0
      %1328 = vmatprep.subr.mxu0 0.0
      %1329 = vmatpush2.msra.mxu0 0.0
      %1330 = vmatprep.subr.mxu0 0.0
      %1331 = vmatpush2.msra.mxu0 0.0
      %1332 = vmatprep.subr.mxu0 0.0
      %1333 = vmatpush2.msra.mxu0 0.0
      %1334 = vmatprep.subr.mxu0 0.0
      %1335 = vmatpush2.msra.mxu0 0.0
      %1336 = vmatprep.subr.mxu0 0.0
      %1337 = vmatpush2.msra.mxu0 0.0
      %1338 = vmatprep.subr.mxu0 0.0
      %1339 = vmatpush2.msra.mxu0 0.0
      %1340 = vmatprep.subr.mxu0 0.0
      %1341 = vmatpush2.msra.mxu0 0.0
      %1342 = vmatprep.subr.mxu0 0.0
      %1343 = vmatpush2.msra.mxu0 0.0
      %1344 = vmatprep.mubr.f32.mxu0 0.0
      %1345 = vmatmul.mubr.f32.gmra.mxu0 %v1272
      %v1346 = vpop.f32.mrf.mxu0
      %v1347 = vadd.f32 0.0, %v1346
      %v1348 = vpop.f32.mrf.mxu0
      %v1349 = vadd.f32 0.0, %v1348
      %1350 = vdwg.mxu0
      %v1351 = vadd.f32 %v1265, %v1347
      %v1352 = vadd.f32 %v1267, %v1349
      %v1353 = vld [vmem:[%s4] sm:$0x3]
      %1355 = vset.pattern.permute.xlu0 0
      %1356 = vperm.xlu0 %1355, %v1353
      %v1357 = vpop.permute.xlu0 %1356
      %v1359 = vadd.f32 %v1351, %v1357
      %v1360 = vadd.f32 %v1352, %v1357
      %s1361 = scalar_lea.vmem %s3, 12
      %v1362 = vld [vmem:[%s1361] sm:$0x3]
      %s1363 = scalar_lea.vmem %s3, 14
      %v1364 = vld [vmem:[%s1363] sm:$0x3]
      %v1366 = vsel %vm326, %v1364, 0
      %1368 = vmatprep.subr.mxu0 0.0
      %1369 = vmatpush1.msra.mxu0 0.0
      %1370 = vmatprep.subr.mxu0 0.0
      %1371 = vmatpush1.msra.mxu0 0.0
      %1372 = vmatprep.subr.mxu0 0.0
      %1373 = vmatpush1.msra.mxu0 0.0
      %1374 = vmatprep.subr.mxu0 0.0
      %1375 = vmatpush1.msra.mxu0 0.0
      %1376 = vmatprep.subr.mxu0 0.0
      %1377 = vmatpush1.msra.mxu0 0.0
      %1378 = vmatprep.subr.mxu0 0.0
      %1379 = vmatpush1.msra.mxu0 0.0
      %1380 = vmatprep.subr.mxu0 0.0
      %1381 = vmatpush1.msra.mxu0 0.0
      %1382 = vmatprep.subr.mxu0 0.0
      %1383 = vmatpush1.msra.mxu0 0.0
      %1384 = vmatprep.subr.mxu0 0.0
      %1385 = vmatpush1.msra.mxu0 0.0
      %1386 = vmatprep.subr.mxu0 0.0
      %1387 = vmatpush1.msra.mxu0 0.0
      %1388 = vmatprep.subr.mxu0 0.0
      %1389 = vmatpush1.msra.mxu0 0.0
      %1390 = vmatprep.subr.mxu0 0.0
      %1391 = vmatpush1.msra.mxu0 0.0
      %1392 = vmatprep.subr.mxu0 0.0
      %1393 = vmatpush1.msra.mxu0 0.0
      %1394 = vmatprep.subr.mxu0 0.0
      %1395 = vmatpush1.msra.mxu0 0.0
      %1396 = vmatprep.subr.mxu0 0.0
      %1397 = vmatpush1.msra.mxu0 0.0
      %1398 = vmatprep.subr.mxu0 %v1116
      %1399 = vmatpush1.msra.mxu0 %v1114
      %1400 = vmatprep.subr.mxu0 0.0
      %1401 = vmatpush2.msra.mxu0 0.0
      %1402 = vmatprep.subr.mxu0 0.0
      %1403 = vmatpush2.msra.mxu0 0.0
      %1404 = vmatprep.subr.mxu0 0.0
      %1405 = vmatpush2.msra.mxu0 0.0
      %1406 = vmatprep.subr.mxu0 0.0
      %1407 = vmatpush2.msra.mxu0 0.0
      %1408 = vmatprep.subr.mxu0 0.0
      %1409 = vmatpush2.msra.mxu0 0.0
      %1410 = vmatprep.subr.mxu0 0.0
      %1411 = vmatpush2.msra.mxu0 0.0
      %1412 = vmatprep.subr.mxu0 0.0
      %1413 = vmatpush2.msra.mxu0 0.0
      %1414 = vmatprep.subr.mxu0 0.0
      %1415 = vmatpush2.msra.mxu0 0.0
      %1416 = vmatprep.subr.mxu0 0.0
      %1417 = vmatpush2.msra.mxu0 0.0
      %1418 = vmatprep.subr.mxu0 0.0
      %1419 = vmatpush2.msra.mxu0 0.0
      %1420 = vmatprep.subr.mxu0 0.0
      %1421 = vmatpush2.msra.mxu0 0.0
      %1422 = vmatprep.subr.mxu0 0.0
      %1423 = vmatpush2.msra.mxu0 0.0
      %1424 = vmatprep.subr.mxu0 0.0
      %1425 = vmatpush2.msra.mxu0 0.0
      %1426 = vmatprep.subr.mxu0 0.0
      %1427 = vmatpush2.msra.mxu0 0.0
      %1428 = vmatprep.subr.mxu0 0.0
      %1429 = vmatpush2.msra.mxu0 0.0
      %1430 = vmatprep.subr.mxu0 0.0
      %1431 = vmatpush2.msra.mxu0 0.0
      %1432 = vmatprep.mubr.f32.mxu0 0.0
      %1433 = vmatmul.mubr.f32.gmra.mxu0 %v1366
      %v1434 = vpop.f32.mrf.mxu0
      %v1435 = vadd.f32 0.0, %v1434
      %v1436 = vpop.f32.mrf.mxu0
      %v1437 = vadd.f32 0.0, %v1436
      %1438 = vdwg.mxu0
      %v1440 = vsel %vm326, %v1362, 0
      %1442 = vmatprep.subr.mxu0 0.0
      %1443 = vmatpush1.msra.mxu0 0.0
      %1444 = vmatprep.subr.mxu0 0.0
      %1445 = vmatpush1.msra.mxu0 0.0
      %1446 = vmatprep.subr.mxu0 0.0
      %1447 = vmatpush1.msra.mxu0 0.0
      %1448 = vmatprep.subr.mxu0 0.0
      %1449 = vmatpush1.msra.mxu0 0.0
      %1450 = vmatprep.subr.mxu0 0.0
      %1451 = vmatpush1.msra.mxu0 0.0
      %1452 = vmatprep.subr.mxu0 0.0
      %1453 = vmatpush1.msra.mxu0 0.0
      %1454 = vmatprep.subr.mxu0 0.0
      %1455 = vmatpush1.msra.mxu0 0.0
      %1456 = vmatprep.subr.mxu0 0.0
      %1457 = vmatpush1.msra.mxu0 0.0
      %1458 = vmatprep.subr.mxu0 0.0
      %1459 = vmatpush1.msra.mxu0 0.0
      %1460 = vmatprep.subr.mxu0 0.0
      %1461 = vmatpush1.msra.mxu0 0.0
      %1462 = vmatprep.subr.mxu0 0.0
      %1463 = vmatpush1.msra.mxu0 0.0
      %1464 = vmatprep.subr.mxu0 0.0
      %1465 = vmatpush1.msra.mxu0 0.0
      %1466 = vmatprep.subr.mxu0 0.0
      %1467 = vmatpush1.msra.mxu0 0.0
      %1468 = vmatprep.subr.mxu0 0.0
      %1469 = vmatpush1.msra.mxu0 0.0
      %1470 = vmatprep.subr.mxu0 0.0
      %1471 = vmatpush1.msra.mxu0 0.0
      %1472 = vmatprep.subr.mxu0 %v1196
      %1473 = vmatpush1.msra.mxu0 %v1193
      %1474 = vmatprep.subr.mxu0 0.0
      %1475 = vmatpush2.msra.mxu0 0.0
      %1476 = vmatprep.subr.mxu0 0.0
      %1477 = vmatpush2.msra.mxu0 0.0
      %1478 = vmatprep.subr.mxu0 0.0
      %1479 = vmatpush2.msra.mxu0 0.0
      %1480 = vmatprep.subr.mxu0 0.0
      %1481 = vmatpush2.msra.mxu0 0.0
      %1482 = vmatprep.subr.mxu0 0.0
      %1483 = vmatpush2.msra.mxu0 0.0
      %1484 = vmatprep.subr.mxu0 0.0
      %1485 = vmatpush2.msra.mxu0 0.0
      %1486 = vmatprep.subr.mxu0 0.0
      %1487 = vmatpush2.msra.mxu0 0.0
      %1488 = vmatprep.subr.mxu0 0.0
      %1489 = vmatpush2.msra.mxu0 0.0
      %1490 = vmatprep.subr.mxu0 0.0
      %1491 = vmatpush2.msra.mxu0 0.0
      %1492 = vmatprep.subr.mxu0 0.0
      %1493 = vmatpush2.msra.mxu0 0.0
      %1494 = vmatprep.subr.mxu0 0.0
      %1495 = vmatpush2.msra.mxu0 0.0
      %1496 = vmatprep.subr.mxu0 0.0
      %1497 = vmatpush2.msra.mxu0 0.0
      %1498 = vmatprep.subr.mxu0 0.0
      %1499 = vmatpush2.msra.mxu0 0.0
      %1500 = vmatprep.subr.mxu0 0.0
      %1501 = vmatpush2.msra.mxu0 0.0
      %1502 = vmatprep.subr.mxu0 0.0
      %1503 = vmatpush2.msra.mxu0 0.0
      %1504 = vmatprep.subr.mxu0 0.0
      %1505 = vmatpush2.msra.mxu0 0.0
      %1506 = vmatprep.mubr.f32.mxu0 0.0
      %1507 = vmatmul.mubr.f32.gmra.mxu0 %v1440
      %v1508 = vpop.f32.mrf.mxu0
      %v1509 = vadd.f32 %v1435, %v1508
      %v1510 = vpop.f32.mrf.mxu0
      %v1511 = vadd.f32 %v1437, %v1510
      %1512 = vdwg.mxu0
      %s1513 = scalar_lea.vmem %s3, 16
      %v1514 = vld [vmem:[%s1513] sm:$0x3]
      %v1516 = vsel %vm326, %v1514, 0
      %1518 = vmatprep.subr.mxu0 0.0
      %1519 = vmatpush1.msra.mxu0 0.0
      %1520 = vmatprep.subr.mxu0 0.0
      %1521 = vmatpush1.msra.mxu0 0.0
      %1522 = vmatprep.subr.mxu0 0.0
      %1523 = vmatpush1.msra.mxu0 0.0
      %1524 = vmatprep.subr.mxu0 0.0
      %1525 = vmatpush1.msra.mxu0 0.0
      %1526 = vmatprep.subr.mxu0 0.0
      %1527 = vmatpush1.msra.mxu0 0.0
      %1528 = vmatprep.subr.mxu0 0.0
      %1529 = vmatpush1.msra.mxu0 0.0
      %1530 = vmatprep.subr.mxu0 0.0
      %1531 = vmatpush1.msra.mxu0 0.0
      %1532 = vmatprep.subr.mxu0 0.0
      %1533 = vmatpush1.msra.mxu0 0.0
      %1534 = vmatprep.subr.mxu0 0.0
      %1535 = vmatpush1.msra.mxu0 0.0
      %1536 = vmatprep.subr.mxu0 0.0
      %1537 = vmatpush1.msra.mxu0 0.0
      %1538 = vmatprep.subr.mxu0 0.0
      %1539 = vmatpush1.msra.mxu0 0.0
      %1540 = vmatprep.subr.mxu0 0.0
      %1541 = vmatpush1.msra.mxu0 0.0
      %1542 = vmatprep.subr.mxu0 0.0
      %1543 = vmatpush1.msra.mxu0 0.0
      %1544 = vmatprep.subr.mxu0 0.0
      %1545 = vmatpush1.msra.mxu0 0.0
      %1546 = vmatprep.subr.mxu0 0.0
      %1547 = vmatpush1.msra.mxu0 0.0
      %1548 = vmatprep.subr.mxu0 %v1278
      %1549 = vmatpush1.msra.mxu0 %v1275
      %1550 = vmatprep.subr.mxu0 0.0
      %1551 = vmatpush2.msra.mxu0 0.0
      %1552 = vmatprep.subr.mxu0 0.0
      %1553 = vmatpush2.msra.mxu0 0.0
      %1554 = vmatprep.subr.mxu0 0.0
      %1555 = vmatpush2.msra.mxu0 0.0
      %1556 = vmatprep.subr.mxu0 0.0
      %1557 = vmatpush2.msra.mxu0 0.0
      %1558 = vmatprep.subr.mxu0 0.0
      %1559 = vmatpush2.msra.mxu0 0.0
      %1560 = vmatprep.subr.mxu0 0.0
      %1561 = vmatpush2.msra.mxu0 0.0
      %1562 = vmatprep.subr.mxu0 0.0
      %1563 = vmatpush2.msra.mxu0 0.0
      %1564 = vmatprep.subr.mxu0 0.0
      %1565 = vmatpush2.msra.mxu0 0.0
      %1566 = vmatprep.subr.mxu0 0.0
      %1567 = vmatpush2.msra.mxu0 0.0
      %1568 = vmatprep.subr.mxu0 0.0
      %1569 = vmatpush2.msra.mxu0 0.0
      %1570 = vmatprep.subr.mxu0 0.0
      %1571 = vmatpush2.msra.mxu0 0.0
      %1572 = vmatprep.subr.mxu0 0.0
      %1573 = vmatpush2.msra.mxu0 0.0
      %1574 = vmatprep.subr.mxu0 0.0
      %1575 = vmatpush2.msra.mxu0 0.0
      %1576 = vmatprep.subr.mxu0 0.0
      %1577 = vmatpush2.msra.mxu0 0.0
      %1578 = vmatprep.subr.mxu0 0.0
      %1579 = vmatpush2.msra.mxu0 0.0
      %1580 = vmatprep.subr.mxu0 0.0
      %1581 = vmatpush2.msra.mxu0 0.0
      %1582 = vmatprep.mubr.f32.mxu0 0.0
      %1583 = vmatmul.mubr.f32.gmra.mxu0 %v1516
      %v1584 = vpop.f32.mrf.mxu0
      %v1585 = vadd.f32 0.0, %v1584
      %v1586 = vpop.f32.mrf.mxu0
      %v1587 = vadd.f32 0.0, %v1586
      %1588 = vdwg.mxu0
      %v1589 = vadd.f32 %v1509, %v1585
      %v1590 = vadd.f32 %v1511, %v1587
      %1593 = vrot.lane.b32.xlu0 %v1589, 112
      %v1594 = vpop.permute.xlu0 %1593
      %1595 = vrot.lane.b32.xlu0 %v1590, 112
      %v1596 = vpop.permute.xlu0 %1595
      %v1597 = vsel %vm814, %v1594, %v1596
      %v1600 = vsel %vm814, %v1596, 0.0
      %v1601 = vadd.f32 %v1359, %v1597
      %v1602 = vadd.f32 %v1360, %v1600
      %v1603 = vld [vmem:[%s3] sm:$0x3]
      %s1604 = scalar_lea.vmem %s3, 2
      %v1605 = vld [vmem:[%s1604] sm:$0x3]
      %v1607 = vsel %vm326, %v1605, 0
      %1609 = vmatprep.subr.mxu0 0.0
      %1610 = vmatpush1.msra.mxu0 0.0
      %1611 = vmatprep.subr.mxu0 0.0
      %1612 = vmatpush1.msra.mxu0 0.0
      %1613 = vmatprep.subr.mxu0 0.0
      %1614 = vmatpush1.msra.mxu0 0.0
      %1615 = vmatprep.subr.mxu0 0.0
      %1616 = vmatpush1.msra.mxu0 0.0
      %1617 = vmatprep.subr.mxu0 0.0
      %1618 = vmatpush1.msra.mxu0 0.0
      %1619 = vmatprep.subr.mxu0 0.0
      %1620 = vmatpush1.msra.mxu0 0.0
      %1621 = vmatprep.subr.mxu0 0.0
      %1622 = vmatpush1.msra.mxu0 0.0
      %1623 = vmatprep.subr.mxu0 0.0
      %1624 = vmatpush1.msra.mxu0 0.0
      %1625 = vmatprep.subr.mxu0 0.0
      %1626 = vmatpush1.msra.mxu0 0.0
      %1627 = vmatprep.subr.mxu0 0.0
      %1628 = vmatpush1.msra.mxu0 0.0
      %1629 = vmatprep.subr.mxu0 0.0
      %1630 = vmatpush1.msra.mxu0 0.0
      %1631 = vmatprep.subr.mxu0 0.0
      %1632 = vmatpush1.msra.mxu0 0.0
      %1633 = vmatprep.subr.mxu0 0.0
      %1634 = vmatpush1.msra.mxu0 0.0
      %1635 = vmatprep.subr.mxu0 0.0
      %1636 = vmatpush1.msra.mxu0 0.0
      %1637 = vmatprep.subr.mxu0 0.0
      %1638 = vmatpush1.msra.mxu0 0.0
      %1639 = vmatprep.subr.mxu0 %v1116
      %1640 = vmatpush1.msra.mxu0 %v1114
      %1641 = vmatprep.subr.mxu0 0.0
      %1642 = vmatpush2.msra.mxu0 0.0
      %1643 = vmatprep.subr.mxu0 0.0
      %1644 = vmatpush2.msra.mxu0 0.0
      %1645 = vmatprep.subr.mxu0 0.0
      %1646 = vmatpush2.msra.mxu0 0.0
      %1647 = vmatprep.subr.mxu0 0.0
      %1648 = vmatpush2.msra.mxu0 0.0
      %1649 = vmatprep.subr.mxu0 0.0
      %1650 = vmatpush2.msra.mxu0 0.0
      %1651 = vmatprep.subr.mxu0 0.0
      %1652 = vmatpush2.msra.mxu0 0.0
      %1653 = vmatprep.subr.mxu0 0.0
      %1654 = vmatpush2.msra.mxu0 0.0
      %1655 = vmatprep.subr.mxu0 0.0
      %1656 = vmatpush2.msra.mxu0 0.0
      %1657 = vmatprep.subr.mxu0 0.0
      %1658 = vmatpush2.msra.mxu0 0.0
      %1659 = vmatprep.subr.mxu0 0.0
      %1660 = vmatpush2.msra.mxu0 0.0
      %1661 = vmatprep.subr.mxu0 0.0
      %1662 = vmatpush2.msra.mxu0 0.0
      %1663 = vmatprep.subr.mxu0 0.0
      %1664 = vmatpush2.msra.mxu0 0.0
      %1665 = vmatprep.subr.mxu0 0.0
      %1666 = vmatpush2.msra.mxu0 0.0
      %1667 = vmatprep.subr.mxu0 0.0
      %1668 = vmatpush2.msra.mxu0 0.0
      %1669 = vmatprep.subr.mxu0 0.0
      %1670 = vmatpush2.msra.mxu0 0.0
      %1671 = vmatprep.subr.mxu0 0.0
      %1672 = vmatpush2.msra.mxu0 0.0
      %1673 = vmatprep.mubr.f32.mxu0 0.0
      %1674 = vmatmul.mubr.f32.gmra.mxu0 %v1607
      %v1675 = vpop.f32.mrf.mxu0
      %v1676 = vadd.f32 0.0, %v1675
      %v1677 = vpop.f32.mrf.mxu0
      %v1678 = vadd.f32 0.0, %v1677
      %1679 = vdwg.mxu0
      %v1681 = vsel %vm326, %v1603, 0
      %1683 = vmatprep.subr.mxu0 0.0
      %1684 = vmatpush1.msra.mxu0 0.0
      %1685 = vmatprep.subr.mxu0 0.0
      %1686 = vmatpush1.msra.mxu0 0.0
      %1687 = vmatprep.subr.mxu0 0.0
      %1688 = vmatpush1.msra.mxu0 0.0
      %1689 = vmatprep.subr.mxu0 0.0
      %1690 = vmatpush1.msra.mxu0 0.0
      %1691 = vmatprep.subr.mxu0 0.0
      %1692 = vmatpush1.msra.mxu0 0.0
      %1693 = vmatprep.subr.mxu0 0.0
      %1694 = vmatpush1.msra.mxu0 0.0
      %1695 = vmatprep.subr.mxu0 0.0
      %1696 = vmatpush1.msra.mxu0 0.0
      %1697 = vmatprep.subr.mxu0 0.0
      %1698 = vmatpush1.msra.mxu0 0.0
      %1699 = vmatprep.subr.mxu0 0.0
      %1700 = vmatpush1.msra.mxu0 0.0
      %1701 = vmatprep.subr.mxu0 0.0
      %1702 = vmatpush1.msra.mxu0 0.0
      %1703 = vmatprep.subr.mxu0 0.0
      %1704 = vmatpush1.msra.mxu0 0.0
      %1705 = vmatprep.subr.mxu0 0.0
      %1706 = vmatpush1.msra.mxu0 0.0
      %1707 = vmatprep.subr.mxu0 0.0
      %1708 = vmatpush1.msra.mxu0 0.0
      %1709 = vmatprep.subr.mxu0 0.0
      %1710 = vmatpush1.msra.mxu0 0.0
      %1711 = vmatprep.subr.mxu0 0.0
      %1712 = vmatpush1.msra.mxu0 0.0
      %1713 = vmatprep.subr.mxu0 %v1196
      %1714 = vmatpush1.msra.mxu0 %v1193
      %1715 = vmatprep.subr.mxu0 0.0
      %1716 = vmatpush2.msra.mxu0 0.0
      %1717 = vmatprep.subr.mxu0 0.0
      %1718 = vmatpush2.msra.mxu0 0.0
      %1719 = vmatprep.subr.mxu0 0.0
      %1720 = vmatpush2.msra.mxu0 0.0
      %1721 = vmatprep.subr.mxu0 0.0
      %1722 = vmatpush2.msra.mxu0 0.0
      %1723 = vmatprep.subr.mxu0 0.0
      %1724 = vmatpush2.msra.mxu0 0.0
      %1725 = vmatprep.subr.mxu0 0.0
      %1726 = vmatpush2.msra.mxu0 0.0
      %1727 = vmatprep.subr.mxu0 0.0
      %1728 = vmatpush2.msra.mxu0 0.0
      %1729 = vmatprep.subr.mxu0 0.0
      %1730 = vmatpush2.msra.mxu0 0.0
      %1731 = vmatprep.subr.mxu0 0.0
      %1732 = vmatpush2.msra.mxu0 0.0
      %1733 = vmatprep.subr.mxu0 0.0
      %1734 = vmatpush2.msra.mxu0 0.0
      %1735 = vmatprep.subr.mxu0 0.0
      %1736 = vmatpush2.msra.mxu0 0.0
      %1737 = vmatprep.subr.mxu0 0.0
      %1738 = vmatpush2.msra.mxu0 0.0
      %1739 = vmatprep.subr.mxu0 0.0
      %1740 = vmatpush2.msra.mxu0 0.0
      %1741 = vmatprep.subr.mxu0 0.0
      %1742 = vmatpush2.msra.mxu0 0.0
      %1743 = vmatprep.subr.mxu0 0.0
      %1744 = vmatpush2.msra.mxu0 0.0
      %1745 = vmatprep.subr.mxu0 0.0
      %1746 = vmatpush2.msra.mxu0 0.0
      %1747 = vmatprep.mubr.f32.mxu0 0.0
      %1748 = vmatmul.mubr.f32.gmra.mxu0 %v1681
      %v1749 = vpop.f32.mrf.mxu0
      %v1750 = vadd.f32 %v1676, %v1749
      %v1751 = vpop.f32.mrf.mxu0
      %v1752 = vadd.f32 %v1678, %v1751
      %1753 = vdwg.mxu0
      %s1754 = scalar_lea.vmem %s3, 4
      %v1755 = vld [vmem:[%s1754] sm:$0x3]
      %v1757 = vsel %vm326, %v1755, 0
      %1759 = vmatprep.subr.mxu0 0.0
      %1760 = vmatpush1.msra.mxu0 0.0
      %1761 = vmatprep.subr.mxu0 0.0
      %1762 = vmatpush1.msra.mxu0 0.0
      %1763 = vmatprep.subr.mxu0 0.0
      %1764 = vmatpush1.msra.mxu0 0.0
      %1765 = vmatprep.subr.mxu0 0.0
      %1766 = vmatpush1.msra.mxu0 0.0
      %1767 = vmatprep.subr.mxu0 0.0
      %1768 = vmatpush1.msra.mxu0 0.0
      %1769 = vmatprep.subr.mxu0 0.0
      %1770 = vmatpush1.msra.mxu0 0.0
      %1771 = vmatprep.subr.mxu0 0.0
      %1772 = vmatpush1.msra.mxu0 0.0
      %1773 = vmatprep.subr.mxu0 0.0
      %1774 = vmatpush1.msra.mxu0 0.0
      %1775 = vmatprep.subr.mxu0 0.0
      %1776 = vmatpush1.msra.mxu0 0.0
      %1777 = vmatprep.subr.mxu0 0.0
      %1778 = vmatpush1.msra.mxu0 0.0
      %1779 = vmatprep.subr.mxu0 0.0
      %1780 = vmatpush1.msra.mxu0 0.0
      %1781 = vmatprep.subr.mxu0 0.0
      %1782 = vmatpush1.msra.mxu0 0.0
      %1783 = vmatprep.subr.mxu0 0.0
      %1784 = vmatpush1.msra.mxu0 0.0
      %1785 = vmatprep.subr.mxu0 0.0
      %1786 = vmatpush1.msra.mxu0 0.0
      %1787 = vmatprep.subr.mxu0 0.0
      %1788 = vmatpush1.msra.mxu0 0.0
      %1789 = vmatprep.subr.mxu0 %v1278
      %1790 = vmatpush1.msra.mxu0 %v1275
      %1791 = vmatprep.subr.mxu0 0.0
      %1792 = vmatpush2.msra.mxu0 0.0
      %1793 = vmatprep.subr.mxu0 0.0
      %1794 = vmatpush2.msra.mxu0 0.0
      %1795 = vmatprep.subr.mxu0 0.0
      %1796 = vmatpush2.msra.mxu0 0.0
      %1797 = vmatprep.subr.mxu0 0.0
      %1798 = vmatpush2.msra.mxu0 0.0
      %1799 = vmatprep.subr.mxu0 0.0
      %1800 = vmatpush2.msra.mxu0 0.0
      %1801 = vmatprep.subr.mxu0 0.0
      %1802 = vmatpush2.msra.mxu0 0.0
      %1803 = vmatprep.subr.mxu0 0.0
      %1804 = vmatpush2.msra.mxu0 0.0
      %1805 = vmatprep.subr.mxu0 0.0
      %1806 = vmatpush2.msra.mxu0 0.0
      %1807 = vmatprep.subr.mxu0 0.0
      %1808 = vmatpush2.msra.mxu0 0.0
      %1809 = vmatprep.subr.mxu0 0.0
      %1810 = vmatpush2.msra.mxu0 0.0
      %1811 = vmatprep.subr.mxu0 0.0
      %1812 = vmatpush2.msra.mxu0 0.0
      %1813 = vmatprep.subr.mxu0 0.0
      %1814 = vmatpush2.msra.mxu0 0.0
      %1815 = vmatprep.subr.mxu0 0.0
      %1816 = vmatpush2.msra.mxu0 0.0
      %1817 = vmatprep.subr.mxu0 0.0
      %1818 = vmatpush2.msra.mxu0 0.0
      %1819 = vmatprep.subr.mxu0 0.0
      %1820 = vmatpush2.msra.mxu0 0.0
      %1821 = vmatprep.subr.mxu0 0.0
      %1822 = vmatpush2.msra.mxu0 0.0
      %1823 = vmatprep.mubr.f32.mxu0 0.0
      %1824 = vmatmul.mubr.f32.gmra.mxu0 %v1757
      %v1825 = vpop.f32.mrf.mxu0
      %v1826 = vadd.f32 0.0, %v1825
      %v1827 = vpop.f32.mrf.mxu0
      %v1828 = vadd.f32 0.0, %v1827
      %1829 = vdwg.mxu0
      %v1830 = vadd.f32 %v1750, %v1826
      %v1831 = vadd.f32 %v1752, %v1828
      %1834 = vrot.lane.b32.xlu0 %v1830, 16
      %v1835 = vpop.permute.xlu0 %1834
      %1836 = vrot.lane.b32.xlu0 %v1831, 16
      %v1837 = vpop.permute.xlu0 %1836
      %v1838 = vsel %vm1056, %v1835, %v1837
      %v1841 = vsel %vm1056, 0.0, %v1835
      %v1842 = vadd.f32 %v1601, %v1841
      %v1843 = vadd.f32 %v1602, %v1838
      %v1844 = vsel %vm330, %v1842, 0.0
      %v1845 = vsel %vm330, %v1843, 0.0
      %v1846 = vadd.f32 %v1844, %v1845
      %1847 = vadd.xlane.f32.xlu0 %v1846
      %v1848 = vpop.xlane.xlu0 %1847
      %v1849 = vmul.f32 %v1848, 0.00390625
      %v1850 = vsub.f32 %v1842, %v1849
      %v1851 = vsub.f32 %v1843, %v1849
      %v1852 = vmul.f32 %v1850, %v1850
      %v1853 = vmul.f32 %v1851, %v1851
      %v1854 = vsel %vm330, %v1852, 0.0
      %v1855 = vsel %vm330, %v1853, 0.0
      %v1856 = vadd.f32 %v1854, %v1855
      %1857 = vadd.xlane.f32.xlu0 %v1856
      %v1858 = vpop.xlane.xlu0 %1857
      %v1859 = vmul.f32 %v1858, 0.00390625
      %v1860 = vadd.f32 %v1859, 1e-05
      %v1861 = vrsqrt.pop %v1860
      %v1862 = vmul.f32 %v1850, %v1861
      %v1863 = vmul.f32 %v1851, %v1861
      %v1864 = vmax.f32 %v1862, 0.0
      %v1865 = vmax.f32 %v1863, 0.0
      %v1868 = vcombine.low %v1864, %v1865
      %v1870 = vunpack.c.l.s4 1983009808
      %v1871 = vunpack.c.0.s8 %v1870
      %v1872 = vlaneseq
      %v1873 = vshrl.u32 %v1872, 7
      %v1874 = vsub.s32 %v1871, %v1873
      %v1875 = vrot.slane %v1868, %v1874
      %1877 = vst [vmem:[%s251] sm:$0xf] %v1875
      %p1878 = scmp.lt.s32.totalorder %s17, 1
      %s1879 = scalar_select %p1878, %s17, 1
      %s1880 = smul.addr %s1879, 2
      %s1881 = smul.addr %s1880, 2
      %s1882 = scalar_lea.vmem %s6, %s1881
      // Predicated region
      $region45: #{grouped_xnet_down.4} parent=43 // pred_check
        %p1883 = pneg %p166
      $region46: #{grouped_xnet_down.4} parent=43 // pred_check_branch
        %1885 = sbr.rel (%p1883) target = $region48
      $region47: #{grouped_xnet_down.4} parent=43 // pred_region
        _
      $region48: #{grouped_xnet_down.4} parent=43 // pred_fallthru
        _
    $region44: #{grouped_xnet_down.4} parent=5 // pred_fallthru
      _
    %p1886 = scmp.le.s32.totalorder 2, %s12
    // Predicated region
    $region49: #{grouped_xnet_down.4} parent=5 // pred_check
      %p1887 = pneg %p1886
    $region50: #{grouped_xnet_down.4} parent=5 // pred_check_branch
      %1889 = sbr.rel (%p1887) target = $region52
    $region51: #{grouped_xnet_down.4} parent=5 // pred_region
      %s1890 = ssub.s32 %s12, 2
      // Predicated region
      $region53: #{grouped_xnet_down.4} parent=51 // pred_check
        %p1891 = pneg %p172
      $region54: #{grouped_xnet_down.4} parent=51 // pred_check_branch
        %1893 = sbr.rel (%p1891) target = $region56
      $region55: #{grouped_xnet_down.4} parent=51 // pred_region
        %p1894 = scmp.lt.s32.totalorder %s18, 1
        %s1895 = scalar_select %p1894, %s18, 1
        %s1896 = smul.addr %s1895, 2
        %s1897 = smul.addr %s1896, 2
        %s1898 = scalar_lea.vmem %s6, %s1897
      $region56: #{grouped_xnet_down.4} parent=51 // pred_fallthru
        _
    $region52: #{grouped_xnet_down.4} parent=5 // pred_fallthru
      _
  $region6: #{grouped_xnet_down.4} parent=0 // loop_footer
    %s16 = sadd.s32 1, %s12
  $region7: #{grouped_xnet_down.4} parent=0 // loop_footer_branch
    %11 = sbr.rel target = $region3
  $region8: #{grouped_xnet_down.4} parent=0 // loop_exit
    _

// kernel: grouped_xnet_down.5
$region0: #{grouped_xnet_down.5}
  #allocation0 [shape = 'u32[]', space=smem, size = 0x4, offset = 0x4, fixed_abs, tag = 'smem constant byte address 0x4 - core index']
  #allocation1 [shape = 'u32[144,128]{1,0:T(1,128)}', space=vmem, size = 0x12000, scoped, tag = 'internal scratch']
  %s0 = inlined_call_operand.vmem [shape: f32[2,2,64], index: 0, kind: input, shape index: {}]
  %s1 = inlined_call_operand.vmem [shape: f32[9,4,2], index: 1, kind: input, shape index: {}]
  %s2 = inlined_call_operand.vmem [shape: f32[4,1], index: 2, kind: input, shape index: {}]
  %s3 = inlined_call_operand.vmem [shape: f32[9,4,4], index: 3, kind: input, shape index: {}]
  %s4 = inlined_call_operand.vmem [shape: f32[4,1], index: 4, kind: input, shape index: {}]
  %s5 = inlined_call_operand.vmem [shape: f32[2,64], index: 5, kind: input, shape index: {}]
  %s6 = inlined_call_operand.vmem [shape: f32[2,4,64], index: 6, kind: output, shape index: {}]
  %s7 = sld [smem:[#allocation0]]
  $region57: #{grouped_xnet_down.5} parent=0
    _
  %s9 = ssub.s32 1, %s7
  %s10 = scalar_select 0, %s9, %s7
  loop: start=0, step=1, limit=4
  $region2: #{grouped_xnet_down.5} parent=0 // loop_pre_header
    _
  $region3: #{grouped_xnet_down.5} parent=0 // loop_header
    %s12 = sphi 0, %s16
    %p13 = scmp.ge.s32.totalorder %s12, 4
    %s22 = sphi 0, %s24
    %s25 = sphi 0, %s22
    %s26 = sphi 0, %s25
    %s42 = sphi 0, %s26
    %s46 = sphi 0, %s46
    %s48 = sphi 0, %s46
    %s49 = sphi 0, %s48
    %s63 = sphi 0, %s49
    %s67 = sphi 0, %s67
    %s69 = sphi 0, %s67
    %s70 = sphi 0, %s69
    %s84 = sphi 0, %s70
    %s88 = sphi 0, %s88
    %s90 = sphi 0, %s88
    %s91 = sphi 0, %s90
    %s105 = sphi 0, %s91
    %s109 = sphi 0, %s109
    %s111 = sphi 0, %s109
    %s112 = sphi 0, %s111
    %s126 = sphi 0, %s112
    %s130 = sphi 0, %s130
    %s132 = sphi 0, %s130
    %s133 = sphi 0, %s132
    %s147 = sphi 0, %s133
    %s153 = sphi 0, %s155
    %s156 = sphi 0, %s153
    %s157 = sphi 0, %s156
    %s173 = sphi 0, %s157
  $region4: #{grouped_xnet_down.5} parent=0 // loop_header_branch
    %15 = sbr.rel (%p13) target = $region8
  $region5: #{grouped_xnet_down.5} parent=0 // loop_body
    %s17 = ssub.s32 %s12, 1
    %s18 = ssub.s32 %s12, 2
    %s19 = sadd.s32 %s12, 1
    %s20 = ssub.s32 %s12, %s19
    %p21 = scmp.eq.s32.totalorder %s20, 0
    %s23 = sadd.s32 %s22, 1
    %s24 = scalar_select %p21, %s22, %s23
    %p27 = pneg %p21
    %p28 = scmp.eq.s32.totalorder %s12, 1
    %p29 = por %p27, %p28
    %p30 = scmp.ne.s32.totalorder %s22, %s25
    %p31 = scmp.eq.s32.totalorder %s12, 0
    %p32 = por %p30, %p31
    %p33 = scmp.ne.s32.totalorder %s22, %s25
    %p34 = scmp.eq.s32.totalorder %s17, 1
    %p35 = por %p33, %p34
    %p36 = scmp.ne.s32.totalorder %s25, %s26
    %p37 = scmp.eq.s32.totalorder %s17, 0
    %p38 = por %p36, %p37
    %p39 = scmp.ne.s32.totalorder %s25, %s26
    %p40 = scmp.eq.s32.totalorder %s18, 1
    %p41 = por %p39, %p40
    %p43 = scmp.ne.s32.totalorder %s26, %s42
    %p44 = scmp.eq.s32.totalorder %s18, 0
    %p45 = por %p43, %p44
    %s47 = sadd.s32 %s46, 1
    %p50 = scmp.eq.s32.totalorder %s12, 1
    %p51 = scmp.ne.s32.totalorder %s46, %s48
    %p52 = scmp.eq.s32.totalorder %s12, 0
    %p53 = por %p51, %p52
    %p54 = scmp.ne.s32.totalorder %s46, %s48
    %p55 = scmp.eq.s32.totalorder %s17, 1
    %p56 = por %p54, %p55
    %p57 = scmp.ne.s32.totalorder %s48, %s49
    %p58 = scmp.eq.s32.totalorder %s17, 0
    %p59 = por %p57, %p58
    %p60 = scmp.ne.s32.totalorder %s48, %s49
    %p61 = scmp.eq.s32.totalorder %s18, 1
    %p62 = por %p60, %p61
    %p64 = scmp.ne.s32.totalorder %s49, %s63
    %p65 = scmp.eq.s32.totalorder %s18, 0
    %p66 = por %p64, %p65
    %s68 = sadd.s32 %s67, 1
    %p71 = scmp.eq.s32.totalorder %s12, 1
    %p72 = scmp.ne.s32.totalorder %s67, %s69
    %p73 = scmp.eq.s32.totalorder %s12, 0
    %p74 = por %p72, %p73
    %p75 = scmp.ne.s32.totalorder %s67, %s69
    %p76 = scmp.eq.s32.totalorder %s17, 1
    %p77 = por %p75, %p76
    %p78 = scmp.ne.s32.totalorder %s69, %s70
    %p79 = scmp.eq.s32.totalorder %s17, 0
    %p80 = por %p78, %p79
    %p81 = scmp.ne.s32.totalorder %s69, %s70
    %p82 = scmp.eq.s32.totalorder %s18, 1
    %p83 = por %p81, %p82
    %p85 = scmp.ne.s32.totalorder %s70, %s84
    %p86 = scmp.eq.s32.totalorder %s18, 0
    %p87 = por %p85, %p86
    %s89 = sadd.s32 %s88, 1
    %p92 = scmp.eq.s32.totalorder %s12, 1
    %p93 = scmp.ne.s32.totalorder %s88, %s90
    %p94 = scmp.eq.s32.totalorder %s12, 0
    %p95 = por %p93, %p94
    %p96 = scmp.ne.s32.totalorder %s88, %s90
    %p97 = scmp.eq.s32.totalorder %s17, 1
    %p98 = por %p96, %p97
    %p99 = scmp.ne.s32.totalorder %s90, %s91
    %p100 = scmp.eq.s32.totalorder %s17, 0
    %p101 = por %p99, %p100
    %p102 = scmp.ne.s32.totalorder %s90, %s91
    %p103 = scmp.eq.s32.totalorder %s18, 1
    %p104 = por %p102, %p103
    %p106 = scmp.ne.s32.totalorder %s91, %s105
    %p107 = scmp.eq.s32.totalorder %s18, 0
    %p108 = por %p106, %p107
    %s110 = sadd.s32 %s109, 1
    %p113 = scmp.eq.s32.totalorder %s12, 1
    %p114 = scmp.ne.s32.totalorder %s109, %s111
    %p115 = scmp.eq.s32.totalorder %s12, 0
    %p116 = por %p114, %p115
    %p117 = scmp.ne.s32.totalorder %s109, %s111
    %p118 = scmp.eq.s32.totalorder %s17, 1
    %p119 = por %p117, %p118
    %p120 = scmp.ne.s32.totalorder %s111, %s112
    %p121 = scmp.eq.s32.totalorder %s17, 0
    %p122 = por %p120, %p121
    %p123 = scmp.ne.s32.totalorder %s111, %s112
    %p124 = scmp.eq.s32.totalorder %s18, 1
    %p125 = por %p123, %p124
    %p127 = scmp.ne.s32.totalorder %s112, %s126
    %p128 = scmp.eq.s32.totalorder %s18, 0
    %p129 = por %p127, %p128
    %s131 = sadd.s32 %s130, 1
    %p134 = scmp.eq.s32.totalorder %s12, 1
    %p135 = scmp.ne.s32.totalorder %s130, %s132
    %p136 = scmp.eq.s32.totalorder %s12, 0
    %p137 = por %p135, %p136
    %p138 = scmp.ne.s32.totalorder %s130, %s132
    %p139 = scmp.eq.s32.totalorder %s17, 1
    %p140 = por %p138, %p139
    %p141 = scmp.ne.s32.totalorder %s132, %s133
    %p142 = scmp.eq.s32.totalorder %s17, 0
    %p143 = por %p141, %p142
    %p144 = scmp.ne.s32.totalorder %s132, %s133
    %p145 = scmp.eq.s32.totalorder %s18, 1
    %p146 = por %p144, %p145
    %p148 = scmp.ne.s32.totalorder %s133, %s147
    %p149 = scmp.eq.s32.totalorder %s18, 0
    %p150 = por %p148, %p149
    %s151 = ssub.s32 %s12, %s19
    %p152 = scmp.eq.s32.totalorder %s151, 0
    %s154 = sadd.s32 %s153, 1
    %s155 = scalar_select %p152, %s153, %s154
    %p158 = pneg %p152
    %p159 = scmp.eq.s32.totalorder %s12, 1
    %p160 = por %p158, %p159
    %p161 = scmp.ne.s32.totalorder %s153, %s156
    %p162 = scmp.eq.s32.totalorder %s12, 0
    %p163 = por %p161, %p162
    %p164 = scmp.ne.s32.totalorder %s153, %s156
    %p165 = scmp.eq.s32.totalorder %s17, 1
    %p166 = por %p164, %p165
    %p167 = scmp.ne.s32.totalorder %s156, %s157
    %p168 = scmp.eq.s32.totalorder %s17, 0
    %p169 = por %p167, %p168
    %p170 = scmp.ne.s32.totalorder %s156, %s157
    %p171 = scmp.eq.s32.totalorder %s18, 1
    %p172 = por %p170, %p171
    %p174 = scmp.ne.s32.totalorder %s157, %s173
    %p175 = scmp.eq.s32.totalorder %s18, 0
    %p176 = por %p174, %p175
    %p177 = scmp.le.s32.totalorder 1, %s12
    %p178 = scmp.lt.s32.totalorder %s12, 3
    %p179 = pnand %p177, %p178
    %p180 = pneg %p179
    // Predicated region
    $region9: #{grouped_xnet_down.5} parent=5 // pred_check
      _
    $region10: #{grouped_xnet_down.5} parent=5 // pred_check_branch
      %182 = sbr.rel (%p179) target = $region12
    $region11: #{grouped_xnet_down.5} parent=5 // pred_region
      %s183 = ssub.s32 %s12, 1
      // Predicated region
      $region13: #{grouped_xnet_down.5} parent=11 // pred_check
        %p184 = pneg %p59
      $region14: #{grouped_xnet_down.5} parent=11 // pred_check_branch
        %186 = sbr.rel (%p184) target = $region16
      $region15: #{grouped_xnet_down.5} parent=11 // pred_region
        _
      $region16: #{grouped_xnet_down.5} parent=11 // pred_fallthru
        _
      // Predicated region
      $region17: #{grouped_xnet_down.5} parent=11 // pred_check
        %p187 = pneg %p80
      $region18: #{grouped_xnet_down.5} parent=11 // pred_check_branch
        %189 = sbr.rel (%p187) target = $region20
      $region19: #{grouped_xnet_down.5} parent=11 // pred_region
        _
      $region20: #{grouped_xnet_down.5} parent=11 // pred_fallthru
        _
      // Predicated region
      $region21: #{grouped_xnet_down.5} parent=11 // pred_check
        %p190 = pneg %p101
      $region22: #{grouped_xnet_down.5} parent=11 // pred_check_branch
        %192 = sbr.rel (%p190) target = $region24
      $region23: #{grouped_xnet_down.5} parent=11 // pred_region
        _
      $region24: #{grouped_xnet_down.5} parent=11 // pred_fallthru
        _
      // Predicated region
      $region25: #{grouped_xnet_down.5} parent=11 // pred_check
        %p193 = pneg %p122
      $region26: #{grouped_xnet_down.5} parent=11 // pred_check_branch
        %195 = sbr.rel (%p193) target = $region28
      $region27: #{grouped_xnet_down.5} parent=11 // pred_region
        _
      $region28: #{grouped_xnet_down.5} parent=11 // pred_fallthru
        _
      // Predicated region
      $region29: #{grouped_xnet_down.5} parent=11 // pred_check
        %p196 = pneg %p143
      $region30: #{grouped_xnet_down.5} parent=11 // pred_check_branch
        %198 = sbr.rel (%p196) target = $region32
      $region31: #{grouped_xnet_down.5} parent=11 // pred_region
        _
      $region32: #{grouped_xnet_down.5} parent=11 // pred_fallthru
        _
    $region12: #{grouped_xnet_down.5} parent=5 // pred_fallthru
      _
    %p199 = scmp.lt.s32.totalorder %s12, 2
    // Predicated region
    $region33: #{grouped_xnet_down.5} parent=5 // pred_check
      %p200 = pneg %p199
    $region34: #{grouped_xnet_down.5} parent=5 // pred_check_branch
      %202 = sbr.rel (%p200) target = $region36
    $region35: #{grouped_xnet_down.5} parent=5 // pred_region
      // Predicated region
      $region37: #{grouped_xnet_down.5} parent=35 // pred_check
        %p203 = pneg %p32
      $region38: #{grouped_xnet_down.5} parent=35 // pred_check_branch
        %205 = sbr.rel (%p203) target = $region40
      $region39: #{grouped_xnet_down.5} parent=35 // pred_region
        %p206 = scmp.lt.s32.totalorder %s12, 1
        %s207 = scalar_select %p206, %s12, 1
        %s208 = smul.addr %s207, 2
        %s209 = scalar_lea.vmem %s0, %s208
      $region40: #{grouped_xnet_down.5} parent=35 // pred_fallthru
        _
    $region36: #{grouped_xnet_down.5} parent=5 // pred_fallthru
      _
    %p210 = scmp.le.s32.totalorder 1, %s12
    %p211 = scmp.lt.s32.totalorder %s12, 3
    %p212 = pnand %p210, %p211
    %p213 = pneg %p212
    // Predicated region
    $region41: #{grouped_xnet_down.5} parent=5 // pred_check
      _
    $region42: #{grouped_xnet_down.5} parent=5 // pred_check_branch
      %215 = sbr.rel (%p212) target = $region44
    $region43: #{grouped_xnet_down.5} parent=5 // pred_region
      %s216 = ssub.s32 %s12, 1
      %p217 = scmp.lt.s32.totalorder %s17, 1
      %s218 = scalar_select %p217, %s17, 1
      %s219 = smul.addr %s218, 2
      %s220 = scalar_lea.vmem %s0, %s219
      %p221 = pneg %p38
      %p222 = pneg %p35
      %p223 = pneg %p59
      %p224 = pneg %p56
      %p225 = pneg %p80
      %p226 = pneg %p77
      %p227 = pneg %p101
      %p228 = pneg %p98
      %p229 = pneg %p122
      %p230 = pneg %p119
      %p231 = pneg %p143
      %p232 = pneg %p140
      %p233 = pneg %p169
      %p234 = pneg %p166
      %p235 = scmp.lt.s32.totalorder %s17, 1
      %s236 = scalar_select %p235, %s17, 1
      %s237 = smul.addr %s236, 4
      %s238 = scalar_lea.vmem %s6, %s237
      %p239 = scmp.lt.s32.totalorder %s17, 1
      %s240 = scalar_select %p239, %s17, 1
      %s241 = smul.addr %s240, 2
      %s242 = scalar_lea.vmem %s0, %s241
      %p243 = scmp.lt.s32.totalorder %s17, 1
      %s244 = scalar_select %p243, %s17, 1
      %s245 = smul.addr %s244, 4
      %s246 = scalar_lea.vmem %s6, %s245
      %v247 = vld [vmem:[%s5] sm:$0x3]
      %v248 = vld [vmem:[%s242] sm:$0x3]
      %250 = vrot.lane.b32.xlu0 %v248, 1
      %v251 = vpop.permute.xlu0 %250
      %vm253 = vcmask 7168
      %v254 = vsel %vm253, 0.0, %v251
      %v255 = vlaneseq
      %v256 = vshrl.u32 %v255, 7
      %v257 = vsub.s32 0, %v256
      %v258 = vrot.slane %v247, %v257
      %v259 = vmul.f32 %v254, %v258
      %260 = vrot.lane.b32.xlu0 %v248, 127
      %v261 = vpop.permute.xlu0 %260
      %vm263 = vcmask 515072
      %v264 = vsel %vm263, %v261, 0.0
      %v265 = vlaneseq
      %v266 = vshrl.u32 %v265, 7
      %v267 = vsub.s32 1, %v266
      %v268 = vrot.slane %v247, %v267
      %v269 = vmul.f32 %v264, %v268
      %s270 = scalar_lea.vmem %s1, 12
      %v271 = vld [vmem:[%s270] sm:$0xf]
      %s272 = scalar_lea.vmem %s1, 16
      %v273 = vld [vmem:[%s272] sm:$0xf]
      %vm274 = vcmask 15360
      %v276 = vsel %vm274, %v273, 0
      %vm278 = vcmask 1041408
      %v279 = vsel %vm278, %v248, 0
      %281 = vmatprep.subr.mxu0 0.0
      %282 = vmatpush1.msra.mxu0 0.0
      %283 = vmatprep.subr.mxu0 0.0
      %284 = vmatpush1.msra.mxu0 0.0
      %285 = vmatprep.subr.mxu0 0.0
      %286 = vmatpush1.msra.mxu0 0.0
      %287 = vmatprep.subr.mxu0 0.0
      %288 = vmatpush1.msra.mxu0 0.0
      %289 = vmatprep.subr.mxu0 0.0
      %290 = vmatpush1.msra.mxu0 0.0
      %291 = vmatprep.subr.mxu0 0.0
      %292 = vmatpush1.msra.mxu0 0.0
      %293 = vmatprep.subr.mxu0 0.0
      %294 = vmatpush1.msra.mxu0 0.0
      %295 = vmatprep.subr.mxu0 0.0
      %296 = vmatpush1.msra.mxu0 0.0
      %297 = vmatprep.subr.mxu0 0.0
      %298 = vmatpush1.msra.mxu0 0.0
      %299 = vmatprep.subr.mxu0 0.0
      %300 = vmatpush1.msra.mxu0 0.0
      %301 = vmatprep.subr.mxu0 0.0
      %302 = vmatpush1.msra.mxu0 0.0
      %303 = vmatprep.subr.mxu0 0.0
      %304 = vmatpush1.msra.mxu0 0.0
      %305 = vmatprep.subr.mxu0 0.0
      %306 = vmatpush1.msra.mxu0 0.0
      %307 = vmatprep.subr.mxu0 0.0
      %308 = vmatpush1.msra.mxu0 0.0
      %309 = vmatprep.subr.mxu0 0.0
      %310 = vmatpush1.msra.mxu0 0.0
      %311 = vmatprep.subr.mxu0 0.0
      %312 = vmatpush1.msra.mxu0 %v279
      %313 = vmatprep.subr.mxu0 0.0
      %314 = vmatpush2.msra.mxu0 0.0
      %315 = vmatprep.subr.mxu0 0.0
      %316 = vmatpush2.msra.mxu0 0.0
      %317 = vmatprep.subr.mxu0 0.0
      %318 = vmatpush2.msra.mxu0 0.0
      %319 = vmatprep.subr.mxu0 0.0
      %320 = vmatpush2.msra.mxu0 0.0
      %321 = vmatprep.subr.mxu0 0.0
      %322 = vmatpush2.msra.mxu0 0.0
      %323 = vmatprep.subr.mxu0 0.0
      %324 = vmatpush2.msra.mxu0 0.0
      %325 = vmatprep.subr.mxu0 0.0
      %326 = vmatpush2.msra.mxu0 0.0
      %327 = vmatprep.subr.mxu0 0.0
      %328 = vmatpush2.msra.mxu0 0.0
      %329 = vmatprep.subr.mxu0 0.0
      %330 = vmatpush2.msra.mxu0 0.0
      %331 = vmatprep.subr.mxu0 0.0
      %332 = vmatpush2.msra.mxu0 0.0
      %333 = vmatprep.subr.mxu0 0.0
      %334 = vmatpush2.msra.mxu0 0.0
      %335 = vmatprep.subr.mxu0 0.0
      %336 = vmatpush2.msra.mxu0 0.0
      %337 = vmatprep.subr.mxu0 0.0
      %338 = vmatpush2.msra.mxu0 0.0
      %339 = vmatprep.subr.mxu0 0.0
      %340 = vmatpush2.msra.mxu0 0.0
      %341 = vmatprep.subr.mxu0 0.0
      %342 = vmatpush2.msra.mxu0 0.0
      %343 = vmatprep.subr.mxu0 0.0
      %344 = vmatpush2.msra.mxu0 0.0
      %345 = vmatprep.mubr.f32.mxu0 0.0
      %346 = vmatmul.mubr.f32.gmra.mxu0 %v276
      %v347 = vpop.f32.mrf.mxu0
      %v348 = vadd.f32 0.0, %v347
      %v349 = vpop.f32.mrf.mxu0
      %350 = vdwg.mxu0
      %v352 = vsel %vm274, %v271, 0
      %v355 = vsel %vm278, %v259, 0
      %357 = vmatprep.subr.mxu0 0.0
      %358 = vmatpush1.msra.mxu0 0.0
      %359 = vmatprep.subr.mxu0 0.0
      %360 = vmatpush1.msra.mxu0 0.0
      %361 = vmatprep.subr.mxu0 0.0
      %362 = vmatpush1.msra.mxu0 0.0
      %363 = vmatprep.subr.mxu0 0.0
      %364 = vmatpush1.msra.mxu0 0.0
      %365 = vmatprep.subr.mxu0 0.0
      %366 = vmatpush1.msra.mxu0 0.0
      %367 = vmatprep.subr.mxu0 0.0
      %368 = vmatpush1.msra.mxu0 0.0
      %369 = vmatprep.subr.mxu0 0.0
      %370 = vmatpush1.msra.mxu0 0.0
      %371 = vmatprep.subr.mxu0 0.0
      %372 = vmatpush1.msra.mxu0 0.0
      %373 = vmatprep.subr.mxu0 0.0
      %374 = vmatpush1.msra.mxu0 0.0
      %375 = vmatprep.subr.mxu0 0.0
      %376 = vmatpush1.msra.mxu0 0.0
      %377 = vmatprep.subr.mxu0 0.0
      %378 = vmatpush1.msra.mxu0 0.0
      %379 = vmatprep.subr.mxu0 0.0
      %380 = vmatpush1.msra.mxu0 0.0
      %381 = vmatprep.subr.mxu0 0.0
      %382 = vmatpush1.msra.mxu0 0.0
      %383 = vmatprep.subr.mxu0 0.0
      %384 = vmatpush1.msra.mxu0 0.0
      %385 = vmatprep.subr.mxu0 0.0
      %386 = vmatpush1.msra.mxu0 0.0
      %387 = vmatprep.subr.mxu0 0.0
      %388 = vmatpush1.msra.mxu0 %v355
      %389 = vmatprep.subr.mxu0 0.0
      %390 = vmatpush2.msra.mxu0 0.0
      %391 = vmatprep.subr.mxu0 0.0
      %392 = vmatpush2.msra.mxu0 0.0
      %393 = vmatprep.subr.mxu0 0.0
      %394 = vmatpush2.msra.mxu0 0.0
      %395 = vmatprep.subr.mxu0 0.0
      %396 = vmatpush2.msra.mxu0 0.0
      %397 = vmatprep.subr.mxu0 0.0
      %398 = vmatpush2.msra.mxu0 0.0
      %399 = vmatprep.subr.mxu0 0.0
      %400 = vmatpush2.msra.mxu0 0.0
      %401 = vmatprep.subr.mxu0 0.0
      %402 = vmatpush2.msra.mxu0 0.0
      %403 = vmatprep.subr.mxu0 0.0
      %404 = vmatpush2.msra.mxu0 0.0
      %405 = vmatprep.subr.mxu0 0.0
      %406 = vmatpush2.msra.mxu0 0.0
      %407 = vmatprep.subr.mxu0 0.0
      %408 = vmatpush2.msra.mxu0 0.0
      %409 = vmatprep.subr.mxu0 0.0
      %410 = vmatpush2.msra.mxu0 0.0
      %411 = vmatprep.subr.mxu0 0.0
      %412 = vmatpush2.msra.mxu0 0.0
      %413 = vmatprep.subr.mxu0 0.0
      %414 = vmatpush2.msra.mxu0 0.0
      %415 = vmatprep.subr.mxu0 0.0
      %416 = vmatpush2.msra.mxu0 0.0
      %417 = vmatprep.subr.mxu0 0.0
      %418 = vmatpush2.msra.mxu0 0.0
      %419 = vmatprep.subr.mxu0 0.0
      %420 = vmatpush2.msra.mxu0 0.0
      %421 = vmatprep.mubr.f32.mxu0 0.0
      %422 = vmatmul.mubr.f32.gmra.mxu0 %v352
      %v423 = vpop.f32.mrf.mxu0
      %v424 = vadd.f32 %v348, %v423
      %v425 = vpop.f32.mrf.mxu0
      %426 = vdwg.mxu0
      %s427 = scalar_lea.vmem %s1, 20
      %v428 = vld [vmem:[%s427] sm:$0xf]
      %v430 = vsel %vm274, %v428, 0
      %v433 = vsel %vm278, %v269, 0
      %435 = vmatprep.subr.mxu0 0.0
      %436 = vmatpush1.msra.mxu0 0.0
      %437 = vmatprep.subr.mxu0 0.0
      %438 = vmatpush1.msra.mxu0 0.0
      %439 = vmatprep.subr.mxu0 0.0
      %440 = vmatpush1.msra.mxu0 0.0
      %441 = vmatprep.subr.mxu0 0.0
      %442 = vmatpush1.msra.mxu0 0.0
      %443 = vmatprep.subr.mxu0 0.0
      %444 = vmatpush1.msra.mxu0 0.0
      %445 = vmatprep.subr.mxu0 0.0
      %446 = vmatpush1.msra.mxu0 0.0
      %447 = vmatprep.subr.mxu0 0.0
      %448 = vmatpush1.msra.mxu0 0.0
      %449 = vmatprep.subr.mxu0 0.0
      %450 = vmatpush1.msra.mxu0 0.0
      %451 = vmatprep.subr.mxu0 0.0
      %452 = vmatpush1.msra.mxu0 0.0
      %453 = vmatprep.subr.mxu0 0.0
      %454 = vmatpush1.msra.mxu0 0.0
      %455 = vmatprep.subr.mxu0 0.0
      %456 = vmatpush1.msra.mxu0 0.0
      %457 = vmatprep.subr.mxu0 0.0
      %458 = vmatpush1.msra.mxu0 0.0
      %459 = vmatprep.subr.mxu0 0.0
      %460 = vmatpush1.msra.mxu0 0.0
      %461 = vmatprep.subr.mxu0 0.0
      %462 = vmatpush1.msra.mxu0 0.0
      %463 = vmatprep.subr.mxu0 0.0
      %464 = vmatpush1.msra.mxu0 0.0
      %465 = vmatprep.subr.mxu0 0.0
      %466 = vmatpush1.msra.mxu0 %v433
      %467 = vmatprep.subr.mxu0 0.0
      %468 = vmatpush2.msra.mxu0 0.0
      %469 = vmatprep.subr.mxu0 0.0
      %470 = vmatpush2.msra.mxu0 0.0
      %471 = vmatprep.subr.mxu0 0.0
      %472 = vmatpush2.msra.mxu0 0.0
      %473 = vmatprep.subr.mxu0 0.0
      %474 = vmatpush2.msra.mxu0 0.0
      %475 = vmatprep.subr.mxu0 0.0
      %476 = vmatpush2.msra.mxu0 0.0
      %477 = vmatprep.subr.mxu0 0.0
      %478 = vmatpush2.msra.mxu0 0.0
      %479 = vmatprep.subr.mxu0 0.0
      %480 = vmatpush2.msra.mxu0 0.0
      %481 = vmatprep.subr.mxu0 0.0
      %482 = vmatpush2.msra.mxu0 0.0
      %483 = vmatprep.subr.mxu0 0.0
      %484 = vmatpush2.msra.mxu0 0.0
      %485 = vmatprep.subr.mxu0 0.0
      %486 = vmatpush2.msra.mxu0 0.0
      %487 = vmatprep.subr.mxu0 0.0
      %488 = vmatpush2.msra.mxu0 0.0
      %489 = vmatprep.subr.mxu0 0.0
      %490 = vmatpush2.msra.mxu0 0.0
      %491 = vmatprep.subr.mxu0 0.0
      %492 = vmatpush2.msra.mxu0 0.0
      %493 = vmatprep.subr.mxu0 0.0
      %494 = vmatpush2.msra.mxu0 0.0
      %495 = vmatprep.subr.mxu0 0.0
      %496 = vmatpush2.msra.mxu0 0.0
      %497 = vmatprep.subr.mxu0 0.0
      %498 = vmatpush2.msra.mxu0 0.0
      %499 = vmatprep.mubr.f32.mxu0 0.0
      %500 = vmatmul.mubr.f32.gmra.mxu0 %v430
      %v501 = vpop.f32.mrf.mxu0
      %v502 = vadd.f32 0.0, %v501
      %v503 = vpop.f32.mrf.mxu0
      %504 = vdwg.mxu0
      %v505 = vadd.f32 %v424, %v502
      %v506 = vld [vmem:[%s2] sm:$0xf]
      %508 = vset.pattern.permute.xlu0 0
      %509 = vperm.xlu0 %508, %v506
      %v510 = vpop.permute.xlu0 %509
      %v512 = vadd.f32 %v505, %v510
      %s513 = scalar_lea.vmem %s1, 24
      %v514 = vld [vmem:[%s513] sm:$0xf]
      %s515 = scalar_lea.vmem %s1, 28
      %v516 = vld [vmem:[%s515] sm:$0xf]
      %v518 = vsel %vm274, %v516, 0
      %520 = vmatprep.subr.mxu0 0.0
      %521 = vmatpush1.msra.mxu0 0.0
      %522 = vmatprep.subr.mxu0 0.0
      %523 = vmatpush1.msra.mxu0 0.0
      %524 = vmatprep.subr.mxu0 0.0
      %525 = vmatpush1.msra.mxu0 0.0
      %526 = vmatprep.subr.mxu0 0.0
      %527 = vmatpush1.msra.mxu0 0.0
      %528 = vmatprep.subr.mxu0 0.0
      %529 = vmatpush1.msra.mxu0 0.0
      %530 = vmatprep.subr.mxu0 0.0
      %531 = vmatpush1.msra.mxu0 0.0
      %532 = vmatprep.subr.mxu0 0.0
      %533 = vmatpush1.msra.mxu0 0.0
      %534 = vmatprep.subr.mxu0 0.0
      %535 = vmatpush1.msra.mxu0 0.0
      %536 = vmatprep.subr.mxu0 0.0
      %537 = vmatpush1.msra.mxu0 0.0
      %538 = vmatprep.subr.mxu0 0.0
      %539 = vmatpush1.msra.mxu0 0.0
      %540 = vmatprep.subr.mxu0 0.0
      %541 = vmatpush1.msra.mxu0 0.0
      %542 = vmatprep.subr.mxu0 0.0
      %543 = vmatpush1.msra.mxu0 0.0
      %544 = vmatprep.subr.mxu0 0.0
      %545 = vmatpush1.msra.mxu0 0.0
      %546 = vmatprep.subr.mxu0 0.0
      %547 = vmatpush1.msra.mxu0 0.0
      %548 = vmatprep.subr.mxu0 0.0
      %549 = vmatpush1.msra.mxu0 0.0
      %550 = vmatprep.subr.mxu0 0.0
      %551 = vmatpush1.msra.mxu0 %v279
      %552 = vmatprep.subr.mxu0 0.0
      %553 = vmatpush2.msra.mxu0 0.0
      %554 = vmatprep.subr.mxu0 0.0
      %555 = vmatpush2.msra.mxu0 0.0
      %556 = vmatprep.subr.mxu0 0.0
      %557 = vmatpush2.msra.mxu0 0.0
      %558 = vmatprep.subr.mxu0 0.0
      %559 = vmatpush2.msra.mxu0 0.0
      %560 = vmatprep.subr.mxu0 0.0
      %561 = vmatpush2.msra.mxu0 0.0
      %562 = vmatprep.subr.mxu0 0.0
      %563 = vmatpush2.msra.mxu0 0.0
      %564 = vmatprep.subr.mxu0 0.0
      %565 = vmatpush2.msra.mxu0 0.0
      %566 = vmatprep.subr.mxu0 0.0
      %567 = vmatpush2.msra.mxu0 0.0
      %568 = vmatprep.subr.mxu0 0.0
      %569 = vmatpush2.msra.mxu0 0.0
      %570 = vmatprep.subr.mxu0 0.0
      %571 = vmatpush2.msra.mxu0 0.0
      %572 = vmatprep.subr.mxu0 0.0
      %573 = vmatpush2.msra.mxu0 0.0
      %574 = vmatprep.subr.mxu0 0.0
      %575 = vmatpush2.msra.mxu0 0.0
      %576 = vmatprep.subr.mxu0 0.0
      %577 = vmatpush2.msra.mxu0 0.0
      %578 = vmatprep.subr.mxu0 0.0
      %579 = vmatpush2.msra.mxu0 0.0
      %580 = vmatprep.subr.mxu0 0.0
      %581 = vmatpush2.msra.mxu0 0.0
      %582 = vmatprep.subr.mxu0 0.0
      %583 = vmatpush2.msra.mxu0 0.0
      %584 = vmatprep.mubr.f32.mxu0 0.0
      %585 = vmatmul.mubr.f32.gmra.mxu0 %v518
      %v586 = vpop.f32.mrf.mxu0
      %v587 = vadd.f32 0.0, %v586
      %v588 = vpop.f32.mrf.mxu0
      %589 = vdwg.mxu0
      %v591 = vsel %vm274, %v514, 0
      %593 = vmatprep.subr.mxu0 0.0
      %594 = vmatpush1.msra.mxu0 0.0
      %595 = vmatprep.subr.mxu0 0.0
      %596 = vmatpush1.msra.mxu0 0.0
      %597 = vmatprep.subr.mxu0 0.0
      %598 = vmatpush1.msra.mxu0 0.0
      %599 = vmatprep.subr.mxu0 0.0
      %600 = vmatpush1.msra.mxu0 0.0
      %601 = vmatprep.subr.mxu0 0.0
      %602 = vmatpush1.msra.mxu0 0.0
      %603 = vmatprep.subr.mxu0 0.0
      %604 = vmatpush1.msra.mxu0 0.0
      %605 = vmatprep.subr.mxu0 0.0
      %606 = vmatpush1.msra.mxu0 0.0
      %607 = vmatprep.subr.mxu0 0.0
      %608 = vmatpush1.msra.mxu0 0.0
      %609 = vmatprep.subr.mxu0 0.0
      %610 = vmatpush1.msra.mxu0 0.0
      %611 = vmatprep.subr.mxu0 0.0
      %612 = vmatpush1.msra.mxu0 0.0
      %613 = vmatprep.subr.mxu0 0.0
      %614 = vmatpush1.msra.mxu0 0.0
      %615 = vmatprep.subr.mxu0 0.0
      %616 = vmatpush1.msra.mxu0 0.0
      %617 = vmatprep.subr.mxu0 0.0
      %618 = vmatpush1.msra.mxu0 0.0
      %619 = vmatprep.subr.mxu0 0.0
      %620 = vmatpush1.msra.mxu0 0.0
      %621 = vmatprep.subr.mxu0 0.0
      %622 = vmatpush1.msra.mxu0 0.0
      %623 = vmatprep.subr.mxu0 0.0
      %624 = vmatpush1.msra.mxu0 %v355
      %625 = vmatprep.subr.mxu0 0.0
      %626 = vmatpush2.msra.mxu0 0.0
      %627 = vmatprep.subr.mxu0 0.0
      %628 = vmatpush2.msra.mxu0 0.0
      %629 = vmatprep.subr.mxu0 0.0
      %630 = vmatpush2.msra.mxu0 0.0
      %631 = vmatprep.subr.mxu0 0.0
      %632 = vmatpush2.msra.mxu0 0.0
      %633 = vmatprep.subr.mxu0 0.0
      %634 = vmatpush2.msra.mxu0 0.0
      %635 = vmatprep.subr.mxu0 0.0
      %636 = vmatpush2.msra.mxu0 0.0
      %637 = vmatprep.subr.mxu0 0.0
      %638 = vmatpush2.msra.mxu0 0.0
      %639 = vmatprep.subr.mxu0 0.0
      %640 = vmatpush2.msra.mxu0 0.0
      %641 = vmatprep.subr.mxu0 0.0
      %642 = vmatpush2.msra.mxu0 0.0
      %643 = vmatprep.subr.mxu0 0.0
      %644 = vmatpush2.msra.mxu0 0.0
      %645 = vmatprep.subr.mxu0 0.0
      %646 = vmatpush2.msra.mxu0 0.0
      %647 = vmatprep.subr.mxu0 0.0
      %648 = vmatpush2.msra.mxu0 0.0
      %649 = vmatprep.subr.mxu0 0.0
      %650 = vmatpush2.msra.mxu0 0.0
      %651 = vmatprep.subr.mxu0 0.0
      %652 = vmatpush2.msra.mxu0 0.0
      %653 = vmatprep.subr.mxu0 0.0
      %654 = vmatpush2.msra.mxu0 0.0
      %655 = vmatprep.subr.mxu0 0.0
      %656 = vmatpush2.msra.mxu0 0.0
      %657 = vmatprep.mubr.f32.mxu0 0.0
      %658 = vmatmul.mubr.f32.gmra.mxu0 %v591
      %v659 = vpop.f32.mrf.mxu0
      %v660 = vadd.f32 %v587, %v659
      %v661 = vpop.f32.mrf.mxu0
      %662 = vdwg.mxu0
      %s663 = scalar_lea.vmem %s1, 32
      %v664 = vld [vmem:[%s663] sm:$0xf]
      %v666 = vsel %vm274, %v664, 0
      %668 = vmatprep.subr.mxu0 0.0
      %669 = vmatpush1.msra.mxu0 0.0
      %670 = vmatprep.subr.mxu0 0.0
      %671 = vmatpush1.msra.mxu0 0.0
      %672 = vmatprep.subr.mxu0 0.0
      %673 = vmatpush1.msra.mxu0 0.0
      %674 = vmatprep.subr.mxu0 0.0
      %675 = vmatpush1.msra.mxu0 0.0
      %676 = vmatprep.subr.mxu0 0.0
      %677 = vmatpush1.msra.mxu0 0.0
      %678 = vmatprep.subr.mxu0 0.0
      %679 = vmatpush1.msra.mxu0 0.0
      %680 = vmatprep.subr.mxu0 0.0
      %681 = vmatpush1.msra.mxu0 0.0
      %682 = vmatprep.subr.mxu0 0.0
      %683 = vmatpush1.msra.mxu0 0.0
      %684 = vmatprep.subr.mxu0 0.0
      %685 = vmatpush1.msra.mxu0 0.0
      %686 = vmatprep.subr.mxu0 0.0
      %687 = vmatpush1.msra.mxu0 0.0
      %688 = vmatprep.subr.mxu0 0.0
      %689 = vmatpush1.msra.mxu0 0.0
      %690 = vmatprep.subr.mxu0 0.0
      %691 = vmatpush1.msra.mxu0 0.0
      %692 = vmatprep.subr.mxu0 0.0
      %693 = vmatpush1.msra.mxu0 0.0
      %694 = vmatprep.subr.mxu0 0.0
      %695 = vmatpush1.msra.mxu0 0.0
      %696 = vmatprep.subr.mxu0 0.0
      %697 = vmatpush1.msra.mxu0 0.0
      %698 = vmatprep.subr.mxu0 0.0
      %699 = vmatpush1.msra.mxu0 %v433
      %700 = vmatprep.subr.mxu0 0.0
      %701 = vmatpush2.msra.mxu0 0.0
      %702 = vmatprep.subr.mxu0 0.0
      %703 = vmatpush2.msra.mxu0 0.0
      %704 = vmatprep.subr.mxu0 0.0
      %705 = vmatpush2.msra.mxu0 0.0
      %706 = vmatprep.subr.mxu0 0.0
      %707 = vmatpush2.msra.mxu0 0.0
      %708 = vmatprep.subr.mxu0 0.0
      %709 = vmatpush2.msra.mxu0 0.0
      %710 = vmatprep.subr.mxu0 0.0
      %711 = vmatpush2.msra.mxu0 0.0
      %712 = vmatprep.subr.mxu0 0.0
      %713 = vmatpush2.msra.mxu0 0.0
      %714 = vmatprep.subr.mxu0 0.0
      %715 = vmatpush2.msra.mxu0 0.0
      %716 = vmatprep.subr.mxu0 0.0
      %717 = vmatpush2.msra.mxu0 0.0
      %718 = vmatprep.subr.mxu0 0.0
      %719 = vmatpush2.msra.mxu0 0.0
      %720 = vmatprep.subr.mxu0 0.0
      %721 = vmatpush2.msra.mxu0 0.0
      %722 = vmatprep.subr.mxu0 0.0
      %723 = vmatpush2.msra.mxu0 0.0
      %724 = vmatprep.subr.mxu0 0.0
      %725 = vmatpush2.msra.mxu0 0.0
      %726 = vmatprep.subr.mxu0 0.0
      %727 = vmatpush2.msra.mxu0 0.0
      %728 = vmatprep.subr.mxu0 0.0
      %729 = vmatpush2.msra.mxu0 0.0
      %730 = vmatprep.subr.mxu0 0.0
      %731 = vmatpush2.msra.mxu0 0.0
      %732 = vmatprep.mubr.f32.mxu0 0.0
      %733 = vmatmul.mubr.f32.gmra.mxu0 %v666
      %v734 = vpop.f32.mrf.mxu0
      %v735 = vadd.f32 0.0, %v734
      %v736 = vpop.f32.mrf.mxu0
      %737 = vdwg.mxu0
      %v738 = vadd.f32 %v660, %v735
      %740 = vrot.lane.b32.xlu0 %v738, 120
      %v741 = vpop.permute.xlu0 %740
      %vm743 = vcmask 457728
      %v744 = vsel %vm743, %v741, 0.0
      %v745 = vadd.f32 %v512, %v744
      %v746 = vld [vmem:[%s1] sm:$0xf]
      %s747 = scalar_lea.vmem %s1, 4
      %v748 = vld [vmem:[%s747] sm:$0xf]
      %v750 = vsel %vm274, %v748, 0
      %752 = vmatprep.subr.mxu0 0.0
      %753 = vmatpush1.msra.mxu0 0.0
      %754 = vmatprep.subr.mxu0 0.0
      %755 = vmatpush1.msra.mxu0 0.0
      %756 = vmatprep.subr.mxu0 0.0
      %757 = vmatpush1.msra.mxu0 0.0
      %758 = vmatprep.subr.mxu0 0.0
      %759 = vmatpush1.msra.mxu0 0.0
      %760 = vmatprep.subr.mxu0 0.0
      %761 = vmatpush1.msra.mxu0 0.0
      %762 = vmatprep.subr.mxu0 0.0
      %763 = vmatpush1.msra.mxu0 0.0
      %764 = vmatprep.subr.mxu0 0.0
      %765 = vmatpush1.msra.mxu0 0.0
      %766 = vmatprep.subr.mxu0 0.0
      %767 = vmatpush1.msra.mxu0 0.0
      %768 = vmatprep.subr.mxu0 0.0
      %769 = vmatpush1.msra.mxu0 0.0
      %770 = vmatprep.subr.mxu0 0.0
      %771 = vmatpush1.msra.mxu0 0.0
      %772 = vmatprep.subr.mxu0 0.0
      %773 = vmatpush1.msra.mxu0 0.0
      %774 = vmatprep.subr.mxu0 0.0
      %775 = vmatpush1.msra.mxu0 0.0
      %776 = vmatprep.subr.mxu0 0.0
      %777 = vmatpush1.msra.mxu0 0.0
      %778 = vmatprep.subr.mxu0 0.0
      %779 = vmatpush1.msra.mxu0 0.0
      %780 = vmatprep.subr.mxu0 0.0
      %781 = vmatpush1.msra.mxu0 0.0
      %782 = vmatprep.subr.mxu0 0.0
      %783 = vmatpush1.msra.mxu0 %v279
      %784 = vmatprep.subr.mxu0 0.0
      %785 = vmatpush2.msra.mxu0 0.0
      %786 = vmatprep.subr.mxu0 0.0
      %787 = vmatpush2.msra.mxu0 0.0
      %788 = vmatprep.subr.mxu0 0.0
      %789 = vmatpush2.msra.mxu0 0.0
      %790 = vmatprep.subr.mxu0 0.0
      %791 = vmatpush2.msra.mxu0 0.0
      %792 = vmatprep.subr.mxu0 0.0
      %793 = vmatpush2.msra.mxu0 0.0
      %794 = vmatprep.subr.mxu0 0.0
      %795 = vmatpush2.msra.mxu0 0.0
      %796 = vmatprep.subr.mxu0 0.0
      %797 = vmatpush2.msra.mxu0 0.0
      %798 = vmatprep.subr.mxu0 0.0
      %799 = vmatpush2.msra.mxu0 0.0
      %800 = vmatprep.subr.mxu0 0.0
      %801 = vmatpush2.msra.mxu0 0.0
      %802 = vmatprep.subr.mxu0 0.0
      %803 = vmatpush2.msra.mxu0 0.0
      %804 = vmatprep.subr.mxu0 0.0
      %805 = vmatpush2.msra.mxu0 0.0
      %806 = vmatprep.subr.mxu0 0.0
      %807 = vmatpush2.msra.mxu0 0.0
      %808 = vmatprep.subr.mxu0 0.0
      %809 = vmatpush2.msra.mxu0 0.0
      %810 = vmatprep.subr.mxu0 0.0
      %811 = vmatpush2.msra.mxu0 0.0
      %812 = vmatprep.subr.mxu0 0.0
      %813 = vmatpush2.msra.mxu0 0.0
      %814 = vmatprep.subr.mxu0 0.0
      %815 = vmatpush2.msra.mxu0 0.0
      %816 = vmatprep.mubr.f32.mxu0 0.0
      %817 = vmatmul.mubr.f32.gmra.mxu0 %v750
      %v818 = vpop.f32.mrf.mxu0
      %v819 = vadd.f32 0.0, %v818
      %v820 = vpop.f32.mrf.mxu0
      %821 = vdwg.mxu0
      %v823 = vsel %vm274, %v746, 0
      %825 = vmatprep.subr.mxu0 0.0
      %826 = vmatpush1.msra.mxu0 0.0
      %827 = vmatprep.subr.mxu0 0.0
      %828 = vmatpush1.msra.mxu0 0.0
      %829 = vmatprep.subr.mxu0 0.0
      %830 = vmatpush1.msra.mxu0 0.0
      %831 = vmatprep.subr.mxu0 0.0
      %832 = vmatpush1.msra.mxu0 0.0
      %833 = vmatprep.subr.mxu0 0.0
      %834 = vmatpush1.msra.mxu0 0.0
      %835 = vmatprep.subr.mxu0 0.0
      %836 = vmatpush1.msra.mxu0 0.0
      %837 = vmatprep.subr.mxu0 0.0
      %838 = vmatpush1.msra.mxu0 0.0
      %839 = vmatprep.subr.mxu0 0.0
      %840 = vmatpush1.msra.mxu0 0.0
      %841 = vmatprep.subr.mxu0 0.0
      %842 = vmatpush1.msra.mxu0 0.0
      %843 = vmatprep.subr.mxu0 0.0
      %844 = vmatpush1.msra.mxu0 0.0
      %845 = vmatprep.subr.mxu0 0.0
      %846 = vmatpush1.msra.mxu0 0.0
      %847 = vmatprep.subr.mxu0 0.0
      %848 = vmatpush1.msra.mxu0 0.0
      %849 = vmatprep.subr.mxu0 0.0
      %850 = vmatpush1.msra.mxu0 0.0
      %851 = vmatprep.subr.mxu0 0.0
      %852 = vmatpush1.msra.mxu0 0.0
      %853 = vmatprep.subr.mxu0 0.0
      %854 = vmatpush1.msra.mxu0 0.0
      %855 = vmatprep.subr.mxu0 0.0
      %856 = vmatpush1.msra.mxu0 %v355
      %857 = vmatprep.subr.mxu0 0.0
      %858 = vmatpush2.msra.mxu0 0.0
      %859 = vmatprep.subr.mxu0 0.0
      %860 = vmatpush2.msra.mxu0 0.0
      %861 = vmatprep.subr.mxu0 0.0
      %862 = vmatpush2.msra.mxu0 0.0
      %863 = vmatprep.subr.mxu0 0.0
      %864 = vmatpush2.msra.mxu0 0.0
      %865 = vmatprep.subr.mxu0 0.0
      %866 = vmatpush2.msra.mxu0 0.0
      %867 = vmatprep.subr.mxu0 0.0
      %868 = vmatpush2.msra.mxu0 0.0
      %869 = vmatprep.subr.mxu0 0.0
      %870 = vmatpush2.msra.mxu0 0.0
      %871 = vmatprep.subr.mxu0 0.0
      %872 = vmatpush2.msra.mxu0 0.0
      %873 = vmatprep.subr.mxu0 0.0
      %874 = vmatpush2.msra.mxu0 0.0
      %875 = vmatprep.subr.mxu0 0.0
      %876 = vmatpush2.msra.mxu0 0.0
      %877 = vmatprep.subr.mxu0 0.0
      %878 = vmatpush2.msra.mxu0 0.0
      %879 = vmatprep.subr.mxu0 0.0
      %880 = vmatpush2.msra.mxu0 0.0
      %881 = vmatprep.subr.mxu0 0.0
      %882 = vmatpush2.msra.mxu0 0.0
      %883 = vmatprep.subr.mxu0 0.0
      %884 = vmatpush2.msra.mxu0 0.0
      %885 = vmatprep.subr.mxu0 0.0
      %886 = vmatpush2.msra.mxu0 0.0
      %887 = vmatprep.subr.mxu0 0.0
      %888 = vmatpush2.msra.mxu0 0.0
      %889 = vmatprep.mubr.f32.mxu0 0.0
      %890 = vmatmul.mubr.f32.gmra.mxu0 %v823
      %v891 = vpop.f32.mrf.mxu0
      %v892 = vadd.f32 %v819, %v891
      %v893 = vpop.f32.mrf.mxu0
      %894 = vdwg.mxu0
      %s895 = scalar_lea.vmem %s1, 8
      %v896 = vld [vmem:[%s895] sm:$0xf]
      %v898 = vsel %vm274, %v896, 0
      %900 = vmatprep.subr.mxu0 0.0
      %901 = vmatpush1.msra.mxu0 0.0
      %902 = vmatprep.subr.mxu0 0.0
      %903 = vmatpush1.msra.mxu0 0.0
      %904 = vmatprep.subr.mxu0 0.0
      %905 = vmatpush1.msra.mxu0 0.0
      %906 = vmatprep.subr.mxu0 0.0
      %907 = vmatpush1.msra.mxu0 0.0
      %908 = vmatprep.subr.mxu0 0.0
      %909 = vmatpush1.msra.mxu0 0.0
      %910 = vmatprep.subr.mxu0 0.0
      %911 = vmatpush1.msra.mxu0 0.0
      %912 = vmatprep.subr.mxu0 0.0
      %913 = vmatpush1.msra.mxu0 0.0
      %914 = vmatprep.subr.mxu0 0.0
      %915 = vmatpush1.msra.mxu0 0.0
      %916 = vmatprep.subr.mxu0 0.0
      %917 = vmatpush1.msra.mxu0 0.0
      %918 = vmatprep.subr.mxu0 0.0
      %919 = vmatpush1.msra.mxu0 0.0
      %920 = vmatprep.subr.mxu0 0.0
      %921 = vmatpush1.msra.mxu0 0.0
      %922 = vmatprep.subr.mxu0 0.0
      %923 = vmatpush1.msra.mxu0 0.0
      %924 = vmatprep.subr.mxu0 0.0
      %925 = vmatpush1.msra.mxu0 0.0
      %926 = vmatprep.subr.mxu0 0.0
      %927 = vmatpush1.msra.mxu0 0.0
      %928 = vmatprep.subr.mxu0 0.0
      %929 = vmatpush1.msra.mxu0 0.0
      %930 = vmatprep.subr.mxu0 0.0
      %931 = vmatpush1.msra.mxu0 %v433
      %932 = vmatprep.subr.mxu0 0.0
      %933 = vmatpush2.msra.mxu0 0.0
      %934 = vmatprep.subr.mxu0 0.0
      %935 = vmatpush2.msra.mxu0 0.0
      %936 = vmatprep.subr.mxu0 0.0
      %937 = vmatpush2.msra.mxu0 0.0
      %938 = vmatprep.subr.mxu0 0.0
      %939 = vmatpush2.msra.mxu0 0.0
      %940 = vmatprep.subr.mxu0 0.0
      %941 = vmatpush2.msra.mxu0 0.0
      %942 = vmatprep.subr.mxu0 0.0
      %943 = vmatpush2.msra.mxu0 0.0
      %944 = vmatprep.subr.mxu0 0.0
      %945 = vmatpush2.msra.mxu0 0.0
      %946 = vmatprep.subr.mxu0 0.0
      %947 = vmatpush2.msra.mxu0 0.0
      %948 = vmatprep.subr.mxu0 0.0
      %949 = vmatpush2.msra.mxu0 0.0
      %950 = vmatprep.subr.mxu0 0.0
      %951 = vmatpush2.msra.mxu0 0.0
      %952 = vmatprep.subr.mxu0 0.0
      %953 = vmatpush2.msra.mxu0 0.0
      %954 = vmatprep.subr.mxu0 0.0
      %955 = vmatpush2.msra.mxu0 0.0
      %956 = vmatprep.subr.mxu0 0.0
      %957 = vmatpush2.msra.mxu0 0.0
      %958 = vmatprep.subr.mxu0 0.0
      %959 = vmatpush2.msra.mxu0 0.0
      %960 = vmatprep.subr.mxu0 0.0
      %961 = vmatpush2.msra.mxu0 0.0
      %962 = vmatprep.subr.mxu0 0.0
      %963 = vmatpush2.msra.mxu0 0.0
      %964 = vmatprep.mubr.f32.mxu0 0.0
      %965 = vmatmul.mubr.f32.gmra.mxu0 %v898
      %v966 = vpop.f32.mrf.mxu0
      %v967 = vadd.f32 0.0, %v966
      %v968 = vpop.f32.mrf.mxu0
      %969 = vdwg.mxu0
      %v970 = vadd.f32 %v892, %v967
      %972 = vrot.lane.b32.xlu0 %v970, 8
      %v973 = vpop.permute.xlu0 %972
      %vm975 = vcmask 64512
      %v976 = vsel %vm975, 0.0, %v973
      %v977 = vadd.f32 %v745, %v976
      %vm978 = vcmask 519168
      %v979 = vsel %vm978, %v977, 0.0
      %980 = vadd.xlane.f32.xlu0 %v979
      %v981 = vpop.xlane.xlu0 %980
      %v982 = vmul.f32 %v981, 0.015625
      %v983 = vsub.f32 %v977, %v982
      %v984 = vmul.f32 %v983, %v983
      %v985 = vsel %vm978, %v984, 0.0
      %986 = vadd.xlane.f32.xlu0 %v985
      %v987 = vpop.xlane.xlu0 %986
      %v988 = vmul.f32 %v987, 0.015625
      %v989 = vadd.f32 %v988, 1e-05
      %v990 = vrsqrt.pop %v989
      %v991 = vmul.f32 %v983, %v990
      %v992 = vmax.f32 %v991, 0.0
      %994 = vrot.lane.b32.xlu0 %v992, 1
      %v995 = vpop.permute.xlu0 %994
      %v997 = vsel %vm253, 0.0, %v995
      %v998 = vmul.f32 %v997, %v258
      %999 = vrot.lane.b32.xlu0 %v992, 127
      %v1000 = vpop.permute.xlu0 %999
      %v1002 = vsel %vm263, %v1000, 0.0
      %v1003 = vmul.f32 %v1002, %v268
      %s1004 = scalar_lea.vmem %s3, 12
      %v1005 = vld [vmem:[%s1004] sm:$0xf]
      %s1006 = scalar_lea.vmem %s3, 16
      %v1007 = vld [vmem:[%s1006] sm:$0xf]
      %vm1008 = vcmask 31744
      %v1010 = vsel %vm1008, %v1007, 0
      %vm1012 = vcmask 1043456
      %v1013 = vsel %vm1012, %v992, 0
      %1015 = vmatprep.subr.mxu0 0.0
      %1016 = vmatpush1.msra.mxu0 0.0
      %1017 = vmatprep.subr.mxu0 0.0
      %1018 = vmatpush1.msra.mxu0 0.0
      %1019 = vmatprep.subr.mxu0 0.0
      %1020 = vmatpush1.msra.mxu0 0.0
      %1021 = vmatprep.subr.mxu0 0.0
      %1022 = vmatpush1.msra.mxu0 0.0
      %1023 = vmatprep.subr.mxu0 0.0
      %1024 = vmatpush1.msra.mxu0 0.0
      %1025 = vmatprep.subr.mxu0 0.0
      %1026 = vmatpush1.msra.mxu0 0.0
      %1027 = vmatprep.subr.mxu0 0.0
      %1028 = vmatpush1.msra.mxu0 0.0
      %1029 = vmatprep.subr.mxu0 0.0
      %1030 = vmatpush1.msra.mxu0 0.0
      %1031 = vmatprep.subr.mxu0 0.0
      %1032 = vmatpush1.msra.mxu0 0.0
      %1033 = vmatprep.subr.mxu0 0.0
      %1034 = vmatpush1.msra.mxu0 0.0
      %1035 = vmatprep.subr.mxu0 0.0
      %1036 = vmatpush1.msra.mxu0 0.0
      %1037 = vmatprep.subr.mxu0 0.0
      %1038 = vmatpush1.msra.mxu0 0.0
      %1039 = vmatprep.subr.mxu0 0.0
      %1040 = vmatpush1.msra.mxu0 0.0
      %1041 = vmatprep.subr.mxu0 0.0
      %1042 = vmatpush1.msra.mxu0 0.0
      %1043 = vmatprep.subr.mxu0 0.0
      %1044 = vmatpush1.msra.mxu0 0.0
      %1045 = vmatprep.subr.mxu0 0.0
      %1046 = vmatpush1.msra.mxu0 %v1013
      %1047 = vmatprep.subr.mxu0 0.0
      %1048 = vmatpush2.msra.mxu0 0.0
      %1049 = vmatprep.subr.mxu0 0.0
      %1050 = vmatpush2.msra.mxu0 0.0
      %1051 = vmatprep.subr.mxu0 0.0
      %1052 = vmatpush2.msra.mxu0 0.0
      %1053 = vmatprep.subr.mxu0 0.0
      %1054 = vmatpush2.msra.mxu0 0.0
      %1055 = vmatprep.subr.mxu0 0.0
      %1056 = vmatpush2.msra.mxu0 0.0
      %1057 = vmatprep.subr.mxu0 0.0
      %1058 = vmatpush2.msra.mxu0 0.0
      %1059 = vmatprep.subr.mxu0 0.0
      %1060 = vmatpush2.msra.mxu0 0.0
      %1061 = vmatprep.subr.mxu0 0.0
      %1062 = vmatpush2.msra.mxu0 0.0
      %1063 = vmatprep.subr.mxu0 0.0
      %1064 = vmatpush2.msra.mxu0 0.0
      %1065 = vmatprep.subr.mxu0 0.0
      %1066 = vmatpush2.msra.mxu0 0.0
      %1067 = vmatprep.subr.mxu0 0.0
      %1068 = vmatpush2.msra.mxu0 0.0
      %1069 = vmatprep.subr.mxu0 0.0
      %1070 = vmatpush2.msra.mxu0 0.0
      %1071 = vmatprep.subr.mxu0 0.0
      %1072 = vmatpush2.msra.mxu0 0.0
      %1073 = vmatprep.subr.mxu0 0.0
      %1074 = vmatpush2.msra.mxu0 0.0
      %1075 = vmatprep.subr.mxu0 0.0
      %1076 = vmatpush2.msra.mxu0 0.0
      %1077 = vmatprep.subr.mxu0 0.0
      %1078 = vmatpush2.msra.mxu0 0.0
      %1079 = vmatprep.mubr.f32.mxu0 0.0
      %1080 = vmatmul.mubr.f32.gmra.mxu0 %v1010
      %v1081 = vpop.f32.mrf.mxu0
      %v1082 = vadd.f32 0.0, %v1081
      %v1083 = vpop.f32.mrf.mxu0
      %1084 = vdwg.mxu0
      %v1086 = vsel %vm1008, %v1005, 0
      %v1089 = vsel %vm1012, %v998, 0
      %1091 = vmatprep.subr.mxu0 0.0
      %1092 = vmatpush1.msra.mxu0 0.0
      %1093 = vmatprep.subr.mxu0 0.0
      %1094 = vmatpush1.msra.mxu0 0.0
      %1095 = vmatprep.subr.mxu0 0.0
      %1096 = vmatpush1.msra.mxu0 0.0
      %1097 = vmatprep.subr.mxu0 0.0
      %1098 = vmatpush1.msra.mxu0 0.0
      %1099 = vmatprep.subr.mxu0 0.0
      %1100 = vmatpush1.msra.mxu0 0.0
      %1101 = vmatprep.subr.mxu0 0.0
      %1102 = vmatpush1.msra.mxu0 0.0
      %1103 = vmatprep.subr.mxu0 0.0
      %1104 = vmatpush1.msra.mxu0 0.0
      %1105 = vmatprep.subr.mxu0 0.0
      %1106 = vmatpush1.msra.mxu0 0.0
      %1107 = vmatprep.subr.mxu0 0.0
      %1108 = vmatpush1.msra.mxu0 0.0
      %1109 = vmatprep.subr.mxu0 0.0
      %1110 = vmatpush1.msra.mxu0 0.0
      %1111 = vmatprep.subr.mxu0 0.0
      %1112 = vmatpush1.msra.mxu0 0.0
      %1113 = vmatprep.subr.mxu0 0.0
      %1114 = vmatpush1.msra.mxu0 0.0
      %1115 = vmatprep.subr.mxu0 0.0
      %1116 = vmatpush1.msra.mxu0 0.0
      %1117 = vmatprep.subr.mxu0 0.0
      %1118 = vmatpush1.msra.mxu0 0.0
      %1119 = vmatprep.subr.mxu0 0.0
      %1120 = vmatpush1.msra.mxu0 0.0
      %1121 = vmatprep.subr.mxu0 0.0
      %1122 = vmatpush1.msra.mxu0 %v1089
      %1123 = vmatprep.subr.mxu0 0.0
      %1124 = vmatpush2.msra.mxu0 0.0
      %1125 = vmatprep.subr.mxu0 0.0
      %1126 = vmatpush2.msra.mxu0 0.0
      %1127 = vmatprep.subr.mxu0 0.0
      %1128 = vmatpush2.msra.mxu0 0.0
      %1129 = vmatprep.subr.mxu0 0.0
      %1130 = vmatpush2.msra.mxu0 0.0
      %1131 = vmatprep.subr.mxu0 0.0
      %1132 = vmatpush2.msra.mxu0 0.0
      %1133 = vmatprep.subr.mxu0 0.0
      %1134 = vmatpush2.msra.mxu0 0.0
      %1135 = vmatprep.subr.mxu0 0.0
      %1136 = vmatpush2.msra.mxu0 0.0
      %1137 = vmatprep.subr.mxu0 0.0
      %1138 = vmatpush2.msra.mxu0 0.0
      %1139 = vmatprep.subr.mxu0 0.0
      %1140 = vmatpush2.msra.mxu0 0.0
      %1141 = vmatprep.subr.mxu0 0.0
      %1142 = vmatpush2.msra.mxu0 0.0
      %1143 = vmatprep.subr.mxu0 0.0
      %1144 = vmatpush2.msra.mxu0 0.0
      %1145 = vmatprep.subr.mxu0 0.0
      %1146 = vmatpush2.msra.mxu0 0.0
      %1147 = vmatprep.subr.mxu0 0.0
      %1148 = vmatpush2.msra.mxu0 0.0
      %1149 = vmatprep.subr.mxu0 0.0
      %1150 = vmatpush2.msra.mxu0 0.0
      %1151 = vmatprep.subr.mxu0 0.0
      %1152 = vmatpush2.msra.mxu0 0.0
      %1153 = vmatprep.subr.mxu0 0.0
      %1154 = vmatpush2.msra.mxu0 0.0
      %1155 = vmatprep.mubr.f32.mxu0 0.0
      %1156 = vmatmul.mubr.f32.gmra.mxu0 %v1086
      %v1157 = vpop.f32.mrf.mxu0
      %v1158 = vadd.f32 %v1082, %v1157
      %v1159 = vpop.f32.mrf.mxu0
      %1160 = vdwg.mxu0
      %s1161 = scalar_lea.vmem %s3, 20
      %v1162 = vld [vmem:[%s1161] sm:$0xf]
      %v1164 = vsel %vm1008, %v1162, 0
      %v1167 = vsel %vm1012, %v1003, 0
      %1169 = vmatprep.subr.mxu0 0.0
      %1170 = vmatpush1.msra.mxu0 0.0
      %1171 = vmatprep.subr.mxu0 0.0
      %1172 = vmatpush1.msra.mxu0 0.0
      %1173 = vmatprep.subr.mxu0 0.0
      %1174 = vmatpush1.msra.mxu0 0.0
      %1175 = vmatprep.subr.mxu0 0.0
      %1176 = vmatpush1.msra.mxu0 0.0
      %1177 = vmatprep.subr.mxu0 0.0
      %1178 = vmatpush1.msra.mxu0 0.0
      %1179 = vmatprep.subr.mxu0 0.0
      %1180 = vmatpush1.msra.mxu0 0.0
      %1181 = vmatprep.subr.mxu0 0.0
      %1182 = vmatpush1.msra.mxu0 0.0
      %1183 = vmatprep.subr.mxu0 0.0
      %1184 = vmatpush1.msra.mxu0 0.0
      %1185 = vmatprep.subr.mxu0 0.0
      %1186 = vmatpush1.msra.mxu0 0.0
      %1187 = vmatprep.subr.mxu0 0.0
      %1188 = vmatpush1.msra.mxu0 0.0
      %1189 = vmatprep.subr.mxu0 0.0
      %1190 = vmatpush1.msra.mxu0 0.0
      %1191 = vmatprep.subr.mxu0 0.0
      %1192 = vmatpush1.msra.mxu0 0.0
      %1193 = vmatprep.subr.mxu0 0.0
      %1194 = vmatpush1.msra.mxu0 0.0
      %1195 = vmatprep.subr.mxu0 0.0
      %1196 = vmatpush1.msra.mxu0 0.0
      %1197 = vmatprep.subr.mxu0 0.0
      %1198 = vmatpush1.msra.mxu0 0.0
      %1199 = vmatprep.subr.mxu0 0.0
      %1200 = vmatpush1.msra.mxu0 %v1167
      %1201 = vmatprep.subr.mxu0 0.0
      %1202 = vmatpush2.msra.mxu0 0.0
      %1203 = vmatprep.subr.mxu0 0.0
      %1204 = vmatpush2.msra.mxu0 0.0
      %1205 = vmatprep.subr.mxu0 0.0
      %1206 = vmatpush2.msra.mxu0 0.0
      %1207 = vmatprep.subr.mxu0 0.0
      %1208 = vmatpush2.msra.mxu0 0.0
      %1209 = vmatprep.subr.mxu0 0.0
      %1210 = vmatpush2.msra.mxu0 0.0
      %1211 = vmatprep.subr.mxu0 0.0
      %1212 = vmatpush2.msra.mxu0 0.0
      %1213 = vmatprep.subr.mxu0 0.0
      %1214 = vmatpush2.msra.mxu0 0.0
      %1215 = vmatprep.subr.mxu0 0.0
      %1216 = vmatpush2.msra.mxu0 0.0
      %1217 = vmatprep.subr.mxu0 0.0
      %1218 = vmatpush2.msra.mxu0 0.0
      %1219 = vmatprep.subr.mxu0 0.0
      %1220 = vmatpush2.msra.mxu0 0.0
      %1221 = vmatprep.subr.mxu0 0.0
      %1222 = vmatpush2.msra.mxu0 0.0
      %1223 = vmatprep.subr.mxu0 0.0
      %1224 = vmatpush2.msra.mxu0 0.0
      %1225 = vmatprep.subr.mxu0 0.0
      %1226 = vmatpush2.msra.mxu0 0.0
      %1227 = vmatprep.subr.mxu0 0.0
      %1228 = vmatpush2.msra.mxu0 0.0
      %1229 = vmatprep.subr.mxu0 0.0
      %1230 = vmatpush2.msra.mxu0 0.0
      %1231 = vmatprep.subr.mxu0 0.0
      %1232 = vmatpush2.msra.mxu0 0.0
      %1233 = vmatprep.mubr.f32.mxu0 0.0
      %1234 = vmatmul.mubr.f32.gmra.mxu0 %v1164
      %v1235 = vpop.f32.mrf.mxu0
      %v1236 = vadd.f32 0.0, %v1235
      %v1237 = vpop.f32.mrf.mxu0
      %1238 = vdwg.mxu0
      %v1239 = vadd.f32 %v1158, %v1236
      %v1240 = vld [vmem:[%s4] sm:$0xf]
      %1242 = vset.pattern.permute.xlu0 0
      %1243 = vperm.xlu0 %1242, %v1240
      %v1244 = vpop.permute.xlu0 %1243
      %v1246 = vadd.f32 %v1239, %v1244
      %s1247 = scalar_lea.vmem %s3, 24
      %v1248 = vld [vmem:[%s1247] sm:$0xf]
      %s1249 = scalar_lea.vmem %s3, 28
      %v1250 = vld [vmem:[%s1249] sm:$0xf]
      %v1252 = vsel %vm1008, %v1250, 0
      %1254 = vmatprep.subr.mxu0 0.0
      %1255 = vmatpush1.msra.mxu0 0.0
      %1256 = vmatprep.subr.mxu0 0.0
      %1257 = vmatpush1.msra.mxu0 0.0
      %1258 = vmatprep.subr.mxu0 0.0
      %1259 = vmatpush1.msra.mxu0 0.0
      %1260 = vmatprep.subr.mxu0 0.0
      %1261 = vmatpush1.msra.mxu0 0.0
      %1262 = vmatprep.subr.mxu0 0.0
      %1263 = vmatpush1.msra.mxu0 0.0
      %1264 = vmatprep.subr.mxu0 0.0
      %1265 = vmatpush1.msra.mxu0 0.0
      %1266 = vmatprep.subr.mxu0 0.0
      %1267 = vmatpush1.msra.mxu0 0.0
      %1268 = vmatprep.subr.mxu0 0.0
      %1269 = vmatpush1.msra.mxu0 0.0
      %1270 = vmatprep.subr.mxu0 0.0
      %1271 = vmatpush1.msra.mxu0 0.0
      %1272 = vmatprep.subr.mxu0 0.0
      %1273 = vmatpush1.msra.mxu0 0.0
      %1274 = vmatprep.subr.mxu0 0.0
      %1275 = vmatpush1.msra.mxu0 0.0
      %1276 = vmatprep.subr.mxu0 0.0
      %1277 = vmatpush1.msra.mxu0 0.0
      %1278 = vmatprep.subr.mxu0 0.0
      %1279 = vmatpush1.msra.mxu0 0.0
      %1280 = vmatprep.subr.mxu0 0.0
      %1281 = vmatpush1.msra.mxu0 0.0
      %1282 = vmatprep.subr.mxu0 0.0
      %1283 = vmatpush1.msra.mxu0 0.0
      %1284 = vmatprep.subr.mxu0 0.0
      %1285 = vmatpush1.msra.mxu0 %v1013
      %1286 = vmatprep.subr.mxu0 0.0
      %1287 = vmatpush2.msra.mxu0 0.0
      %1288 = vmatprep.subr.mxu0 0.0
      %1289 = vmatpush2.msra.mxu0 0.0
      %1290 = vmatprep.subr.mxu0 0.0
      %1291 = vmatpush2.msra.mxu0 0.0
      %1292 = vmatprep.subr.mxu0 0.0
      %1293 = vmatpush2.msra.mxu0 0.0
      %1294 = vmatprep.subr.mxu0 0.0
      %1295 = vmatpush2.msra.mxu0 0.0
      %1296 = vmatprep.subr.mxu0 0.0
      %1297 = vmatpush2.msra.mxu0 0.0
      %1298 = vmatprep.subr.mxu0 0.0
      %1299 = vmatpush2.msra.mxu0 0.0
      %1300 = vmatprep.subr.mxu0 0.0
      %1301 = vmatpush2.msra.mxu0 0.0
      %1302 = vmatprep.subr.mxu0 0.0
      %1303 = vmatpush2.msra.mxu0 0.0
      %1304 = vmatprep.subr.mxu0 0.0
      %1305 = vmatpush2.msra.mxu0 0.0
      %1306 = vmatprep.subr.mxu0 0.0
      %1307 = vmatpush2.msra.mxu0 0.0
      %1308 = vmatprep.subr.mxu0 0.0
      %1309 = vmatpush2.msra.mxu0 0.0
      %1310 = vmatprep.subr.mxu0 0.0
      %1311 = vmatpush2.msra.mxu0 0.0
      %1312 = vmatprep.subr.mxu0 0.0
      %1313 = vmatpush2.msra.mxu0 0.0
      %1314 = vmatprep.subr.mxu0 0.0
      %1315 = vmatpush2.msra.mxu0 0.0
      %1316 = vmatprep.subr.mxu0 0.0
      %1317 = vmatpush2.msra.mxu0 0.0
      %1318 = vmatprep.mubr.f32.mxu0 0.0
      %1319 = vmatmul.mubr.f32.gmra.mxu0 %v1252
      %v1320 = vpop.f32.mrf.mxu0
      %v1321 = vadd.f32 0.0, %v1320
      %v1322 = vpop.f32.mrf.mxu0
      %1323 = vdwg.mxu0
      %v1325 = vsel %vm1008, %v1248, 0
      %1327 = vmatprep.subr.mxu0 0.0
      %1328 = vmatpush1.msra.mxu0 0.0
      %1329 = vmatprep.subr.mxu0 0.0
      %1330 = vmatpush1.msra.mxu0 0.0
      %1331 = vmatprep.subr.mxu0 0.0
      %1332 = vmatpush1.msra.mxu0 0.0
      %1333 = vmatprep.subr.mxu0 0.0
      %1334 = vmatpush1.msra.mxu0 0.0
      %1335 = vmatprep.subr.mxu0 0.0
      %1336 = vmatpush1.msra.mxu0 0.0
      %1337 = vmatprep.subr.mxu0 0.0
      %1338 = vmatpush1.msra.mxu0 0.0
      %1339 = vmatprep.subr.mxu0 0.0
      %1340 = vmatpush1.msra.mxu0 0.0
      %1341 = vmatprep.subr.mxu0 0.0
      %1342 = vmatpush1.msra.mxu0 0.0
      %1343 = vmatprep.subr.mxu0 0.0
      %1344 = vmatpush1.msra.mxu0 0.0
      %1345 = vmatprep.subr.mxu0 0.0
      %1346 = vmatpush1.msra.mxu0 0.0
      %1347 = vmatprep.subr.mxu0 0.0
      %1348 = vmatpush1.msra.mxu0 0.0
      %1349 = vmatprep.subr.mxu0 0.0
      %1350 = vmatpush1.msra.mxu0 0.0
      %1351 = vmatprep.subr.mxu0 0.0
      %1352 = vmatpush1.msra.mxu0 0.0
      %1353 = vmatprep.subr.mxu0 0.0
      %1354 = vmatpush1.msra.mxu0 0.0
      %1355 = vmatprep.subr.mxu0 0.0
      %1356 = vmatpush1.msra.mxu0 0.0
      %1357 = vmatprep.subr.mxu0 0.0
      %1358 = vmatpush1.msra.mxu0 %v1089
      %1359 = vmatprep.subr.mxu0 0.0
      %1360 = vmatpush2.msra.mxu0 0.0
      %1361 = vmatprep.subr.mxu0 0.0
      %1362 = vmatpush2.msra.mxu0 0.0
      %1363 = vmatprep.subr.mxu0 0.0
      %1364 = vmatpush2.msra.mxu0 0.0
      %1365 = vmatprep.subr.mxu0 0.0
      %1366 = vmatpush2.msra.mxu0 0.0
      %1367 = vmatprep.subr.mxu0 0.0
      %1368 = vmatpush2.msra.mxu0 0.0
      %1369 = vmatprep.subr.mxu0 0.0
      %1370 = vmatpush2.msra.mxu0 0.0
      %1371 = vmatprep.subr.mxu0 0.0
      %1372 = vmatpush2.msra.mxu0 0.0
      %1373 = vmatprep.subr.mxu0 0.0
      %1374 = vmatpush2.msra.mxu0 0.0
      %1375 = vmatprep.subr.mxu0 0.0
      %1376 = vmatpush2.msra.mxu0 0.0
      %1377 = vmatprep.subr.mxu0 0.0
      %1378 = vmatpush2.msra.mxu0 0.0
      %1379 = vmatprep.subr.mxu0 0.0
      %1380 = vmatpush2.msra.mxu0 0.0
      %1381 = vmatprep.subr.mxu0 0.0
      %1382 = vmatpush2.msra.mxu0 0.0
      %1383 = vmatprep.subr.mxu0 0.0
      %1384 = vmatpush2.msra.mxu0 0.0
      %1385 = vmatprep.subr.mxu0 0.0
      %1386 = vmatpush2.msra.mxu0 0.0
      %1387 = vmatprep.subr.mxu0 0.0
      %1388 = vmatpush2.msra.mxu0 0.0
      %1389 = vmatprep.subr.mxu0 0.0
      %1390 = vmatpush2.msra.mxu0 0.0
      %1391 = vmatprep.mubr.f32.mxu0 0.0
      %1392 = vmatmul.mubr.f32.gmra.mxu0 %v1325
      %v1393 = vpop.f32.mrf.mxu0
      %v1394 = vadd.f32 %v1321, %v1393
      %v1395 = vpop.f32.mrf.mxu0
      %1396 = vdwg.mxu0
      %s1397 = scalar_lea.vmem %s3, 32
      %v1398 = vld [vmem:[%s1397] sm:$0xf]
      %v1400 = vsel %vm1008, %v1398, 0
      %1402 = vmatprep.subr.mxu0 0.0
      %1403 = vmatpush1.msra.mxu0 0.0
      %1404 = vmatprep.subr.mxu0 0.0
      %1405 = vmatpush1.msra.mxu0 0.0
      %1406 = vmatprep.subr.mxu0 0.0
      %1407 = vmatpush1.msra.mxu0 0.0
      %1408 = vmatprep.subr.mxu0 0.0
      %1409 = vmatpush1.msra.mxu0 0.0
      %1410 = vmatprep.subr.mxu0 0.0
      %1411 = vmatpush1.msra.mxu0 0.0
      %1412 = vmatprep.subr.mxu0 0.0
      %1413 = vmatpush1.msra.mxu0 0.0
      %1414 = vmatprep.subr.mxu0 0.0
      %1415 = vmatpush1.msra.mxu0 0.0
      %1416 = vmatprep.subr.mxu0 0.0
      %1417 = vmatpush1.msra.mxu0 0.0
      %1418 = vmatprep.subr.mxu0 0.0
      %1419 = vmatpush1.msra.mxu0 0.0
      %1420 = vmatprep.subr.mxu0 0.0
      %1421 = vmatpush1.msra.mxu0 0.0
      %1422 = vmatprep.subr.mxu0 0.0
      %1423 = vmatpush1.msra.mxu0 0.0
      %1424 = vmatprep.subr.mxu0 0.0
      %1425 = vmatpush1.msra.mxu0 0.0
      %1426 = vmatprep.subr.mxu0 0.0
      %1427 = vmatpush1.msra.mxu0 0.0
      %1428 = vmatprep.subr.mxu0 0.0
      %1429 = vmatpush1.msra.mxu0 0.0
      %1430 = vmatprep.subr.mxu0 0.0
      %1431 = vmatpush1.msra.mxu0 0.0
      %1432 = vmatprep.subr.mxu0 0.0
      %1433 = vmatpush1.msra.mxu0 %v1167
      %1434 = vmatprep.subr.mxu0 0.0
      %1435 = vmatpush2.msra.mxu0 0.0
      %1436 = vmatprep.subr.mxu0 0.0
      %1437 = vmatpush2.msra.mxu0 0.0
      %1438 = vmatprep.subr.mxu0 0.0
      %1439 = vmatpush2.msra.mxu0 0.0
      %1440 = vmatprep.subr.mxu0 0.0
      %1441 = vmatpush2.msra.mxu0 0.0
      %1442 = vmatprep.subr.mxu0 0.0
      %1443 = vmatpush2.msra.mxu0 0.0
      %1444 = vmatprep.subr.mxu0 0.0
      %1445 = vmatpush2.msra.mxu0 0.0
      %1446 = vmatprep.subr.mxu0 0.0
      %1447 = vmatpush2.msra.mxu0 0.0
      %1448 = vmatprep.subr.mxu0 0.0
      %1449 = vmatpush2.msra.mxu0 0.0
      %1450 = vmatprep.subr.mxu0 0.0
      %1451 = vmatpush2.msra.mxu0 0.0
      %1452 = vmatprep.subr.mxu0 0.0
      %1453 = vmatpush2.msra.mxu0 0.0
      %1454 = vmatprep.subr.mxu0 0.0
      %1455 = vmatpush2.msra.mxu0 0.0
      %1456 = vmatprep.subr.mxu0 0.0
      %1457 = vmatpush2.msra.mxu0 0.0
      %1458 = vmatprep.subr.mxu0 0.0
      %1459 = vmatpush2.msra.mxu0 0.0
      %1460 = vmatprep.subr.mxu0 0.0
      %1461 = vmatpush2.msra.mxu0 0.0
      %1462 = vmatprep.subr.mxu0 0.0
      %1463 = vmatpush2.msra.mxu0 0.0
      %1464 = vmatprep.subr.mxu0 0.0
      %1465 = vmatpush2.msra.mxu0 0.0
      %1466 = vmatprep.mubr.f32.mxu0 0.0
      %1467 = vmatmul.mubr.f32.gmra.mxu0 %v1400
      %v1468 = vpop.f32.mrf.mxu0
      %v1469 = vadd.f32 0.0, %v1468
      %v1470 = vpop.f32.mrf.mxu0
      %1471 = vdwg.mxu0
      %v1472 = vadd.f32 %v1394, %v1469
      %1474 = vrot.lane.b32.xlu0 %v1472, 120
      %v1475 = vpop.permute.xlu0 %1474
      %v1477 = vsel %vm743, %v1475, 0.0
      %v1478 = vadd.f32 %v1246, %v1477
      %v1479 = vld [vmem:[%s3] sm:$0xf]
      %s1480 = scalar_lea.vmem %s3, 4
      %v1481 = vld [vmem:[%s1480] sm:$0xf]
      %v1483 = vsel %vm1008, %v1481, 0
      %1485 = vmatprep.subr.mxu0 0.0
      %1486 = vmatpush1.msra.mxu0 0.0
      %1487 = vmatprep.subr.mxu0 0.0
      %1488 = vmatpush1.msra.mxu0 0.0
      %1489 = vmatprep.subr.mxu0 0.0
      %1490 = vmatpush1.msra.mxu0 0.0
      %1491 = vmatprep.subr.mxu0 0.0
      %1492 = vmatpush1.msra.mxu0 0.0
      %1493 = vmatprep.subr.mxu0 0.0
      %1494 = vmatpush1.msra.mxu0 0.0
      %1495 = vmatprep.subr.mxu0 0.0
      %1496 = vmatpush1.msra.mxu0 0.0
      %1497 = vmatprep.subr.mxu0 0.0
      %1498 = vmatpush1.msra.mxu0 0.0
      %1499 = vmatprep.subr.mxu0 0.0
      %1500 = vmatpush1.msra.mxu0 0.0
      %1501 = vmatprep.subr.mxu0 0.0
      %1502 = vmatpush1.msra.mxu0 0.0
      %1503 = vmatprep.subr.mxu0 0.0
      %1504 = vmatpush1.msra.mxu0 0.0
      %1505 = vmatprep.subr.mxu0 0.0
      %1506 = vmatpush1.msra.mxu0 0.0
      %1507 = vmatprep.subr.mxu0 0.0
      %1508 = vmatpush1.msra.mxu0 0.0
      %1509 = vmatprep.subr.mxu0 0.0
      %1510 = vmatpush1.msra.mxu0 0.0
      %1511 = vmatprep.subr.mxu0 0.0
      %1512 = vmatpush1.msra.mxu0 0.0
      %1513 = vmatprep.subr.mxu0 0.0
      %1514 = vmatpush1.msra.mxu0 0.0
      %1515 = vmatprep.subr.mxu0 0.0
      %1516 = vmatpush1.msra.mxu0 %v1013
      %1517 = vmatprep.subr.mxu0 0.0
      %1518 = vmatpush2.msra.mxu0 0.0
      %1519 = vmatprep.subr.mxu0 0.0
      %1520 = vmatpush2.msra.mxu0 0.0
      %1521 = vmatprep.subr.mxu0 0.0
      %1522 = vmatpush2.msra.mxu0 0.0
      %1523 = vmatprep.subr.mxu0 0.0
      %1524 = vmatpush2.msra.mxu0 0.0
      %1525 = vmatprep.subr.mxu0 0.0
      %1526 = vmatpush2.msra.mxu0 0.0
      %1527 = vmatprep.subr.mxu0 0.0
      %1528 = vmatpush2.msra.mxu0 0.0
      %1529 = vmatprep.subr.mxu0 0.0
      %1530 = vmatpush2.msra.mxu0 0.0
      %1531 = vmatprep.subr.mxu0 0.0
      %1532 = vmatpush2.msra.mxu0 0.0
      %1533 = vmatprep.subr.mxu0 0.0
      %1534 = vmatpush2.msra.mxu0 0.0
      %1535 = vmatprep.subr.mxu0 0.0
      %1536 = vmatpush2.msra.mxu0 0.0
      %1537 = vmatprep.subr.mxu0 0.0
      %1538 = vmatpush2.msra.mxu0 0.0
      %1539 = vmatprep.subr.mxu0 0.0
      %1540 = vmatpush2.msra.mxu0 0.0
      %1541 = vmatprep.subr.mxu0 0.0
      %1542 = vmatpush2.msra.mxu0 0.0
      %1543 = vmatprep.subr.mxu0 0.0
      %1544 = vmatpush2.msra.mxu0 0.0
      %1545 = vmatprep.subr.mxu0 0.0
      %1546 = vmatpush2.msra.mxu0 0.0
      %1547 = vmatprep.subr.mxu0 0.0
      %1548 = vmatpush2.msra.mxu0 0.0
      %1549 = vmatprep.mubr.f32.mxu0 0.0
      %1550 = vmatmul.mubr.f32.gmra.mxu0 %v1483
      %v1551 = vpop.f32.mrf.mxu0
      %v1552 = vadd.f32 0.0, %v1551
      %v1553 = vpop.f32.mrf.mxu0
      %1554 = vdwg.mxu0
      %v1556 = vsel %vm1008, %v1479, 0
      %1558 = vmatprep.subr.mxu0 0.0
      %1559 = vmatpush1.msra.mxu0 0.0
      %1560 = vmatprep.subr.mxu0 0.0
      %1561 = vmatpush1.msra.mxu0 0.0
      %1562 = vmatprep.subr.mxu0 0.0
      %1563 = vmatpush1.msra.mxu0 0.0
      %1564 = vmatprep.subr.mxu0 0.0
      %1565 = vmatpush1.msra.mxu0 0.0
      %1566 = vmatprep.subr.mxu0 0.0
      %1567 = vmatpush1.msra.mxu0 0.0
      %1568 = vmatprep.subr.mxu0 0.0
      %1569 = vmatpush1.msra.mxu0 0.0
      %1570 = vmatprep.subr.mxu0 0.0
      %1571 = vmatpush1.msra.mxu0 0.0
      %1572 = vmatprep.subr.mxu0 0.0
      %1573 = vmatpush1.msra.mxu0 0.0
      %1574 = vmatprep.subr.mxu0 0.0
      %1575 = vmatpush1.msra.mxu0 0.0
      %1576 = vmatprep.subr.mxu0 0.0
      %1577 = vmatpush1.msra.mxu0 0.0
      %1578 = vmatprep.subr.mxu0 0.0
      %1579 = vmatpush1.msra.mxu0 0.0
      %1580 = vmatprep.subr.mxu0 0.0
      %1581 = vmatpush1.msra.mxu0 0.0
      %1582 = vmatprep.subr.mxu0 0.0
      %1583 = vmatpush1.msra.mxu0 0.0
      %1584 = vmatprep.subr.mxu0 0.0
      %1585 = vmatpush1.msra.mxu0 0.0
      %1586 = vmatprep.subr.mxu0 0.0
      %1587 = vmatpush1.msra.mxu0 0.0
      %1588 = vmatprep.subr.mxu0 0.0
      %1589 = vmatpush1.msra.mxu0 %v1089
      %1590 = vmatprep.subr.mxu0 0.0
      %1591 = vmatpush2.msra.mxu0 0.0
      %1592 = vmatprep.subr.mxu0 0.0
      %1593 = vmatpush2.msra.mxu0 0.0
      %1594 = vmatprep.subr.mxu0 0.0
      %1595 = vmatpush2.msra.mxu0 0.0
      %1596 = vmatprep.subr.mxu0 0.0
      %1597 = vmatpush2.msra.mxu0 0.0
      %1598 = vmatprep.subr.mxu0 0.0
      %1599 = vmatpush2.msra.mxu0 0.0
      %1600 = vmatprep.subr.mxu0 0.0
      %1601 = vmatpush2.msra.mxu0 0.0
      %1602 = vmatprep.subr.mxu0 0.0
      %1603 = vmatpush2.msra.mxu0 0.0
      %1604 = vmatprep.subr.mxu0 0.0
      %1605 = vmatpush2.msra.mxu0 0.0
      %1606 = vmatprep.subr.mxu0 0.0
      %1607 = vmatpush2.msra.mxu0 0.0
      %1608 = vmatprep.subr.mxu0 0.0
      %1609 = vmatpush2.msra.mxu0 0.0
      %1610 = vmatprep.subr.mxu0 0.0
      %1611 = vmatpush2.msra.mxu0 0.0
      %1612 = vmatprep.subr.mxu0 0.0
      %1613 = vmatpush2.msra.mxu0 0.0
      %1614 = vmatprep.subr.mxu0 0.0
      %1615 = vmatpush2.msra.mxu0 0.0
      %1616 = vmatprep.subr.mxu0 0.0
      %1617 = vmatpush2.msra.mxu0 0.0
      %1618 = vmatprep.subr.mxu0 0.0
      %1619 = vmatpush2.msra.mxu0 0.0
      %1620 = vmatprep.subr.mxu0 0.0
      %1621 = vmatpush2.msra.mxu0 0.0
      %1622 = vmatprep.mubr.f32.mxu0 0.0
      %1623 = vmatmul.mubr.f32.gmra.mxu0 %v1556
      %v1624 = vpop.f32.mrf.mxu0
      %v1625 = vadd.f32 %v1552, %v1624
      %v1626 = vpop.f32.mrf.mxu0
      %1627 = vdwg.mxu0
      %s1628 = scalar_lea.vmem %s3, 8
      %v1629 = vld [vmem:[%s1628] sm:$0xf]
      %v1631 = vsel %vm1008, %v1629, 0
      %1633 = vmatprep.subr.mxu0 0.0
      %1634 = vmatpush1.msra.mxu0 0.0
      %1635 = vmatprep.subr.mxu0 0.0
      %1636 = vmatpush1.msra.mxu0 0.0
      %1637 = vmatprep.subr.mxu0 0.0
      %1638 = vmatpush1.msra.mxu0 0.0
      %1639 = vmatprep.subr.mxu0 0.0
      %1640 = vmatpush1.msra.mxu0 0.0
      %1641 = vmatprep.subr.mxu0 0.0
      %1642 = vmatpush1.msra.mxu0 0.0
      %1643 = vmatprep.subr.mxu0 0.0
      %1644 = vmatpush1.msra.mxu0 0.0
      %1645 = vmatprep.subr.mxu0 0.0
      %1646 = vmatpush1.msra.mxu0 0.0
      %1647 = vmatprep.subr.mxu0 0.0
      %1648 = vmatpush1.msra.mxu0 0.0
      %1649 = vmatprep.subr.mxu0 0.0
      %1650 = vmatpush1.msra.mxu0 0.0
      %1651 = vmatprep.subr.mxu0 0.0
      %1652 = vmatpush1.msra.mxu0 0.0
      %1653 = vmatprep.subr.mxu0 0.0
      %1654 = vmatpush1.msra.mxu0 0.0
      %1655 = vmatprep.subr.mxu0 0.0
      %1656 = vmatpush1.msra.mxu0 0.0
      %1657 = vmatprep.subr.mxu0 0.0
      %1658 = vmatpush1.msra.mxu0 0.0
      %1659 = vmatprep.subr.mxu0 0.0
      %1660 = vmatpush1.msra.mxu0 0.0
      %1661 = vmatprep.subr.mxu0 0.0
      %1662 = vmatpush1.msra.mxu0 0.0
      %1663 = vmatprep.subr.mxu0 0.0
      %1664 = vmatpush1.msra.mxu0 %v1167
      %1665 = vmatprep.subr.mxu0 0.0
      %1666 = vmatpush2.msra.mxu0 0.0
      %1667 = vmatprep.subr.mxu0 0.0
      %1668 = vmatpush2.msra.mxu0 0.0
      %1669 = vmatprep.subr.mxu0 0.0
      %1670 = vmatpush2.msra.mxu0 0.0
      %1671 = vmatprep.subr.mxu0 0.0
      %1672 = vmatpush2.msra.mxu0 0.0
      %1673 = vmatprep.subr.mxu0 0.0
      %1674 = vmatpush2.msra.mxu0 0.0
      %1675 = vmatprep.subr.mxu0 0.0
      %1676 = vmatpush2.msra.mxu0 0.0
      %1677 = vmatprep.subr.mxu0 0.0
      %1678 = vmatpush2.msra.mxu0 0.0
      %1679 = vmatprep.subr.mxu0 0.0
      %1680 = vmatpush2.msra.mxu0 0.0
      %1681 = vmatprep.subr.mxu0 0.0
      %1682 = vmatpush2.msra.mxu0 0.0
      %1683 = vmatprep.subr.mxu0 0.0
      %1684 = vmatpush2.msra.mxu0 0.0
      %1685 = vmatprep.subr.mxu0 0.0
      %1686 = vmatpush2.msra.mxu0 0.0
      %1687 = vmatprep.subr.mxu0 0.0
      %1688 = vmatpush2.msra.mxu0 0.0
      %1689 = vmatprep.subr.mxu0 0.0
      %1690 = vmatpush2.msra.mxu0 0.0
      %1691 = vmatprep.subr.mxu0 0.0
      %1692 = vmatpush2.msra.mxu0 0.0
      %1693 = vmatprep.subr.mxu0 0.0
      %1694 = vmatpush2.msra.mxu0 0.0
      %1695 = vmatprep.subr.mxu0 0.0
      %1696 = vmatpush2.msra.mxu0 0.0
      %1697 = vmatprep.mubr.f32.mxu0 0.0
      %1698 = vmatmul.mubr.f32.gmra.mxu0 %v1631
      %v1699 = vpop.f32.mrf.mxu0
      %v1700 = vadd.f32 0.0, %v1699
      %v1701 = vpop.f32.mrf.mxu0
      %1702 = vdwg.mxu0
      %v1703 = vadd.f32 %v1625, %v1700
      %1705 = vrot.lane.b32.xlu0 %v1703, 8
      %v1706 = vpop.permute.xlu0 %1705
      %v1708 = vsel %vm975, 0.0, %v1706
      %v1709 = vadd.f32 %v1478, %v1708
      %v1710 = vsel %vm978, %v1709, 0.0
      %1711 = vadd.xlane.f32.xlu0 %v1710
      %v1712 = vpop.xlane.xlu0 %1711
      %v1713 = vmul.f32 %v1712, 0.015625
      %v1714 = vsub.f32 %v1709, %v1713
      %v1715 = vmul.f32 %v1714, %v1714
      %v1716 = vsel %vm978, %v1715, 0.0
      %1717 = vadd.xlane.f32.xlu0 %v1716
      %v1718 = vpop.xlane.xlu0 %1717
      %v1719 = vmul.f32 %v1718, 0.015625
      %v1720 = vadd.f32 %v1719, 1e-05
      %v1721 = vrsqrt.pop %v1720
      %v1722 = vmul.f32 %v1714, %v1721
      %v1723 = vmax.f32 %v1722, 0.0
      %1724 = vst.msk [vmem:[%s246] sm:$0xf] %vm978, %v1723
      %p1725 = scmp.lt.s32.totalorder %s17, 1
      %s1726 = scalar_select %p1725, %s17, 1
      %s1727 = smul.addr %s1726, 4
      %s1728 = scalar_lea.vmem %s6, %s1727
      // Predicated region
      $region45: #{grouped_xnet_down.5} parent=43 // pred_check
        %p1729 = pneg %p166
      $region46: #{grouped_xnet_down.5} parent=43 // pred_check_branch
        %1731 = sbr.rel (%p1729) target = $region48
      $region47: #{grouped_xnet_down.5} parent=43 // pred_region
        _
      $region48: #{grouped_xnet_down.5} parent=43 // pred_fallthru
        _
    $region44: #{grouped_xnet_down.5} parent=5 // pred_fallthru
      _
    %p1732 = scmp.le.s32.totalorder 2, %s12
    // Predicated region
    $region49: #{grouped_xnet_down.5} parent=5 // pred_check
      %p1733 = pneg %p1732
    $region50: #{grouped_xnet_down.5} parent=5 // pred_check_branch
      %1735 = sbr.rel (%p1733) target = $region52
    $region51: #{grouped_xnet_down.5} parent=5 // pred_region
      %s1736 = ssub.s32 %s12, 2
      // Predicated region
      $region53: #{grouped_xnet_down.5} parent=51 // pred_check
        %p1737 = pneg %p172
      $region54: #{grouped_xnet_down.5} parent=51 // pred_check_branch
        %1739 = sbr.rel (%p1737) target = $region56
      $region55: #{grouped_xnet_down.5} parent=51 // pred_region
        %p1740 = scmp.lt.s32.totalorder %s18, 1
        %s1741 = scalar_select %p1740, %s18, 1
        %s1742 = smul.addr %s1741, 4
        %s1743 = scalar_lea.vmem %s6, %s1742
      $region56: #{grouped_xnet_down.5} parent=51 // pred_fallthru
        _
    $region52: #{grouped_xnet_down.5} parent=5 // pred_fallthru
      _
  $region6: #{grouped_xnet_down.5} parent=0 // loop_footer
    %s16 = sadd.s32 1, %s12
  $region7: #{grouped_xnet_down.5} parent=0 // loop_footer_branch
    %11 = sbr.rel target = $region3
  $region8: #{grouped_xnet_down.5} parent=0 // loop_exit
    _

// kernel: grouped_xnet_down.7
$region0: #{grouped_xnet_down.7}
  #allocation0 [shape = 'u32[]', space=smem, size = 0x4, offset = 0x4, fixed_abs, tag = 'smem constant byte address 0x4 - core index']
  #allocation1 [shape = 'u32[144,128]{1,0:T(1,128)}', space=vmem, size = 0x12000, scoped, tag = 'internal scratch']
  %s0 = inlined_call_operand.vmem [shape: f32[2,8,4], index: 0, kind: input, shape index: {}]
  %s1 = inlined_call_operand.vmem [shape: f32[9,8,8], index: 1, kind: input, shape index: {}]
  %s2 = inlined_call_operand.vmem [shape: f32[8,1], index: 2, kind: input, shape index: {}]
  %s3 = inlined_call_operand.vmem [shape: f32[9,8,8], index: 3, kind: input, shape index: {}]
  %s4 = inlined_call_operand.vmem [shape: f32[8,1], index: 4, kind: input, shape index: {}]
  %s5 = inlined_call_operand.vmem [shape: f32[2,4], index: 5, kind: input, shape index: {}]
  %s6 = inlined_call_operand.vmem [shape: f32[2,8,4], index: 6, kind: output, shape index: {}]
  %s7 = sld [smem:[#allocation0]]
  $region57: #{grouped_xnet_down.7} parent=0
    _
  %s9 = ssub.s32 1, %s7
  %s10 = scalar_select 0, %s9, %s7
  loop: start=0, step=1, limit=4
  $region2: #{grouped_xnet_down.7} parent=0 // loop_pre_header
    _
  $region3: #{grouped_xnet_down.7} parent=0 // loop_header
    %s12 = sphi 0, %s16
    %p13 = scmp.ge.s32.totalorder %s12, 4
    %s22 = sphi 0, %s24
    %s25 = sphi 0, %s22
    %s26 = sphi 0, %s25
    %s42 = sphi 0, %s26
    %s46 = sphi 0, %s46
    %s48 = sphi 0, %s46
    %s49 = sphi 0, %s48
    %s63 = sphi 0, %s49
    %s67 = sphi 0, %s67
    %s69 = sphi 0, %s67
    %s70 = sphi 0, %s69
    %s84 = sphi 0, %s70
    %s88 = sphi 0, %s88
    %s90 = sphi 0, %s88
    %s91 = sphi 0, %s90
    %s105 = sphi 0, %s91
    %s109 = sphi 0, %s109
    %s111 = sphi 0, %s109
    %s112 = sphi 0, %s111
    %s126 = sphi 0, %s112
    %s130 = sphi 0, %s130
    %s132 = sphi 0, %s130
    %s133 = sphi 0, %s132
    %s147 = sphi 0, %s133
    %s153 = sphi 0, %s155
    %s156 = sphi 0, %s153
    %s157 = sphi 0, %s156
    %s173 = sphi 0, %s157
  $region4: #{grouped_xnet_down.7} parent=0 // loop_header_branch
    %15 = sbr.rel (%p13) target = $region8
  $region5: #{grouped_xnet_down.7} parent=0 // loop_body
    %s17 = ssub.s32 %s12, 1
    %s18 = ssub.s32 %s12, 2
    %s19 = sadd.s32 %s12, 1
    %s20 = ssub.s32 %s12, %s19
    %p21 = scmp.eq.s32.totalorder %s20, 0
    %s23 = sadd.s32 %s22, 1
    %s24 = scalar_select %p21, %s22, %s23
    %p27 = pneg %p21
    %p28 = scmp.eq.s32.totalorder %s12, 1
    %p29 = por %p27, %p28
    %p30 = scmp.ne.s32.totalorder %s22, %s25
    %p31 = scmp.eq.s32.totalorder %s12, 0
    %p32 = por %p30, %p31
    %p33 = scmp.ne.s32.totalorder %s22, %s25
    %p34 = scmp.eq.s32.totalorder %s17, 1
    %p35 = por %p33, %p34
    %p36 = scmp.ne.s32.totalorder %s25, %s26
    %p37 = scmp.eq.s32.totalorder %s17, 0
    %p38 = por %p36, %p37
    %p39 = scmp.ne.s32.totalorder %s25, %s26
    %p40 = scmp.eq.s32.totalorder %s18, 1
    %p41 = por %p39, %p40
    %p43 = scmp.ne.s32.totalorder %s26, %s42
    %p44 = scmp.eq.s32.totalorder %s18, 0
    %p45 = por %p43, %p44
    %s47 = sadd.s32 %s46, 1
    %p50 = scmp.eq.s32.totalorder %s12, 1
    %p51 = scmp.ne.s32.totalorder %s46, %s48
    %p52 = scmp.eq.s32.totalorder %s12, 0
    %p53 = por %p51, %p52
    %p54 = scmp.ne.s32.totalorder %s46, %s48
    %p55 = scmp.eq.s32.totalorder %s17, 1
    %p56 = por %p54, %p55
    %p57 = scmp.ne.s32.totalorder %s48, %s49
    %p58 = scmp.eq.s32.totalorder %s17, 0
    %p59 = por %p57, %p58
    %p60 = scmp.ne.s32.totalorder %s48, %s49
    %p61 = scmp.eq.s32.totalorder %s18, 1
    %p62 = por %p60, %p61
    %p64 = scmp.ne.s32.totalorder %s49, %s63
    %p65 = scmp.eq.s32.totalorder %s18, 0
    %p66 = por %p64, %p65
    %s68 = sadd.s32 %s67, 1
    %p71 = scmp.eq.s32.totalorder %s12, 1
    %p72 = scmp.ne.s32.totalorder %s67, %s69
    %p73 = scmp.eq.s32.totalorder %s12, 0
    %p74 = por %p72, %p73
    %p75 = scmp.ne.s32.totalorder %s67, %s69
    %p76 = scmp.eq.s32.totalorder %s17, 1
    %p77 = por %p75, %p76
    %p78 = scmp.ne.s32.totalorder %s69, %s70
    %p79 = scmp.eq.s32.totalorder %s17, 0
    %p80 = por %p78, %p79
    %p81 = scmp.ne.s32.totalorder %s69, %s70
    %p82 = scmp.eq.s32.totalorder %s18, 1
    %p83 = por %p81, %p82
    %p85 = scmp.ne.s32.totalorder %s70, %s84
    %p86 = scmp.eq.s32.totalorder %s18, 0
    %p87 = por %p85, %p86
    %s89 = sadd.s32 %s88, 1
    %p92 = scmp.eq.s32.totalorder %s12, 1
    %p93 = scmp.ne.s32.totalorder %s88, %s90
    %p94 = scmp.eq.s32.totalorder %s12, 0
    %p95 = por %p93, %p94
    %p96 = scmp.ne.s32.totalorder %s88, %s90
    %p97 = scmp.eq.s32.totalorder %s17, 1
    %p98 = por %p96, %p97
    %p99 = scmp.ne.s32.totalorder %s90, %s91
    %p100 = scmp.eq.s32.totalorder %s17, 0
    %p101 = por %p99, %p100
    %p102 = scmp.ne.s32.totalorder %s90, %s91
    %p103 = scmp.eq.s32.totalorder %s18, 1
    %p104 = por %p102, %p103
    %p106 = scmp.ne.s32.totalorder %s91, %s105
    %p107 = scmp.eq.s32.totalorder %s18, 0
    %p108 = por %p106, %p107
    %s110 = sadd.s32 %s109, 1
    %p113 = scmp.eq.s32.totalorder %s12, 1
    %p114 = scmp.ne.s32.totalorder %s109, %s111
    %p115 = scmp.eq.s32.totalorder %s12, 0
    %p116 = por %p114, %p115
    %p117 = scmp.ne.s32.totalorder %s109, %s111
    %p118 = scmp.eq.s32.totalorder %s17, 1
    %p119 = por %p117, %p118
    %p120 = scmp.ne.s32.totalorder %s111, %s112
    %p121 = scmp.eq.s32.totalorder %s17, 0
    %p122 = por %p120, %p121
    %p123 = scmp.ne.s32.totalorder %s111, %s112
    %p124 = scmp.eq.s32.totalorder %s18, 1
    %p125 = por %p123, %p124
    %p127 = scmp.ne.s32.totalorder %s112, %s126
    %p128 = scmp.eq.s32.totalorder %s18, 0
    %p129 = por %p127, %p128
    %s131 = sadd.s32 %s130, 1
    %p134 = scmp.eq.s32.totalorder %s12, 1
    %p135 = scmp.ne.s32.totalorder %s130, %s132
    %p136 = scmp.eq.s32.totalorder %s12, 0
    %p137 = por %p135, %p136
    %p138 = scmp.ne.s32.totalorder %s130, %s132
    %p139 = scmp.eq.s32.totalorder %s17, 1
    %p140 = por %p138, %p139
    %p141 = scmp.ne.s32.totalorder %s132, %s133
    %p142 = scmp.eq.s32.totalorder %s17, 0
    %p143 = por %p141, %p142
    %p144 = scmp.ne.s32.totalorder %s132, %s133
    %p145 = scmp.eq.s32.totalorder %s18, 1
    %p146 = por %p144, %p145
    %p148 = scmp.ne.s32.totalorder %s133, %s147
    %p149 = scmp.eq.s32.totalorder %s18, 0
    %p150 = por %p148, %p149
    %s151 = ssub.s32 %s12, %s19
    %p152 = scmp.eq.s32.totalorder %s151, 0
    %s154 = sadd.s32 %s153, 1
    %s155 = scalar_select %p152, %s153, %s154
    %p158 = pneg %p152
    %p159 = scmp.eq.s32.totalorder %s12, 1
    %p160 = por %p158, %p159
    %p161 = scmp.ne.s32.totalorder %s153, %s156
    %p162 = scmp.eq.s32.totalorder %s12, 0
    %p163 = por %p161, %p162
    %p164 = scmp.ne.s32.totalorder %s153, %s156
    %p165 = scmp.eq.s32.totalorder %s17, 1
    %p166 = por %p164, %p165
    %p167 = scmp.ne.s32.totalorder %s156, %s157
    %p168 = scmp.eq.s32.totalorder %s17, 0
    %p169 = por %p167, %p168
    %p170 = scmp.ne.s32.totalorder %s156, %s157
    %p171 = scmp.eq.s32.totalorder %s18, 1
    %p172 = por %p170, %p171
    %p174 = scmp.ne.s32.totalorder %s157, %s173
    %p175 = scmp.eq.s32.totalorder %s18, 0
    %p176 = por %p174, %p175
    %p177 = scmp.le.s32.totalorder 1, %s12
    %p178 = scmp.lt.s32.totalorder %s12, 3
    %p179 = pnand %p177, %p178
    %p180 = pneg %p179
    // Predicated region
    $region9: #{grouped_xnet_down.7} parent=5 // pred_check
      _
    $region10: #{grouped_xnet_down.7} parent=5 // pred_check_branch
      %182 = sbr.rel (%p179) target = $region12
    $region11: #{grouped_xnet_down.7} parent=5 // pred_region
      %s183 = ssub.s32 %s12, 1
      // Predicated region
      $region13: #{grouped_xnet_down.7} parent=11 // pred_check
        %p184 = pneg %p59
      $region14: #{grouped_xnet_down.7} parent=11 // pred_check_branch
        %186 = sbr.rel (%p184) target = $region16
      $region15: #{grouped_xnet_down.7} parent=11 // pred_region
        _
      $region16: #{grouped_xnet_down.7} parent=11 // pred_fallthru
        _
      // Predicated region
      $region17: #{grouped_xnet_down.7} parent=11 // pred_check
        %p187 = pneg %p80
      $region18: #{grouped_xnet_down.7} parent=11 // pred_check_branch
        %189 = sbr.rel (%p187) target = $region20
      $region19: #{grouped_xnet_down.7} parent=11 // pred_region
        _
      $region20: #{grouped_xnet_down.7} parent=11 // pred_fallthru
        _
      // Predicated region
      $region21: #{grouped_xnet_down.7} parent=11 // pred_check
        %p190 = pneg %p101
      $region22: #{grouped_xnet_down.7} parent=11 // pred_check_branch
        %192 = sbr.rel (%p190) target = $region24
      $region23: #{grouped_xnet_down.7} parent=11 // pred_region
        _
      $region24: #{grouped_xnet_down.7} parent=11 // pred_fallthru
        _
      // Predicated region
      $region25: #{grouped_xnet_down.7} parent=11 // pred_check
        %p193 = pneg %p122
      $region26: #{grouped_xnet_down.7} parent=11 // pred_check_branch
        %195 = sbr.rel (%p193) target = $region28
      $region27: #{grouped_xnet_down.7} parent=11 // pred_region
        _
      $region28: #{grouped_xnet_down.7} parent=11 // pred_fallthru
        _
      // Predicated region
      $region29: #{grouped_xnet_down.7} parent=11 // pred_check
        %p196 = pneg %p143
      $region30: #{grouped_xnet_down.7} parent=11 // pred_check_branch
        %198 = sbr.rel (%p196) target = $region32
      $region31: #{grouped_xnet_down.7} parent=11 // pred_region
        _
      $region32: #{grouped_xnet_down.7} parent=11 // pred_fallthru
        _
    $region12: #{grouped_xnet_down.7} parent=5 // pred_fallthru
      _
    %p199 = scmp.lt.s32.totalorder %s12, 2
    // Predicated region
    $region33: #{grouped_xnet_down.7} parent=5 // pred_check
      %p200 = pneg %p199
    $region34: #{grouped_xnet_down.7} parent=5 // pred_check_branch
      %202 = sbr.rel (%p200) target = $region36
    $region35: #{grouped_xnet_down.7} parent=5 // pred_region
      // Predicated region
      $region37: #{grouped_xnet_down.7} parent=35 // pred_check
        %p203 = pneg %p32
      $region38: #{grouped_xnet_down.7} parent=35 // pred_check_branch
        %205 = sbr.rel (%p203) target = $region40
      $region39: #{grouped_xnet_down.7} parent=35 // pred_region
        %p206 = scmp.lt.s32.totalorder %s12, 1
        %s207 = scalar_select %p206, %s12, 1
        %s208 = smul.addr %s207, 8
        %s209 = scalar_lea.vmem %s0, %s208
      $region40: #{grouped_xnet_down.7} parent=35 // pred_fallthru
        _
    $region36: #{grouped_xnet_down.7} parent=5 // pred_fallthru
      _
    %p210 = scmp.le.s32.totalorder 1, %s12
    %p211 = scmp.lt.s32.totalorder %s12, 3
    %p212 = pnand %p210, %p211
    %p213 = pneg %p212
    // Predicated region
    $region41: #{grouped_xnet_down.7} parent=5 // pred_check
      _
    $region42: #{grouped_xnet_down.7} parent=5 // pred_check_branch
      %215 = sbr.rel (%p212) target = $region44
    $region43: #{grouped_xnet_down.7} parent=5 // pred_region
      %s216 = ssub.s32 %s12, 1
      %p217 = scmp.lt.s32.totalorder %s17, 1
      %s218 = scalar_select %p217, %s17, 1
      %s219 = smul.addr %s218, 8
      %s220 = scalar_lea.vmem %s0, %s219
      %p221 = pneg %p38
      %p222 = pneg %p35
      %p223 = pneg %p59
      %p224 = pneg %p56
      %p225 = pneg %p80
      %p226 = pneg %p77
      %p227 = pneg %p101
      %p228 = pneg %p98
      %p229 = pneg %p122
      %p230 = pneg %p119
      %p231 = pneg %p143
      %p232 = pneg %p140
      %p233 = pneg %p169
      %p234 = pneg %p166
      %p235 = scmp.lt.s32.totalorder %s17, 1
      %s236 = scalar_select %p235, %s17, 1
      %s237 = smul.addr %s236, 8
      %s238 = scalar_lea.vmem %s6, %s237
      %p239 = scmp.lt.s32.totalorder %s17, 1
      %s240 = scalar_select %p239, %s17, 1
      %s241 = smul.addr %s240, 8
      %s242 = scalar_lea.vmem %s0, %s241
      %p243 = scmp.lt.s32.totalorder %s17, 1
      %s244 = scalar_select %p243, %s17, 1
      %s245 = smul.addr %s244, 8
      %s246 = scalar_lea.vmem %s6, %s245
      %v247 = vld [vmem:[%s5] sm:$0x3]
      %v248 = vld [vmem:[%s242] sm:$0xff]
      %250 = vrot.lane.b32.xlu0 %v248, 1
      %v251 = vpop.permute.xlu0 %250
      %vm253 = vcmask 7168
      %v254 = vsel %vm253, 0.0, %v251
      %v255 = vlaneseq
      %v256 = vshrl.u32 %v255, 7
      %v257 = vsub.s32 0, %v256
      %v258 = vrot.slane %v247, %v257
      %v259 = vmul.f32 %v254, %v258
      %260 = vrot.lane.b32.xlu0 %v248, 127
      %v261 = vpop.permute.xlu0 %260
      %vm263 = vcmask 23552
      %v264 = vsel %vm263, %v261, 0.0
      %v265 = vlaneseq
      %v266 = vshrl.u32 %v265, 7
      %v267 = vsub.s32 1, %v266
      %v268 = vrot.slane %v247, %v267
      %v269 = vmul.f32 %v264, %v268
      %s270 = scalar_lea.vmem %s1, 24
      %v271 = vld [vmem:[%s270] sm:$0xff]
      %s272 = scalar_lea.vmem %s1, 32
      %v273 = vld [vmem:[%s272] sm:$0xff]
      %vm274 = vcmask 64512
      %v276 = vsel %vm274, %v273, 0
      %278 = vmatprep.subr.mxu0 0.0
      %279 = vmatpush1.msra.mxu0 0.0
      %280 = vmatprep.subr.mxu0 0.0
      %281 = vmatpush1.msra.mxu0 0.0
      %282 = vmatprep.subr.mxu0 0.0
      %283 = vmatpush1.msra.mxu0 0.0
      %284 = vmatprep.subr.mxu0 0.0
      %285 = vmatpush1.msra.mxu0 0.0
      %286 = vmatprep.subr.mxu0 0.0
      %287 = vmatpush1.msra.mxu0 0.0
      %288 = vmatprep.subr.mxu0 0.0
      %289 = vmatpush1.msra.mxu0 0.0
      %290 = vmatprep.subr.mxu0 0.0
      %291 = vmatpush1.msra.mxu0 0.0
      %292 = vmatprep.subr.mxu0 0.0
      %293 = vmatpush1.msra.mxu0 0.0
      %294 = vmatprep.subr.mxu0 0.0
      %295 = vmatpush1.msra.mxu0 0.0
      %296 = vmatprep.subr.mxu0 0.0
      %297 = vmatpush1.msra.mxu0 0.0
      %298 = vmatprep.subr.mxu0 0.0
      %299 = vmatpush1.msra.mxu0 0.0
      %300 = vmatprep.subr.mxu0 0.0
      %301 = vmatpush1.msra.mxu0 0.0
      %302 = vmatprep.subr.mxu0 0.0
      %303 = vmatpush1.msra.mxu0 0.0
      %304 = vmatprep.subr.mxu0 0.0
      %305 = vmatpush1.msra.mxu0 0.0
      %306 = vmatprep.subr.mxu0 0.0
      %307 = vmatpush1.msra.mxu0 0.0
      %308 = vmatprep.subr.mxu0 0.0
      %309 = vmatpush1.msra.mxu0 %v248
      %310 = vmatprep.subr.mxu0 0.0
      %311 = vmatpush2.msra.mxu0 0.0
      %312 = vmatprep.subr.mxu0 0.0
      %313 = vmatpush2.msra.mxu0 0.0
      %314 = vmatprep.subr.mxu0 0.0
      %315 = vmatpush2.msra.mxu0 0.0
      %316 = vmatprep.subr.mxu0 0.0
      %317 = vmatpush2.msra.mxu0 0.0
      %318 = vmatprep.subr.mxu0 0.0
      %319 = vmatpush2.msra.mxu0 0.0
      %320 = vmatprep.subr.mxu0 0.0
      %321 = vmatpush2.msra.mxu0 0.0
      %322 = vmatprep.subr.mxu0 0.0
      %323 = vmatpush2.msra.mxu0 0.0
      %324 = vmatprep.subr.mxu0 0.0
      %325 = vmatpush2.msra.mxu0 0.0
      %326 = vmatprep.subr.mxu0 0.0
      %327 = vmatpush2.msra.mxu0 0.0
      %328 = vmatprep.subr.mxu0 0.0
      %329 = vmatpush2.msra.mxu0 0.0
      %330 = vmatprep.subr.mxu0 0.0
      %331 = vmatpush2.msra.mxu0 0.0
      %332 = vmatprep.subr.mxu0 0.0
      %333 = vmatpush2.msra.mxu0 0.0
      %334 = vmatprep.subr.mxu0 0.0
      %335 = vmatpush2.msra.mxu0 0.0
      %336 = vmatprep.subr.mxu0 0.0
      %337 = vmatpush2.msra.mxu0 0.0
      %338 = vmatprep.subr.mxu0 0.0
      %339 = vmatpush2.msra.mxu0 0.0
      %340 = vmatprep.subr.mxu0 0.0
      %341 = vmatpush2.msra.mxu0 0.0
      %342 = vmatprep.mubr.f32.mxu0 0.0
      %343 = vmatmul.mubr.f32.gmra.mxu0 %v276
      %v344 = vpop.f32.mrf.mxu0
      %v345 = vadd.f32 0.0, %v344
      %v346 = vpop.f32.mrf.mxu0
      %347 = vdwg.mxu0
      %v349 = vsel %vm274, %v271, 0
      %351 = vmatprep.subr.mxu0 0.0
      %352 = vmatpush1.msra.mxu0 0.0
      %353 = vmatprep.subr.mxu0 0.0
      %354 = vmatpush1.msra.mxu0 0.0
      %355 = vmatprep.subr.mxu0 0.0
      %356 = vmatpush1.msra.mxu0 0.0
      %357 = vmatprep.subr.mxu0 0.0
      %358 = vmatpush1.msra.mxu0 0.0
      %359 = vmatprep.subr.mxu0 0.0
      %360 = vmatpush1.msra.mxu0 0.0
      %361 = vmatprep.subr.mxu0 0.0
      %362 = vmatpush1.msra.mxu0 0.0
      %363 = vmatprep.subr.mxu0 0.0
      %364 = vmatpush1.msra.mxu0 0.0
      %365 = vmatprep.subr.mxu0 0.0
      %366 = vmatpush1.msra.mxu0 0.0
      %367 = vmatprep.subr.mxu0 0.0
      %368 = vmatpush1.msra.mxu0 0.0
      %369 = vmatprep.subr.mxu0 0.0
      %370 = vmatpush1.msra.mxu0 0.0
      %371 = vmatprep.subr.mxu0 0.0
      %372 = vmatpush1.msra.mxu0 0.0
      %373 = vmatprep.subr.mxu0 0.0
      %374 = vmatpush1.msra.mxu0 0.0
      %375 = vmatprep.subr.mxu0 0.0
      %376 = vmatpush1.msra.mxu0 0.0
      %377 = vmatprep.subr.mxu0 0.0
      %378 = vmatpush1.msra.mxu0 0.0
      %379 = vmatprep.subr.mxu0 0.0
      %380 = vmatpush1.msra.mxu0 0.0
      %381 = vmatprep.subr.mxu0 0.0
      %382 = vmatpush1.msra.mxu0 %v259
      %383 = vmatprep.subr.mxu0 0.0
      %384 = vmatpush2.msra.mxu0 0.0
      %385 = vmatprep.subr.mxu0 0.0
      %386 = vmatpush2.msra.mxu0 0.0
      %387 = vmatprep.subr.mxu0 0.0
      %388 = vmatpush2.msra.mxu0 0.0
      %389 = vmatprep.subr.mxu0 0.0
      %390 = vmatpush2.msra.mxu0 0.0
      %391 = vmatprep.subr.mxu0 0.0
      %392 = vmatpush2.msra.mxu0 0.0
      %393 = vmatprep.subr.mxu0 0.0
      %394 = vmatpush2.msra.mxu0 0.0
      %395 = vmatprep.subr.mxu0 0.0
      %396 = vmatpush2.msra.mxu0 0.0
      %397 = vmatprep.subr.mxu0 0.0
      %398 = vmatpush2.msra.mxu0 0.0
      %399 = vmatprep.subr.mxu0 0.0
      %400 = vmatpush2.msra.mxu0 0.0
      %401 = vmatprep.subr.mxu0 0.0
      %402 = vmatpush2.msra.mxu0 0.0
      %403 = vmatprep.subr.mxu0 0.0
      %404 = vmatpush2.msra.mxu0 0.0
      %405 = vmatprep.subr.mxu0 0.0
      %406 = vmatpush2.msra.mxu0 0.0
      %407 = vmatprep.subr.mxu0 0.0
      %408 = vmatpush2.msra.mxu0 0.0
      %409 = vmatprep.subr.mxu0 0.0
      %410 = vmatpush2.msra.mxu0 0.0
      %411 = vmatprep.subr.mxu0 0.0
      %412 = vmatpush2.msra.mxu0 0.0
      %413 = vmatprep.subr.mxu0 0.0
      %414 = vmatpush2.msra.mxu0 0.0
      %415 = vmatprep.mubr.f32.mxu0 0.0
      %416 = vmatmul.mubr.f32.gmra.mxu0 %v349
      %v417 = vpop.f32.mrf.mxu0
      %v418 = vadd.f32 %v345, %v417
      %v419 = vpop.f32.mrf.mxu0
      %420 = vdwg.mxu0
      %s421 = scalar_lea.vmem %s1, 40
      %v422 = vld [vmem:[%s421] sm:$0xff]
      %v424 = vsel %vm274, %v422, 0
      %426 = vmatprep.subr.mxu0 0.0
      %427 = vmatpush1.msra.mxu0 0.0
      %428 = vmatprep.subr.mxu0 0.0
      %429 = vmatpush1.msra.mxu0 0.0
      %430 = vmatprep.subr.mxu0 0.0
      %431 = vmatpush1.msra.mxu0 0.0
      %432 = vmatprep.subr.mxu0 0.0
      %433 = vmatpush1.msra.mxu0 0.0
      %434 = vmatprep.subr.mxu0 0.0
      %435 = vmatpush1.msra.mxu0 0.0
      %436 = vmatprep.subr.mxu0 0.0
      %437 = vmatpush1.msra.mxu0 0.0
      %438 = vmatprep.subr.mxu0 0.0
      %439 = vmatpush1.msra.mxu0 0.0
      %440 = vmatprep.subr.mxu0 0.0
      %441 = vmatpush1.msra.mxu0 0.0
      %442 = vmatprep.subr.mxu0 0.0
      %443 = vmatpush1.msra.mxu0 0.0
      %444 = vmatprep.subr.mxu0 0.0
      %445 = vmatpush1.msra.mxu0 0.0
      %446 = vmatprep.subr.mxu0 0.0
      %447 = vmatpush1.msra.mxu0 0.0
      %448 = vmatprep.subr.mxu0 0.0
      %449 = vmatpush1.msra.mxu0 0.0
      %450 = vmatprep.subr.mxu0 0.0
      %451 = vmatpush1.msra.mxu0 0.0
      %452 = vmatprep.subr.mxu0 0.0
      %453 = vmatpush1.msra.mxu0 0.0
      %454 = vmatprep.subr.mxu0 0.0
      %455 = vmatpush1.msra.mxu0 0.0
      %456 = vmatprep.subr.mxu0 0.0
      %457 = vmatpush1.msra.mxu0 %v269
      %458 = vmatprep.subr.mxu0 0.0
      %459 = vmatpush2.msra.mxu0 0.0
      %460 = vmatprep.subr.mxu0 0.0
      %461 = vmatpush2.msra.mxu0 0.0
      %462 = vmatprep.subr.mxu0 0.0
      %463 = vmatpush2.msra.mxu0 0.0
      %464 = vmatprep.subr.mxu0 0.0
      %465 = vmatpush2.msra.mxu0 0.0
      %466 = vmatprep.subr.mxu0 0.0
      %467 = vmatpush2.msra.mxu0 0.0
      %468 = vmatprep.subr.mxu0 0.0
      %469 = vmatpush2.msra.mxu0 0.0
      %470 = vmatprep.subr.mxu0 0.0
      %471 = vmatpush2.msra.mxu0 0.0
      %472 = vmatprep.subr.mxu0 0.0
      %473 = vmatpush2.msra.mxu0 0.0
      %474 = vmatprep.subr.mxu0 0.0
      %475 = vmatpush2.msra.mxu0 0.0
      %476 = vmatprep.subr.mxu0 0.0
      %477 = vmatpush2.msra.mxu0 0.0
      %478 = vmatprep.subr.mxu0 0.0
      %479 = vmatpush2.msra.mxu0 0.0
      %480 = vmatprep.subr.mxu0 0.0
      %481 = vmatpush2.msra.mxu0 0.0
      %482 = vmatprep.subr.mxu0 0.0
      %483 = vmatpush2.msra.mxu0 0.0
      %484 = vmatprep.subr.mxu0 0.0
      %485 = vmatpush2.msra.mxu0 0.0
      %486 = vmatprep.subr.mxu0 0.0
      %487 = vmatpush2.msra.mxu0 0.0
      %488 = vmatprep.subr.mxu0 0.0
      %489 = vmatpush2.msra.mxu0 0.0
      %490 = vmatprep.mubr.f32.mxu0 0.0
      %491 = vmatmul.mubr.f32.gmra.mxu0 %v424
      %v492 = vpop.f32.mrf.mxu0
      %v493 = vadd.f32 0.0, %v492
      %v494 = vpop.f32.mrf.mxu0
      %495 = vdwg.mxu0
      %v496 = vadd.f32 %v418, %v493
      %v497 = vld [vmem:[%s2] sm:$0xff]
      %499 = vset.pattern.permute.xlu0 0
      %500 = vperm.xlu0 %499, %v497
      %v501 = vpop.permute.xlu0 %500
      %v503 = vadd.f32 %v496, %v501
      %s504 = scalar_lea.vmem %s1, 48
      %v505 = vld [vmem:[%s504] sm:$0xff]
      %s506 = scalar_lea.vmem %s1, 56
      %v507 = vld [vmem:[%s506] sm:$0xff]
      %v509 = vsel %vm274, %v507, 0
      %511 = vmatprep.subr.mxu0 0.0
      %512 = vmatpush1.msra.mxu0 0.0
      %513 = vmatprep.subr.mxu0 0.0
      %514 = vmatpush1.msra.mxu0 0.0
      %515 = vmatprep.subr.mxu0 0.0
      %516 = vmatpush1.msra.mxu0 0.0
      %517 = vmatprep.subr.mxu0 0.0
      %518 = vmatpush1.msra.mxu0 0.0
      %519 = vmatprep.subr.mxu0 0.0
      %520 = vmatpush1.msra.mxu0 0.0
      %521 = vmatprep.subr.mxu0 0.0
      %522 = vmatpush1.msra.mxu0 0.0
      %523 = vmatprep.subr.mxu0 0.0
      %524 = vmatpush1.msra.mxu0 0.0
      %525 = vmatprep.subr.mxu0 0.0
      %526 = vmatpush1.msra.mxu0 0.0
      %527 = vmatprep.subr.mxu0 0.0
      %528 = vmatpush1.msra.mxu0 0.0
      %529 = vmatprep.subr.mxu0 0.0
      %530 = vmatpush1.msra.mxu0 0.0
      %531 = vmatprep.subr.mxu0 0.0
      %532 = vmatpush1.msra.mxu0 0.0
      %533 = vmatprep.subr.mxu0 0.0
      %534 = vmatpush1.msra.mxu0 0.0
      %535 = vmatprep.subr.mxu0 0.0
      %536 = vmatpush1.msra.mxu0 0.0
      %537 = vmatprep.subr.mxu0 0.0
      %538 = vmatpush1.msra.mxu0 0.0
      %539 = vmatprep.subr.mxu0 0.0
      %540 = vmatpush1.msra.mxu0 0.0
      %541 = vmatprep.subr.mxu0 0.0
      %542 = vmatpush1.msra.mxu0 %v248
      %543 = vmatprep.subr.mxu0 0.0
      %544 = vmatpush2.msra.mxu0 0.0
      %545 = vmatprep.subr.mxu0 0.0
      %546 = vmatpush2.msra.mxu0 0.0
      %547 = vmatprep.subr.mxu0 0.0
      %548 = vmatpush2.msra.mxu0 0.0
      %549 = vmatprep.subr.mxu0 0.0
      %550 = vmatpush2.msra.mxu0 0.0
      %551 = vmatprep.subr.mxu0 0.0
      %552 = vmatpush2.msra.mxu0 0.0
      %553 = vmatprep.subr.mxu0 0.0
      %554 = vmatpush2.msra.mxu0 0.0
      %555 = vmatprep.subr.mxu0 0.0
      %556 = vmatpush2.msra.mxu0 0.0
      %557 = vmatprep.subr.mxu0 0.0
      %558 = vmatpush2.msra.mxu0 0.0
      %559 = vmatprep.subr.mxu0 0.0
      %560 = vmatpush2.msra.mxu0 0.0
      %561 = vmatprep.subr.mxu0 0.0
      %562 = vmatpush2.msra.mxu0 0.0
      %563 = vmatprep.subr.mxu0 0.0
      %564 = vmatpush2.msra.mxu0 0.0
      %565 = vmatprep.subr.mxu0 0.0
      %566 = vmatpush2.msra.mxu0 0.0
      %567 = vmatprep.subr.mxu0 0.0
      %568 = vmatpush2.msra.mxu0 0.0
      %569 = vmatprep.subr.mxu0 0.0
      %570 = vmatpush2.msra.mxu0 0.0
      %571 = vmatprep.subr.mxu0 0.0
      %572 = vmatpush2.msra.mxu0 0.0
      %573 = vmatprep.subr.mxu0 0.0
      %574 = vmatpush2.msra.mxu0 0.0
      %575 = vmatprep.mubr.f32.mxu0 0.0
      %576 = vmatmul.mubr.f32.gmra.mxu0 %v509
      %v577 = vpop.f32.mrf.mxu0
      %v578 = vadd.f32 0.0, %v577
      %v579 = vpop.f32.mrf.mxu0
      %580 = vdwg.mxu0
      %v582 = vsel %vm274, %v505, 0
      %584 = vmatprep.subr.mxu0 0.0
      %585 = vmatpush1.msra.mxu0 0.0
      %586 = vmatprep.subr.mxu0 0.0
      %587 = vmatpush1.msra.mxu0 0.0
      %588 = vmatprep.subr.mxu0 0.0
      %589 = vmatpush1.msra.mxu0 0.0
      %590 = vmatprep.subr.mxu0 0.0
      %591 = vmatpush1.msra.mxu0 0.0
      %592 = vmatprep.subr.mxu0 0.0
      %593 = vmatpush1.msra.mxu0 0.0
      %594 = vmatprep.subr.mxu0 0.0
      %595 = vmatpush1.msra.mxu0 0.0
      %596 = vmatprep.subr.mxu0 0.0
      %597 = vmatpush1.msra.mxu0 0.0
      %598 = vmatprep.subr.mxu0 0.0
      %599 = vmatpush1.msra.mxu0 0.0
      %600 = vmatprep.subr.mxu0 0.0
      %601 = vmatpush1.msra.mxu0 0.0
      %602 = vmatprep.subr.mxu0 0.0
      %603 = vmatpush1.msra.mxu0 0.0
      %604 = vmatprep.subr.mxu0 0.0
      %605 = vmatpush1.msra.mxu0 0.0
      %606 = vmatprep.subr.mxu0 0.0
      %607 = vmatpush1.msra.mxu0 0.0
      %608 = vmatprep.subr.mxu0 0.0
      %609 = vmatpush1.msra.mxu0 0.0
      %610 = vmatprep.subr.mxu0 0.0
      %611 = vmatpush1.msra.mxu0 0.0
      %612 = vmatprep.subr.mxu0 0.0
      %613 = vmatpush1.msra.mxu0 0.0
      %614 = vmatprep.subr.mxu0 0.0
      %615 = vmatpush1.msra.mxu0 %v259
      %616 = vmatprep.subr.mxu0 0.0
      %617 = vmatpush2.msra.mxu0 0.0
      %618 = vmatprep.subr.mxu0 0.0
      %619 = vmatpush2.msra.mxu0 0.0
      %620 = vmatprep.subr.mxu0 0.0
      %621 = vmatpush2.msra.mxu0 0.0
      %622 = vmatprep.subr.mxu0 0.0
      %623 = vmatpush2.msra.mxu0 0.0
      %624 = vmatprep.subr.mxu0 0.0
      %625 = vmatpush2.msra.mxu0 0.0
      %626 = vmatprep.subr.mxu0 0.0
      %627 = vmatpush2.msra.mxu0 0.0
      %628 = vmatprep.subr.mxu0 0.0
      %629 = vmatpush2.msra.mxu0 0.0
      %630 = vmatprep.subr.mxu0 0.0
      %631 = vmatpush2.msra.mxu0 0.0
      %632 = vmatprep.subr.mxu0 0.0
      %633 = vmatpush2.msra.mxu0 0.0
      %634 = vmatprep.subr.mxu0 0.0
      %635 = vmatpush2.msra.mxu0 0.0
      %636 = vmatprep.subr.mxu0 0.0
      %637 = vmatpush2.msra.mxu0 0.0
      %638 = vmatprep.subr.mxu0 0.0
      %639 = vmatpush2.msra.mxu0 0.0
      %640 = vmatprep.subr.mxu0 0.0
      %641 = vmatpush2.msra.mxu0 0.0
      %642 = vmatprep.subr.mxu0 0.0
      %643 = vmatpush2.msra.mxu0 0.0
      %644 = vmatprep.subr.mxu0 0.0
      %645 = vmatpush2.msra.mxu0 0.0
      %646 = vmatprep.subr.mxu0 0.0
      %647 = vmatpush2.msra.mxu0 0.0
      %648 = vmatprep.mubr.f32.mxu0 0.0
      %649 = vmatmul.mubr.f32.gmra.mxu0 %v582
      %v650 = vpop.f32.mrf.mxu0
      %v651 = vadd.f32 %v578, %v650
      %v652 = vpop.f32.mrf.mxu0
      %653 = vdwg.mxu0
      %s654 = scalar_lea.vmem %s1, 64
      %v655 = vld [vmem:[%s654] sm:$0xff]
      %v657 = vsel %vm274, %v655, 0
      %659 = vmatprep.subr.mxu0 0.0
      %660 = vmatpush1.msra.mxu0 0.0
      %661 = vmatprep.subr.mxu0 0.0
      %662 = vmatpush1.msra.mxu0 0.0
      %663 = vmatprep.subr.mxu0 0.0
      %664 = vmatpush1.msra.mxu0 0.0
      %665 = vmatprep.subr.mxu0 0.0
      %666 = vmatpush1.msra.mxu0 0.0
      %667 = vmatprep.subr.mxu0 0.0
      %668 = vmatpush1.msra.mxu0 0.0
      %669 = vmatprep.subr.mxu0 0.0
      %670 = vmatpush1.msra.mxu0 0.0
      %671 = vmatprep.subr.mxu0 0.0
      %672 = vmatpush1.msra.mxu0 0.0
      %673 = vmatprep.subr.mxu0 0.0
      %674 = vmatpush1.msra.mxu0 0.0
      %675 = vmatprep.subr.mxu0 0.0
      %676 = vmatpush1.msra.mxu0 0.0
      %677 = vmatprep.subr.mxu0 0.0
      %678 = vmatpush1.msra.mxu0 0.0
      %679 = vmatprep.subr.mxu0 0.0
      %680 = vmatpush1.msra.mxu0 0.0
      %681 = vmatprep.subr.mxu0 0.0
      %682 = vmatpush1.msra.mxu0 0.0
      %683 = vmatprep.subr.mxu0 0.0
      %684 = vmatpush1.msra.mxu0 0.0
      %685 = vmatprep.subr.mxu0 0.0
      %686 = vmatpush1.msra.mxu0 0.0
      %687 = vmatprep.subr.mxu0 0.0
      %688 = vmatpush1.msra.mxu0 0.0
      %689 = vmatprep.subr.mxu0 0.0
      %690 = vmatpush1.msra.mxu0 %v269
      %691 = vmatprep.subr.mxu0 0.0
      %692 = vmatpush2.msra.mxu0 0.0
      %693 = vmatprep.subr.mxu0 0.0
      %694 = vmatpush2.msra.mxu0 0.0
      %695 = vmatprep.subr.mxu0 0.0
      %696 = vmatpush2.msra.mxu0 0.0
      %697 = vmatprep.subr.mxu0 0.0
      %698 = vmatpush2.msra.mxu0 0.0
      %699 = vmatprep.subr.mxu0 0.0
      %700 = vmatpush2.msra.mxu0 0.0
      %701 = vmatprep.subr.mxu0 0.0
      %702 = vmatpush2.msra.mxu0 0.0
      %703 = vmatprep.subr.mxu0 0.0
      %704 = vmatpush2.msra.mxu0 0.0
      %705 = vmatprep.subr.mxu0 0.0
      %706 = vmatpush2.msra.mxu0 0.0
      %707 = vmatprep.subr.mxu0 0.0
      %708 = vmatpush2.msra.mxu0 0.0
      %709 = vmatprep.subr.mxu0 0.0
      %710 = vmatpush2.msra.mxu0 0.0
      %711 = vmatprep.subr.mxu0 0.0
      %712 = vmatpush2.msra.mxu0 0.0
      %713 = vmatprep.subr.mxu0 0.0
      %714 = vmatpush2.msra.mxu0 0.0
      %715 = vmatprep.subr.mxu0 0.0
      %716 = vmatpush2.msra.mxu0 0.0
      %717 = vmatprep.subr.mxu0 0.0
      %718 = vmatpush2.msra.mxu0 0.0
      %719 = vmatprep.subr.mxu0 0.0
      %720 = vmatpush2.msra.mxu0 0.0
      %721 = vmatprep.subr.mxu0 0.0
      %722 = vmatpush2.msra.mxu0 0.0
      %723 = vmatprep.mubr.f32.mxu0 0.0
      %724 = vmatmul.mubr.f32.gmra.mxu0 %v657
      %v725 = vpop.f32.mrf.mxu0
      %v726 = vadd.f32 0.0, %v725
      %v727 = vpop.f32.mrf.mxu0
      %728 = vdwg.mxu0
      %v729 = vadd.f32 %v651, %v726
      %731 = vrot.lane.b32.xlu0 %v729, 126
      %v732 = vpop.permute.xlu0 %731
      %vm734 = vcmask 15360
      %v735 = vsel %vm734, %v732, 0.0
      %v736 = vadd.f32 %v503, %v735
      %v737 = vld [vmem:[%s1] sm:$0xff]
      %s738 = scalar_lea.vmem %s1, 8
      %v739 = vld [vmem:[%s738] sm:$0xff]
      %v741 = vsel %vm274, %v739, 0
      %743 = vmatprep.subr.mxu0 0.0
      %744 = vmatpush1.msra.mxu0 0.0
      %745 = vmatprep.subr.mxu0 0.0
      %746 = vmatpush1.msra.mxu0 0.0
      %747 = vmatprep.subr.mxu0 0.0
      %748 = vmatpush1.msra.mxu0 0.0
      %749 = vmatprep.subr.mxu0 0.0
      %750 = vmatpush1.msra.mxu0 0.0
      %751 = vmatprep.subr.mxu0 0.0
      %752 = vmatpush1.msra.mxu0 0.0
      %753 = vmatprep.subr.mxu0 0.0
      %754 = vmatpush1.msra.mxu0 0.0
      %755 = vmatprep.subr.mxu0 0.0
      %756 = vmatpush1.msra.mxu0 0.0
      %757 = vmatprep.subr.mxu0 0.0
      %758 = vmatpush1.msra.mxu0 0.0
      %759 = vmatprep.subr.mxu0 0.0
      %760 = vmatpush1.msra.mxu0 0.0
      %761 = vmatprep.subr.mxu0 0.0
      %762 = vmatpush1.msra.mxu0 0.0
      %763 = vmatprep.subr.mxu0 0.0
      %764 = vmatpush1.msra.mxu0 0.0
      %765 = vmatprep.subr.mxu0 0.0
      %766 = vmatpush1.msra.mxu0 0.0
      %767 = vmatprep.subr.mxu0 0.0
      %768 = vmatpush1.msra.mxu0 0.0
      %769 = vmatprep.subr.mxu0 0.0
      %770 = vmatpush1.msra.mxu0 0.0
      %771 = vmatprep.subr.mxu0 0.0
      %772 = vmatpush1.msra.mxu0 0.0
      %773 = vmatprep.subr.mxu0 0.0
      %774 = vmatpush1.msra.mxu0 %v248
      %775 = vmatprep.subr.mxu0 0.0
      %776 = vmatpush2.msra.mxu0 0.0
      %777 = vmatprep.subr.mxu0 0.0
      %778 = vmatpush2.msra.mxu0 0.0
      %779 = vmatprep.subr.mxu0 0.0
      %780 = vmatpush2.msra.mxu0 0.0
      %781 = vmatprep.subr.mxu0 0.0
      %782 = vmatpush2.msra.mxu0 0.0
      %783 = vmatprep.subr.mxu0 0.0
      %784 = vmatpush2.msra.mxu0 0.0
      %785 = vmatprep.subr.mxu0 0.0
      %786 = vmatpush2.msra.mxu0 0.0
      %787 = vmatprep.subr.mxu0 0.0
      %788 = vmatpush2.msra.mxu0 0.0
      %789 = vmatprep.subr.mxu0 0.0
      %790 = vmatpush2.msra.mxu0 0.0
      %791 = vmatprep.subr.mxu0 0.0
      %792 = vmatpush2.msra.mxu0 0.0
      %793 = vmatprep.subr.mxu0 0.0
      %794 = vmatpush2.msra.mxu0 0.0
      %795 = vmatprep.subr.mxu0 0.0
      %796 = vmatpush2.msra.mxu0 0.0
      %797 = vmatprep.subr.mxu0 0.0
      %798 = vmatpush2.msra.mxu0 0.0
      %799 = vmatprep.subr.mxu0 0.0
      %800 = vmatpush2.msra.mxu0 0.0
      %801 = vmatprep.subr.mxu0 0.0
      %802 = vmatpush2.msra.mxu0 0.0
      %803 = vmatprep.subr.mxu0 0.0
      %804 = vmatpush2.msra.mxu0 0.0
      %805 = vmatprep.subr.mxu0 0.0
      %806 = vmatpush2.msra.mxu0 0.0
      %807 = vmatprep.mubr.f32.mxu0 0.0
      %808 = vmatmul.mubr.f32.gmra.mxu0 %v741
      %v809 = vpop.f32.mrf.mxu0
      %v810 = vadd.f32 0.0, %v809
      %v811 = vpop.f32.mrf.mxu0
      %812 = vdwg.mxu0
      %v814 = vsel %vm274, %v737, 0
      %816 = vmatprep.subr.mxu0 0.0
      %817 = vmatpush1.msra.mxu0 0.0
      %818 = vmatprep.subr.mxu0 0.0
      %819 = vmatpush1.msra.mxu0 0.0
      %820 = vmatprep.subr.mxu0 0.0
      %821 = vmatpush1.msra.mxu0 0.0
      %822 = vmatprep.subr.mxu0 0.0
      %823 = vmatpush1.msra.mxu0 0.0
      %824 = vmatprep.subr.mxu0 0.0
      %825 = vmatpush1.msra.mxu0 0.0
      %826 = vmatprep.subr.mxu0 0.0
      %827 = vmatpush1.msra.mxu0 0.0
      %828 = vmatprep.subr.mxu0 0.0
      %829 = vmatpush1.msra.mxu0 0.0
      %830 = vmatprep.subr.mxu0 0.0
      %831 = vmatpush1.msra.mxu0 0.0
      %832 = vmatprep.subr.mxu0 0.0
      %833 = vmatpush1.msra.mxu0 0.0
      %834 = vmatprep.subr.mxu0 0.0
      %835 = vmatpush1.msra.mxu0 0.0
      %836 = vmatprep.subr.mxu0 0.0
      %837 = vmatpush1.msra.mxu0 0.0
      %838 = vmatprep.subr.mxu0 0.0
      %839 = vmatpush1.msra.mxu0 0.0
      %840 = vmatprep.subr.mxu0 0.0
      %841 = vmatpush1.msra.mxu0 0.0
      %842 = vmatprep.subr.mxu0 0.0
      %843 = vmatpush1.msra.mxu0 0.0
      %844 = vmatprep.subr.mxu0 0.0
      %845 = vmatpush1.msra.mxu0 0.0
      %846 = vmatprep.subr.mxu0 0.0
      %847 = vmatpush1.msra.mxu0 %v259
      %848 = vmatprep.subr.mxu0 0.0
      %849 = vmatpush2.msra.mxu0 0.0
      %850 = vmatprep.subr.mxu0 0.0
      %851 = vmatpush2.msra.mxu0 0.0
      %852 = vmatprep.subr.mxu0 0.0
      %853 = vmatpush2.msra.mxu0 0.0
      %854 = vmatprep.subr.mxu0 0.0
      %855 = vmatpush2.msra.mxu0 0.0
      %856 = vmatprep.subr.mxu0 0.0
      %857 = vmatpush2.msra.mxu0 0.0
      %858 = vmatprep.subr.mxu0 0.0
      %859 = vmatpush2.msra.mxu0 0.0
      %860 = vmatprep.subr.mxu0 0.0
      %861 = vmatpush2.msra.mxu0 0.0
      %862 = vmatprep.subr.mxu0 0.0
      %863 = vmatpush2.msra.mxu0 0.0
      %864 = vmatprep.subr.mxu0 0.0
      %865 = vmatpush2.msra.mxu0 0.0
      %866 = vmatprep.subr.mxu0 0.0
      %867 = vmatpush2.msra.mxu0 0.0
      %868 = vmatprep.subr.mxu0 0.0
      %869 = vmatpush2.msra.mxu0 0.0
      %870 = vmatprep.subr.mxu0 0.0
      %871 = vmatpush2.msra.mxu0 0.0
      %872 = vmatprep.subr.mxu0 0.0
      %873 = vmatpush2.msra.mxu0 0.0
      %874 = vmatprep.subr.mxu0 0.0
      %875 = vmatpush2.msra.mxu0 0.0
      %876 = vmatprep.subr.mxu0 0.0
      %877 = vmatpush2.msra.mxu0 0.0
      %878 = vmatprep.subr.mxu0 0.0
      %879 = vmatpush2.msra.mxu0 0.0
      %880 = vmatprep.mubr.f32.mxu0 0.0
      %881 = vmatmul.mubr.f32.gmra.mxu0 %v814
      %v882 = vpop.f32.mrf.mxu0
      %v883 = vadd.f32 %v810, %v882
      %v884 = vpop.f32.mrf.mxu0
      %885 = vdwg.mxu0
      %s886 = scalar_lea.vmem %s1, 16
      %v887 = vld [vmem:[%s886] sm:$0xff]
      %v889 = vsel %vm274, %v887, 0
      %891 = vmatprep.subr.mxu0 0.0
      %892 = vmatpush1.msra.mxu0 0.0
      %893 = vmatprep.subr.mxu0 0.0
      %894 = vmatpush1.msra.mxu0 0.0
      %895 = vmatprep.subr.mxu0 0.0
      %896 = vmatpush1.msra.mxu0 0.0
      %897 = vmatprep.subr.mxu0 0.0
      %898 = vmatpush1.msra.mxu0 0.0
      %899 = vmatprep.subr.mxu0 0.0
      %900 = vmatpush1.msra.mxu0 0.0
      %901 = vmatprep.subr.mxu0 0.0
      %902 = vmatpush1.msra.mxu0 0.0
      %903 = vmatprep.subr.mxu0 0.0
      %904 = vmatpush1.msra.mxu0 0.0
      %905 = vmatprep.subr.mxu0 0.0
      %906 = vmatpush1.msra.mxu0 0.0
      %907 = vmatprep.subr.mxu0 0.0
      %908 = vmatpush1.msra.mxu0 0.0
      %909 = vmatprep.subr.mxu0 0.0
      %910 = vmatpush1.msra.mxu0 0.0
      %911 = vmatprep.subr.mxu0 0.0
      %912 = vmatpush1.msra.mxu0 0.0
      %913 = vmatprep.subr.mxu0 0.0
      %914 = vmatpush1.msra.mxu0 0.0
      %915 = vmatprep.subr.mxu0 0.0
      %916 = vmatpush1.msra.mxu0 0.0
      %917 = vmatprep.subr.mxu0 0.0
      %918 = vmatpush1.msra.mxu0 0.0
      %919 = vmatprep.subr.mxu0 0.0
      %920 = vmatpush1.msra.mxu0 0.0
      %921 = vmatprep.subr.mxu0 0.0
      %922 = vmatpush1.msra.mxu0 %v269
      %923 = vmatprep.subr.mxu0 0.0
      %924 = vmatpush2.msra.mxu0 0.0
      %925 = vmatprep.subr.mxu0 0.0
      %926 = vmatpush2.msra.mxu0 0.0
      %927 = vmatprep.subr.mxu0 0.0
      %928 = vmatpush2.msra.mxu0 0.0
      %929 = vmatprep.subr.mxu0 0.0
      %930 = vmatpush2.msra.mxu0 0.0
      %931 = vmatprep.subr.mxu0 0.0
      %932 = vmatpush2.msra.mxu0 0.0
      %933 = vmatprep.subr.mxu0 0.0
      %934 = vmatpush2.msra.mxu0 0.0
      %935 = vmatprep.subr.mxu0 0.0
      %936 = vmatpush2.msra.mxu0 0.0
      %937 = vmatprep.subr.mxu0 0.0
      %938 = vmatpush2.msra.mxu0 0.0
      %939 = vmatprep.subr.mxu0 0.0
      %940 = vmatpush2.msra.mxu0 0.0
      %941 = vmatprep.subr.mxu0 0.0
      %942 = vmatpush2.msra.mxu0 0.0
      %943 = vmatprep.subr.mxu0 0.0
      %944 = vmatpush2.msra.mxu0 0.0
      %945 = vmatprep.subr.mxu0 0.0
      %946 = vmatpush2.msra.mxu0 0.0
      %947 = vmatprep.subr.mxu0 0.0
      %948 = vmatpush2.msra.mxu0 0.0
      %949 = vmatprep.subr.mxu0 0.0
      %950 = vmatpush2.msra.mxu0 0.0
      %951 = vmatprep.subr.mxu0 0.0
      %952 = vmatpush2.msra.mxu0 0.0
      %953 = vmatprep.subr.mxu0 0.0
      %954 = vmatpush2.msra.mxu0 0.0
      %955 = vmatprep.mubr.f32.mxu0 0.0
      %956 = vmatmul.mubr.f32.gmra.mxu0 %v889
      %v957 = vpop.f32.mrf.mxu0
      %v958 = vadd.f32 0.0, %v957
      %v959 = vpop.f32.mrf.mxu0
      %960 = vdwg.mxu0
      %v961 = vadd.f32 %v883, %v958
      %963 = vrot.lane.b32.xlu0 %v961, 2
      %v964 = vpop.permute.xlu0 %963
      %v966 = vsel %vm734, 0.0, %v964
      %v967 = vadd.f32 %v736, %v966
      %vm968 = vcmask 31744
      %v969 = vsel %vm968, %v967, 0.0
      %970 = vadd.xlane.f32.xlu0 %v969
      %v971 = vpop.xlane.xlu0 %970
      %v972 = vmul.f32 %v971, 0.25
      %v973 = vsub.f32 %v967, %v972
      %v974 = vmul.f32 %v973, %v973
      %v975 = vsel %vm968, %v974, 0.0
      %976 = vadd.xlane.f32.xlu0 %v975
      %v977 = vpop.xlane.xlu0 %976
      %v978 = vmul.f32 %v977, 0.25
      %v979 = vadd.f32 %v978, 1e-05
      %v980 = vrsqrt.pop %v979
      %v981 = vmul.f32 %v973, %v980
      %v982 = vmax.f32 %v981, 0.0
      %984 = vrot.lane.b32.xlu0 %v982, 1
      %v985 = vpop.permute.xlu0 %984
      %v987 = vsel %vm253, 0.0, %v985
      %v988 = vmul.f32 %v987, %v258
      %989 = vrot.lane.b32.xlu0 %v982, 127
      %v990 = vpop.permute.xlu0 %989
      %v992 = vsel %vm263, %v990, 0.0
      %v993 = vmul.f32 %v992, %v268
      %s994 = scalar_lea.vmem %s3, 24
      %v995 = vld [vmem:[%s994] sm:$0xff]
      %s996 = scalar_lea.vmem %s3, 32
      %v997 = vld [vmem:[%s996] sm:$0xff]
      %v999 = vsel %vm274, %v997, 0
      %1001 = vmatprep.subr.mxu0 0.0
      %1002 = vmatpush1.msra.mxu0 0.0
      %1003 = vmatprep.subr.mxu0 0.0
      %1004 = vmatpush1.msra.mxu0 0.0
      %1005 = vmatprep.subr.mxu0 0.0
      %1006 = vmatpush1.msra.mxu0 0.0
      %1007 = vmatprep.subr.mxu0 0.0
      %1008 = vmatpush1.msra.mxu0 0.0
      %1009 = vmatprep.subr.mxu0 0.0
      %1010 = vmatpush1.msra.mxu0 0.0
      %1011 = vmatprep.subr.mxu0 0.0
      %1012 = vmatpush1.msra.mxu0 0.0
      %1013 = vmatprep.subr.mxu0 0.0
      %1014 = vmatpush1.msra.mxu0 0.0
      %1015 = vmatprep.subr.mxu0 0.0
      %1016 = vmatpush1.msra.mxu0 0.0
      %1017 = vmatprep.subr.mxu0 0.0
      %1018 = vmatpush1.msra.mxu0 0.0
      %1019 = vmatprep.subr.mxu0 0.0
      %1020 = vmatpush1.msra.mxu0 0.0
      %1021 = vmatprep.subr.mxu0 0.0
      %1022 = vmatpush1.msra.mxu0 0.0
      %1023 = vmatprep.subr.mxu0 0.0
      %1024 = vmatpush1.msra.mxu0 0.0
      %1025 = vmatprep.subr.mxu0 0.0
      %1026 = vmatpush1.msra.mxu0 0.0
      %1027 = vmatprep.subr.mxu0 0.0
      %1028 = vmatpush1.msra.mxu0 0.0
      %1029 = vmatprep.subr.mxu0 0.0
      %1030 = vmatpush1.msra.mxu0 0.0
      %1031 = vmatprep.subr.mxu0 0.0
      %1032 = vmatpush1.msra.mxu0 %v982
      %1033 = vmatprep.subr.mxu0 0.0
      %1034 = vmatpush2.msra.mxu0 0.0
      %1035 = vmatprep.subr.mxu0 0.0
      %1036 = vmatpush2.msra.mxu0 0.0
      %1037 = vmatprep.subr.mxu0 0.0
      %1038 = vmatpush2.msra.mxu0 0.0
      %1039 = vmatprep.subr.mxu0 0.0
      %1040 = vmatpush2.msra.mxu0 0.0
      %1041 = vmatprep.subr.mxu0 0.0
      %1042 = vmatpush2.msra.mxu0 0.0
      %1043 = vmatprep.subr.mxu0 0.0
      %1044 = vmatpush2.msra.mxu0 0.0
      %1045 = vmatprep.subr.mxu0 0.0
      %1046 = vmatpush2.msra.mxu0 0.0
      %1047 = vmatprep.subr.mxu0 0.0
      %1048 = vmatpush2.msra.mxu0 0.0
      %1049 = vmatprep.subr.mxu0 0.0
      %1050 = vmatpush2.msra.mxu0 0.0
      %1051 = vmatprep.subr.mxu0 0.0
      %1052 = vmatpush2.msra.mxu0 0.0
      %1053 = vmatprep.subr.mxu0 0.0
      %1054 = vmatpush2.msra.mxu0 0.0
      %1055 = vmatprep.subr.mxu0 0.0
      %1056 = vmatpush2.msra.mxu0 0.0
      %1057 = vmatprep.subr.mxu0 0.0
      %1058 = vmatpush2.msra.mxu0 0.0
      %1059 = vmatprep.subr.mxu0 0.0
      %1060 = vmatpush2.msra.mxu0 0.0
      %1061 = vmatprep.subr.mxu0 0.0
      %1062 = vmatpush2.msra.mxu0 0.0
      %1063 = vmatprep.subr.mxu0 0.0
      %1064 = vmatpush2.msra.mxu0 0.0
      %1065 = vmatprep.mubr.f32.mxu0 0.0
      %1066 = vmatmul.mubr.f32.gmra.mxu0 %v999
      %v1067 = vpop.f32.mrf.mxu0
      %v1068 = vadd.f32 0.0, %v1067
      %v1069 = vpop.f32.mrf.mxu0
      %1070 = vdwg.mxu0
      %v1072 = vsel %vm274, %v995, 0
      %1074 = vmatprep.subr.mxu0 0.0
      %1075 = vmatpush1.msra.mxu0 0.0
      %1076 = vmatprep.subr.mxu0 0.0
      %1077 = vmatpush1.msra.mxu0 0.0
      %1078 = vmatprep.subr.mxu0 0.0
      %1079 = vmatpush1.msra.mxu0 0.0
      %1080 = vmatprep.subr.mxu0 0.0
      %1081 = vmatpush1.msra.mxu0 0.0
      %1082 = vmatprep.subr.mxu0 0.0
      %1083 = vmatpush1.msra.mxu0 0.0
      %1084 = vmatprep.subr.mxu0 0.0
      %1085 = vmatpush1.msra.mxu0 0.0
      %1086 = vmatprep.subr.mxu0 0.0
      %1087 = vmatpush1.msra.mxu0 0.0
      %1088 = vmatprep.subr.mxu0 0.0
      %1089 = vmatpush1.msra.mxu0 0.0
      %1090 = vmatprep.subr.mxu0 0.0
      %1091 = vmatpush1.msra.mxu0 0.0
      %1092 = vmatprep.subr.mxu0 0.0
      %1093 = vmatpush1.msra.mxu0 0.0
      %1094 = vmatprep.subr.mxu0 0.0
      %1095 = vmatpush1.msra.mxu0 0.0
      %1096 = vmatprep.subr.mxu0 0.0
      %1097 = vmatpush1.msra.mxu0 0.0
      %1098 = vmatprep.subr.mxu0 0.0
      %1099 = vmatpush1.msra.mxu0 0.0
      %1100 = vmatprep.subr.mxu0 0.0
      %1101 = vmatpush1.msra.mxu0 0.0
      %1102 = vmatprep.subr.mxu0 0.0
      %1103 = vmatpush1.msra.mxu0 0.0
      %1104 = vmatprep.subr.mxu0 0.0
      %1105 = vmatpush1.msra.mxu0 %v988
      %1106 = vmatprep.subr.mxu0 0.0
      %1107 = vmatpush2.msra.mxu0 0.0
      %1108 = vmatprep.subr.mxu0 0.0
      %1109 = vmatpush2.msra.mxu0 0.0
      %1110 = vmatprep.subr.mxu0 0.0
      %1111 = vmatpush2.msra.mxu0 0.0
      %1112 = vmatprep.subr.mxu0 0.0
      %1113 = vmatpush2.msra.mxu0 0.0
      %1114 = vmatprep.subr.mxu0 0.0
      %1115 = vmatpush2.msra.mxu0 0.0
      %1116 = vmatprep.subr.mxu0 0.0
      %1117 = vmatpush2.msra.mxu0 0.0
      %1118 = vmatprep.subr.mxu0 0.0
      %1119 = vmatpush2.msra.mxu0 0.0
      %1120 = vmatprep.subr.mxu0 0.0
      %1121 = vmatpush2.msra.mxu0 0.0
      %1122 = vmatprep.subr.mxu0 0.0
      %1123 = vmatpush2.msra.mxu0 0.0
      %1124 = vmatprep.subr.mxu0 0.0
      %1125 = vmatpush2.msra.mxu0 0.0
      %1126 = vmatprep.subr.mxu0 0.0
      %1127 = vmatpush2.msra.mxu0 0.0
      %1128 = vmatprep.subr.mxu0 0.0
      %1129 = vmatpush2.msra.mxu0 0.0
      %1130 = vmatprep.subr.mxu0 0.0
      %1131 = vmatpush2.msra.mxu0 0.0
      %1132 = vmatprep.subr.mxu0 0.0
      %1133 = vmatpush2.msra.mxu0 0.0
      %1134 = vmatprep.subr.mxu0 0.0
      %1135 = vmatpush2.msra.mxu0 0.0
      %1136 = vmatprep.subr.mxu0 0.0
      %1137 = vmatpush2.msra.mxu0 0.0
      %1138 = vmatprep.mubr.f32.mxu0 0.0
      %1139 = vmatmul.mubr.f32.gmra.mxu0 %v1072
      %v1140 = vpop.f32.mrf.mxu0
      %v1141 = vadd.f32 %v1068, %v1140
      %v1142 = vpop.f32.mrf.mxu0
      %1143 = vdwg.mxu0
      %s1144 = scalar_lea.vmem %s3, 40
      %v1145 = vld [vmem:[%s1144] sm:$0xff]
      %v1147 = vsel %vm274, %v1145, 0
      %1149 = vmatprep.subr.mxu0 0.0
      %1150 = vmatpush1.msra.mxu0 0.0
      %1151 = vmatprep.subr.mxu0 0.0
      %1152 = vmatpush1.msra.mxu0 0.0
      %1153 = vmatprep.subr.mxu0 0.0
      %1154 = vmatpush1.msra.mxu0 0.0
      %1155 = vmatprep.subr.mxu0 0.0
      %1156 = vmatpush1.msra.mxu0 0.0
      %1157 = vmatprep.subr.mxu0 0.0
      %1158 = vmatpush1.msra.mxu0 0.0
      %1159 = vmatprep.subr.mxu0 0.0
      %1160 = vmatpush1.msra.mxu0 0.0
      %1161 = vmatprep.subr.mxu0 0.0
      %1162 = vmatpush1.msra.mxu0 0.0
      %1163 = vmatprep.subr.mxu0 0.0
      %1164 = vmatpush1.msra.mxu0 0.0
      %1165 = vmatprep.subr.mxu0 0.0
      %1166 = vmatpush1.msra.mxu0 0.0
      %1167 = vmatprep.subr.mxu0 0.0
      %1168 = vmatpush1.msra.mxu0 0.0
      %1169 = vmatprep.subr.mxu0 0.0
      %1170 = vmatpush1.msra.mxu0 0.0
      %1171 = vmatprep.subr.mxu0 0.0
      %1172 = vmatpush1.msra.mxu0 0.0
      %1173 = vmatprep.subr.mxu0 0.0
      %1174 = vmatpush1.msra.mxu0 0.0
      %1175 = vmatprep.subr.mxu0 0.0
      %1176 = vmatpush1.msra.mxu0 0.0
      %1177 = vmatprep.subr.mxu0 0.0
      %1178 = vmatpush1.msra.mxu0 0.0
      %1179 = vmatprep.subr.mxu0 0.0
      %1180 = vmatpush1.msra.mxu0 %v993
      %1181 = vmatprep.subr.mxu0 0.0
      %1182 = vmatpush2.msra.mxu0 0.0
      %1183 = vmatprep.subr.mxu0 0.0
      %1184 = vmatpush2.msra.mxu0 0.0
      %1185 = vmatprep.subr.mxu0 0.0
      %1186 = vmatpush2.msra.mxu0 0.0
      %1187 = vmatprep.subr.mxu0 0.0
      %1188 = vmatpush2.msra.mxu0 0.0
      %1189 = vmatprep.subr.mxu0 0.0
      %1190 = vmatpush2.msra.mxu0 0.0
      %1191 = vmatprep.subr.mxu0 0.0
      %1192 = vmatpush2.msra.mxu0 0.0
      %1193 = vmatprep.subr.mxu0 0.0
      %1194 = vmatpush2.msra.mxu0 0.0
      %1195 = vmatprep.subr.mxu0 0.0
      %1196 = vmatpush2.msra.mxu0 0.0
      %1197 = vmatprep.subr.mxu0 0.0
      %1198 = vmatpush2.msra.mxu0 0.0
      %1199 = vmatprep.subr.mxu0 0.0
      %1200 = vmatpush2.msra.mxu0 0.0
      %1201 = vmatprep.subr.mxu0 0.0
      %1202 = vmatpush2.msra.mxu0 0.0
      %1203 = vmatprep.subr.mxu0 0.0
      %1204 = vmatpush2.msra.mxu0 0.0
      %1205 = vmatprep.subr.mxu0 0.0
      %1206 = vmatpush2.msra.mxu0 0.0
      %1207 = vmatprep.subr.mxu0 0.0
      %1208 = vmatpush2.msra.mxu0 0.0
      %1209 = vmatprep.subr.mxu0 0.0
      %1210 = vmatpush2.msra.mxu0 0.0
      %1211 = vmatprep.subr.mxu0 0.0
      %1212 = vmatpush2.msra.mxu0 0.0
      %1213 = vmatprep.mubr.f32.mxu0 0.0
      %1214 = vmatmul.mubr.f32.gmra.mxu0 %v1147
      %v1215 = vpop.f32.mrf.mxu0
      %v1216 = vadd.f32 0.0, %v1215
      %v1217 = vpop.f32.mrf.mxu0
      %1218 = vdwg.mxu0
      %v1219 = vadd.f32 %v1141, %v1216
      %v1220 = vld [vmem:[%s4] sm:$0xff]
      %1222 = vset.pattern.permute.xlu0 0
      %1223 = vperm.xlu0 %1222, %v1220
      %v1224 = vpop.permute.xlu0 %1223
      %v1226 = vadd.f32 %v1219, %v1224
      %s1227 = scalar_lea.vmem %s3, 48
      %v1228 = vld [vmem:[%s1227] sm:$0xff]
      %s1229 = scalar_lea.vmem %s3, 56
      %v1230 = vld [vmem:[%s1229] sm:$0xff]
      %v1232 = vsel %vm274, %v1230, 0
      %1234 = vmatprep.subr.mxu0 0.0
      %1235 = vmatpush1.msra.mxu0 0.0
      %1236 = vmatprep.subr.mxu0 0.0
      %1237 = vmatpush1.msra.mxu0 0.0
      %1238 = vmatprep.subr.mxu0 0.0
      %1239 = vmatpush1.msra.mxu0 0.0
      %1240 = vmatprep.subr.mxu0 0.0
      %1241 = vmatpush1.msra.mxu0 0.0
      %1242 = vmatprep.subr.mxu0 0.0
      %1243 = vmatpush1.msra.mxu0 0.0
      %1244 = vmatprep.subr.mxu0 0.0
      %1245 = vmatpush1.msra.mxu0 0.0
      %1246 = vmatprep.subr.mxu0 0.0
      %1247 = vmatpush1.msra.mxu0 0.0
      %1248 = vmatprep.subr.mxu0 0.0
      %1249 = vmatpush1.msra.mxu0 0.0
      %1250 = vmatprep.subr.mxu0 0.0
      %1251 = vmatpush1.msra.mxu0 0.0
      %1252 = vmatprep.subr.mxu0 0.0
      %1253 = vmatpush1.msra.mxu0 0.0
      %1254 = vmatprep.subr.mxu0 0.0
      %1255 = vmatpush1.msra.mxu0 0.0
      %1256 = vmatprep.subr.mxu0 0.0
      %1257 = vmatpush1.msra.mxu0 0.0
      %1258 = vmatprep.subr.mxu0 0.0
      %1259 = vmatpush1.msra.mxu0 0.0
      %1260 = vmatprep.subr.mxu0 0.0
      %1261 = vmatpush1.msra.mxu0 0.0
      %1262 = vmatprep.subr.mxu0 0.0
      %1263 = vmatpush1.msra.mxu0 0.0
      %1264 = vmatprep.subr.mxu0 0.0
      %1265 = vmatpush1.msra.mxu0 %v982
      %1266 = vmatprep.subr.mxu0 0.0
      %1267 = vmatpush2.msra.mxu0 0.0
      %1268 = vmatprep.subr.mxu0 0.0
      %1269 = vmatpush2.msra.mxu0 0.0
      %1270 = vmatprep.subr.mxu0 0.0
      %1271 = vmatpush2.msra.mxu0 0.0
      %1272 = vmatprep.subr.mxu0 0.0
      %1273 = vmatpush2.msra.mxu0 0.0
      %1274 = vmatprep.subr.mxu0 0.0
      %1275 = vmatpush2.msra.mxu0 0.0
      %1276 = vmatprep.subr.mxu0 0.0
      %1277 = vmatpush2.msra.mxu0 0.0
      %1278 = vmatprep.subr.mxu0 0.0
      %1279 = vmatpush2.msra.mxu0 0.0
      %1280 = vmatprep.subr.mxu0 0.0
      %1281 = vmatpush2.msra.mxu0 0.0
      %1282 = vmatprep.subr.mxu0 0.0
      %1283 = vmatpush2.msra.mxu0 0.0
      %1284 = vmatprep.subr.mxu0 0.0
      %1285 = vmatpush2.msra.mxu0 0.0
      %1286 = vmatprep.subr.mxu0 0.0
      %1287 = vmatpush2.msra.mxu0 0.0
      %1288 = vmatprep.subr.mxu0 0.0
      %1289 = vmatpush2.msra.mxu0 0.0
      %1290 = vmatprep.subr.mxu0 0.0
      %1291 = vmatpush2.msra.mxu0 0.0
      %1292 = vmatprep.subr.mxu0 0.0
      %1293 = vmatpush2.msra.mxu0 0.0
      %1294 = vmatprep.subr.mxu0 0.0
      %1295 = vmatpush2.msra.mxu0 0.0
      %1296 = vmatprep.subr.mxu0 0.0
      %1297 = vmatpush2.msra.mxu0 0.0
      %1298 = vmatprep.mubr.f32.mxu0 0.0
      %1299 = vmatmul.mubr.f32.gmra.mxu0 %v1232
      %v1300 = vpop.f32.mrf.mxu0
      %v1301 = vadd.f32 0.0, %v1300
      %v1302 = vpop.f32.mrf.mxu0
      %1303 = vdwg.mxu0
      %v1305 = vsel %vm274, %v1228, 0
      %1307 = vmatprep.subr.mxu0 0.0
      %1308 = vmatpush1.msra.mxu0 0.0
      %1309 = vmatprep.subr.mxu0 0.0
      %1310 = vmatpush1.msra.mxu0 0.0
      %1311 = vmatprep.subr.mxu0 0.0
      %1312 = vmatpush1.msra.mxu0 0.0
      %1313 = vmatprep.subr.mxu0 0.0
      %1314 = vmatpush1.msra.mxu0 0.0
      %1315 = vmatprep.subr.mxu0 0.0
      %1316 = vmatpush1.msra.mxu0 0.0
      %1317 = vmatprep.subr.mxu0 0.0
      %1318 = vmatpush1.msra.mxu0 0.0
      %1319 = vmatprep.subr.mxu0 0.0
      %1320 = vmatpush1.msra.mxu0 0.0
      %1321 = vmatprep.subr.mxu0 0.0
      %1322 = vmatpush1.msra.mxu0 0.0
      %1323 = vmatprep.subr.mxu0 0.0
      %1324 = vmatpush1.msra.mxu0 0.0
      %1325 = vmatprep.subr.mxu0 0.0
      %1326 = vmatpush1.msra.mxu0 0.0
      %1327 = vmatprep.subr.mxu0 0.0
      %1328 = vmatpush1.msra.mxu0 0.0
      %1329 = vmatprep.subr.mxu0 0.0
      %1330 = vmatpush1.msra.mxu0 0.0
      %1331 = vmatprep.subr.mxu0 0.0
      %1332 = vmatpush1.msra.mxu0 0.0
      %1333 = vmatprep.subr.mxu0 0.0
      %1334 = vmatpush1.msra.mxu0 0.0
      %1335 = vmatprep.subr.mxu0 0.0
      %1336 = vmatpush1.msra.mxu0 0.0
      %1337 = vmatprep.subr.mxu0 0.0
      %1338 = vmatpush1.msra.mxu0 %v988
      %1339 = vmatprep.subr.mxu0 0.0
      %1340 = vmatpush2.msra.mxu0 0.0
      %1341 = vmatprep.subr.mxu0 0.0
      %1342 = vmatpush2.msra.mxu0 0.0
      %1343 = vmatprep.subr.mxu0 0.0
      %1344 = vmatpush2.msra.mxu0 0.0
      %1345 = vmatprep.subr.mxu0 0.0
      %1346 = vmatpush2.msra.mxu0 0.0
      %1347 = vmatprep.subr.mxu0 0.0
      %1348 = vmatpush2.msra.mxu0 0.0
      %1349 = vmatprep.subr.mxu0 0.0
      %1350 = vmatpush2.msra.mxu0 0.0
      %1351 = vmatprep.subr.mxu0 0.0
      %1352 = vmatpush2.msra.mxu0 0.0
      %1353 = vmatprep.subr.mxu0 0.0
      %1354 = vmatpush2.msra.mxu0 0.0
      %1355 = vmatprep.subr.mxu0 0.0
      %1356 = vmatpush2.msra.mxu0 0.0
      %1357 = vmatprep.subr.mxu0 0.0
      %1358 = vmatpush2.msra.mxu0 0.0
      %1359 = vmatprep.subr.mxu0 0.0
      %1360 = vmatpush2.msra.mxu0 0.0
      %1361 = vmatprep.subr.mxu0 0.0
      %1362 = vmatpush2.msra.mxu0 0.0
      %1363 = vmatprep.subr.mxu0 0.0
      %1364 = vmatpush2.msra.mxu0 0.0
      %1365 = vmatprep.subr.mxu0 0.0
      %1366 = vmatpush2.msra.mxu0 0.0
      %1367 = vmatprep.subr.mxu0 0.0
      %1368 = vmatpush2.msra.mxu0 0.0
      %1369 = vmatprep.subr.mxu0 0.0
      %1370 = vmatpush2.msra.mxu0 0.0
      %1371 = vmatprep.mubr.f32.mxu0 0.0
      %1372 = vmatmul.mubr.f32.gmra.mxu0 %v1305
      %v1373 = vpop.f32.mrf.mxu0
      %v1374 = vadd.f32 %v1301, %v1373
      %v1375 = vpop.f32.mrf.mxu0
      %1376 = vdwg.mxu0
      %s1377 = scalar_lea.vmem %s3, 64
      %v1378 = vld [vmem:[%s1377] sm:$0xff]
      %v1380 = vsel %vm274, %v1378, 0
      %1382 = vmatprep.subr.mxu0 0.0
      %1383 = vmatpush1.msra.mxu0 0.0
      %1384 = vmatprep.subr.mxu0 0.0
      %1385 = vmatpush1.msra.mxu0 0.0
      %1386 = vmatprep.subr.mxu0 0.0
      %1387 = vmatpush1.msra.mxu0 0.0
      %1388 = vmatprep.subr.mxu0 0.0
      %1389 = vmatpush1.msra.mxu0 0.0
      %1390 = vmatprep.subr.mxu0 0.0
      %1391 = vmatpush1.msra.mxu0 0.0
      %1392 = vmatprep.subr.mxu0 0.0
      %1393 = vmatpush1.msra.mxu0 0.0
      %1394 = vmatprep.subr.mxu0 0.0
      %1395 = vmatpush1.msra.mxu0 0.0
      %1396 = vmatprep.subr.mxu0 0.0
      %1397 = vmatpush1.msra.mxu0 0.0
      %1398 = vmatprep.subr.mxu0 0.0
      %1399 = vmatpush1.msra.mxu0 0.0
      %1400 = vmatprep.subr.mxu0 0.0
      %1401 = vmatpush1.msra.mxu0 0.0
      %1402 = vmatprep.subr.mxu0 0.0
      %1403 = vmatpush1.msra.mxu0 0.0
      %1404 = vmatprep.subr.mxu0 0.0
      %1405 = vmatpush1.msra.mxu0 0.0
      %1406 = vmatprep.subr.mxu0 0.0
      %1407 = vmatpush1.msra.mxu0 0.0
      %1408 = vmatprep.subr.mxu0 0.0
      %1409 = vmatpush1.msra.mxu0 0.0
      %1410 = vmatprep.subr.mxu0 0.0
      %1411 = vmatpush1.msra.mxu0 0.0
      %1412 = vmatprep.subr.mxu0 0.0
      %1413 = vmatpush1.msra.mxu0 %v993
      %1414 = vmatprep.subr.mxu0 0.0
      %1415 = vmatpush2.msra.mxu0 0.0
      %1416 = vmatprep.subr.mxu0 0.0
      %1417 = vmatpush2.msra.mxu0 0.0
      %1418 = vmatprep.subr.mxu0 0.0
      %1419 = vmatpush2.msra.mxu0 0.0
      %1420 = vmatprep.subr.mxu0 0.0
      %1421 = vmatpush2.msra.mxu0 0.0
      %1422 = vmatprep.subr.mxu0 0.0
      %1423 = vmatpush2.msra.mxu0 0.0
      %1424 = vmatprep.subr.mxu0 0.0
      %1425 = vmatpush2.msra.mxu0 0.0
      %1426 = vmatprep.subr.mxu0 0.0
      %1427 = vmatpush2.msra.mxu0 0.0
      %1428 = vmatprep.subr.mxu0 0.0
      %1429 = vmatpush2.msra.mxu0 0.0
      %1430 = vmatprep.subr.mxu0 0.0
      %1431 = vmatpush2.msra.mxu0 0.0
      %1432 = vmatprep.subr.mxu0 0.0
      %1433 = vmatpush2.msra.mxu0 0.0
      %1434 = vmatprep.subr.mxu0 0.0
      %1435 = vmatpush2.msra.mxu0 0.0
      %1436 = vmatprep.subr.mxu0 0.0
      %1437 = vmatpush2.msra.mxu0 0.0
      %1438 = vmatprep.subr.mxu0 0.0
      %1439 = vmatpush2.msra.mxu0 0.0
      %1440 = vmatprep.subr.mxu0 0.0
      %1441 = vmatpush2.msra.mxu0 0.0
      %1442 = vmatprep.subr.mxu0 0.0
      %1443 = vmatpush2.msra.mxu0 0.0
      %1444 = vmatprep.subr.mxu0 0.0
      %1445 = vmatpush2.msra.mxu0 0.0
      %1446 = vmatprep.mubr.f32.mxu0 0.0
      %1447 = vmatmul.mubr.f32.gmra.mxu0 %v1380
      %v1448 = vpop.f32.mrf.mxu0
      %v1449 = vadd.f32 0.0, %v1448
      %v1450 = vpop.f32.mrf.mxu0
      %1451 = vdwg.mxu0
      %v1452 = vadd.f32 %v1374, %v1449
      %1454 = vrot.lane.b32.xlu0 %v1452, 126
      %v1455 = vpop.permute.xlu0 %1454
      %v1457 = vsel %vm734, %v1455, 0.0
      %v1458 = vadd.f32 %v1226, %v1457
      %v1459 = vld [vmem:[%s3] sm:$0xff]
      %s1460 = scalar_lea.vmem %s3, 8
      %v1461 = vld [vmem:[%s1460] sm:$0xff]
      %v1463 = vsel %vm274, %v1461, 0
      %1465 = vmatprep.subr.mxu0 0.0
      %1466 = vmatpush1.msra.mxu0 0.0
      %1467 = vmatprep.subr.mxu0 0.0
      %1468 = vmatpush1.msra.mxu0 0.0
      %1469 = vmatprep.subr.mxu0 0.0
      %1470 = vmatpush1.msra.mxu0 0.0
      %1471 = vmatprep.subr.mxu0 0.0
      %1472 = vmatpush1.msra.mxu0 0.0
      %1473 = vmatprep.subr.mxu0 0.0
      %1474 = vmatpush1.msra.mxu0 0.0
      %1475 = vmatprep.subr.mxu0 0.0
      %1476 = vmatpush1.msra.mxu0 0.0
      %1477 = vmatprep.subr.mxu0 0.0
      %1478 = vmatpush1.msra.mxu0 0.0
      %1479 = vmatprep.subr.mxu0 0.0
      %1480 = vmatpush1.msra.mxu0 0.0
      %1481 = vmatprep.subr.mxu0 0.0
      %1482 = vmatpush1.msra.mxu0 0.0
      %1483 = vmatprep.subr.mxu0 0.0
      %1484 = vmatpush1.msra.mxu0 0.0
      %1485 = vmatprep.subr.mxu0 0.0
      %1486 = vmatpush1.msra.mxu0 0.0
      %1487 = vmatprep.subr.mxu0 0.0
      %1488 = vmatpush1.msra.mxu0 0.0
      %1489 = vmatprep.subr.mxu0 0.0
      %1490 = vmatpush1.msra.mxu0 0.0
      %1491 = vmatprep.subr.mxu0 0.0
      %1492 = vmatpush1.msra.mxu0 0.0
      %1493 = vmatprep.subr.mxu0 0.0
      %1494 = vmatpush1.msra.mxu0 0.0
      %1495 = vmatprep.subr.mxu0 0.0
      %1496 = vmatpush1.msra.mxu0 %v982
      %1497 = vmatprep.subr.mxu0 0.0
      %1498 = vmatpush2.msra.mxu0 0.0
      %1499 = vmatprep.subr.mxu0 0.0
      %1500 = vmatpush2.msra.mxu0 0.0
      %1501 = vmatprep.subr.mxu0 0.0
      %1502 = vmatpush2.msra.mxu0 0.0
      %1503 = vmatprep.subr.mxu0 0.0
      %1504 = vmatpush2.msra.mxu0 0.0
      %1505 = vmatprep.subr.mxu0 0.0
      %1506 = vmatpush2.msra.mxu0 0.0
      %1507 = vmatprep.subr.mxu0 0.0
      %1508 = vmatpush2.msra.mxu0 0.0
      %1509 = vmatprep.subr.mxu0 0.0
      %1510 = vmatpush2.msra.mxu0 0.0
      %1511 = vmatprep.subr.mxu0 0.0
      %1512 = vmatpush2.msra.mxu0 0.0
      %1513 = vmatprep.subr.mxu0 0.0
      %1514 = vmatpush2.msra.mxu0 0.0
      %1515 = vmatprep.subr.mxu0 0.0
      %1516 = vmatpush2.msra.mxu0 0.0
      %1517 = vmatprep.subr.mxu0 0.0
      %1518 = vmatpush2.msra.mxu0 0.0
      %1519 = vmatprep.subr.mxu0 0.0
      %1520 = vmatpush2.msra.mxu0 0.0
      %1521 = vmatprep.subr.mxu0 0.0
      %1522 = vmatpush2.msra.mxu0 0.0
      %1523 = vmatprep.subr.mxu0 0.0
      %1524 = vmatpush2.msra.mxu0 0.0
      %1525 = vmatprep.subr.mxu0 0.0
      %1526 = vmatpush2.msra.mxu0 0.0
      %1527 = vmatprep.subr.mxu0 0.0
      %1528 = vmatpush2.msra.mxu0 0.0
      %1529 = vmatprep.mubr.f32.mxu0 0.0
      %1530 = vmatmul.mubr.f32.gmra.mxu0 %v1463
      %v1531 = vpop.f32.mrf.mxu0
      %v1532 = vadd.f32 0.0, %v1531
      %v1533 = vpop.f32.mrf.mxu0
      %1534 = vdwg.mxu0
      %v1536 = vsel %vm274, %v1459, 0
      %1538 = vmatprep.subr.mxu0 0.0
      %1539 = vmatpush1.msra.mxu0 0.0
      %1540 = vmatprep.subr.mxu0 0.0
      %1541 = vmatpush1.msra.mxu0 0.0
      %1542 = vmatprep.subr.mxu0 0.0
      %1543 = vmatpush1.msra.mxu0 0.0
      %1544 = vmatprep.subr.mxu0 0.0
      %1545 = vmatpush1.msra.mxu0 0.0
      %1546 = vmatprep.subr.mxu0 0.0
      %1547 = vmatpush1.msra.mxu0 0.0
      %1548 = vmatprep.subr.mxu0 0.0
      %1549 = vmatpush1.msra.mxu0 0.0
      %1550 = vmatprep.subr.mxu0 0.0
      %1551 = vmatpush1.msra.mxu0 0.0
      %1552 = vmatprep.subr.mxu0 0.0
      %1553 = vmatpush1.msra.mxu0 0.0
      %1554 = vmatprep.subr.mxu0 0.0
      %1555 = vmatpush1.msra.mxu0 0.0
      %1556 = vmatprep.subr.mxu0 0.0
      %1557 = vmatpush1.msra.mxu0 0.0
      %1558 = vmatprep.subr.mxu0 0.0
      %1559 = vmatpush1.msra.mxu0 0.0
      %1560 = vmatprep.subr.mxu0 0.0
      %1561 = vmatpush1.msra.mxu0 0.0
      %1562 = vmatprep.subr.mxu0 0.0
      %1563 = vmatpush1.msra.mxu0 0.0
      %1564 = vmatprep.subr.mxu0 0.0
      %1565 = vmatpush1.msra.mxu0 0.0
      %1566 = vmatprep.subr.mxu0 0.0
      %1567 = vmatpush1.msra.mxu0 0.0
      %1568 = vmatprep.subr.mxu0 0.0
      %1569 = vmatpush1.msra.mxu0 %v988
      %1570 = vmatprep.subr.mxu0 0.0
      %1571 = vmatpush2.msra.mxu0 0.0
      %1572 = vmatprep.subr.mxu0 0.0
      %1573 = vmatpush2.msra.mxu0 0.0
      %1574 = vmatprep.subr.mxu0 0.0
      %1575 = vmatpush2.msra.mxu0 0.0
      %1576 = vmatprep.subr.mxu0 0.0
      %1577 = vmatpush2.msra.mxu0 0.0
      %1578 = vmatprep.subr.mxu0 0.0
      %1579 = vmatpush2.msra.mxu0 0.0
      %1580 = vmatprep.subr.mxu0 0.0
      %1581 = vmatpush2.msra.mxu0 0.0
      %1582 = vmatprep.subr.mxu0 0.0
      %1583 = vmatpush2.msra.mxu0 0.0
      %1584 = vmatprep.subr.mxu0 0.0
      %1585 = vmatpush2.msra.mxu0 0.0
      %1586 = vmatprep.subr.mxu0 0.0
      %1587 = vmatpush2.msra.mxu0 0.0
      %1588 = vmatprep.subr.mxu0 0.0
      %1589 = vmatpush2.msra.mxu0 0.0
      %1590 = vmatprep.subr.mxu0 0.0
      %1591 = vmatpush2.msra.mxu0 0.0
      %1592 = vmatprep.subr.mxu0 0.0
      %1593 = vmatpush2.msra.mxu0 0.0
      %1594 = vmatprep.subr.mxu0 0.0
      %1595 = vmatpush2.msra.mxu0 0.0
      %1596 = vmatprep.subr.mxu0 0.0
      %1597 = vmatpush2.msra.mxu0 0.0
      %1598 = vmatprep.subr.mxu0 0.0
      %1599 = vmatpush2.msra.mxu0 0.0
      %1600 = vmatprep.subr.mxu0 0.0
      %1601 = vmatpush2.msra.mxu0 0.0
      %1602 = vmatprep.mubr.f32.mxu0 0.0
      %1603 = vmatmul.mubr.f32.gmra.mxu0 %v1536
      %v1604 = vpop.f32.mrf.mxu0
      %v1605 = vadd.f32 %v1532, %v1604
      %v1606 = vpop.f32.mrf.mxu0
      %1607 = vdwg.mxu0
      %s1608 = scalar_lea.vmem %s3, 16
      %v1609 = vld [vmem:[%s1608] sm:$0xff]
      %v1611 = vsel %vm274, %v1609, 0
      %1613 = vmatprep.subr.mxu0 0.0
      %1614 = vmatpush1.msra.mxu0 0.0
      %1615 = vmatprep.subr.mxu0 0.0
      %1616 = vmatpush1.msra.mxu0 0.0
      %1617 = vmatprep.subr.mxu0 0.0
      %1618 = vmatpush1.msra.mxu0 0.0
      %1619 = vmatprep.subr.mxu0 0.0
      %1620 = vmatpush1.msra.mxu0 0.0
      %1621 = vmatprep.subr.mxu0 0.0
      %1622 = vmatpush1.msra.mxu0 0.0
      %1623 = vmatprep.subr.mxu0 0.0
      %1624 = vmatpush1.msra.mxu0 0.0
      %1625 = vmatprep.subr.mxu0 0.0
      %1626 = vmatpush1.msra.mxu0 0.0
      %1627 = vmatprep.subr.mxu0 0.0
      %1628 = vmatpush1.msra.mxu0 0.0
      %1629 = vmatprep.subr.mxu0 0.0
      %1630 = vmatpush1.msra.mxu0 0.0
      %1631 = vmatprep.subr.mxu0 0.0
      %1632 = vmatpush1.msra.mxu0 0.0
      %1633 = vmatprep.subr.mxu0 0.0
      %1634 = vmatpush1.msra.mxu0 0.0
      %1635 = vmatprep.subr.mxu0 0.0
      %1636 = vmatpush1.msra.mxu0 0.0
      %1637 = vmatprep.subr.mxu0 0.0
      %1638 = vmatpush1.msra.mxu0 0.0
      %1639 = vmatprep.subr.mxu0 0.0
      %1640 = vmatpush1.msra.mxu0 0.0
      %1641 = vmatprep.subr.mxu0 0.0
      %1642 = vmatpush1.msra.mxu0 0.0
      %1643 = vmatprep.subr.mxu0 0.0
      %1644 = vmatpush1.msra.mxu0 %v993
      %1645 = vmatprep.subr.mxu0 0.0
      %1646 = vmatpush2.msra.mxu0 0.0
      %1647 = vmatprep.subr.mxu0 0.0
      %1648 = vmatpush2.msra.mxu0 0.0
      %1649 = vmatprep.subr.mxu0 0.0
      %1650 = vmatpush2.msra.mxu0 0.0
      %1651 = vmatprep.subr.mxu0 0.0
      %1652 = vmatpush2.msra.mxu0 0.0
      %1653 = vmatprep.subr.mxu0 0.0
      %1654 = vmatpush2.msra.mxu0 0.0
      %1655 = vmatprep.subr.mxu0 0.0
      %1656 = vmatpush2.msra.mxu0 0.0
      %1657 = vmatprep.subr.mxu0 0.0
      %1658 = vmatpush2.msra.mxu0 0.0
      %1659 = vmatprep.subr.mxu0 0.0
      %1660 = vmatpush2.msra.mxu0 0.0
      %1661 = vmatprep.subr.mxu0 0.0
      %1662 = vmatpush2.msra.mxu0 0.0
      %1663 = vmatprep.subr.mxu0 0.0
      %1664 = vmatpush2.msra.mxu0 0.0
      %1665 = vmatprep.subr.mxu0 0.0
      %1666 = vmatpush2.msra.mxu0 0.0
      %1667 = vmatprep.subr.mxu0 0.0
      %1668 = vmatpush2.msra.mxu0 0.0
      %1669 = vmatprep.subr.mxu0 0.0
      %1670 = vmatpush2.msra.mxu0 0.0
      %1671 = vmatprep.subr.mxu0 0.0
      %1672 = vmatpush2.msra.mxu0 0.0
      %1673 = vmatprep.subr.mxu0 0.0
      %1674 = vmatpush2.msra.mxu0 0.0
      %1675 = vmatprep.subr.mxu0 0.0
      %1676 = vmatpush2.msra.mxu0 0.0
      %1677 = vmatprep.mubr.f32.mxu0 0.0
      %1678 = vmatmul.mubr.f32.gmra.mxu0 %v1611
      %v1679 = vpop.f32.mrf.mxu0
      %v1680 = vadd.f32 0.0, %v1679
      %v1681 = vpop.f32.mrf.mxu0
      %1682 = vdwg.mxu0
      %v1683 = vadd.f32 %v1605, %v1680
      %1685 = vrot.lane.b32.xlu0 %v1683, 2
      %v1686 = vpop.permute.xlu0 %1685
      %v1688 = vsel %vm734, 0.0, %v1686
      %v1689 = vadd.f32 %v1458, %v1688
      %v1690 = vsel %vm968, %v1689, 0.0
      %1691 = vadd.xlane.f32.xlu0 %v1690
      %v1692 = vpop.xlane.xlu0 %1691
      %v1693 = vmul.f32 %v1692, 0.25
      %v1694 = vsub.f32 %v1689, %v1693
      %v1695 = vmul.f32 %v1694, %v1694
      %v1696 = vsel %vm968, %v1695, 0.0
      %1697 = vadd.xlane.f32.xlu0 %v1696
      %v1698 = vpop.xlane.xlu0 %1697
      %v1699 = vmul.f32 %v1698, 0.25
      %v1700 = vadd.f32 %v1699, 1e-05
      %v1701 = vrsqrt.pop %v1700
      %v1702 = vmul.f32 %v1694, %v1701
      %v1703 = vmax.f32 %v1702, 0.0
      %1704 = vst.msk [vmem:[%s246] sm:$0xff] %vm968, %v1703
      %p1705 = scmp.lt.s32.totalorder %s17, 1
      %s1706 = scalar_select %p1705, %s17, 1
      %s1707 = smul.addr %s1706, 8
      %s1708 = scalar_lea.vmem %s6, %s1707
      // Predicated region
      $region45: #{grouped_xnet_down.7} parent=43 // pred_check
        %p1709 = pneg %p166
      $region46: #{grouped_xnet_down.7} parent=43 // pred_check_branch
        %1711 = sbr.rel (%p1709) target = $region48
      $region47: #{grouped_xnet_down.7} parent=43 // pred_region
        _
      $region48: #{grouped_xnet_down.7} parent=43 // pred_fallthru
        _
    $region44: #{grouped_xnet_down.7} parent=5 // pred_fallthru
      _
    %p1712 = scmp.le.s32.totalorder 2, %s12
    // Predicated region
    $region49: #{grouped_xnet_down.7} parent=5 // pred_check
      %p1713 = pneg %p1712
    $region50: #{grouped_xnet_down.7} parent=5 // pred_check_branch
      %1715 = sbr.rel (%p1713) target = $region52
    $region51: #{grouped_xnet_down.7} parent=5 // pred_region
      %s1716 = ssub.s32 %s12, 2
      // Predicated region
      $region53: #{grouped_xnet_down.7} parent=51 // pred_check
        %p1717 = pneg %p172
      $region54: #{grouped_xnet_down.7} parent=51 // pred_check_branch
        %1719 = sbr.rel (%p1717) target = $region56
      $region55: #{grouped_xnet_down.7} parent=51 // pred_region
        %p1720 = scmp.lt.s32.totalorder %s18, 1
        %s1721 = scalar_select %p1720, %s18, 1
        %s1722 = smul.addr %s1721, 8
        %s1723 = scalar_lea.vmem %s6, %s1722
      $region56: #{grouped_xnet_down.7} parent=51 // pred_fallthru
        _
    $region52: #{grouped_xnet_down.7} parent=5 // pred_fallthru
      _
  $region6: #{grouped_xnet_down.7} parent=0 // loop_footer
    %s16 = sadd.s32 1, %s12
  $region7: #{grouped_xnet_down.7} parent=0 // loop_footer_branch
    %11 = sbr.rel target = $region3
  $region8: #{grouped_xnet_down.7} parent=0 // loop_exit
    _

// kernel: grouped_xnet_down.6
$region0: #{grouped_xnet_down.6}
  #allocation0 [shape = 'u32[]', space=smem, size = 0x4, offset = 0x4, fixed_abs, tag = 'smem constant byte address 0x4 - core index']
  #allocation1 [shape = 'u32[144,128]{1,0:T(1,128)}', space=vmem, size = 0x12000, scoped, tag = 'internal scratch']
  %s0 = inlined_call_operand.vmem [shape: f32[2,4,16], index: 0, kind: input, shape index: {}]
  %s1 = inlined_call_operand.vmem [shape: f32[9,8,4], index: 1, kind: input, shape index: {}]
  %s2 = inlined_call_operand.vmem [shape: f32[8,1], index: 2, kind: input, shape index: {}]
  %s3 = inlined_call_operand.vmem [shape: f32[9,8,8], index: 3, kind: input, shape index: {}]
  %s4 = inlined_call_operand.vmem [shape: f32[8,1], index: 4, kind: input, shape index: {}]
  %s5 = inlined_call_operand.vmem [shape: f32[2,16], index: 5, kind: input, shape index: {}]
  %s6 = inlined_call_operand.vmem [shape: f32[2,8,16], index: 6, kind: output, shape index: {}]
  %s7 = sld [smem:[#allocation0]]
  $region57: #{grouped_xnet_down.6} parent=0
    _
  %s9 = ssub.s32 1, %s7
  %s10 = scalar_select 0, %s9, %s7
  loop: start=0, step=1, limit=4
  $region2: #{grouped_xnet_down.6} parent=0 // loop_pre_header
    _
  $region3: #{grouped_xnet_down.6} parent=0 // loop_header
    %s12 = sphi 0, %s16
    %p13 = scmp.ge.s32.totalorder %s12, 4
    %s22 = sphi 0, %s24
    %s25 = sphi 0, %s22
    %s26 = sphi 0, %s25
    %s42 = sphi 0, %s26
    %s46 = sphi 0, %s46
    %s48 = sphi 0, %s46
    %s49 = sphi 0, %s48
    %s63 = sphi 0, %s49
    %s67 = sphi 0, %s67
    %s69 = sphi 0, %s67
    %s70 = sphi 0, %s69
    %s84 = sphi 0, %s70
    %s88 = sphi 0, %s88
    %s90 = sphi 0, %s88
    %s91 = sphi 0, %s90
    %s105 = sphi 0, %s91
    %s109 = sphi 0, %s109
    %s111 = sphi 0, %s109
    %s112 = sphi 0, %s111
    %s126 = sphi 0, %s112
    %s130 = sphi 0, %s130
    %s132 = sphi 0, %s130
    %s133 = sphi 0, %s132
    %s147 = sphi 0, %s133
    %s153 = sphi 0, %s155
    %s156 = sphi 0, %s153
    %s157 = sphi 0, %s156
    %s173 = sphi 0, %s157
  $region4: #{grouped_xnet_down.6} parent=0 // loop_header_branch
    %15 = sbr.rel (%p13) target = $region8
  $region5: #{grouped_xnet_down.6} parent=0 // loop_body
    %s17 = ssub.s32 %s12, 1
    %s18 = ssub.s32 %s12, 2
    %s19 = sadd.s32 %s12, 1
    %s20 = ssub.s32 %s12, %s19
    %p21 = scmp.eq.s32.totalorder %s20, 0
    %s23 = sadd.s32 %s22, 1
    %s24 = scalar_select %p21, %s22, %s23
    %p27 = pneg %p21
    %p28 = scmp.eq.s32.totalorder %s12, 1
    %p29 = por %p27, %p28
    %p30 = scmp.ne.s32.totalorder %s22, %s25
    %p31 = scmp.eq.s32.totalorder %s12, 0
    %p32 = por %p30, %p31
    %p33 = scmp.ne.s32.totalorder %s22, %s25
    %p34 = scmp.eq.s32.totalorder %s17, 1
    %p35 = por %p33, %p34
    %p36 = scmp.ne.s32.totalorder %s25, %s26
    %p37 = scmp.eq.s32.totalorder %s17, 0
    %p38 = por %p36, %p37
    %p39 = scmp.ne.s32.totalorder %s25, %s26
    %p40 = scmp.eq.s32.totalorder %s18, 1
    %p41 = por %p39, %p40
    %p43 = scmp.ne.s32.totalorder %s26, %s42
    %p44 = scmp.eq.s32.totalorder %s18, 0
    %p45 = por %p43, %p44
    %s47 = sadd.s32 %s46, 1
    %p50 = scmp.eq.s32.totalorder %s12, 1
    %p51 = scmp.ne.s32.totalorder %s46, %s48
    %p52 = scmp.eq.s32.totalorder %s12, 0
    %p53 = por %p51, %p52
    %p54 = scmp.ne.s32.totalorder %s46, %s48
    %p55 = scmp.eq.s32.totalorder %s17, 1
    %p56 = por %p54, %p55
    %p57 = scmp.ne.s32.totalorder %s48, %s49
    %p58 = scmp.eq.s32.totalorder %s17, 0
    %p59 = por %p57, %p58
    %p60 = scmp.ne.s32.totalorder %s48, %s49
    %p61 = scmp.eq.s32.totalorder %s18, 1
    %p62 = por %p60, %p61
    %p64 = scmp.ne.s32.totalorder %s49, %s63
    %p65 = scmp.eq.s32.totalorder %s18, 0
    %p66 = por %p64, %p65
    %s68 = sadd.s32 %s67, 1
    %p71 = scmp.eq.s32.totalorder %s12, 1
    %p72 = scmp.ne.s32.totalorder %s67, %s69
    %p73 = scmp.eq.s32.totalorder %s12, 0
    %p74 = por %p72, %p73
    %p75 = scmp.ne.s32.totalorder %s67, %s69
    %p76 = scmp.eq.s32.totalorder %s17, 1
    %p77 = por %p75, %p76
    %p78 = scmp.ne.s32.totalorder %s69, %s70
    %p79 = scmp.eq.s32.totalorder %s17, 0
    %p80 = por %p78, %p79
    %p81 = scmp.ne.s32.totalorder %s69, %s70
    %p82 = scmp.eq.s32.totalorder %s18, 1
    %p83 = por %p81, %p82
    %p85 = scmp.ne.s32.totalorder %s70, %s84
    %p86 = scmp.eq.s32.totalorder %s18, 0
    %p87 = por %p85, %p86
    %s89 = sadd.s32 %s88, 1
    %p92 = scmp.eq.s32.totalorder %s12, 1
    %p93 = scmp.ne.s32.totalorder %s88, %s90
    %p94 = scmp.eq.s32.totalorder %s12, 0
    %p95 = por %p93, %p94
    %p96 = scmp.ne.s32.totalorder %s88, %s90
    %p97 = scmp.eq.s32.totalorder %s17, 1
    %p98 = por %p96, %p97
    %p99 = scmp.ne.s32.totalorder %s90, %s91
    %p100 = scmp.eq.s32.totalorder %s17, 0
    %p101 = por %p99, %p100
    %p102 = scmp.ne.s32.totalorder %s90, %s91
    %p103 = scmp.eq.s32.totalorder %s18, 1
    %p104 = por %p102, %p103
    %p106 = scmp.ne.s32.totalorder %s91, %s105
    %p107 = scmp.eq.s32.totalorder %s18, 0
    %p108 = por %p106, %p107
    %s110 = sadd.s32 %s109, 1
    %p113 = scmp.eq.s32.totalorder %s12, 1
    %p114 = scmp.ne.s32.totalorder %s109, %s111
    %p115 = scmp.eq.s32.totalorder %s12, 0
    %p116 = por %p114, %p115
    %p117 = scmp.ne.s32.totalorder %s109, %s111
    %p118 = scmp.eq.s32.totalorder %s17, 1
    %p119 = por %p117, %p118
    %p120 = scmp.ne.s32.totalorder %s111, %s112
    %p121 = scmp.eq.s32.totalorder %s17, 0
    %p122 = por %p120, %p121
    %p123 = scmp.ne.s32.totalorder %s111, %s112
    %p124 = scmp.eq.s32.totalorder %s18, 1
    %p125 = por %p123, %p124
    %p127 = scmp.ne.s32.totalorder %s112, %s126
    %p128 = scmp.eq.s32.totalorder %s18, 0
    %p129 = por %p127, %p128
    %s131 = sadd.s32 %s130, 1
    %p134 = scmp.eq.s32.totalorder %s12, 1
    %p135 = scmp.ne.s32.totalorder %s130, %s132
    %p136 = scmp.eq.s32.totalorder %s12, 0
    %p137 = por %p135, %p136
    %p138 = scmp.ne.s32.totalorder %s130, %s132
    %p139 = scmp.eq.s32.totalorder %s17, 1
    %p140 = por %p138, %p139
    %p141 = scmp.ne.s32.totalorder %s132, %s133
    %p142 = scmp.eq.s32.totalorder %s17, 0
    %p143 = por %p141, %p142
    %p144 = scmp.ne.s32.totalorder %s132, %s133
    %p145 = scmp.eq.s32.totalorder %s18, 1
    %p146 = por %p144, %p145
    %p148 = scmp.ne.s32.totalorder %s133, %s147
    %p149 = scmp.eq.s32.totalorder %s18, 0
    %p150 = por %p148, %p149
    %s151 = ssub.s32 %s12, %s19
    %p152 = scmp.eq.s32.totalorder %s151, 0
    %s154 = sadd.s32 %s153, 1
    %s155 = scalar_select %p152, %s153, %s154
    %p158 = pneg %p152
    %p159 = scmp.eq.s32.totalorder %s12, 1
    %p160 = por %p158, %p159
    %p161 = scmp.ne.s32.totalorder %s153, %s156
    %p162 = scmp.eq.s32.totalorder %s12, 0
    %p163 = por %p161, %p162
    %p164 = scmp.ne.s32.totalorder %s153, %s156
    %p165 = scmp.eq.s32.totalorder %s17, 1
    %p166 = por %p164, %p165
    %p167 = scmp.ne.s32.totalorder %s156, %s157
    %p168 = scmp.eq.s32.totalorder %s17, 0
    %p169 = por %p167, %p168
    %p170 = scmp.ne.s32.totalorder %s156, %s157
    %p171 = scmp.eq.s32.totalorder %s18, 1
    %p172 = por %p170, %p171
    %p174 = scmp.ne.s32.totalorder %s157, %s173
    %p175 = scmp.eq.s32.totalorder %s18, 0
    %p176 = por %p174, %p175
    %p177 = scmp.le.s32.totalorder 1, %s12
    %p178 = scmp.lt.s32.totalorder %s12, 3
    %p179 = pnand %p177, %p178
    %p180 = pneg %p179
    // Predicated region
    $region9: #{grouped_xnet_down.6} parent=5 // pred_check
      _
    $region10: #{grouped_xnet_down.6} parent=5 // pred_check_branch
      %182 = sbr.rel (%p179) target = $region12
    $region11: #{grouped_xnet_down.6} parent=5 // pred_region
      %s183 = ssub.s32 %s12, 1
      // Predicated region
      $region13: #{grouped_xnet_down.6} parent=11 // pred_check
        %p184 = pneg %p59
      $region14: #{grouped_xnet_down.6} parent=11 // pred_check_branch
        %186 = sbr.rel (%p184) target = $region16
      $region15: #{grouped_xnet_down.6} parent=11 // pred_region
        _
      $region16: #{grouped_xnet_down.6} parent=11 // pred_fallthru
        _
      // Predicated region
      $region17: #{grouped_xnet_down.6} parent=11 // pred_check
        %p187 = pneg %p80
      $region18: #{grouped_xnet_down.6} parent=11 // pred_check_branch
        %189 = sbr.rel (%p187) target = $region20
      $region19: #{grouped_xnet_down.6} parent=11 // pred_region
        _
      $region20: #{grouped_xnet_down.6} parent=11 // pred_fallthru
        _
      // Predicated region
      $region21: #{grouped_xnet_down.6} parent=11 // pred_check
        %p190 = pneg %p101
      $region22: #{grouped_xnet_down.6} parent=11 // pred_check_branch
        %192 = sbr.rel (%p190) target = $region24
      $region23: #{grouped_xnet_down.6} parent=11 // pred_region
        _
      $region24: #{grouped_xnet_down.6} parent=11 // pred_fallthru
        _
      // Predicated region
      $region25: #{grouped_xnet_down.6} parent=11 // pred_check
        %p193 = pneg %p122
      $region26: #{grouped_xnet_down.6} parent=11 // pred_check_branch
        %195 = sbr.rel (%p193) target = $region28
      $region27: #{grouped_xnet_down.6} parent=11 // pred_region
        _
      $region28: #{grouped_xnet_down.6} parent=11 // pred_fallthru
        _
      // Predicated region
      $region29: #{grouped_xnet_down.6} parent=11 // pred_check
        %p196 = pneg %p143
      $region30: #{grouped_xnet_down.6} parent=11 // pred_check_branch
        %198 = sbr.rel (%p196) target = $region32
      $region31: #{grouped_xnet_down.6} parent=11 // pred_region
        _
      $region32: #{grouped_xnet_down.6} parent=11 // pred_fallthru
        _
    $region12: #{grouped_xnet_down.6} parent=5 // pred_fallthru
      _
    %p199 = scmp.lt.s32.totalorder %s12, 2
    // Predicated region
    $region33: #{grouped_xnet_down.6} parent=5 // pred_check
      %p200 = pneg %p199
    $region34: #{grouped_xnet_down.6} parent=5 // pred_check_branch
      %202 = sbr.rel (%p200) target = $region36
    $region35: #{grouped_xnet_down.6} parent=5 // pred_region
      // Predicated region
      $region37: #{grouped_xnet_down.6} parent=35 // pred_check
        %p203 = pneg %p32
      $region38: #{grouped_xnet_down.6} parent=35 // pred_check_branch
        %205 = sbr.rel (%p203) target = $region40
      $region39: #{grouped_xnet_down.6} parent=35 // pred_region
        %p206 = scmp.lt.s32.totalorder %s12, 1
        %s207 = scalar_select %p206, %s12, 1
        %s208 = smul.addr %s207, 4
        %s209 = scalar_lea.vmem %s0, %s208
      $region40: #{grouped_xnet_down.6} parent=35 // pred_fallthru
        _
    $region36: #{grouped_xnet_down.6} parent=5 // pred_fallthru
      _
    %p210 = scmp.le.s32.totalorder 1, %s12
    %p211 = scmp.lt.s32.totalorder %s12, 3
    %p212 = pnand %p210, %p211
    %p213 = pneg %p212
    // Predicated region
    $region41: #{grouped_xnet_down.6} parent=5 // pred_check
      _
    $region42: #{grouped_xnet_down.6} parent=5 // pred_check_branch
      %215 = sbr.rel (%p212) target = $region44
    $region43: #{grouped_xnet_down.6} parent=5 // pred_region
      %s216 = ssub.s32 %s12, 1
      %p217 = scmp.lt.s32.totalorder %s17, 1
      %s218 = scalar_select %p217, %s17, 1
      %s219 = smul.addr %s218, 4
      %s220 = scalar_lea.vmem %s0, %s219
      %p221 = pneg %p38
      %p222 = pneg %p35
      %p223 = pneg %p59
      %p224 = pneg %p56
      %p225 = pneg %p80
      %p226 = pneg %p77
      %p227 = pneg %p101
      %p228 = pneg %p98
      %p229 = pneg %p122
      %p230 = pneg %p119
      %p231 = pneg %p143
      %p232 = pneg %p140
      %p233 = pneg %p169
      %p234 = pneg %p166
      %p235 = scmp.lt.s32.totalorder %s17, 1
      %s236 = scalar_select %p235, %s17, 1
      %s237 = smul.addr %s236, 8
      %s238 = scalar_lea.vmem %s6, %s237
      %p239 = scmp.lt.s32.totalorder %s17, 1
      %s240 = scalar_select %p239, %s17, 1
      %s241 = smul.addr %s240, 4
      %s242 = scalar_lea.vmem %s0, %s241
      %p243 = scmp.lt.s32.totalorder %s17, 1
      %s244 = scalar_select %p243, %s17, 1
      %s245 = smul.addr %s244, 8
      %s246 = scalar_lea.vmem %s6, %s245
      %v247 = vld [vmem:[%s5] sm:$0x3]
      %v248 = vld [vmem:[%s242] sm:$0xf]
      %250 = vrot.lane.b32.xlu0 %v248, 1
      %v251 = vpop.permute.xlu0 %250
      %vm253 = vcmask 7168
      %v254 = vsel %vm253, 0.0, %v251
      %v255 = vlaneseq
      %v256 = vshrl.u32 %v255, 7
      %v257 = vsub.s32 0, %v256
      %v258 = vrot.slane %v247, %v257
      %v259 = vmul.f32 %v254, %v258
      %260 = vrot.lane.b32.xlu0 %v248, 127
      %v261 = vpop.permute.xlu0 %260
      %vm263 = vcmask 121856
      %v264 = vsel %vm263, %v261, 0.0
      %v265 = vlaneseq
      %v266 = vshrl.u32 %v265, 7
      %v267 = vsub.s32 1, %v266
      %v268 = vrot.slane %v247, %v267
      %v269 = vmul.f32 %v264, %v268
      %s270 = scalar_lea.vmem %s1, 24
      %v271 = vld [vmem:[%s270] sm:$0xff]
      %s272 = scalar_lea.vmem %s1, 32
      %v273 = vld [vmem:[%s272] sm:$0xff]
      %vm274 = vcmask 31744
      %v276 = vsel %vm274, %v273, 0
      %vm278 = vcmask 1043456
      %v279 = vsel %vm278, %v248, 0
      %281 = vmatprep.subr.mxu0 0.0
      %282 = vmatpush1.msra.mxu0 0.0
      %283 = vmatprep.subr.mxu0 0.0
      %284 = vmatpush1.msra.mxu0 0.0
      %285 = vmatprep.subr.mxu0 0.0
      %286 = vmatpush1.msra.mxu0 0.0
      %287 = vmatprep.subr.mxu0 0.0
      %288 = vmatpush1.msra.mxu0 0.0
      %289 = vmatprep.subr.mxu0 0.0
      %290 = vmatpush1.msra.mxu0 0.0
      %291 = vmatprep.subr.mxu0 0.0
      %292 = vmatpush1.msra.mxu0 0.0
      %293 = vmatprep.subr.mxu0 0.0
      %294 = vmatpush1.msra.mxu0 0.0
      %295 = vmatprep.subr.mxu0 0.0
      %296 = vmatpush1.msra.mxu0 0.0
      %297 = vmatprep.subr.mxu0 0.0
      %298 = vmatpush1.msra.mxu0 0.0
      %299 = vmatprep.subr.mxu0 0.0
      %300 = vmatpush1.msra.mxu0 0.0
      %301 = vmatprep.subr.mxu0 0.0
      %302 = vmatpush1.msra.mxu0 0.0
      %303 = vmatprep.subr.mxu0 0.0
      %304 = vmatpush1.msra.mxu0 0.0
      %305 = vmatprep.subr.mxu0 0.0
      %306 = vmatpush1.msra.mxu0 0.0
      %307 = vmatprep.subr.mxu0 0.0
      %308 = vmatpush1.msra.mxu0 0.0
      %309 = vmatprep.subr.mxu0 0.0
      %310 = vmatpush1.msra.mxu0 0.0
      %311 = vmatprep.subr.mxu0 0.0
      %312 = vmatpush1.msra.mxu0 %v279
      %313 = vmatprep.subr.mxu0 0.0
      %314 = vmatpush2.msra.mxu0 0.0
      %315 = vmatprep.subr.mxu0 0.0
      %316 = vmatpush2.msra.mxu0 0.0
      %317 = vmatprep.subr.mxu0 0.0
      %318 = vmatpush2.msra.mxu0 0.0
      %319 = vmatprep.subr.mxu0 0.0
      %320 = vmatpush2.msra.mxu0 0.0
      %321 = vmatprep.subr.mxu0 0.0
      %322 = vmatpush2.msra.mxu0 0.0
      %323 = vmatprep.subr.mxu0 0.0
      %324 = vmatpush2.msra.mxu0 0.0
      %325 = vmatprep.subr.mxu0 0.0
      %326 = vmatpush2.msra.mxu0 0.0
      %327 = vmatprep.subr.mxu0 0.0
      %328 = vmatpush2.msra.mxu0 0.0
      %329 = vmatprep.subr.mxu0 0.0
      %330 = vmatpush2.msra.mxu0 0.0
      %331 = vmatprep.subr.mxu0 0.0
      %332 = vmatpush2.msra.mxu0 0.0
      %333 = vmatprep.subr.mxu0 0.0
      %334 = vmatpush2.msra.mxu0 0.0
      %335 = vmatprep.subr.mxu0 0.0
      %336 = vmatpush2.msra.mxu0 0.0
      %337 = vmatprep.subr.mxu0 0.0
      %338 = vmatpush2.msra.mxu0 0.0
      %339 = vmatprep.subr.mxu0 0.0
      %340 = vmatpush2.msra.mxu0 0.0
      %341 = vmatprep.subr.mxu0 0.0
      %342 = vmatpush2.msra.mxu0 0.0
      %343 = vmatprep.subr.mxu0 0.0
      %344 = vmatpush2.msra.mxu0 0.0
      %345 = vmatprep.mubr.f32.mxu0 0.0
      %346 = vmatmul.mubr.f32.gmra.mxu0 %v276
      %v347 = vpop.f32.mrf.mxu0
      %v348 = vadd.f32 0.0, %v347
      %v349 = vpop.f32.mrf.mxu0
      %350 = vdwg.mxu0
      %v352 = vsel %vm274, %v271, 0
      %v355 = vsel %vm278, %v259, 0
      %357 = vmatprep.subr.mxu0 0.0
      %358 = vmatpush1.msra.mxu0 0.0
      %359 = vmatprep.subr.mxu0 0.0
      %360 = vmatpush1.msra.mxu0 0.0
      %361 = vmatprep.subr.mxu0 0.0
      %362 = vmatpush1.msra.mxu0 0.0
      %363 = vmatprep.subr.mxu0 0.0
      %364 = vmatpush1.msra.mxu0 0.0
      %365 = vmatprep.subr.mxu0 0.0
      %366 = vmatpush1.msra.mxu0 0.0
      %367 = vmatprep.subr.mxu0 0.0
      %368 = vmatpush1.msra.mxu0 0.0
      %369 = vmatprep.subr.mxu0 0.0
      %370 = vmatpush1.msra.mxu0 0.0
      %371 = vmatprep.subr.mxu0 0.0
      %372 = vmatpush1.msra.mxu0 0.0
      %373 = vmatprep.subr.mxu0 0.0
      %374 = vmatpush1.msra.mxu0 0.0
      %375 = vmatprep.subr.mxu0 0.0
      %376 = vmatpush1.msra.mxu0 0.0
      %377 = vmatprep.subr.mxu0 0.0
      %378 = vmatpush1.msra.mxu0 0.0
      %379 = vmatprep.subr.mxu0 0.0
      %380 = vmatpush1.msra.mxu0 0.0
      %381 = vmatprep.subr.mxu0 0.0
      %382 = vmatpush1.msra.mxu0 0.0
      %383 = vmatprep.subr.mxu0 0.0
      %384 = vmatpush1.msra.mxu0 0.0
      %385 = vmatprep.subr.mxu0 0.0
      %386 = vmatpush1.msra.mxu0 0.0
      %387 = vmatprep.subr.mxu0 0.0
      %388 = vmatpush1.msra.mxu0 %v355
      %389 = vmatprep.subr.mxu0 0.0
      %390 = vmatpush2.msra.mxu0 0.0
      %391 = vmatprep.subr.mxu0 0.0
      %392 = vmatpush2.msra.mxu0 0.0
      %393 = vmatprep.subr.mxu0 0.0
      %394 = vmatpush2.msra.mxu0 0.0
      %395 = vmatprep.subr.mxu0 0.0
      %396 = vmatpush2.msra.mxu0 0.0
      %397 = vmatprep.subr.mxu0 0.0
      %398 = vmatpush2.msra.mxu0 0.0
      %399 = vmatprep.subr.mxu0 0.0
      %400 = vmatpush2.msra.mxu0 0.0
      %401 = vmatprep.subr.mxu0 0.0
      %402 = vmatpush2.msra.mxu0 0.0
      %403 = vmatprep.subr.mxu0 0.0
      %404 = vmatpush2.msra.mxu0 0.0
      %405 = vmatprep.subr.mxu0 0.0
      %406 = vmatpush2.msra.mxu0 0.0
      %407 = vmatprep.subr.mxu0 0.0
      %408 = vmatpush2.msra.mxu0 0.0
      %409 = vmatprep.subr.mxu0 0.0
      %410 = vmatpush2.msra.mxu0 0.0
      %411 = vmatprep.subr.mxu0 0.0
      %412 = vmatpush2.msra.mxu0 0.0
      %413 = vmatprep.subr.mxu0 0.0
      %414 = vmatpush2.msra.mxu0 0.0
      %415 = vmatprep.subr.mxu0 0.0
      %416 = vmatpush2.msra.mxu0 0.0
      %417 = vmatprep.subr.mxu0 0.0
      %418 = vmatpush2.msra.mxu0 0.0
      %419 = vmatprep.subr.mxu0 0.0
      %420 = vmatpush2.msra.mxu0 0.0
      %421 = vmatprep.mubr.f32.mxu0 0.0
      %422 = vmatmul.mubr.f32.gmra.mxu0 %v352
      %v423 = vpop.f32.mrf.mxu0
      %v424 = vadd.f32 %v348, %v423
      %v425 = vpop.f32.mrf.mxu0
      %426 = vdwg.mxu0
      %s427 = scalar_lea.vmem %s1, 40
      %v428 = vld [vmem:[%s427] sm:$0xff]
      %v430 = vsel %vm274, %v428, 0
      %v433 = vsel %vm278, %v269, 0
      %435 = vmatprep.subr.mxu0 0.0
      %436 = vmatpush1.msra.mxu0 0.0
      %437 = vmatprep.subr.mxu0 0.0
      %438 = vmatpush1.msra.mxu0 0.0
      %439 = vmatprep.subr.mxu0 0.0
      %440 = vmatpush1.msra.mxu0 0.0
      %441 = vmatprep.subr.mxu0 0.0
      %442 = vmatpush1.msra.mxu0 0.0
      %443 = vmatprep.subr.mxu0 0.0
      %444 = vmatpush1.msra.mxu0 0.0
      %445 = vmatprep.subr.mxu0 0.0
      %446 = vmatpush1.msra.mxu0 0.0
      %447 = vmatprep.subr.mxu0 0.0
      %448 = vmatpush1.msra.mxu0 0.0
      %449 = vmatprep.subr.mxu0 0.0
      %450 = vmatpush1.msra.mxu0 0.0
      %451 = vmatprep.subr.mxu0 0.0
      %452 = vmatpush1.msra.mxu0 0.0
      %453 = vmatprep.subr.mxu0 0.0
      %454 = vmatpush1.msra.mxu0 0.0
      %455 = vmatprep.subr.mxu0 0.0
      %456 = vmatpush1.msra.mxu0 0.0
      %457 = vmatprep.subr.mxu0 0.0
      %458 = vmatpush1.msra.mxu0 0.0
      %459 = vmatprep.subr.mxu0 0.0
      %460 = vmatpush1.msra.mxu0 0.0
      %461 = vmatprep.subr.mxu0 0.0
      %462 = vmatpush1.msra.mxu0 0.0
      %463 = vmatprep.subr.mxu0 0.0
      %464 = vmatpush1.msra.mxu0 0.0
      %465 = vmatprep.subr.mxu0 0.0
      %466 = vmatpush1.msra.mxu0 %v433
      %467 = vmatprep.subr.mxu0 0.0
      %468 = vmatpush2.msra.mxu0 0.0
      %469 = vmatprep.subr.mxu0 0.0
      %470 = vmatpush2.msra.mxu0 0.0
      %471 = vmatprep.subr.mxu0 0.0
      %472 = vmatpush2.msra.mxu0 0.0
      %473 = vmatprep.subr.mxu0 0.0
      %474 = vmatpush2.msra.mxu0 0.0
      %475 = vmatprep.subr.mxu0 0.0
      %476 = vmatpush2.msra.mxu0 0.0
      %477 = vmatprep.subr.mxu0 0.0
      %478 = vmatpush2.msra.mxu0 0.0
      %479 = vmatprep.subr.mxu0 0.0
      %480 = vmatpush2.msra.mxu0 0.0
      %481 = vmatprep.subr.mxu0 0.0
      %482 = vmatpush2.msra.mxu0 0.0
      %483 = vmatprep.subr.mxu0 0.0
      %484 = vmatpush2.msra.mxu0 0.0
      %485 = vmatprep.subr.mxu0 0.0
      %486 = vmatpush2.msra.mxu0 0.0
      %487 = vmatprep.subr.mxu0 0.0
      %488 = vmatpush2.msra.mxu0 0.0
      %489 = vmatprep.subr.mxu0 0.0
      %490 = vmatpush2.msra.mxu0 0.0
      %491 = vmatprep.subr.mxu0 0.0
      %492 = vmatpush2.msra.mxu0 0.0
      %493 = vmatprep.subr.mxu0 0.0
      %494 = vmatpush2.msra.mxu0 0.0
      %495 = vmatprep.subr.mxu0 0.0
      %496 = vmatpush2.msra.mxu0 0.0
      %497 = vmatprep.subr.mxu0 0.0
      %498 = vmatpush2.msra.mxu0 0.0
      %499 = vmatprep.mubr.f32.mxu0 0.0
      %500 = vmatmul.mubr.f32.gmra.mxu0 %v430
      %v501 = vpop.f32.mrf.mxu0
      %v502 = vadd.f32 0.0, %v501
      %v503 = vpop.f32.mrf.mxu0
      %504 = vdwg.mxu0
      %v505 = vadd.f32 %v424, %v502
      %v506 = vld [vmem:[%s2] sm:$0xff]
      %508 = vset.pattern.permute.xlu0 0
      %509 = vperm.xlu0 %508, %v506
      %v510 = vpop.permute.xlu0 %509
      %v512 = vadd.f32 %v505, %v510
      %s513 = scalar_lea.vmem %s1, 48
      %v514 = vld [vmem:[%s513] sm:$0xff]
      %s515 = scalar_lea.vmem %s1, 56
      %v516 = vld [vmem:[%s515] sm:$0xff]
      %v518 = vsel %vm274, %v516, 0
      %520 = vmatprep.subr.mxu0 0.0
      %521 = vmatpush1.msra.mxu0 0.0
      %522 = vmatprep.subr.mxu0 0.0
      %523 = vmatpush1.msra.mxu0 0.0
      %524 = vmatprep.subr.mxu0 0.0
      %525 = vmatpush1.msra.mxu0 0.0
      %526 = vmatprep.subr.mxu0 0.0
      %527 = vmatpush1.msra.mxu0 0.0
      %528 = vmatprep.subr.mxu0 0.0
      %529 = vmatpush1.msra.mxu0 0.0
      %530 = vmatprep.subr.mxu0 0.0
      %531 = vmatpush1.msra.mxu0 0.0
      %532 = vmatprep.subr.mxu0 0.0
      %533 = vmatpush1.msra.mxu0 0.0
      %534 = vmatprep.subr.mxu0 0.0
      %535 = vmatpush1.msra.mxu0 0.0
      %536 = vmatprep.subr.mxu0 0.0
      %537 = vmatpush1.msra.mxu0 0.0
      %538 = vmatprep.subr.mxu0 0.0
      %539 = vmatpush1.msra.mxu0 0.0
      %540 = vmatprep.subr.mxu0 0.0
      %541 = vmatpush1.msra.mxu0 0.0
      %542 = vmatprep.subr.mxu0 0.0
      %543 = vmatpush1.msra.mxu0 0.0
      %544 = vmatprep.subr.mxu0 0.0
      %545 = vmatpush1.msra.mxu0 0.0
      %546 = vmatprep.subr.mxu0 0.0
      %547 = vmatpush1.msra.mxu0 0.0
      %548 = vmatprep.subr.mxu0 0.0
      %549 = vmatpush1.msra.mxu0 0.0
      %550 = vmatprep.subr.mxu0 0.0
      %551 = vmatpush1.msra.mxu0 %v279
      %552 = vmatprep.subr.mxu0 0.0
      %553 = vmatpush2.msra.mxu0 0.0
      %554 = vmatprep.subr.mxu0 0.0
      %555 = vmatpush2.msra.mxu0 0.0
      %556 = vmatprep.subr.mxu0 0.0
      %557 = vmatpush2.msra.mxu0 0.0
      %558 = vmatprep.subr.mxu0 0.0
      %559 = vmatpush2.msra.mxu0 0.0
      %560 = vmatprep.subr.mxu0 0.0
      %561 = vmatpush2.msra.mxu0 0.0
      %562 = vmatprep.subr.mxu0 0.0
      %563 = vmatpush2.msra.mxu0 0.0
      %564 = vmatprep.subr.mxu0 0.0
      %565 = vmatpush2.msra.mxu0 0.0
      %566 = vmatprep.subr.mxu0 0.0
      %567 = vmatpush2.msra.mxu0 0.0
      %568 = vmatprep.subr.mxu0 0.0
      %569 = vmatpush2.msra.mxu0 0.0
      %570 = vmatprep.subr.mxu0 0.0
      %571 = vmatpush2.msra.mxu0 0.0
      %572 = vmatprep.subr.mxu0 0.0
      %573 = vmatpush2.msra.mxu0 0.0
      %574 = vmatprep.subr.mxu0 0.0
      %575 = vmatpush2.msra.mxu0 0.0
      %576 = vmatprep.subr.mxu0 0.0
      %577 = vmatpush2.msra.mxu0 0.0
      %578 = vmatprep.subr.mxu0 0.0
      %579 = vmatpush2.msra.mxu0 0.0
      %580 = vmatprep.subr.mxu0 0.0
      %581 = vmatpush2.msra.mxu0 0.0
      %582 = vmatprep.subr.mxu0 0.0
      %583 = vmatpush2.msra.mxu0 0.0
      %584 = vmatprep.mubr.f32.mxu0 0.0
      %585 = vmatmul.mubr.f32.gmra.mxu0 %v518
      %v586 = vpop.f32.mrf.mxu0
      %v587 = vadd.f32 0.0, %v586
      %v588 = vpop.f32.mrf.mxu0
      %589 = vdwg.mxu0
      %v591 = vsel %vm274, %v514, 0
      %593 = vmatprep.subr.mxu0 0.0
      %594 = vmatpush1.msra.mxu0 0.0
      %595 = vmatprep.subr.mxu0 0.0
      %596 = vmatpush1.msra.mxu0 0.0
      %597 = vmatprep.subr.mxu0 0.0
      %598 = vmatpush1.msra.mxu0 0.0
      %599 = vmatprep.subr.mxu0 0.0
      %600 = vmatpush1.msra.mxu0 0.0
      %601 = vmatprep.subr.mxu0 0.0
      %602 = vmatpush1.msra.mxu0 0.0
      %603 = vmatprep.subr.mxu0 0.0
      %604 = vmatpush1.msra.mxu0 0.0
      %605 = vmatprep.subr.mxu0 0.0
      %606 = vmatpush1.msra.mxu0 0.0
      %607 = vmatprep.subr.mxu0 0.0
      %608 = vmatpush1.msra.mxu0 0.0
      %609 = vmatprep.subr.mxu0 0.0
      %610 = vmatpush1.msra.mxu0 0.0
      %611 = vmatprep.subr.mxu0 0.0
      %612 = vmatpush1.msra.mxu0 0.0
      %613 = vmatprep.subr.mxu0 0.0
      %614 = vmatpush1.msra.mxu0 0.0
      %615 = vmatprep.subr.mxu0 0.0
      %616 = vmatpush1.msra.mxu0 0.0
      %617 = vmatprep.subr.mxu0 0.0
      %618 = vmatpush1.msra.mxu0 0.0
      %619 = vmatprep.subr.mxu0 0.0
      %620 = vmatpush1.msra.mxu0 0.0
      %621 = vmatprep.subr.mxu0 0.0
      %622 = vmatpush1.msra.mxu0 0.0
      %623 = vmatprep.subr.mxu0 0.0
      %624 = vmatpush1.msra.mxu0 %v355
      %625 = vmatprep.subr.mxu0 0.0
      %626 = vmatpush2.msra.mxu0 0.0
      %627 = vmatprep.subr.mxu0 0.0
      %628 = vmatpush2.msra.mxu0 0.0
      %629 = vmatprep.subr.mxu0 0.0
      %630 = vmatpush2.msra.mxu0 0.0
      %631 = vmatprep.subr.mxu0 0.0
      %632 = vmatpush2.msra.mxu0 0.0
      %633 = vmatprep.subr.mxu0 0.0
      %634 = vmatpush2.msra.mxu0 0.0
      %635 = vmatprep.subr.mxu0 0.0
      %636 = vmatpush2.msra.mxu0 0.0
      %637 = vmatprep.subr.mxu0 0.0
      %638 = vmatpush2.msra.mxu0 0.0
      %639 = vmatprep.subr.mxu0 0.0
      %640 = vmatpush2.msra.mxu0 0.0
      %641 = vmatprep.subr.mxu0 0.0
      %642 = vmatpush2.msra.mxu0 0.0
      %643 = vmatprep.subr.mxu0 0.0
      %644 = vmatpush2.msra.mxu0 0.0
      %645 = vmatprep.subr.mxu0 0.0
      %646 = vmatpush2.msra.mxu0 0.0
      %647 = vmatprep.subr.mxu0 0.0
      %648 = vmatpush2.msra.mxu0 0.0
      %649 = vmatprep.subr.mxu0 0.0
      %650 = vmatpush2.msra.mxu0 0.0
      %651 = vmatprep.subr.mxu0 0.0
      %652 = vmatpush2.msra.mxu0 0.0
      %653 = vmatprep.subr.mxu0 0.0
      %654 = vmatpush2.msra.mxu0 0.0
      %655 = vmatprep.subr.mxu0 0.0
      %656 = vmatpush2.msra.mxu0 0.0
      %657 = vmatprep.mubr.f32.mxu0 0.0
      %658 = vmatmul.mubr.f32.gmra.mxu0 %v591
      %v659 = vpop.f32.mrf.mxu0
      %v660 = vadd.f32 %v587, %v659
      %v661 = vpop.f32.mrf.mxu0
      %662 = vdwg.mxu0
      %s663 = scalar_lea.vmem %s1, 64
      %v664 = vld [vmem:[%s663] sm:$0xff]
      %v666 = vsel %vm274, %v664, 0
      %668 = vmatprep.subr.mxu0 0.0
      %669 = vmatpush1.msra.mxu0 0.0
      %670 = vmatprep.subr.mxu0 0.0
      %671 = vmatpush1.msra.mxu0 0.0
      %672 = vmatprep.subr.mxu0 0.0
      %673 = vmatpush1.msra.mxu0 0.0
      %674 = vmatprep.subr.mxu0 0.0
      %675 = vmatpush1.msra.mxu0 0.0
      %676 = vmatprep.subr.mxu0 0.0
      %677 = vmatpush1.msra.mxu0 0.0
      %678 = vmatprep.subr.mxu0 0.0
      %679 = vmatpush1.msra.mxu0 0.0
      %680 = vmatprep.subr.mxu0 0.0
      %681 = vmatpush1.msra.mxu0 0.0
      %682 = vmatprep.subr.mxu0 0.0
      %683 = vmatpush1.msra.mxu0 0.0
      %684 = vmatprep.subr.mxu0 0.0
      %685 = vmatpush1.msra.mxu0 0.0
      %686 = vmatprep.subr.mxu0 0.0
      %687 = vmatpush1.msra.mxu0 0.0
      %688 = vmatprep.subr.mxu0 0.0
      %689 = vmatpush1.msra.mxu0 0.0
      %690 = vmatprep.subr.mxu0 0.0
      %691 = vmatpush1.msra.mxu0 0.0
      %692 = vmatprep.subr.mxu0 0.0
      %693 = vmatpush1.msra.mxu0 0.0
      %694 = vmatprep.subr.mxu0 0.0
      %695 = vmatpush1.msra.mxu0 0.0
      %696 = vmatprep.subr.mxu0 0.0
      %697 = vmatpush1.msra.mxu0 0.0
      %698 = vmatprep.subr.mxu0 0.0
      %699 = vmatpush1.msra.mxu0 %v433
      %700 = vmatprep.subr.mxu0 0.0
      %701 = vmatpush2.msra.mxu0 0.0
      %702 = vmatprep.subr.mxu0 0.0
      %703 = vmatpush2.msra.mxu0 0.0
      %704 = vmatprep.subr.mxu0 0.0
      %705 = vmatpush2.msra.mxu0 0.0
      %706 = vmatprep.subr.mxu0 0.0
      %707 = vmatpush2.msra.mxu0 0.0
      %708 = vmatprep.subr.mxu0 0.0
      %709 = vmatpush2.msra.mxu0 0.0
      %710 = vmatprep.subr.mxu0 0.0
      %711 = vmatpush2.msra.mxu0 0.0
      %712 = vmatprep.subr.mxu0 0.0
      %713 = vmatpush2.msra.mxu0 0.0
      %714 = vmatprep.subr.mxu0 0.0
      %715 = vmatpush2.msra.mxu0 0.0
      %716 = vmatprep.subr.mxu0 0.0
      %717 = vmatpush2.msra.mxu0 0.0
      %718 = vmatprep.subr.mxu0 0.0
      %719 = vmatpush2.msra.mxu0 0.0
      %720 = vmatprep.subr.mxu0 0.0
      %721 = vmatpush2.msra.mxu0 0.0
      %722 = vmatprep.subr.mxu0 0.0
      %723 = vmatpush2.msra.mxu0 0.0
      %724 = vmatprep.subr.mxu0 0.0
      %725 = vmatpush2.msra.mxu0 0.0
      %726 = vmatprep.subr.mxu0 0.0
      %727 = vmatpush2.msra.mxu0 0.0
      %728 = vmatprep.subr.mxu0 0.0
      %729 = vmatpush2.msra.mxu0 0.0
      %730 = vmatprep.subr.mxu0 0.0
      %731 = vmatpush2.msra.mxu0 0.0
      %732 = vmatprep.mubr.f32.mxu0 0.0
      %733 = vmatmul.mubr.f32.gmra.mxu0 %v666
      %v734 = vpop.f32.mrf.mxu0
      %v735 = vadd.f32 0.0, %v734
      %v736 = vpop.f32.mrf.mxu0
      %737 = vdwg.mxu0
      %v738 = vadd.f32 %v660, %v735
      %740 = vrot.lane.b32.xlu0 %v738, 124
      %v741 = vpop.permute.xlu0 %740
      %vm743 = vcmask 97280
      %v744 = vsel %vm743, %v741, 0.0
      %v745 = vadd.f32 %v512, %v744
      %v746 = vld [vmem:[%s1] sm:$0xff]
      %s747 = scalar_lea.vmem %s1, 8
      %v748 = vld [vmem:[%s747] sm:$0xff]
      %v750 = vsel %vm274, %v748, 0
      %752 = vmatprep.subr.mxu0 0.0
      %753 = vmatpush1.msra.mxu0 0.0
      %754 = vmatprep.subr.mxu0 0.0
      %755 = vmatpush1.msra.mxu0 0.0
      %756 = vmatprep.subr.mxu0 0.0
      %757 = vmatpush1.msra.mxu0 0.0
      %758 = vmatprep.subr.mxu0 0.0
      %759 = vmatpush1.msra.mxu0 0.0
      %760 = vmatprep.subr.mxu0 0.0
      %761 = vmatpush1.msra.mxu0 0.0
      %762 = vmatprep.subr.mxu0 0.0
      %763 = vmatpush1.msra.mxu0 0.0
      %764 = vmatprep.subr.mxu0 0.0
      %765 = vmatpush1.msra.mxu0 0.0
      %766 = vmatprep.subr.mxu0 0.0
      %767 = vmatpush1.msra.mxu0 0.0
      %768 = vmatprep.subr.mxu0 0.0
      %769 = vmatpush1.msra.mxu0 0.0
      %770 = vmatprep.subr.mxu0 0.0
      %771 = vmatpush1.msra.mxu0 0.0
      %772 = vmatprep.subr.mxu0 0.0
      %773 = vmatpush1.msra.mxu0 0.0
      %774 = vmatprep.subr.mxu0 0.0
      %775 = vmatpush1.msra.mxu0 0.0
      %776 = vmatprep.subr.mxu0 0.0
      %777 = vmatpush1.msra.mxu0 0.0
      %778 = vmatprep.subr.mxu0 0.0
      %779 = vmatpush1.msra.mxu0 0.0
      %780 = vmatprep.subr.mxu0 0.0
      %781 = vmatpush1.msra.mxu0 0.0
      %782 = vmatprep.subr.mxu0 0.0
      %783 = vmatpush1.msra.mxu0 %v279
      %784 = vmatprep.subr.mxu0 0.0
      %785 = vmatpush2.msra.mxu0 0.0
      %786 = vmatprep.subr.mxu0 0.0
      %787 = vmatpush2.msra.mxu0 0.0
      %788 = vmatprep.subr.mxu0 0.0
      %789 = vmatpush2.msra.mxu0 0.0
      %790 = vmatprep.subr.mxu0 0.0
      %791 = vmatpush2.msra.mxu0 0.0
      %792 = vmatprep.subr.mxu0 0.0
      %793 = vmatpush2.msra.mxu0 0.0
      %794 = vmatprep.subr.mxu0 0.0
      %795 = vmatpush2.msra.mxu0 0.0
      %796 = vmatprep.subr.mxu0 0.0
      %797 = vmatpush2.msra.mxu0 0.0
      %798 = vmatprep.subr.mxu0 0.0
      %799 = vmatpush2.msra.mxu0 0.0
      %800 = vmatprep.subr.mxu0 0.0
      %801 = vmatpush2.msra.mxu0 0.0
      %802 = vmatprep.subr.mxu0 0.0
      %803 = vmatpush2.msra.mxu0 0.0
      %804 = vmatprep.subr.mxu0 0.0
      %805 = vmatpush2.msra.mxu0 0.0
      %806 = vmatprep.subr.mxu0 0.0
      %807 = vmatpush2.msra.mxu0 0.0
      %808 = vmatprep.subr.mxu0 0.0
      %809 = vmatpush2.msra.mxu0 0.0
      %810 = vmatprep.subr.mxu0 0.0
      %811 = vmatpush2.msra.mxu0 0.0
      %812 = vmatprep.subr.mxu0 0.0
      %813 = vmatpush2.msra.mxu0 0.0
      %814 = vmatprep.subr.mxu0 0.0
      %815 = vmatpush2.msra.mxu0 0.0
      %816 = vmatprep.mubr.f32.mxu0 0.0
      %817 = vmatmul.mubr.f32.gmra.mxu0 %v750
      %v818 = vpop.f32.mrf.mxu0
      %v819 = vadd.f32 0.0, %v818
      %v820 = vpop.f32.mrf.mxu0
      %821 = vdwg.mxu0
      %v823 = vsel %vm274, %v746, 0
      %825 = vmatprep.subr.mxu0 0.0
      %826 = vmatpush1.msra.mxu0 0.0
      %827 = vmatprep.subr.mxu0 0.0
      %828 = vmatpush1.msra.mxu0 0.0
      %829 = vmatprep.subr.mxu0 0.0
      %830 = vmatpush1.msra.mxu0 0.0
      %831 = vmatprep.subr.mxu0 0.0
      %832 = vmatpush1.msra.mxu0 0.0
      %833 = vmatprep.subr.mxu0 0.0
      %834 = vmatpush1.msra.mxu0 0.0
      %835 = vmatprep.subr.mxu0 0.0
      %836 = vmatpush1.msra.mxu0 0.0
      %837 = vmatprep.subr.mxu0 0.0
      %838 = vmatpush1.msra.mxu0 0.0
      %839 = vmatprep.subr.mxu0 0.0
      %840 = vmatpush1.msra.mxu0 0.0
      %841 = vmatprep.subr.mxu0 0.0
      %842 = vmatpush1.msra.mxu0 0.0
      %843 = vmatprep.subr.mxu0 0.0
      %844 = vmatpush1.msra.mxu0 0.0
      %845 = vmatprep.subr.mxu0 0.0
      %846 = vmatpush1.msra.mxu0 0.0
      %847 = vmatprep.subr.mxu0 0.0
      %848 = vmatpush1.msra.mxu0 0.0
      %849 = vmatprep.subr.mxu0 0.0
      %850 = vmatpush1.msra.mxu0 0.0
      %851 = vmatprep.subr.mxu0 0.0
      %852 = vmatpush1.msra.mxu0 0.0
      %853 = vmatprep.subr.mxu0 0.0
      %854 = vmatpush1.msra.mxu0 0.0
      %855 = vmatprep.subr.mxu0 0.0
      %856 = vmatpush1.msra.mxu0 %v355
      %857 = vmatprep.subr.mxu0 0.0
      %858 = vmatpush2.msra.mxu0 0.0
      %859 = vmatprep.subr.mxu0 0.0
      %860 = vmatpush2.msra.mxu0 0.0
      %861 = vmatprep.subr.mxu0 0.0
      %862 = vmatpush2.msra.mxu0 0.0
      %863 = vmatprep.subr.mxu0 0.0
      %864 = vmatpush2.msra.mxu0 0.0
      %865 = vmatprep.subr.mxu0 0.0
      %866 = vmatpush2.msra.mxu0 0.0
      %867 = vmatprep.subr.mxu0 0.0
      %868 = vmatpush2.msra.mxu0 0.0
      %869 = vmatprep.subr.mxu0 0.0
      %870 = vmatpush2.msra.mxu0 0.0
      %871 = vmatprep.subr.mxu0 0.0
      %872 = vmatpush2.msra.mxu0 0.0
      %873 = vmatprep.subr.mxu0 0.0
      %874 = vmatpush2.msra.mxu0 0.0
      %875 = vmatprep.subr.mxu0 0.0
      %876 = vmatpush2.msra.mxu0 0.0
      %877 = vmatprep.subr.mxu0 0.0
      %878 = vmatpush2.msra.mxu0 0.0
      %879 = vmatprep.subr.mxu0 0.0
      %880 = vmatpush2.msra.mxu0 0.0
      %881 = vmatprep.subr.mxu0 0.0
      %882 = vmatpush2.msra.mxu0 0.0
      %883 = vmatprep.subr.mxu0 0.0
      %884 = vmatpush2.msra.mxu0 0.0
      %885 = vmatprep.subr.mxu0 0.0
      %886 = vmatpush2.msra.mxu0 0.0
      %887 = vmatprep.subr.mxu0 0.0
      %888 = vmatpush2.msra.mxu0 0.0
      %889 = vmatprep.mubr.f32.mxu0 0.0
      %890 = vmatmul.mubr.f32.gmra.mxu0 %v823
      %v891 = vpop.f32.mrf.mxu0
      %v892 = vadd.f32 %v819, %v891
      %v893 = vpop.f32.mrf.mxu0
      %894 = vdwg.mxu0
      %s895 = scalar_lea.vmem %s1, 16
      %v896 = vld [vmem:[%s895] sm:$0xff]
      %v898 = vsel %vm274, %v896, 0
      %900 = vmatprep.subr.mxu0 0.0
      %901 = vmatpush1.msra.mxu0 0.0
      %902 = vmatprep.subr.mxu0 0.0
      %903 = vmatpush1.msra.mxu0 0.0
      %904 = vmatprep.subr.mxu0 0.0
      %905 = vmatpush1.msra.mxu0 0.0
      %906 = vmatprep.subr.mxu0 0.0
      %907 = vmatpush1.msra.mxu0 0.0
      %908 = vmatprep.subr.mxu0 0.0
      %909 = vmatpush1.msra.mxu0 0.0
      %910 = vmatprep.subr.mxu0 0.0
      %911 = vmatpush1.msra.mxu0 0.0
      %912 = vmatprep.subr.mxu0 0.0
      %913 = vmatpush1.msra.mxu0 0.0
      %914 = vmatprep.subr.mxu0 0.0
      %915 = vmatpush1.msra.mxu0 0.0
      %916 = vmatprep.subr.mxu0 0.0
      %917 = vmatpush1.msra.mxu0 0.0
      %918 = vmatprep.subr.mxu0 0.0
      %919 = vmatpush1.msra.mxu0 0.0
      %920 = vmatprep.subr.mxu0 0.0
      %921 = vmatpush1.msra.mxu0 0.0
      %922 = vmatprep.subr.mxu0 0.0
      %923 = vmatpush1.msra.mxu0 0.0
      %924 = vmatprep.subr.mxu0 0.0
      %925 = vmatpush1.msra.mxu0 0.0
      %926 = vmatprep.subr.mxu0 0.0
      %927 = vmatpush1.msra.mxu0 0.0
      %928 = vmatprep.subr.mxu0 0.0
      %929 = vmatpush1.msra.mxu0 0.0
      %930 = vmatprep.subr.mxu0 0.0
      %931 = vmatpush1.msra.mxu0 %v433
      %932 = vmatprep.subr.mxu0 0.0
      %933 = vmatpush2.msra.mxu0 0.0
      %934 = vmatprep.subr.mxu0 0.0
      %935 = vmatpush2.msra.mxu0 0.0
      %936 = vmatprep.subr.mxu0 0.0
      %937 = vmatpush2.msra.mxu0 0.0
      %938 = vmatprep.subr.mxu0 0.0
      %939 = vmatpush2.msra.mxu0 0.0
      %940 = vmatprep.subr.mxu0 0.0
      %941 = vmatpush2.msra.mxu0 0.0
      %942 = vmatprep.subr.mxu0 0.0
      %943 = vmatpush2.msra.mxu0 0.0
      %944 = vmatprep.subr.mxu0 0.0
      %945 = vmatpush2.msra.mxu0 0.0
      %946 = vmatprep.subr.mxu0 0.0
      %947 = vmatpush2.msra.mxu0 0.0
      %948 = vmatprep.subr.mxu0 0.0
      %949 = vmatpush2.msra.mxu0 0.0
      %950 = vmatprep.subr.mxu0 0.0
      %951 = vmatpush2.msra.mxu0 0.0
      %952 = vmatprep.subr.mxu0 0.0
      %953 = vmatpush2.msra.mxu0 0.0
      %954 = vmatprep.subr.mxu0 0.0
      %955 = vmatpush2.msra.mxu0 0.0
      %956 = vmatprep.subr.mxu0 0.0
      %957 = vmatpush2.msra.mxu0 0.0
      %958 = vmatprep.subr.mxu0 0.0
      %959 = vmatpush2.msra.mxu0 0.0
      %960 = vmatprep.subr.mxu0 0.0
      %961 = vmatpush2.msra.mxu0 0.0
      %962 = vmatprep.subr.mxu0 0.0
      %963 = vmatpush2.msra.mxu0 0.0
      %964 = vmatprep.mubr.f32.mxu0 0.0
      %965 = vmatmul.mubr.f32.gmra.mxu0 %v898
      %v966 = vpop.f32.mrf.mxu0
      %v967 = vadd.f32 0.0, %v966
      %v968 = vpop.f32.mrf.mxu0
      %969 = vdwg.mxu0
      %v970 = vadd.f32 %v892, %v967
      %972 = vrot.lane.b32.xlu0 %v970, 4
      %v973 = vpop.permute.xlu0 %972
      %v975 = vsel %vm274, 0.0, %v973
      %v976 = vadd.f32 %v745, %v975
      %vm977 = vcmask 130048
      %v978 = vsel %vm977, %v976, 0.0
      %979 = vadd.xlane.f32.xlu0 %v978
      %v980 = vpop.xlane.xlu0 %979
      %v981 = vmul.f32 %v980, 0.0625
      %v982 = vsub.f32 %v976, %v981
      %v983 = vmul.f32 %v982, %v982
      %v984 = vsel %vm977, %v983, 0.0
      %985 = vadd.xlane.f32.xlu0 %v984
      %v986 = vpop.xlane.xlu0 %985
      %v987 = vmul.f32 %v986, 0.0625
      %v988 = vadd.f32 %v987, 1e-05
      %v989 = vrsqrt.pop %v988
      %v990 = vmul.f32 %v982, %v989
      %v991 = vmax.f32 %v990, 0.0
      %993 = vrot.lane.b32.xlu0 %v991, 1
      %v994 = vpop.permute.xlu0 %993
      %v996 = vsel %vm253, 0.0, %v994
      %v997 = vmul.f32 %v996, %v258
      %998 = vrot.lane.b32.xlu0 %v991, 127
      %v999 = vpop.permute.xlu0 %998
      %v1001 = vsel %vm263, %v999, 0.0
      %v1002 = vmul.f32 %v1001, %v268
      %s1003 = scalar_lea.vmem %s3, 24
      %v1004 = vld [vmem:[%s1003] sm:$0xff]
      %s1005 = scalar_lea.vmem %s3, 32
      %v1006 = vld [vmem:[%s1005] sm:$0xff]
      %vm1007 = vcmask 64512
      %v1009 = vsel %vm1007, %v1006, 0
      %1011 = vmatprep.subr.mxu0 0.0
      %1012 = vmatpush1.msra.mxu0 0.0
      %1013 = vmatprep.subr.mxu0 0.0
      %1014 = vmatpush1.msra.mxu0 0.0
      %1015 = vmatprep.subr.mxu0 0.0
      %1016 = vmatpush1.msra.mxu0 0.0
      %1017 = vmatprep.subr.mxu0 0.0
      %1018 = vmatpush1.msra.mxu0 0.0
      %1019 = vmatprep.subr.mxu0 0.0
      %1020 = vmatpush1.msra.mxu0 0.0
      %1021 = vmatprep.subr.mxu0 0.0
      %1022 = vmatpush1.msra.mxu0 0.0
      %1023 = vmatprep.subr.mxu0 0.0
      %1024 = vmatpush1.msra.mxu0 0.0
      %1025 = vmatprep.subr.mxu0 0.0
      %1026 = vmatpush1.msra.mxu0 0.0
      %1027 = vmatprep.subr.mxu0 0.0
      %1028 = vmatpush1.msra.mxu0 0.0
      %1029 = vmatprep.subr.mxu0 0.0
      %1030 = vmatpush1.msra.mxu0 0.0
      %1031 = vmatprep.subr.mxu0 0.0
      %1032 = vmatpush1.msra.mxu0 0.0
      %1033 = vmatprep.subr.mxu0 0.0
      %1034 = vmatpush1.msra.mxu0 0.0
      %1035 = vmatprep.subr.mxu0 0.0
      %1036 = vmatpush1.msra.mxu0 0.0
      %1037 = vmatprep.subr.mxu0 0.0
      %1038 = vmatpush1.msra.mxu0 0.0
      %1039 = vmatprep.subr.mxu0 0.0
      %1040 = vmatpush1.msra.mxu0 0.0
      %1041 = vmatprep.subr.mxu0 0.0
      %1042 = vmatpush1.msra.mxu0 %v991
      %1043 = vmatprep.subr.mxu0 0.0
      %1044 = vmatpush2.msra.mxu0 0.0
      %1045 = vmatprep.subr.mxu0 0.0
      %1046 = vmatpush2.msra.mxu0 0.0
      %1047 = vmatprep.subr.mxu0 0.0
      %1048 = vmatpush2.msra.mxu0 0.0
      %1049 = vmatprep.subr.mxu0 0.0
      %1050 = vmatpush2.msra.mxu0 0.0
      %1051 = vmatprep.subr.mxu0 0.0
      %1052 = vmatpush2.msra.mxu0 0.0
      %1053 = vmatprep.subr.mxu0 0.0
      %1054 = vmatpush2.msra.mxu0 0.0
      %1055 = vmatprep.subr.mxu0 0.0
      %1056 = vmatpush2.msra.mxu0 0.0
      %1057 = vmatprep.subr.mxu0 0.0
      %1058 = vmatpush2.msra.mxu0 0.0
      %1059 = vmatprep.subr.mxu0 0.0
      %1060 = vmatpush2.msra.mxu0 0.0
      %1061 = vmatprep.subr.mxu0 0.0
      %1062 = vmatpush2.msra.mxu0 0.0
      %1063 = vmatprep.subr.mxu0 0.0
      %1064 = vmatpush2.msra.mxu0 0.0
      %1065 = vmatprep.subr.mxu0 0.0
      %1066 = vmatpush2.msra.mxu0 0.0
      %1067 = vmatprep.subr.mxu0 0.0
      %1068 = vmatpush2.msra.mxu0 0.0
      %1069 = vmatprep.subr.mxu0 0.0
      %1070 = vmatpush2.msra.mxu0 0.0
      %1071 = vmatprep.subr.mxu0 0.0
      %1072 = vmatpush2.msra.mxu0 0.0
      %1073 = vmatprep.subr.mxu0 0.0
      %1074 = vmatpush2.msra.mxu0 0.0
      %1075 = vmatprep.mubr.f32.mxu0 0.0
      %1076 = vmatmul.mubr.f32.gmra.mxu0 %v1009
      %v1077 = vpop.f32.mrf.mxu0
      %v1078 = vadd.f32 0.0, %v1077
      %v1079 = vpop.f32.mrf.mxu0
      %1080 = vdwg.mxu0
      %v1082 = vsel %vm1007, %v1004, 0
      %1084 = vmatprep.subr.mxu0 0.0
      %1085 = vmatpush1.msra.mxu0 0.0
      %1086 = vmatprep.subr.mxu0 0.0
      %1087 = vmatpush1.msra.mxu0 0.0
      %1088 = vmatprep.subr.mxu0 0.0
      %1089 = vmatpush1.msra.mxu0 0.0
      %1090 = vmatprep.subr.mxu0 0.0
      %1091 = vmatpush1.msra.mxu0 0.0
      %1092 = vmatprep.subr.mxu0 0.0
      %1093 = vmatpush1.msra.mxu0 0.0
      %1094 = vmatprep.subr.mxu0 0.0
      %1095 = vmatpush1.msra.mxu0 0.0
      %1096 = vmatprep.subr.mxu0 0.0
      %1097 = vmatpush1.msra.mxu0 0.0
      %1098 = vmatprep.subr.mxu0 0.0
      %1099 = vmatpush1.msra.mxu0 0.0
      %1100 = vmatprep.subr.mxu0 0.0
      %1101 = vmatpush1.msra.mxu0 0.0
      %1102 = vmatprep.subr.mxu0 0.0
      %1103 = vmatpush1.msra.mxu0 0.0
      %1104 = vmatprep.subr.mxu0 0.0
      %1105 = vmatpush1.msra.mxu0 0.0
      %1106 = vmatprep.subr.mxu0 0.0
      %1107 = vmatpush1.msra.mxu0 0.0
      %1108 = vmatprep.subr.mxu0 0.0
      %1109 = vmatpush1.msra.mxu0 0.0
      %1110 = vmatprep.subr.mxu0 0.0
      %1111 = vmatpush1.msra.mxu0 0.0
      %1112 = vmatprep.subr.mxu0 0.0
      %1113 = vmatpush1.msra.mxu0 0.0
      %1114 = vmatprep.subr.mxu0 0.0
      %1115 = vmatpush1.msra.mxu0 %v997
      %1116 = vmatprep.subr.mxu0 0.0
      %1117 = vmatpush2.msra.mxu0 0.0
      %1118 = vmatprep.subr.mxu0 0.0
      %1119 = vmatpush2.msra.mxu0 0.0
      %1120 = vmatprep.subr.mxu0 0.0
      %1121 = vmatpush2.msra.mxu0 0.0
      %1122 = vmatprep.subr.mxu0 0.0
      %1123 = vmatpush2.msra.mxu0 0.0
      %1124 = vmatprep.subr.mxu0 0.0
      %1125 = vmatpush2.msra.mxu0 0.0
      %1126 = vmatprep.subr.mxu0 0.0
      %1127 = vmatpush2.msra.mxu0 0.0
      %1128 = vmatprep.subr.mxu0 0.0
      %1129 = vmatpush2.msra.mxu0 0.0
      %1130 = vmatprep.subr.mxu0 0.0
      %1131 = vmatpush2.msra.mxu0 0.0
      %1132 = vmatprep.subr.mxu0 0.0
      %1133 = vmatpush2.msra.mxu0 0.0
      %1134 = vmatprep.subr.mxu0 0.0
      %1135 = vmatpush2.msra.mxu0 0.0
      %1136 = vmatprep.subr.mxu0 0.0
      %1137 = vmatpush2.msra.mxu0 0.0
      %1138 = vmatprep.subr.mxu0 0.0
      %1139 = vmatpush2.msra.mxu0 0.0
      %1140 = vmatprep.subr.mxu0 0.0
      %1141 = vmatpush2.msra.mxu0 0.0
      %1142 = vmatprep.subr.mxu0 0.0
      %1143 = vmatpush2.msra.mxu0 0.0
      %1144 = vmatprep.subr.mxu0 0.0
      %1145 = vmatpush2.msra.mxu0 0.0
      %1146 = vmatprep.subr.mxu0 0.0
      %1147 = vmatpush2.msra.mxu0 0.0
      %1148 = vmatprep.mubr.f32.mxu0 0.0
      %1149 = vmatmul.mubr.f32.gmra.mxu0 %v1082
      %v1150 = vpop.f32.mrf.mxu0
      %v1151 = vadd.f32 %v1078, %v1150
      %v1152 = vpop.f32.mrf.mxu0
      %1153 = vdwg.mxu0
      %s1154 = scalar_lea.vmem %s3, 40
      %v1155 = vld [vmem:[%s1154] sm:$0xff]
      %v1157 = vsel %vm1007, %v1155, 0
      %1159 = vmatprep.subr.mxu0 0.0
      %1160 = vmatpush1.msra.mxu0 0.0
      %1161 = vmatprep.subr.mxu0 0.0
      %1162 = vmatpush1.msra.mxu0 0.0
      %1163 = vmatprep.subr.mxu0 0.0
      %1164 = vmatpush1.msra.mxu0 0.0
      %1165 = vmatprep.subr.mxu0 0.0
      %1166 = vmatpush1.msra.mxu0 0.0
      %1167 = vmatprep.subr.mxu0 0.0
      %1168 = vmatpush1.msra.mxu0 0.0
      %1169 = vmatprep.subr.mxu0 0.0
      %1170 = vmatpush1.msra.mxu0 0.0
      %1171 = vmatprep.subr.mxu0 0.0
      %1172 = vmatpush1.msra.mxu0 0.0
      %1173 = vmatprep.subr.mxu0 0.0
      %1174 = vmatpush1.msra.mxu0 0.0
      %1175 = vmatprep.subr.mxu0 0.0
      %1176 = vmatpush1.msra.mxu0 0.0
      %1177 = vmatprep.subr.mxu0 0.0
      %1178 = vmatpush1.msra.mxu0 0.0
      %1179 = vmatprep.subr.mxu0 0.0
      %1180 = vmatpush1.msra.mxu0 0.0
      %1181 = vmatprep.subr.mxu0 0.0
      %1182 = vmatpush1.msra.mxu0 0.0
      %1183 = vmatprep.subr.mxu0 0.0
      %1184 = vmatpush1.msra.mxu0 0.0
      %1185 = vmatprep.subr.mxu0 0.0
      %1186 = vmatpush1.msra.mxu0 0.0
      %1187 = vmatprep.subr.mxu0 0.0
      %1188 = vmatpush1.msra.mxu0 0.0
      %1189 = vmatprep.subr.mxu0 0.0
      %1190 = vmatpush1.msra.mxu0 %v1002
      %1191 = vmatprep.subr.mxu0 0.0
      %1192 = vmatpush2.msra.mxu0 0.0
      %1193 = vmatprep.subr.mxu0 0.0
      %1194 = vmatpush2.msra.mxu0 0.0
      %1195 = vmatprep.subr.mxu0 0.0
      %1196 = vmatpush2.msra.mxu0 0.0
      %1197 = vmatprep.subr.mxu0 0.0
      %1198 = vmatpush2.msra.mxu0 0.0
      %1199 = vmatprep.subr.mxu0 0.0
      %1200 = vmatpush2.msra.mxu0 0.0
      %1201 = vmatprep.subr.mxu0 0.0
      %1202 = vmatpush2.msra.mxu0 0.0
      %1203 = vmatprep.subr.mxu0 0.0
      %1204 = vmatpush2.msra.mxu0 0.0
      %1205 = vmatprep.subr.mxu0 0.0
      %1206 = vmatpush2.msra.mxu0 0.0
      %1207 = vmatprep.subr.mxu0 0.0
      %1208 = vmatpush2.msra.mxu0 0.0
      %1209 = vmatprep.subr.mxu0 0.0
      %1210 = vmatpush2.msra.mxu0 0.0
      %1211 = vmatprep.subr.mxu0 0.0
      %1212 = vmatpush2.msra.mxu0 0.0
      %1213 = vmatprep.subr.mxu0 0.0
      %1214 = vmatpush2.msra.mxu0 0.0
      %1215 = vmatprep.subr.mxu0 0.0
      %1216 = vmatpush2.msra.mxu0 0.0
      %1217 = vmatprep.subr.mxu0 0.0
      %1218 = vmatpush2.msra.mxu0 0.0
      %1219 = vmatprep.subr.mxu0 0.0
      %1220 = vmatpush2.msra.mxu0 0.0
      %1221 = vmatprep.subr.mxu0 0.0
      %1222 = vmatpush2.msra.mxu0 0.0
      %1223 = vmatprep.mubr.f32.mxu0 0.0
      %1224 = vmatmul.mubr.f32.gmra.mxu0 %v1157
      %v1225 = vpop.f32.mrf.mxu0
      %v1226 = vadd.f32 0.0, %v1225
      %v1227 = vpop.f32.mrf.mxu0
      %1228 = vdwg.mxu0
      %v1229 = vadd.f32 %v1151, %v1226
      %v1230 = vld [vmem:[%s4] sm:$0xff]
      %1232 = vset.pattern.permute.xlu0 0
      %1233 = vperm.xlu0 %1232, %v1230
      %v1234 = vpop.permute.xlu0 %1233
      %v1236 = vadd.f32 %v1229, %v1234
      %s1237 = scalar_lea.vmem %s3, 48
      %v1238 = vld [vmem:[%s1237] sm:$0xff]
      %s1239 = scalar_lea.vmem %s3, 56
      %v1240 = vld [vmem:[%s1239] sm:$0xff]
      %v1242 = vsel %vm1007, %v1240, 0
      %1244 = vmatprep.subr.mxu0 0.0
      %1245 = vmatpush1.msra.mxu0 0.0
      %1246 = vmatprep.subr.mxu0 0.0
      %1247 = vmatpush1.msra.mxu0 0.0
      %1248 = vmatprep.subr.mxu0 0.0
      %1249 = vmatpush1.msra.mxu0 0.0
      %1250 = vmatprep.subr.mxu0 0.0
      %1251 = vmatpush1.msra.mxu0 0.0
      %1252 = vmatprep.subr.mxu0 0.0
      %1253 = vmatpush1.msra.mxu0 0.0
      %1254 = vmatprep.subr.mxu0 0.0
      %1255 = vmatpush1.msra.mxu0 0.0
      %1256 = vmatprep.subr.mxu0 0.0
      %1257 = vmatpush1.msra.mxu0 0.0
      %1258 = vmatprep.subr.mxu0 0.0
      %1259 = vmatpush1.msra.mxu0 0.0
      %1260 = vmatprep.subr.mxu0 0.0
      %1261 = vmatpush1.msra.mxu0 0.0
      %1262 = vmatprep.subr.mxu0 0.0
      %1263 = vmatpush1.msra.mxu0 0.0
      %1264 = vmatprep.subr.mxu0 0.0
      %1265 = vmatpush1.msra.mxu0 0.0
      %1266 = vmatprep.subr.mxu0 0.0
      %1267 = vmatpush1.msra.mxu0 0.0
      %1268 = vmatprep.subr.mxu0 0.0
      %1269 = vmatpush1.msra.mxu0 0.0
      %1270 = vmatprep.subr.mxu0 0.0
      %1271 = vmatpush1.msra.mxu0 0.0
      %1272 = vmatprep.subr.mxu0 0.0
      %1273 = vmatpush1.msra.mxu0 0.0
      %1274 = vmatprep.subr.mxu0 0.0
      %1275 = vmatpush1.msra.mxu0 %v991
      %1276 = vmatprep.subr.mxu0 0.0
      %1277 = vmatpush2.msra.mxu0 0.0
      %1278 = vmatprep.subr.mxu0 0.0
      %1279 = vmatpush2.msra.mxu0 0.0
      %1280 = vmatprep.subr.mxu0 0.0
      %1281 = vmatpush2.msra.mxu0 0.0
      %1282 = vmatprep.subr.mxu0 0.0
      %1283 = vmatpush2.msra.mxu0 0.0
      %1284 = vmatprep.subr.mxu0 0.0
      %1285 = vmatpush2.msra.mxu0 0.0
      %1286 = vmatprep.subr.mxu0 0.0
      %1287 = vmatpush2.msra.mxu0 0.0
      %1288 = vmatprep.subr.mxu0 0.0
      %1289 = vmatpush2.msra.mxu0 0.0
      %1290 = vmatprep.subr.mxu0 0.0
      %1291 = vmatpush2.msra.mxu0 0.0
      %1292 = vmatprep.subr.mxu0 0.0
      %1293 = vmatpush2.msra.mxu0 0.0
      %1294 = vmatprep.subr.mxu0 0.0
      %1295 = vmatpush2.msra.mxu0 0.0
      %1296 = vmatprep.subr.mxu0 0.0
      %1297 = vmatpush2.msra.mxu0 0.0
      %1298 = vmatprep.subr.mxu0 0.0
      %1299 = vmatpush2.msra.mxu0 0.0
      %1300 = vmatprep.subr.mxu0 0.0
      %1301 = vmatpush2.msra.mxu0 0.0
      %1302 = vmatprep.subr.mxu0 0.0
      %1303 = vmatpush2.msra.mxu0 0.0
      %1304 = vmatprep.subr.mxu0 0.0
      %1305 = vmatpush2.msra.mxu0 0.0
      %1306 = vmatprep.subr.mxu0 0.0
      %1307 = vmatpush2.msra.mxu0 0.0
      %1308 = vmatprep.mubr.f32.mxu0 0.0
      %1309 = vmatmul.mubr.f32.gmra.mxu0 %v1242
      %v1310 = vpop.f32.mrf.mxu0
      %v1311 = vadd.f32 0.0, %v1310
      %v1312 = vpop.f32.mrf.mxu0
      %1313 = vdwg.mxu0
      %v1315 = vsel %vm1007, %v1238, 0
      %1317 = vmatprep.subr.mxu0 0.0
      %1318 = vmatpush1.msra.mxu0 0.0
      %1319 = vmatprep.subr.mxu0 0.0
      %1320 = vmatpush1.msra.mxu0 0.0
      %1321 = vmatprep.subr.mxu0 0.0
      %1322 = vmatpush1.msra.mxu0 0.0
      %1323 = vmatprep.subr.mxu0 0.0
      %1324 = vmatpush1.msra.mxu0 0.0
      %1325 = vmatprep.subr.mxu0 0.0
      %1326 = vmatpush1.msra.mxu0 0.0
      %1327 = vmatprep.subr.mxu0 0.0
      %1328 = vmatpush1.msra.mxu0 0.0
      %1329 = vmatprep.subr.mxu0 0.0
      %1330 = vmatpush1.msra.mxu0 0.0
      %1331 = vmatprep.subr.mxu0 0.0
      %1332 = vmatpush1.msra.mxu0 0.0
      %1333 = vmatprep.subr.mxu0 0.0
      %1334 = vmatpush1.msra.mxu0 0.0
      %1335 = vmatprep.subr.mxu0 0.0
      %1336 = vmatpush1.msra.mxu0 0.0
      %1337 = vmatprep.subr.mxu0 0.0
      %1338 = vmatpush1.msra.mxu0 0.0
      %1339 = vmatprep.subr.mxu0 0.0
      %1340 = vmatpush1.msra.mxu0 0.0
      %1341 = vmatprep.subr.mxu0 0.0
      %1342 = vmatpush1.msra.mxu0 0.0
      %1343 = vmatprep.subr.mxu0 0.0
      %1344 = vmatpush1.msra.mxu0 0.0
      %1345 = vmatprep.subr.mxu0 0.0
      %1346 = vmatpush1.msra.mxu0 0.0
      %1347 = vmatprep.subr.mxu0 0.0
      %1348 = vmatpush1.msra.mxu0 %v997
      %1349 = vmatprep.subr.mxu0 0.0
      %1350 = vmatpush2.msra.mxu0 0.0
      %1351 = vmatprep.subr.mxu0 0.0
      %1352 = vmatpush2.msra.mxu0 0.0
      %1353 = vmatprep.subr.mxu0 0.0
      %1354 = vmatpush2.msra.mxu0 0.0
      %1355 = vmatprep.subr.mxu0 0.0
      %1356 = vmatpush2.msra.mxu0 0.0
      %1357 = vmatprep.subr.mxu0 0.0
      %1358 = vmatpush2.msra.mxu0 0.0
      %1359 = vmatprep.subr.mxu0 0.0
      %1360 = vmatpush2.msra.mxu0 0.0
      %1361 = vmatprep.subr.mxu0 0.0
      %1362 = vmatpush2.msra.mxu0 0.0
      %1363 = vmatprep.subr.mxu0 0.0
      %1364 = vmatpush2.msra.mxu0 0.0
      %1365 = vmatprep.subr.mxu0 0.0
      %1366 = vmatpush2.msra.mxu0 0.0
      %1367 = vmatprep.subr.mxu0 0.0
      %1368 = vmatpush2.msra.mxu0 0.0
      %1369 = vmatprep.subr.mxu0 0.0
      %1370 = vmatpush2.msra.mxu0 0.0
      %1371 = vmatprep.subr.mxu0 0.0
      %1372 = vmatpush2.msra.mxu0 0.0
      %1373 = vmatprep.subr.mxu0 0.0
      %1374 = vmatpush2.msra.mxu0 0.0
      %1375 = vmatprep.subr.mxu0 0.0
      %1376 = vmatpush2.msra.mxu0 0.0
      %1377 = vmatprep.subr.mxu0 0.0
      %1378 = vmatpush2.msra.mxu0 0.0
      %1379 = vmatprep.subr.mxu0 0.0
      %1380 = vmatpush2.msra.mxu0 0.0
      %1381 = vmatprep.mubr.f32.mxu0 0.0
      %1382 = vmatmul.mubr.f32.gmra.mxu0 %v1315
      %v1383 = vpop.f32.mrf.mxu0
      %v1384 = vadd.f32 %v1311, %v1383
      %v1385 = vpop.f32.mrf.mxu0
      %1386 = vdwg.mxu0
      %s1387 = scalar_lea.vmem %s3, 64
      %v1388 = vld [vmem:[%s1387] sm:$0xff]
      %v1390 = vsel %vm1007, %v1388, 0
      %1392 = vmatprep.subr.mxu0 0.0
      %1393 = vmatpush1.msra.mxu0 0.0
      %1394 = vmatprep.subr.mxu0 0.0
      %1395 = vmatpush1.msra.mxu0 0.0
      %1396 = vmatprep.subr.mxu0 0.0
      %1397 = vmatpush1.msra.mxu0 0.0
      %1398 = vmatprep.subr.mxu0 0.0
      %1399 = vmatpush1.msra.mxu0 0.0
      %1400 = vmatprep.subr.mxu0 0.0
      %1401 = vmatpush1.msra.mxu0 0.0
      %1402 = vmatprep.subr.mxu0 0.0
      %1403 = vmatpush1.msra.mxu0 0.0
      %1404 = vmatprep.subr.mxu0 0.0
      %1405 = vmatpush1.msra.mxu0 0.0
      %1406 = vmatprep.subr.mxu0 0.0
      %1407 = vmatpush1.msra.mxu0 0.0
      %1408 = vmatprep.subr.mxu0 0.0
      %1409 = vmatpush1.msra.mxu0 0.0
      %1410 = vmatprep.subr.mxu0 0.0
      %1411 = vmatpush1.msra.mxu0 0.0
      %1412 = vmatprep.subr.mxu0 0.0
      %1413 = vmatpush1.msra.mxu0 0.0
      %1414 = vmatprep.subr.mxu0 0.0
      %1415 = vmatpush1.msra.mxu0 0.0
      %1416 = vmatprep.subr.mxu0 0.0
      %1417 = vmatpush1.msra.mxu0 0.0
      %1418 = vmatprep.subr.mxu0 0.0
      %1419 = vmatpush1.msra.mxu0 0.0
      %1420 = vmatprep.subr.mxu0 0.0
      %1421 = vmatpush1.msra.mxu0 0.0
      %1422 = vmatprep.subr.mxu0 0.0
      %1423 = vmatpush1.msra.mxu0 %v1002
      %1424 = vmatprep.subr.mxu0 0.0
      %1425 = vmatpush2.msra.mxu0 0.0
      %1426 = vmatprep.subr.mxu0 0.0
      %1427 = vmatpush2.msra.mxu0 0.0
      %1428 = vmatprep.subr.mxu0 0.0
      %1429 = vmatpush2.msra.mxu0 0.0
      %1430 = vmatprep.subr.mxu0 0.0
      %1431 = vmatpush2.msra.mxu0 0.0
      %1432 = vmatprep.subr.mxu0 0.0
      %1433 = vmatpush2.msra.mxu0 0.0
      %1434 = vmatprep.subr.mxu0 0.0
      %1435 = vmatpush2.msra.mxu0 0.0
      %1436 = vmatprep.subr.mxu0 0.0
      %1437 = vmatpush2.msra.mxu0 0.0
      %1438 = vmatprep.subr.mxu0 0.0
      %1439 = vmatpush2.msra.mxu0 0.0
      %1440 = vmatprep.subr.mxu0 0.0
      %1441 = vmatpush2.msra.mxu0 0.0
      %1442 = vmatprep.subr.mxu0 0.0
      %1443 = vmatpush2.msra.mxu0 0.0
      %1444 = vmatprep.subr.mxu0 0.0
      %1445 = vmatpush2.msra.mxu0 0.0
      %1446 = vmatprep.subr.mxu0 0.0
      %1447 = vmatpush2.msra.mxu0 0.0
      %1448 = vmatprep.subr.mxu0 0.0
      %1449 = vmatpush2.msra.mxu0 0.0
      %1450 = vmatprep.subr.mxu0 0.0
      %1451 = vmatpush2.msra.mxu0 0.0
      %1452 = vmatprep.subr.mxu0 0.0
      %1453 = vmatpush2.msra.mxu0 0.0
      %1454 = vmatprep.subr.mxu0 0.0
      %1455 = vmatpush2.msra.mxu0 0.0
      %1456 = vmatprep.mubr.f32.mxu0 0.0
      %1457 = vmatmul.mubr.f32.gmra.mxu0 %v1390
      %v1458 = vpop.f32.mrf.mxu0
      %v1459 = vadd.f32 0.0, %v1458
      %v1460 = vpop.f32.mrf.mxu0
      %1461 = vdwg.mxu0
      %v1462 = vadd.f32 %v1384, %v1459
      %1464 = vrot.lane.b32.xlu0 %v1462, 124
      %v1465 = vpop.permute.xlu0 %1464
      %v1467 = vsel %vm743, %v1465, 0.0
      %v1468 = vadd.f32 %v1236, %v1467
      %v1469 = vld [vmem:[%s3] sm:$0xff]
      %s1470 = scalar_lea.vmem %s3, 8
      %v1471 = vld [vmem:[%s1470] sm:$0xff]
      %v1473 = vsel %vm1007, %v1471, 0
      %1475 = vmatprep.subr.mxu0 0.0
      %1476 = vmatpush1.msra.mxu0 0.0
      %1477 = vmatprep.subr.mxu0 0.0
      %1478 = vmatpush1.msra.mxu0 0.0
      %1479 = vmatprep.subr.mxu0 0.0
      %1480 = vmatpush1.msra.mxu0 0.0
      %1481 = vmatprep.subr.mxu0 0.0
      %1482 = vmatpush1.msra.mxu0 0.0
      %1483 = vmatprep.subr.mxu0 0.0
      %1484 = vmatpush1.msra.mxu0 0.0
      %1485 = vmatprep.subr.mxu0 0.0
      %1486 = vmatpush1.msra.mxu0 0.0
      %1487 = vmatprep.subr.mxu0 0.0
      %1488 = vmatpush1.msra.mxu0 0.0
      %1489 = vmatprep.subr.mxu0 0.0
      %1490 = vmatpush1.msra.mxu0 0.0
      %1491 = vmatprep.subr.mxu0 0.0
      %1492 = vmatpush1.msra.mxu0 0.0
      %1493 = vmatprep.subr.mxu0 0.0
      %1494 = vmatpush1.msra.mxu0 0.0
      %1495 = vmatprep.subr.mxu0 0.0
      %1496 = vmatpush1.msra.mxu0 0.0
      %1497 = vmatprep.subr.mxu0 0.0
      %1498 = vmatpush1.msra.mxu0 0.0
      %1499 = vmatprep.subr.mxu0 0.0
      %1500 = vmatpush1.msra.mxu0 0.0
      %1501 = vmatprep.subr.mxu0 0.0
      %1502 = vmatpush1.msra.mxu0 0.0
      %1503 = vmatprep.subr.mxu0 0.0
      %1504 = vmatpush1.msra.mxu0 0.0
      %1505 = vmatprep.subr.mxu0 0.0
      %1506 = vmatpush1.msra.mxu0 %v991
      %1507 = vmatprep.subr.mxu0 0.0
      %1508 = vmatpush2.msra.mxu0 0.0
      %1509 = vmatprep.subr.mxu0 0.0
      %1510 = vmatpush2.msra.mxu0 0.0
      %1511 = vmatprep.subr.mxu0 0.0
      %1512 = vmatpush2.msra.mxu0 0.0
      %1513 = vmatprep.subr.mxu0 0.0
      %1514 = vmatpush2.msra.mxu0 0.0
      %1515 = vmatprep.subr.mxu0 0.0
      %1516 = vmatpush2.msra.mxu0 0.0
      %1517 = vmatprep.subr.mxu0 0.0
      %1518 = vmatpush2.msra.mxu0 0.0
      %1519 = vmatprep.subr.mxu0 0.0
      %1520 = vmatpush2.msra.mxu0 0.0
      %1521 = vmatprep.subr.mxu0 0.0
      %1522 = vmatpush2.msra.mxu0 0.0
      %1523 = vmatprep.subr.mxu0 0.0
      %1524 = vmatpush2.msra.mxu0 0.0
      %1525 = vmatprep.subr.mxu0 0.0
      %1526 = vmatpush2.msra.mxu0 0.0
      %1527 = vmatprep.subr.mxu0 0.0
      %1528 = vmatpush2.msra.mxu0 0.0
      %1529 = vmatprep.subr.mxu0 0.0
      %1530 = vmatpush2.msra.mxu0 0.0
      %1531 = vmatprep.subr.mxu0 0.0
      %1532 = vmatpush2.msra.mxu0 0.0
      %1533 = vmatprep.subr.mxu0 0.0
      %1534 = vmatpush2.msra.mxu0 0.0
      %1535 = vmatprep.subr.mxu0 0.0
      %1536 = vmatpush2.msra.mxu0 0.0
      %1537 = vmatprep.subr.mxu0 0.0
      %1538 = vmatpush2.msra.mxu0 0.0
      %1539 = vmatprep.mubr.f32.mxu0 0.0
      %1540 = vmatmul.mubr.f32.gmra.mxu0 %v1473
      %v1541 = vpop.f32.mrf.mxu0
      %v1542 = vadd.f32 0.0, %v1541
      %v1543 = vpop.f32.mrf.mxu0
      %1544 = vdwg.mxu0
      %v1546 = vsel %vm1007, %v1469, 0
      %1548 = vmatprep.subr.mxu0 0.0
      %1549 = vmatpush1.msra.mxu0 0.0
      %1550 = vmatprep.subr.mxu0 0.0
      %1551 = vmatpush1.msra.mxu0 0.0
      %1552 = vmatprep.subr.mxu0 0.0
      %1553 = vmatpush1.msra.mxu0 0.0
      %1554 = vmatprep.subr.mxu0 0.0
      %1555 = vmatpush1.msra.mxu0 0.0
      %1556 = vmatprep.subr.mxu0 0.0
      %1557 = vmatpush1.msra.mxu0 0.0
      %1558 = vmatprep.subr.mxu0 0.0
      %1559 = vmatpush1.msra.mxu0 0.0
      %1560 = vmatprep.subr.mxu0 0.0
      %1561 = vmatpush1.msra.mxu0 0.0
      %1562 = vmatprep.subr.mxu0 0.0
      %1563 = vmatpush1.msra.mxu0 0.0
      %1564 = vmatprep.subr.mxu0 0.0
      %1565 = vmatpush1.msra.mxu0 0.0
      %1566 = vmatprep.subr.mxu0 0.0
      %1567 = vmatpush1.msra.mxu0 0.0
      %1568 = vmatprep.subr.mxu0 0.0
      %1569 = vmatpush1.msra.mxu0 0.0
      %1570 = vmatprep.subr.mxu0 0.0
      %1571 = vmatpush1.msra.mxu0 0.0
      %1572 = vmatprep.subr.mxu0 0.0
      %1573 = vmatpush1.msra.mxu0 0.0
      %1574 = vmatprep.subr.mxu0 0.0
      %1575 = vmatpush1.msra.mxu0 0.0
      %1576 = vmatprep.subr.mxu0 0.0
      %1577 = vmatpush1.msra.mxu0 0.0
      %1578 = vmatprep.subr.mxu0 0.0
      %1579 = vmatpush1.msra.mxu0 %v997
      %1580 = vmatprep.subr.mxu0 0.0
      %1581 = vmatpush2.msra.mxu0 0.0
      %1582 = vmatprep.subr.mxu0 0.0
      %1583 = vmatpush2.msra.mxu0 0.0
      %1584 = vmatprep.subr.mxu0 0.0
      %1585 = vmatpush2.msra.mxu0 0.0
      %1586 = vmatprep.subr.mxu0 0.0
      %1587 = vmatpush2.msra.mxu0 0.0
      %1588 = vmatprep.subr.mxu0 0.0
      %1589 = vmatpush2.msra.mxu0 0.0
      %1590 = vmatprep.subr.mxu0 0.0
      %1591 = vmatpush2.msra.mxu0 0.0
      %1592 = vmatprep.subr.mxu0 0.0
      %1593 = vmatpush2.msra.mxu0 0.0
      %1594 = vmatprep.subr.mxu0 0.0
      %1595 = vmatpush2.msra.mxu0 0.0
      %1596 = vmatprep.subr.mxu0 0.0
      %1597 = vmatpush2.msra.mxu0 0.0
      %1598 = vmatprep.subr.mxu0 0.0
      %1599 = vmatpush2.msra.mxu0 0.0
      %1600 = vmatprep.subr.mxu0 0.0
      %1601 = vmatpush2.msra.mxu0 0.0
      %1602 = vmatprep.subr.mxu0 0.0
      %1603 = vmatpush2.msra.mxu0 0.0
      %1604 = vmatprep.subr.mxu0 0.0
      %1605 = vmatpush2.msra.mxu0 0.0
      %1606 = vmatprep.subr.mxu0 0.0
      %1607 = vmatpush2.msra.mxu0 0.0
      %1608 = vmatprep.subr.mxu0 0.0
      %1609 = vmatpush2.msra.mxu0 0.0
      %1610 = vmatprep.subr.mxu0 0.0
      %1611 = vmatpush2.msra.mxu0 0.0
      %1612 = vmatprep.mubr.f32.mxu0 0.0
      %1613 = vmatmul.mubr.f32.gmra.mxu0 %v1546
      %v1614 = vpop.f32.mrf.mxu0
      %v1615 = vadd.f32 %v1542, %v1614
      %v1616 = vpop.f32.mrf.mxu0
      %1617 = vdwg.mxu0
      %s1618 = scalar_lea.vmem %s3, 16
      %v1619 = vld [vmem:[%s1618] sm:$0xff]
      %v1621 = vsel %vm1007, %v1619, 0
      %1623 = vmatprep.subr.mxu0 0.0
      %1624 = vmatpush1.msra.mxu0 0.0
      %1625 = vmatprep.subr.mxu0 0.0
      %1626 = vmatpush1.msra.mxu0 0.0
      %1627 = vmatprep.subr.mxu0 0.0
      %1628 = vmatpush1.msra.mxu0 0.0
      %1629 = vmatprep.subr.mxu0 0.0
      %1630 = vmatpush1.msra.mxu0 0.0
      %1631 = vmatprep.subr.mxu0 0.0
      %1632 = vmatpush1.msra.mxu0 0.0
      %1633 = vmatprep.subr.mxu0 0.0
      %1634 = vmatpush1.msra.mxu0 0.0
      %1635 = vmatprep.subr.mxu0 0.0
      %1636 = vmatpush1.msra.mxu0 0.0
      %1637 = vmatprep.subr.mxu0 0.0
      %1638 = vmatpush1.msra.mxu0 0.0
      %1639 = vmatprep.subr.mxu0 0.0
      %1640 = vmatpush1.msra.mxu0 0.0
      %1641 = vmatprep.subr.mxu0 0.0
      %1642 = vmatpush1.msra.mxu0 0.0
      %1643 = vmatprep.subr.mxu0 0.0
      %1644 = vmatpush1.msra.mxu0 0.0
      %1645 = vmatprep.subr.mxu0 0.0
      %1646 = vmatpush1.msra.mxu0 0.0
      %1647 = vmatprep.subr.mxu0 0.0
      %1648 = vmatpush1.msra.mxu0 0.0
      %1649 = vmatprep.subr.mxu0 0.0
      %1650 = vmatpush1.msra.mxu0 0.0
      %1651 = vmatprep.subr.mxu0 0.0
      %1652 = vmatpush1.msra.mxu0 0.0
      %1653 = vmatprep.subr.mxu0 0.0
      %1654 = vmatpush1.msra.mxu0 %v1002
      %1655 = vmatprep.subr.mxu0 0.0
      %1656 = vmatpush2.msra.mxu0 0.0
      %1657 = vmatprep.subr.mxu0 0.0
      %1658 = vmatpush2.msra.mxu0 0.0
      %1659 = vmatprep.subr.mxu0 0.0
      %1660 = vmatpush2.msra.mxu0 0.0
      %1661 = vmatprep.subr.mxu0 0.0
      %1662 = vmatpush2.msra.mxu0 0.0
      %1663 = vmatprep.subr.mxu0 0.0
      %1664 = vmatpush2.msra.mxu0 0.0
      %1665 = vmatprep.subr.mxu0 0.0
      %1666 = vmatpush2.msra.mxu0 0.0
      %1667 = vmatprep.subr.mxu0 0.0
      %1668 = vmatpush2.msra.mxu0 0.0
      %1669 = vmatprep.subr.mxu0 0.0
      %1670 = vmatpush2.msra.mxu0 0.0
      %1671 = vmatprep.subr.mxu0 0.0
      %1672 = vmatpush2.msra.mxu0 0.0
      %1673 = vmatprep.subr.mxu0 0.0
      %1674 = vmatpush2.msra.mxu0 0.0
      %1675 = vmatprep.subr.mxu0 0.0
      %1676 = vmatpush2.msra.mxu0 0.0
      %1677 = vmatprep.subr.mxu0 0.0
      %1678 = vmatpush2.msra.mxu0 0.0
      %1679 = vmatprep.subr.mxu0 0.0
      %1680 = vmatpush2.msra.mxu0 0.0
      %1681 = vmatprep.subr.mxu0 0.0
      %1682 = vmatpush2.msra.mxu0 0.0
      %1683 = vmatprep.subr.mxu0 0.0
      %1684 = vmatpush2.msra.mxu0 0.0
      %1685 = vmatprep.subr.mxu0 0.0
      %1686 = vmatpush2.msra.mxu0 0.0
      %1687 = vmatprep.mubr.f32.mxu0 0.0
      %1688 = vmatmul.mubr.f32.gmra.mxu0 %v1621
      %v1689 = vpop.f32.mrf.mxu0
      %v1690 = vadd.f32 0.0, %v1689
      %v1691 = vpop.f32.mrf.mxu0
      %1692 = vdwg.mxu0
      %v1693 = vadd.f32 %v1615, %v1690
      %1695 = vrot.lane.b32.xlu0 %v1693, 4
      %v1696 = vpop.permute.xlu0 %1695
      %v1698 = vsel %vm274, 0.0, %v1696
      %v1699 = vadd.f32 %v1468, %v1698
      %v1700 = vsel %vm977, %v1699, 0.0
      %1701 = vadd.xlane.f32.xlu0 %v1700
      %v1702 = vpop.xlane.xlu0 %1701
      %v1703 = vmul.f32 %v1702, 0.0625
      %v1704 = vsub.f32 %v1699, %v1703
      %v1705 = vmul.f32 %v1704, %v1704
      %v1706 = vsel %vm977, %v1705, 0.0
      %1707 = vadd.xlane.f32.xlu0 %v1706
      %v1708 = vpop.xlane.xlu0 %1707
      %v1709 = vmul.f32 %v1708, 0.0625
      %v1710 = vadd.f32 %v1709, 1e-05
      %v1711 = vrsqrt.pop %v1710
      %v1712 = vmul.f32 %v1704, %v1711
      %v1713 = vmax.f32 %v1712, 0.0
      %1714 = vst.msk [vmem:[%s246] sm:$0xff] %vm977, %v1713
      %p1715 = scmp.lt.s32.totalorder %s17, 1
      %s1716 = scalar_select %p1715, %s17, 1
      %s1717 = smul.addr %s1716, 8
      %s1718 = scalar_lea.vmem %s6, %s1717
      // Predicated region
      $region45: #{grouped_xnet_down.6} parent=43 // pred_check
        %p1719 = pneg %p166
      $region46: #{grouped_xnet_down.6} parent=43 // pred_check_branch
        %1721 = sbr.rel (%p1719) target = $region48
      $region47: #{grouped_xnet_down.6} parent=43 // pred_region
        _
      $region48: #{grouped_xnet_down.6} parent=43 // pred_fallthru
        _
    $region44: #{grouped_xnet_down.6} parent=5 // pred_fallthru
      _
    %p1722 = scmp.le.s32.totalorder 2, %s12
    // Predicated region
    $region49: #{grouped_xnet_down.6} parent=5 // pred_check
      %p1723 = pneg %p1722
    $region50: #{grouped_xnet_down.6} parent=5 // pred_check_branch
      %1725 = sbr.rel (%p1723) target = $region52
    $region51: #{grouped_xnet_down.6} parent=5 // pred_region
      %s1726 = ssub.s32 %s12, 2
      // Predicated region
      $region53: #{grouped_xnet_down.6} parent=51 // pred_check
        %p1727 = pneg %p172
      $region54: #{grouped_xnet_down.6} parent=51 // pred_check_branch
        %1729 = sbr.rel (%p1727) target = $region56
      $region55: #{grouped_xnet_down.6} parent=51 // pred_region
        %p1730 = scmp.lt.s32.totalorder %s18, 1
        %s1731 = scalar_select %p1730, %s18, 1
        %s1732 = smul.addr %s1731, 8
        %s1733 = scalar_lea.vmem %s6, %s1732
      $region56: #{grouped_xnet_down.6} parent=51 // pred_fallthru
        _
    $region52: #{grouped_xnet_down.6} parent=5 // pred_fallthru
      _
  $region6: #{grouped_xnet_down.6} parent=0 // loop_footer
    %s16 = sadd.s32 1, %s12
  $region7: #{grouped_xnet_down.6} parent=0 // loop_footer_branch
    %11 = sbr.rel target = $region3
  $region8: #{grouped_xnet_down.6} parent=0 // loop_exit
    _

</llo_original>
